<compile_context>
chip_gen: v7x
topology: tpu7x:2x2x1
jax: 0.10.0
libtpu: 0.0.40
codegen_flags: <defaults>
</compile_context>

<pallas_src>
import functools

import jax
import jax.numpy as jnp
from jax.experimental import pallas as pl
from jax.experimental.pallas import tpu as pltpu

_LN_EPS = 1e-5              # PyTorch LayerNorm default eps
_INV_SQRT2 = 0.7071067811865476


def _layer_norm(x, w, b):
    mu = jnp.mean(x, axis=-1, keepdims=True)
    xc = x - mu
    var = jnp.mean(xc * xc, axis=-1, keepdims=True)
    return xc * jax.lax.rsqrt(var + _LN_EPS) * w + b


def _gelu_exact(x):
    # matches torch.nn.functional.gelu(approximate='none'); computed in f32.
    return 0.5 * x * (1.0 + jax.lax.erf(x * _INV_SQRT2))


def _aggregator_kernel(num_layers, num_streams, *args):
    stream_refs = args[:num_streams]
    (pw_ref, pb_ref,
     wv_ref, bv_ref, wo_ref, bo_ref, ln1w_ref, ln1b_ref,
     w1_ref, b1_ref, w2_ref, b2_ref, ln2w_ref, ln2b_ref,
     lnfw_ref, lnfb_ref, out_ref) = args[num_streams:]

    # Fused concat + projection: per-stream partial matmuls (bf16 MXU, f32 acc).
    h = jnp.dot(stream_refs[0][...].astype(jnp.bfloat16), pw_ref[0],
                preferred_element_type=jnp.float32)
    for s in range(1, num_streams):
        h = h + jnp.dot(stream_refs[s][...].astype(jnp.bfloat16), pw_ref[s],
                        preferred_element_type=jnp.float32)
    h = h + pb_ref[...]

    for l in range(num_layers):  # static unrolled loop over encoder layers
        # Hoist bias / LN parameter reads out of the hot dot+add expressions.
        bv = bv_ref[l]
        bo = bo_ref[l]
        ln1w, ln1b = ln1w_ref[l], ln1b_ref[l]
        b1 = b1_ref[l]
        b2 = b2_ref[l]
        ln2w, ln2b = ln2w_ref[l], ln2b_ref[l]

        # --- self-attention block (post-norm, seq_len == 1) ---
        # softmax over a single key is exactly 1, so MHA(x) == out_proj(V).
        v = jnp.dot(h.astype(jnp.bfloat16), wv_ref[l],
                    preferred_element_type=jnp.float32) + bv
        attn = jnp.dot(v.astype(jnp.bfloat16), wo_ref[l],
                       preferred_element_type=jnp.float32) + bo
        h = _layer_norm(h + attn, ln1w, ln1b)

        # --- feed-forward block (GELU exact, elementwise in f32) ---
        f = jnp.dot(h.astype(jnp.bfloat16), w1_ref[l],
                    preferred_element_type=jnp.float32) + b1
        f = _gelu_exact(f)
        f = jnp.dot(f.astype(jnp.bfloat16), w2_ref[l],
                    preferred_element_type=jnp.float32) + b2
        h = _layer_norm(h + f, ln2w, ln2b)

    # output_layer_norm
    out_ref[...] = _layer_norm(h, lnfw_ref[...], lnfb_ref[...])


def _round_up(x, m):
    return (x + m - 1) // m * m


def _pick_block_b(batch):
    # Large batch tiles feed the MXU rows (multiples of 256 preferred on
    # v6e/v7x), but keep >= 2 grid steps so both v7x TensorCores get work.
    if batch >= 1024:
        return 512
    if batch >= 512:
        return 256
    if batch >= 256:
        return 128
    if batch <= 8:
        return 8
    return _round_up(pl.cdiv(batch, 2), 8)


_ORDERED_KEYS = ("proj_w", "proj_b", "wv", "bv", "wo", "bo",
                 "ln1w", "ln1b", "w1", "b1", "w2", "b2",
                 "ln2w", "ln2b", "lnf_w", "lnf_b")


def visual_feature_aggregator(stream_features, params, *, block_b=None):
    """Pallas-backed forward pass. stream_features: list of (B, S) arrays."""
    num_streams = len(stream_features)
    B, S = stream_features[0].shape
    D = params["proj_w"].shape[-1]
    L = params["wv"].shape[0]

    if block_b is None:
        block_b = _pick_block_b(B)

    # Pad the batch to a multiple of block_b (padded rows are computed row-wise
    # and simply dropped afterwards -- LayerNorm/matmuls are per-row).
    B_pad = _round_up(B, block_b)
    if B_pad != B:
        pad = B_pad - B
        stream_features = [jnp.pad(s, ((0, pad), (0, 0))) for s in stream_features]

    weights = [params[k] for k in _ORDERED_KEYS]

    def full_spec(a):
        nd = a.ndim
        # Block index never changes -> the pipeline fetches each weight once.
        return pl.BlockSpec(a.shape, lambda i, _nd=nd: (0,) * _nd)

    stream_specs = [pl.BlockSpec((block_b, S), lambda i: (i, 0))
                    for _ in range(num_streams)]
    in_specs = stream_specs + [full_spec(a) for a in weights]
    out_specs = pl.BlockSpec((block_b, D), lambda i: (i, 0))

    # Explicit VMEM budget: resident weights (x2 for pipeline buffers),
    # f32 in/out activation tiles (x2), ff/LayerNorm temporaries + slack;
    # bounded to stay inside v7x's 64 MiB physical VMEM.
    weight_bytes = sum(int(a.size) * a.dtype.itemsize for a in weights)
    act_bytes = 4 * block_b * (num_streams * S + D)
    inter_bytes = 4 * block_b * 8 * D
    est = 2 * weight_bytes + 2 * act_bytes + inter_bytes
    vmem_limit = int(min(max(4 * est, 32 * 1024 * 1024), 64 * 1024 * 1024))

    out = pl.pallas_call(
        functools.partial(_aggregator_kernel, L, num_streams),
        out_shape=jax.ShapeDtypeStruct((B_pad, D), jnp.float32),
        grid=(B_pad // block_b,),
        in_specs=in_specs,
        out_specs=out_specs,
        compiler_params=pltpu.CompilerParams(
            dimension_semantics=("parallel",),
            vmem_limit_bytes=vmem_limit),
    )(*stream_features, *weights)

    return out[:B] if B_pad != B else out


def init_params(key, *, num_streams, stream_dim, proj_dim, enc_dim, num_layers):
    """Deterministic synthetic parameters with the module's shapes.

    Matmul weights are stored transposed from PyTorch's (out, in) convention
    (i.e. as (in, out)) and cast to bfloat16; biases/LayerNorm params stay f32.
    """
    assert proj_dim == enc_dim
    ff_dim = 4 * enc_dim
    keys = iter(jax.random.split(key, 2 + 8 * num_layers))

    def lin(out_d, in_d):
        w = jax.random.normal(next(keys), (out_d, in_d), jnp.float32) * 0.02
        b = jax.random.normal(next(keys), (out_d,), jnp.float32) * 0.02
        return w.T, b                                   # (in, out), (out,)

    proj_w, proj_b = lin(proj_dim, num_streams * stream_dim)   # (C, D)
    proj_w = proj_w.reshape(num_streams, stream_dim, proj_dim)  # per-stream slices

    wv, bv, wo, bo = [], [], [], []
    w1, b1, w2, b2 = [], [], [], []
    for _ in range(num_layers):
        # nn.MultiheadAttention in_proj_weight: (3D, D); only the V slice
        # matters numerically when seq_len == 1.
        in_proj_w, in_proj_b = lin(3 * enc_dim, enc_dim)        # (D, 3D)
        wv.append(in_proj_w[:, enc_dim:2 * enc_dim])
        bv.append(in_proj_b[enc_dim:2 * enc_dim])
        w, b = lin(enc_dim, enc_dim)                            # out_proj
        wo.append(w); bo.append(b)
        w, b = lin(ff_dim, enc_dim)                             # linear1
        w1.append(w); b1.append(b)
        w, b = lin(enc_dim, ff_dim)                             # linear2
        w2.append(w); b2.append(b)

    bf16 = lambda xs: jnp.stack(xs, axis=0).astype(jnp.bfloat16)
    vecs = lambda xs: jnp.stack([v[None, :] for v in xs], axis=0)   # (L, 1, d) f32
    ones_ln = jnp.ones((num_layers, 1, enc_dim), jnp.float32)
    zeros_ln = jnp.zeros((num_layers, 1, enc_dim), jnp.float32)

    return dict(
        proj_w=proj_w.astype(jnp.bfloat16), proj_b=proj_b[None, :],
        wv=bf16(wv), bv=vecs(bv), wo=bf16(wo), bo=vecs(bo),
        ln1w=ones_ln, ln1b=zeros_ln,
        w1=bf16(w1), b1=vecs(b1), w2=bf16(w2), b2=vecs(b2),
        ln2w=ones_ln, ln2b=zeros_ln,
        lnf_w=jnp.ones((1, enc_dim), jnp.float32),
        lnf_b=jnp.zeros((1, enc_dim), jnp.float32),
    )


def _reference(stream_features, params):
    """Pure-JAX reference of the same (mixed-precision) math."""
    x = jnp.concatenate(stream_features, axis=1).astype(jnp.bfloat16)
    pw = params["proj_w"].reshape(x.shape[1], -1)
    h = jnp.dot(x, pw, preferred_element_type=jnp.float32) + params["proj_b"]
    for l in range(params["wv"].shape[0]):
        v = jnp.dot(h.astype(jnp.bfloat16), params["wv"][l],
                    preferred_element_type=jnp.float32) + params["bv"][l]
        attn = jnp.dot(v.astype(jnp.bfloat16), params["wo"][l],
                       preferred_element_type=jnp.float32) + params["bo"][l]
        h = _layer_norm(h + attn, params["ln1w"][l], params["ln1b"][l])
        f = jnp.dot(h.astype(jnp.bfloat16), params["w1"][l],
                    preferred_element_type=jnp.float32) + params["b1"][l]
        f = _gelu_exact(f)
        f = jnp.dot(f.astype(jnp.bfloat16), params["w2"][l],
                    preferred_element_type=jnp.float32) + params["b2"][l]
        h = _layer_norm(h + f, params["ln2w"][l], params["ln2b"][l])
    return _layer_norm(h, params["lnf_w"], params["lnf_b"])


if __name__ == "__main__":
    # Small dims consistent with the module's forward (scaled down), but a
    # batch big enough to exercise large MXU-friendly tiles and a >=2 grid:
    # block_b=256, grid=(2,) -> both v7x TensorCores busy.
    NUM_STREAMS = 3
    STREAM_DIM = 128
    PROJ_DIM = ENC_DIM = 128
    NUM_LAYERS = 2
    BATCH = 512

    key = jax.random.PRNGKey(0)
    k_params, k_x = jax.random.split(key)
    params = init_params(k_params, num_streams=NUM_STREAMS,
                         stream_dim=STREAM_DIM, proj_dim=PROJ_DIM,
                         enc_dim=ENC_DIM, num_layers=NUM_LAYERS)

    stream_keys = jax.random.split(k_x, NUM_STREAMS)
    streams = [jax.random.normal(k, (BATCH, STREAM_DIM), jnp.float32)
               for k in stream_keys]

    out = visual_feature_aggregator(streams, params)
    out = jax.block_until_ready(out)

    ref = _reference(streams, params)
    assert out.shape == (BATCH, ENC_DIM)
    assert jnp.allclose(out, ref, atol=2e-3, rtol=2e-3), "mismatch vs reference"
    print("KERNEL_OK")
</pallas_src>

<mosaic_0001>
module attributes {stable_mosaic.version = 11 : i64} {
  func.func @_aggregator_kernel(%arg0: i32, %arg1: memref<256x128xf32, #tpu.memory_space<vmem>>, %arg2: memref<256x128xf32, #tpu.memory_space<vmem>>, %arg3: memref<256x128xf32, #tpu.memory_space<vmem>>, %arg4: memref<3x128x128xbf16, #tpu.memory_space<vmem>>, %arg5: memref<1x128xf32, #tpu.memory_space<vmem>>, %arg6: memref<2x128x128xbf16, #tpu.memory_space<vmem>>, %arg7: memref<2x1x128xf32, #tpu.memory_space<vmem>>, %arg8: memref<2x128x128xbf16, #tpu.memory_space<vmem>>, %arg9: memref<2x1x128xf32, #tpu.memory_space<vmem>>, %arg10: memref<2x1x128xf32, #tpu.memory_space<vmem>>, %arg11: memref<2x1x128xf32, #tpu.memory_space<vmem>>, %arg12: memref<2x128x512xbf16, #tpu.memory_space<vmem>>, %arg13: memref<2x1x512xf32, #tpu.memory_space<vmem>>, %arg14: memref<2x512x128xbf16, #tpu.memory_space<vmem>>, %arg15: memref<2x1x128xf32, #tpu.memory_space<vmem>>, %arg16: memref<2x1x128xf32, #tpu.memory_space<vmem>>, %arg17: memref<2x1x128xf32, #tpu.memory_space<vmem>>, %arg18: memref<1x128xf32, #tpu.memory_space<vmem>>, %arg19: memref<1x128xf32, #tpu.memory_space<vmem>>, %arg20: memref<256x128xf32, #tpu.memory_space<vmem>>) attributes {dimension_semantics = [#tpu.dimension_semantics<parallel>], iteration_bounds = array<i64: 2>, scalar_prefetch = 0 : i64, scratch_operands = 0 : i64, tpu.core_type = #tpu.core_type<tc>, window_params = [{transform_indices = @transform_0, window_bounds = array<i64: 256, 128>}, {transform_indices = @transform_1, window_bounds = array<i64: 256, 128>}, {transform_indices = @transform_2, window_bounds = array<i64: 256, 128>}, {pipeline_mode = #tpu.pipeline_mode<synchronous>, transform_indices = @transform_3, window_bounds = array<i64: 3, 128, 128>}, {pipeline_mode = #tpu.pipeline_mode<synchronous>, transform_indices = @transform_4, window_bounds = array<i64: 1, 128>}, {pipeline_mode = #tpu.pipeline_mode<synchronous>, transform_indices = @transform_5, window_bounds = array<i64: 2, 128, 128>}, {pipeline_mode = #tpu.pipeline_mode<synchronous>, transform_indices = @transform_6, window_bounds = array<i64: 2, 1, 128>}, {pipeline_mode = #tpu.pipeline_mode<synchronous>, transform_indices = @transform_7, window_bounds = array<i64: 2, 128, 128>}, {pipeline_mode = #tpu.pipeline_mode<synchronous>, transform_indices = @transform_8, window_bounds = array<i64: 2, 1, 128>}, {pipeline_mode = #tpu.pipeline_mode<synchronous>, transform_indices = @transform_9, window_bounds = array<i64: 2, 1, 128>}, {pipeline_mode = #tpu.pipeline_mode<synchronous>, transform_indices = @transform_10, window_bounds = array<i64: 2, 1, 128>}, {pipeline_mode = #tpu.pipeline_mode<synchronous>, transform_indices = @transform_11, window_bounds = array<i64: 2, 128, 512>}, {pipeline_mode = #tpu.pipeline_mode<synchronous>, transform_indices = @transform_12, window_bounds = array<i64: 2, 1, 512>}, {pipeline_mode = #tpu.pipeline_mode<synchronous>, transform_indices = @transform_13, window_bounds = array<i64: 2, 512, 128>}, {pipeline_mode = #tpu.pipeline_mode<synchronous>, transform_indices = @transform_14, window_bounds = array<i64: 2, 1, 128>}, {pipeline_mode = #tpu.pipeline_mode<synchronous>, transform_indices = @transform_15, window_bounds = array<i64: 2, 1, 128>}, {pipeline_mode = #tpu.pipeline_mode<synchronous>, transform_indices = @transform_16, window_bounds = array<i64: 2, 1, 128>}, {pipeline_mode = #tpu.pipeline_mode<synchronous>, transform_indices = @transform_17, window_bounds = array<i64: 1, 128>}, {pipeline_mode = #tpu.pipeline_mode<synchronous>, transform_indices = @transform_18, window_bounds = array<i64: 1, 128>}, {transform_indices = @transform_19, window_bounds = array<i64: 256, 128>}]} {
    %c0 = arith.constant 0 : index
    %c0_0 = arith.constant 0 : index
    %0 = vector.load %arg1[%c0, %c0_0] : memref<256x128xf32, #tpu.memory_space<vmem>>, vector<256x128xf32>
    %1 = arith.truncf %0 : vector<256x128xf32> to vector<256x128xbf16>
    %c0_1 = arith.constant 0 : index
    %c0_2 = arith.constant 0 : index
    %c0_3 = arith.constant 0 : index
    %2 = vector.load %arg4[%c0_1, %c0_2, %c0_3] : memref<3x128x128xbf16, #tpu.memory_space<vmem>>, vector<1x128x128xbf16>
    %3 = vector.shape_cast %2 : vector<1x128x128xbf16> to vector<128x128xbf16>
    %cst = arith.constant dense<0.000000e+00> : vector<256x128xf32>
    %4 = tpu.matmul %1, %3, %cst {dimension_numbers = #tpu.dot_dimension_numbers<[1], [0], [0], [1], [0, 0, 1, 1], [], []>} : vector<256x128xbf16>, vector<128x128xbf16>, vector<256x128xf32> -> vector<256x128xf32>
    %c0_4 = arith.constant 0 : index
    %c0_5 = arith.constant 0 : index
    %5 = vector.load %arg2[%c0_4, %c0_5] : memref<256x128xf32, #tpu.memory_space<vmem>>, vector<256x128xf32>
    %6 = arith.truncf %5 : vector<256x128xf32> to vector<256x128xbf16>
    %c1 = arith.constant 1 : index
    %c0_6 = arith.constant 0 : index
    %c0_7 = arith.constant 0 : index
    %7 = vector.load %arg4[%c1, %c0_6, %c0_7] : memref<3x128x128xbf16, #tpu.memory_space<vmem>>, vector<1x128x128xbf16>
    %8 = vector.shape_cast %7 : vector<1x128x128xbf16> to vector<128x128xbf16>
    %cst_8 = arith.constant dense<0.000000e+00> : vector<256x128xf32>
    %9 = tpu.matmul %6, %8, %cst_8 {dimension_numbers = #tpu.dot_dimension_numbers<[1], [0], [0], [1], [0, 0, 1, 1], [], []>} : vector<256x128xbf16>, vector<128x128xbf16>, vector<256x128xf32> -> vector<256x128xf32>
    %10 = arith.addf %4, %9 : vector<256x128xf32>
    %c0_9 = arith.constant 0 : index
    %c0_10 = arith.constant 0 : index
    %11 = vector.load %arg3[%c0_9, %c0_10] : memref<256x128xf32, #tpu.memory_space<vmem>>, vector<256x128xf32>
    %12 = arith.truncf %11 : vector<256x128xf32> to vector<256x128xbf16>
    %c2 = arith.constant 2 : index
    %c0_11 = arith.constant 0 : index
    %c0_12 = arith.constant 0 : index
    %13 = vector.load %arg4[%c2, %c0_11, %c0_12] : memref<3x128x128xbf16, #tpu.memory_space<vmem>>, vector<1x128x128xbf16>
    %14 = vector.shape_cast %13 : vector<1x128x128xbf16> to vector<128x128xbf16>
    %cst_13 = arith.constant dense<0.000000e+00> : vector<256x128xf32>
    %15 = tpu.matmul %12, %14, %cst_13 {dimension_numbers = #tpu.dot_dimension_numbers<[1], [0], [0], [1], [0, 0, 1, 1], [], []>} : vector<256x128xbf16>, vector<128x128xbf16>, vector<256x128xf32> -> vector<256x128xf32>
    %16 = arith.addf %10, %15 : vector<256x128xf32>
    %c0_14 = arith.constant 0 : index
    %c0_15 = arith.constant 0 : index
    %17 = vector.load %arg5[%c0_14, %c0_15] : memref<1x128xf32, #tpu.memory_space<vmem>>, vector<1x128xf32>
    %18 = vector.broadcast %17 : vector<1x128xf32> to vector<256x128xf32>
    %19 = arith.addf %16, %18 : vector<256x128xf32>
    %c0_16 = arith.constant 0 : index
    %c0_17 = arith.constant 0 : index
    %c0_18 = arith.constant 0 : index
    %20 = vector.load %arg7[%c0_16, %c0_17, %c0_18] : memref<2x1x128xf32, #tpu.memory_space<vmem>>, vector<1x1x128xf32>
    %21 = vector.shape_cast %20 : vector<1x1x128xf32> to vector<1x128xf32>
    %c0_19 = arith.constant 0 : index
    %c0_20 = arith.constant 0 : index
    %c0_21 = arith.constant 0 : index
    %22 = vector.load %arg9[%c0_19, %c0_20, %c0_21] : memref<2x1x128xf32, #tpu.memory_space<vmem>>, vector<1x1x128xf32>
    %23 = vector.shape_cast %22 : vector<1x1x128xf32> to vector<1x128xf32>
    %c0_22 = arith.constant 0 : index
    %c0_23 = arith.constant 0 : index
    %c0_24 = arith.constant 0 : index
    %24 = vector.load %arg10[%c0_22, %c0_23, %c0_24] : memref<2x1x128xf32, #tpu.memory_space<vmem>>, vector<1x1x128xf32>
    %25 = vector.shape_cast %24 : vector<1x1x128xf32> to vector<1x128xf32>
    %c0_25 = arith.constant 0 : index
    %c0_26 = arith.constant 0 : index
    %c0_27 = arith.constant 0 : index
    %26 = vector.load %arg11[%c0_25, %c0_26, %c0_27] : memref<2x1x128xf32, #tpu.memory_space<vmem>>, vector<1x1x128xf32>
    %27 = vector.shape_cast %26 : vector<1x1x128xf32> to vector<1x128xf32>
    %c0_28 = arith.constant 0 : index
    %c0_29 = arith.constant 0 : index
    %c0_30 = arith.constant 0 : index
    %28 = vector.load %arg13[%c0_28, %c0_29, %c0_30] : memref<2x1x512xf32, #tpu.memory_space<vmem>>, vector<1x1x512xf32>
    %29 = vector.shape_cast %28 : vector<1x1x512xf32> to vector<1x512xf32>
    %c0_31 = arith.constant 0 : index
    %c0_32 = arith.constant 0 : index
    %c0_33 = arith.constant 0 : index
    %30 = vector.load %arg15[%c0_31, %c0_32, %c0_33] : memref<2x1x128xf32, #tpu.memory_space<vmem>>, vector<1x1x128xf32>
    %31 = vector.shape_cast %30 : vector<1x1x128xf32> to vector<1x128xf32>
    %c0_34 = arith.constant 0 : index
    %c0_35 = arith.constant 0 : index
    %c0_36 = arith.constant 0 : index
    %32 = vector.load %arg16[%c0_34, %c0_35, %c0_36] : memref<2x1x128xf32, #tpu.memory_space<vmem>>, vector<1x1x128xf32>
    %33 = vector.shape_cast %32 : vector<1x1x128xf32> to vector<1x128xf32>
    %c0_37 = arith.constant 0 : index
    %c0_38 = arith.constant 0 : index
    %c0_39 = arith.constant 0 : index
    %34 = vector.load %arg17[%c0_37, %c0_38, %c0_39] : memref<2x1x128xf32, #tpu.memory_space<vmem>>, vector<1x1x128xf32>
    %35 = vector.shape_cast %34 : vector<1x1x128xf32> to vector<1x128xf32>
    %36 = arith.truncf %19 : vector<256x128xf32> to vector<256x128xbf16>
    %c0_40 = arith.constant 0 : index
    %c0_41 = arith.constant 0 : index
    %c0_42 = arith.constant 0 : index
    %37 = vector.load %arg6[%c0_40, %c0_41, %c0_42] : memref<2x128x128xbf16, #tpu.memory_space<vmem>>, vector<1x128x128xbf16>
    %38 = vector.shape_cast %37 : vector<1x128x128xbf16> to vector<128x128xbf16>
    %cst_43 = arith.constant dense<0.000000e+00> : vector<256x128xf32>
    %39 = tpu.matmul %36, %38, %cst_43 {dimension_numbers = #tpu.dot_dimension_numbers<[1], [0], [0], [1], [0, 0, 1, 1], [], []>} : vector<256x128xbf16>, vector<128x128xbf16>, vector<256x128xf32> -> vector<256x128xf32>
    %40 = vector.broadcast %21 : vector<1x128xf32> to vector<256x128xf32>
    %41 = arith.addf %39, %40 : vector<256x128xf32>
    %42 = arith.truncf %41 : vector<256x128xf32> to vector<256x128xbf16>
    %c0_44 = arith.constant 0 : index
    %c0_45 = arith.constant 0 : index
    %c0_46 = arith.constant 0 : index
    %43 = vector.load %arg8[%c0_44, %c0_45, %c0_46] : memref<2x128x128xbf16, #tpu.memory_space<vmem>>, vector<1x128x128xbf16>
    %44 = vector.shape_cast %43 : vector<1x128x128xbf16> to vector<128x128xbf16>
    %cst_47 = arith.constant dense<0.000000e+00> : vector<256x128xf32>
    %45 = tpu.matmul %42, %44, %cst_47 {dimension_numbers = #tpu.dot_dimension_numbers<[1], [0], [0], [1], [0, 0, 1, 1], [], []>} : vector<256x128xbf16>, vector<128x128xbf16>, vector<256x128xf32> -> vector<256x128xf32>
    %46 = vector.broadcast %23 : vector<1x128xf32> to vector<256x128xf32>
    %47 = arith.addf %45, %46 : vector<256x128xf32>
    %48 = arith.addf %19, %47 : vector<256x128xf32>
    %cst_48 = arith.constant dense<0.000000e+00> : vector<256xf32>
    %49 = vector.multi_reduction <add>, %48, %cst_48 [1] : vector<256x128xf32> to vector<256xf32>
    %50 = vector.shape_cast %49 : vector<256xf32> to vector<256x1xf32>
    %cst_49 = arith.constant 1.280000e+02 : f32
    %51 = vector.broadcast %cst_49 : f32 to vector<256x1xf32>
    %52 = arith.divf %50, %51 : vector<256x1xf32>
    %53 = vector.broadcast %52 : vector<256x1xf32> to vector<256x128xf32>
    %54 = arith.subf %48, %53 : vector<256x128xf32>
    %55 = arith.mulf %54, %54 : vector<256x128xf32>
    %cst_50 = arith.constant dense<0.000000e+00> : vector<256xf32>
    %56 = vector.multi_reduction <add>, %55, %cst_50 [1] : vector<256x128xf32> to vector<256xf32>
    %57 = vector.shape_cast %56 : vector<256xf32> to vector<256x1xf32>
    %cst_51 = arith.constant 1.280000e+02 : f32
    %58 = vector.broadcast %cst_51 : f32 to vector<256x1xf32>
    %59 = arith.divf %57, %58 : vector<256x1xf32>
    %cst_52 = arith.constant 9.99999974E-6 : f32
    %60 = vector.broadcast %cst_52 : f32 to vector<256x1xf32>
    %61 = arith.addf %59, %60 : vector<256x1xf32>
    %62 = math.rsqrt %61 : vector<256x1xf32>
    %63 = vector.broadcast %62 : vector<256x1xf32> to vector<256x128xf32>
    %64 = arith.mulf %54, %63 : vector<256x128xf32>
    %65 = vector.broadcast %25 : vector<1x128xf32> to vector<256x128xf32>
    %66 = arith.mulf %64, %65 : vector<256x128xf32>
    %67 = vector.broadcast %27 : vector<1x128xf32> to vector<256x128xf32>
    %68 = arith.addf %66, %67 : vector<256x128xf32>
    %69 = arith.truncf %68 : vector<256x128xf32> to vector<256x128xbf16>
    %c0_53 = arith.constant 0 : index
    %c0_54 = arith.constant 0 : index
    %c0_55 = arith.constant 0 : index
    %70 = vector.load %arg12[%c0_53, %c0_54, %c0_55] : memref<2x128x512xbf16, #tpu.memory_space<vmem>>, vector<1x128x512xbf16>
    %71 = vector.shape_cast %70 : vector<1x128x512xbf16> to vector<128x512xbf16>
    %cst_56 = arith.constant dense<0.000000e+00> : vector<256x512xf32>
    %72 = tpu.matmul %69, %71, %cst_56 {dimension_numbers = #tpu.dot_dimension_numbers<[1], [0], [0], [1], [0, 0, 1, 1], [], []>} : vector<256x128xbf16>, vector<128x512xbf16>, vector<256x512xf32> -> vector<256x512xf32>
    %73 = vector.broadcast %29 : vector<1x512xf32> to vector<256x512xf32>
    %74 = arith.addf %72, %73 : vector<256x512xf32>
    %cst_57 = arith.constant 5.000000e-01 : f32
    %75 = vector.broadcast %cst_57 : f32 to vector<256x512xf32>
    %76 = arith.mulf %75, %74 : vector<256x512xf32>
    %cst_58 = arith.constant 0.707106769 : f32
    %77 = vector.broadcast %cst_58 : f32 to vector<256x512xf32>
    %78 = arith.mulf %74, %77 : vector<256x512xf32>
    %79 = math.erf %78 : vector<256x512xf32>
    %cst_59 = arith.constant 1.000000e+00 : f32
    %80 = vector.broadcast %cst_59 : f32 to vector<256x512xf32>
    %81 = arith.addf %80, %79 : vector<256x512xf32>
    %82 = arith.mulf %76, %81 : vector<256x512xf32>
    %83 = arith.truncf %82 : vector<256x512xf32> to vector<256x512xbf16>
    %c0_60 = arith.constant 0 : index
    %c0_61 = arith.constant 0 : index
    %c0_62 = arith.constant 0 : index
    %84 = vector.load %arg14[%c0_60, %c0_61, %c0_62] : memref<2x512x128xbf16, #tpu.memory_space<vmem>>, vector<1x512x128xbf16>
    %85 = vector.shape_cast %84 : vector<1x512x128xbf16> to vector<512x128xbf16>
    %cst_63 = arith.constant dense<0.000000e+00> : vector<256x128xf32>
    %86 = tpu.matmul %83, %85, %cst_63 {dimension_numbers = #tpu.dot_dimension_numbers<[1], [0], [0], [1], [0, 0, 1, 1], [], []>} : vector<256x512xbf16>, vector<512x128xbf16>, vector<256x128xf32> -> vector<256x128xf32>
    %87 = vector.broadcast %31 : vector<1x128xf32> to vector<256x128xf32>
    %88 = arith.addf %86, %87 : vector<256x128xf32>
    %89 = arith.addf %68, %88 : vector<256x128xf32>
    %cst_64 = arith.constant dense<0.000000e+00> : vector<256xf32>
    %90 = vector.multi_reduction <add>, %89, %cst_64 [1] : vector<256x128xf32> to vector<256xf32>
    %91 = vector.shape_cast %90 : vector<256xf32> to vector<256x1xf32>
    %cst_65 = arith.constant 1.280000e+02 : f32
    %92 = vector.broadcast %cst_65 : f32 to vector<256x1xf32>
    %93 = arith.divf %91, %92 : vector<256x1xf32>
    %94 = vector.broadcast %93 : vector<256x1xf32> to vector<256x128xf32>
    %95 = arith.subf %89, %94 : vector<256x128xf32>
    %96 = arith.mulf %95, %95 : vector<256x128xf32>
    %cst_66 = arith.constant dense<0.000000e+00> : vector<256xf32>
    %97 = vector.multi_reduction <add>, %96, %cst_66 [1] : vector<256x128xf32> to vector<256xf32>
    %98 = vector.shape_cast %97 : vector<256xf32> to vector<256x1xf32>
    %cst_67 = arith.constant 1.280000e+02 : f32
    %99 = vector.broadcast %cst_67 : f32 to vector<256x1xf32>
    %100 = arith.divf %98, %99 : vector<256x1xf32>
    %cst_68 = arith.constant 9.99999974E-6 : f32
    %101 = vector.broadcast %cst_68 : f32 to vector<256x1xf32>
    %102 = arith.addf %100, %101 : vector<256x1xf32>
    %103 = math.rsqrt %102 : vector<256x1xf32>
    %104 = vector.broadcast %103 : vector<256x1xf32> to vector<256x128xf32>
    %105 = arith.mulf %95, %104 : vector<256x128xf32>
    %106 = vector.broadcast %33 : vector<1x128xf32> to vector<256x128xf32>
    %107 = arith.mulf %105, %106 : vector<256x128xf32>
    %108 = vector.broadcast %35 : vector<1x128xf32> to vector<256x128xf32>
    %109 = arith.addf %107, %108 : vector<256x128xf32>
    %c1_69 = arith.constant 1 : index
    %c0_70 = arith.constant 0 : index
    %c0_71 = arith.constant 0 : index
    %110 = vector.load %arg7[%c1_69, %c0_70, %c0_71] : memref<2x1x128xf32, #tpu.memory_space<vmem>>, vector<1x1x128xf32>
    %111 = vector.shape_cast %110 : vector<1x1x128xf32> to vector<1x128xf32>
    %c1_72 = arith.constant 1 : index
    %c0_73 = arith.constant 0 : index
    %c0_74 = arith.constant 0 : index
    %112 = vector.load %arg9[%c1_72, %c0_73, %c0_74] : memref<2x1x128xf32, #tpu.memory_space<vmem>>, vector<1x1x128xf32>
    %113 = vector.shape_cast %112 : vector<1x1x128xf32> to vector<1x128xf32>
    %c1_75 = arith.constant 1 : index
    %c0_76 = arith.constant 0 : index
    %c0_77 = arith.constant 0 : index
    %114 = vector.load %arg10[%c1_75, %c0_76, %c0_77] : memref<2x1x128xf32, #tpu.memory_space<vmem>>, vector<1x1x128xf32>
    %115 = vector.shape_cast %114 : vector<1x1x128xf32> to vector<1x128xf32>
    %c1_78 = arith.constant 1 : index
    %c0_79 = arith.constant 0 : index
    %c0_80 = arith.constant 0 : index
    %116 = vector.load %arg11[%c1_78, %c0_79, %c0_80] : memref<2x1x128xf32, #tpu.memory_space<vmem>>, vector<1x1x128xf32>
    %117 = vector.shape_cast %116 : vector<1x1x128xf32> to vector<1x128xf32>
    %c1_81 = arith.constant 1 : index
    %c0_82 = arith.constant 0 : index
    %c0_83 = arith.constant 0 : index
    %118 = vector.load %arg13[%c1_81, %c0_82, %c0_83] : memref<2x1x512xf32, #tpu.memory_space<vmem>>, vector<1x1x512xf32>
    %119 = vector.shape_cast %118 : vector<1x1x512xf32> to vector<1x512xf32>
    %c1_84 = arith.constant 1 : index
    %c0_85 = arith.constant 0 : index
    %c0_86 = arith.constant 0 : index
    %120 = vector.load %arg15[%c1_84, %c0_85, %c0_86] : memref<2x1x128xf32, #tpu.memory_space<vmem>>, vector<1x1x128xf32>
    %121 = vector.shape_cast %120 : vector<1x1x128xf32> to vector<1x128xf32>
    %c1_87 = arith.constant 1 : index
    %c0_88 = arith.constant 0 : index
    %c0_89 = arith.constant 0 : index
    %122 = vector.load %arg16[%c1_87, %c0_88, %c0_89] : memref<2x1x128xf32, #tpu.memory_space<vmem>>, vector<1x1x128xf32>
    %123 = vector.shape_cast %122 : vector<1x1x128xf32> to vector<1x128xf32>
    %c1_90 = arith.constant 1 : index
    %c0_91 = arith.constant 0 : index
    %c0_92 = arith.constant 0 : index
    %124 = vector.load %arg17[%c1_90, %c0_91, %c0_92] : memref<2x1x128xf32, #tpu.memory_space<vmem>>, vector<1x1x128xf32>
    %125 = vector.shape_cast %124 : vector<1x1x128xf32> to vector<1x128xf32>
    %126 = arith.truncf %109 : vector<256x128xf32> to vector<256x128xbf16>
    %c1_93 = arith.constant 1 : index
    %c0_94 = arith.constant 0 : index
    %c0_95 = arith.constant 0 : index
    %127 = vector.load %arg6[%c1_93, %c0_94, %c0_95] : memref<2x128x128xbf16, #tpu.memory_space<vmem>>, vector<1x128x128xbf16>
    %128 = vector.shape_cast %127 : vector<1x128x128xbf16> to vector<128x128xbf16>
    %cst_96 = arith.constant dense<0.000000e+00> : vector<256x128xf32>
    %129 = tpu.matmul %126, %128, %cst_96 {dimension_numbers = #tpu.dot_dimension_numbers<[1], [0], [0], [1], [0, 0, 1, 1], [], []>} : vector<256x128xbf16>, vector<128x128xbf16>, vector<256x128xf32> -> vector<256x128xf32>
    %130 = vector.broadcast %111 : vector<1x128xf32> to vector<256x128xf32>
    %131 = arith.addf %129, %130 : vector<256x128xf32>
    %132 = arith.truncf %131 : vector<256x128xf32> to vector<256x128xbf16>
    %c1_97 = arith.constant 1 : index
    %c0_98 = arith.constant 0 : index
    %c0_99 = arith.constant 0 : index
    %133 = vector.load %arg8[%c1_97, %c0_98, %c0_99] : memref<2x128x128xbf16, #tpu.memory_space<vmem>>, vector<1x128x128xbf16>
    %134 = vector.shape_cast %133 : vector<1x128x128xbf16> to vector<128x128xbf16>
    %cst_100 = arith.constant dense<0.000000e+00> : vector<256x128xf32>
    %135 = tpu.matmul %132, %134, %cst_100 {dimension_numbers = #tpu.dot_dimension_numbers<[1], [0], [0], [1], [0, 0, 1, 1], [], []>} : vector<256x128xbf16>, vector<128x128xbf16>, vector<256x128xf32> -> vector<256x128xf32>
    %136 = vector.broadcast %113 : vector<1x128xf32> to vector<256x128xf32>
    %137 = arith.addf %135, %136 : vector<256x128xf32>
    %138 = arith.addf %109, %137 : vector<256x128xf32>
    %cst_101 = arith.constant dense<0.000000e+00> : vector<256xf32>
    %139 = vector.multi_reduction <add>, %138, %cst_101 [1] : vector<256x128xf32> to vector<256xf32>
    %140 = vector.shape_cast %139 : vector<256xf32> to vector<256x1xf32>
    %cst_102 = arith.constant 1.280000e+02 : f32
    %141 = vector.broadcast %cst_102 : f32 to vector<256x1xf32>
    %142 = arith.divf %140, %141 : vector<256x1xf32>
    %143 = vector.broadcast %142 : vector<256x1xf32> to vector<256x128xf32>
    %144 = arith.subf %138, %143 : vector<256x128xf32>
    %145 = arith.mulf %144, %144 : vector<256x128xf32>
    %cst_103 = arith.constant dense<0.000000e+00> : vector<256xf32>
    %146 = vector.multi_reduction <add>, %145, %cst_103 [1] : vector<256x128xf32> to vector<256xf32>
    %147 = vector.shape_cast %146 : vector<256xf32> to vector<256x1xf32>
    %cst_104 = arith.constant 1.280000e+02 : f32
    %148 = vector.broadcast %cst_104 : f32 to vector<256x1xf32>
    %149 = arith.divf %147, %148 : vector<256x1xf32>
    %cst_105 = arith.constant 9.99999974E-6 : f32
    %150 = vector.broadcast %cst_105 : f32 to vector<256x1xf32>
    %151 = arith.addf %149, %150 : vector<256x1xf32>
    %152 = math.rsqrt %151 : vector<256x1xf32>
    %153 = vector.broadcast %152 : vector<256x1xf32> to vector<256x128xf32>
    %154 = arith.mulf %144, %153 : vector<256x128xf32>
    %155 = vector.broadcast %115 : vector<1x128xf32> to vector<256x128xf32>
    %156 = arith.mulf %154, %155 : vector<256x128xf32>
    %157 = vector.broadcast %117 : vector<1x128xf32> to vector<256x128xf32>
    %158 = arith.addf %156, %157 : vector<256x128xf32>
    %159 = arith.truncf %158 : vector<256x128xf32> to vector<256x128xbf16>
    %c1_106 = arith.constant 1 : index
    %c0_107 = arith.constant 0 : index
    %c0_108 = arith.constant 0 : index
    %160 = vector.load %arg12[%c1_106, %c0_107, %c0_108] : memref<2x128x512xbf16, #tpu.memory_space<vmem>>, vector<1x128x512xbf16>
    %161 = vector.shape_cast %160 : vector<1x128x512xbf16> to vector<128x512xbf16>
    %cst_109 = arith.constant dense<0.000000e+00> : vector<256x512xf32>
    %162 = tpu.matmul %159, %161, %cst_109 {dimension_numbers = #tpu.dot_dimension_numbers<[1], [0], [0], [1], [0, 0, 1, 1], [], []>} : vector<256x128xbf16>, vector<128x512xbf16>, vector<256x512xf32> -> vector<256x512xf32>
    %163 = vector.broadcast %119 : vector<1x512xf32> to vector<256x512xf32>
    %164 = arith.addf %162, %163 : vector<256x512xf32>
    %cst_110 = arith.constant 5.000000e-01 : f32
    %165 = vector.broadcast %cst_110 : f32 to vector<256x512xf32>
    %166 = arith.mulf %165, %164 : vector<256x512xf32>
    %cst_111 = arith.constant 0.707106769 : f32
    %167 = vector.broadcast %cst_111 : f32 to vector<256x512xf32>
    %168 = arith.mulf %164, %167 : vector<256x512xf32>
    %169 = math.erf %168 : vector<256x512xf32>
    %cst_112 = arith.constant 1.000000e+00 : f32
    %170 = vector.broadcast %cst_112 : f32 to vector<256x512xf32>
    %171 = arith.addf %170, %169 : vector<256x512xf32>
    %172 = arith.mulf %166, %171 : vector<256x512xf32>
    %173 = arith.truncf %172 : vector<256x512xf32> to vector<256x512xbf16>
    %c1_113 = arith.constant 1 : index
    %c0_114 = arith.constant 0 : index
    %c0_115 = arith.constant 0 : index
    %174 = vector.load %arg14[%c1_113, %c0_114, %c0_115] : memref<2x512x128xbf16, #tpu.memory_space<vmem>>, vector<1x512x128xbf16>
    %175 = vector.shape_cast %174 : vector<1x512x128xbf16> to vector<512x128xbf16>
    %cst_116 = arith.constant dense<0.000000e+00> : vector<256x128xf32>
    %176 = tpu.matmul %173, %175, %cst_116 {dimension_numbers = #tpu.dot_dimension_numbers<[1], [0], [0], [1], [0, 0, 1, 1], [], []>} : vector<256x512xbf16>, vector<512x128xbf16>, vector<256x128xf32> -> vector<256x128xf32>
    %177 = vector.broadcast %121 : vector<1x128xf32> to vector<256x128xf32>
    %178 = arith.addf %176, %177 : vector<256x128xf32>
    %179 = arith.addf %158, %178 : vector<256x128xf32>
    %cst_117 = arith.constant dense<0.000000e+00> : vector<256xf32>
    %180 = vector.multi_reduction <add>, %179, %cst_117 [1] : vector<256x128xf32> to vector<256xf32>
    %181 = vector.shape_cast %180 : vector<256xf32> to vector<256x1xf32>
    %cst_118 = arith.constant 1.280000e+02 : f32
    %182 = vector.broadcast %cst_118 : f32 to vector<256x1xf32>
    %183 = arith.divf %181, %182 : vector<256x1xf32>
    %184 = vector.broadcast %183 : vector<256x1xf32> to vector<256x128xf32>
    %185 = arith.subf %179, %184 : vector<256x128xf32>
    %186 = arith.mulf %185, %185 : vector<256x128xf32>
    %cst_119 = arith.constant dense<0.000000e+00> : vector<256xf32>
    %187 = vector.multi_reduction <add>, %186, %cst_119 [1] : vector<256x128xf32> to vector<256xf32>
    %188 = vector.shape_cast %187 : vector<256xf32> to vector<256x1xf32>
    %cst_120 = arith.constant 1.280000e+02 : f32
    %189 = vector.broadcast %cst_120 : f32 to vector<256x1xf32>
    %190 = arith.divf %188, %189 : vector<256x1xf32>
    %cst_121 = arith.constant 9.99999974E-6 : f32
    %191 = vector.broadcast %cst_121 : f32 to vector<256x1xf32>
    %192 = arith.addf %190, %191 : vector<256x1xf32>
    %193 = math.rsqrt %192 : vector<256x1xf32>
    %194 = vector.broadcast %193 : vector<256x1xf32> to vector<256x128xf32>
    %195 = arith.mulf %185, %194 : vector<256x128xf32>
    %196 = vector.broadcast %123 : vector<1x128xf32> to vector<256x128xf32>
    %197 = arith.mulf %195, %196 : vector<256x128xf32>
    %198 = vector.broadcast %125 : vector<1x128xf32> to vector<256x128xf32>
    %199 = arith.addf %197, %198 : vector<256x128xf32>
    %c0_122 = arith.constant 0 : index
    %c0_123 = arith.constant 0 : index
    %200 = vector.load %arg18[%c0_122, %c0_123] : memref<1x128xf32, #tpu.memory_space<vmem>>, vector<1x128xf32>
    %c0_124 = arith.constant 0 : index
    %c0_125 = arith.constant 0 : index
    %201 = vector.load %arg19[%c0_124, %c0_125] : memref<1x128xf32, #tpu.memory_space<vmem>>, vector<1x128xf32>
    %cst_126 = arith.constant dense<0.000000e+00> : vector<256xf32>
    %202 = vector.multi_reduction <add>, %199, %cst_126 [1] : vector<256x128xf32> to vector<256xf32>
    %203 = vector.shape_cast %202 : vector<256xf32> to vector<256x1xf32>
    %cst_127 = arith.constant 1.280000e+02 : f32
    %204 = vector.broadcast %cst_127 : f32 to vector<256x1xf32>
    %205 = arith.divf %203, %204 : vector<256x1xf32>
    %206 = vector.broadcast %205 : vector<256x1xf32> to vector<256x128xf32>
    %207 = arith.subf %199, %206 : vector<256x128xf32>
    %208 = arith.mulf %207, %207 : vector<256x128xf32>
    %cst_128 = arith.constant dense<0.000000e+00> : vector<256xf32>
    %209 = vector.multi_reduction <add>, %208, %cst_128 [1] : vector<256x128xf32> to vector<256xf32>
    %210 = vector.shape_cast %209 : vector<256xf32> to vector<256x1xf32>
    %cst_129 = arith.constant 1.280000e+02 : f32
    %211 = vector.broadcast %cst_129 : f32 to vector<256x1xf32>
    %212 = arith.divf %210, %211 : vector<256x1xf32>
    %cst_130 = arith.constant 9.99999974E-6 : f32
    %213 = vector.broadcast %cst_130 : f32 to vector<256x1xf32>
    %214 = arith.addf %212, %213 : vector<256x1xf32>
    %215 = math.rsqrt %214 : vector<256x1xf32>
    %216 = vector.broadcast %215 : vector<256x1xf32> to vector<256x128xf32>
    %217 = arith.mulf %207, %216 : vector<256x128xf32>
    %218 = vector.broadcast %200 : vector<1x128xf32> to vector<256x128xf32>
    %219 = arith.mulf %217, %218 : vector<256x128xf32>
    %220 = vector.broadcast %201 : vector<1x128xf32> to vector<256x128xf32>
    %221 = arith.addf %219, %220 : vector<256x128xf32>
    %c0_131 = arith.constant 0 : index
    %c0_132 = arith.constant 0 : index
    %222 = vector.load %arg20[%c0_131, %c0_132] : memref<256x128xf32, #tpu.memory_space<vmem>>, vector<256x128xf32>
    tpu.vector_store %arg20[%c0_131, %c0_132], %221 {strides = array<i32>} : memref<256x128xf32, #tpu.memory_space<vmem>>, vector<256x128xf32>,
    return
  }
  func.func @transform_0(%arg0: i32) -> (i32, i32) {
    %c0_i32 = arith.constant 0 : i32
    %c0_i32_0 = arith.constant 0 : i32
    return %arg0, %c0_i32 : i32, i32
  }
  func.func @transform_1(%arg0: i32) -> (i32, i32) {
    %c0_i32 = arith.constant 0 : i32
    %c0_i32_0 = arith.constant 0 : i32
    return %arg0, %c0_i32 : i32, i32
  }
  func.func @transform_2(%arg0: i32) -> (i32, i32) {
    %c0_i32 = arith.constant 0 : i32
    %c0_i32_0 = arith.constant 0 : i32
    return %arg0, %c0_i32 : i32, i32
  }
  func.func @transform_3(%arg0: i32) -> (i32, i32, i32) {
    %c0_i32 = arith.constant 0 : i32
    %c0_i32_0 = arith.constant 0 : i32
    %c0_i32_1 = arith.constant 0 : i32
    %c0_i32_2 = arith.constant 0 : i32
    return %c0_i32, %c0_i32_0, %c0_i32_1 : i32, i32, i32
  }
  func.func @transform_4(%arg0: i32) -> (i32, i32) {
    %c0_i32 = arith.constant 0 : i32
    %c0_i32_0 = arith.constant 0 : i32
    %c0_i32_1 = arith.constant 0 : i32
    return %c0_i32, %c0_i32_0 : i32, i32
  }
  func.func @transform_5(%arg0: i32) -> (i32, i32, i32) {
    %c0_i32 = arith.constant 0 : i32
    %c0_i32_0 = arith.constant 0 : i32
    %c0_i32_1 = arith.constant 0 : i32
    %c0_i32_2 = arith.constant 0 : i32
    return %c0_i32, %c0_i32_0, %c0_i32_1 : i32, i32, i32
  }
  func.func @transform_6(%arg0: i32) -> (i32, i32, i32) {
    %c0_i32 = arith.constant 0 : i32
    %c0_i32_0 = arith.constant 0 : i32
    %c0_i32_1 = arith.constant 0 : i32
    %c0_i32_2 = arith.constant 0 : i32
    return %c0_i32, %c0_i32_0, %c0_i32_1 : i32, i32, i32
  }
  func.func @transform_7(%arg0: i32) -> (i32, i32, i32) {
    %c0_i32 = arith.constant 0 : i32
    %c0_i32_0 = arith.constant 0 : i32
    %c0_i32_1 = arith.constant 0 : i32
    %c0_i32_2 = arith.constant 0 : i32
    return %c0_i32, %c0_i32_0, %c0_i32_1 : i32, i32, i32
  }
  func.func @transform_8(%arg0: i32) -> (i32, i32, i32) {
    %c0_i32 = arith.constant 0 : i32
    %c0_i32_0 = arith.constant 0 : i32
    %c0_i32_1 = arith.constant 0 : i32
    %c0_i32_2 = arith.constant 0 : i32
    return %c0_i32, %c0_i32_0, %c0_i32_1 : i32, i32, i32
  }
  func.func @transform_9(%arg0: i32) -> (i32, i32, i32) {
    %c0_i32 = arith.constant 0 : i32
    %c0_i32_0 = arith.constant 0 : i32
    %c0_i32_1 = arith.constant 0 : i32
    %c0_i32_2 = arith.constant 0 : i32
    return %c0_i32, %c0_i32_0, %c0_i32_1 : i32, i32, i32
  }
  func.func @transform_10(%arg0: i32) -> (i32, i32, i32) {
    %c0_i32 = arith.constant 0 : i32
    %c0_i32_0 = arith.constant 0 : i32
    %c0_i32_1 = arith.constant 0 : i32
    %c0_i32_2 = arith.constant 0 : i32
    return %c0_i32, %c0_i32_0, %c0_i32_1 : i32, i32, i32
  }
  func.func @transform_11(%arg0: i32) -> (i32, i32, i32) {
    %c0_i32 = arith.constant 0 : i32
    %c0_i32_0 = arith.constant 0 : i32
    %c0_i32_1 = arith.constant 0 : i32
    %c0_i32_2 = arith.constant 0 : i32
    return %c0_i32, %c0_i32_0, %c0_i32_1 : i32, i32, i32
  }
  func.func @transform_12(%arg0: i32) -> (i32, i32, i32) {
    %c0_i32 = arith.constant 0 : i32
    %c0_i32_0 = arith.constant 0 : i32
    %c0_i32_1 = arith.constant 0 : i32
    %c0_i32_2 = arith.constant 0 : i32
    return %c0_i32, %c0_i32_0, %c0_i32_1 : i32, i32, i32
  }
  func.func @transform_13(%arg0: i32) -> (i32, i32, i32) {
    %c0_i32 = arith.constant 0 : i32
    %c0_i32_0 = arith.constant 0 : i32
    %c0_i32_1 = arith.constant 0 : i32
    %c0_i32_2 = arith.constant 0 : i32
    return %c0_i32, %c0_i32_0, %c0_i32_1 : i32, i32, i32
  }
  func.func @transform_14(%arg0: i32) -> (i32, i32, i32) {
    %c0_i32 = arith.constant 0 : i32
    %c0_i32_0 = arith.constant 0 : i32
    %c0_i32_1 = arith.constant 0 : i32
    %c0_i32_2 = arith.constant 0 : i32
    return %c0_i32, %c0_i32_0, %c0_i32_1 : i32, i32, i32
  }
  func.func @transform_15(%arg0: i32) -> (i32, i32, i32) {
    %c0_i32 = arith.constant 0 : i32
    %c0_i32_0 = arith.constant 0 : i32
    %c0_i32_1 = arith.constant 0 : i32
    %c0_i32_2 = arith.constant 0 : i32
    return %c0_i32, %c0_i32_0, %c0_i32_1 : i32, i32, i32
  }
  func.func @transform_16(%arg0: i32) -> (i32, i32, i32) {
    %c0_i32 = arith.constant 0 : i32
    %c0_i32_0 = arith.constant 0 : i32
    %c0_i32_1 = arith.constant 0 : i32
    %c0_i32_2 = arith.constant 0 : i32
    return %c0_i32, %c0_i32_0, %c0_i32_1 : i32, i32, i32
  }
  func.func @transform_17(%arg0: i32) -> (i32, i32) {
    %c0_i32 = arith.constant 0 : i32
    %c0_i32_0 = arith.constant 0 : i32
    %c0_i32_1 = arith.constant 0 : i32
    return %c0_i32, %c0_i32_0 : i32, i32
  }
  func.func @transform_18(%arg0: i32) -> (i32, i32) {
    %c0_i32 = arith.constant 0 : i32
    %c0_i32_0 = arith.constant 0 : i32
    %c0_i32_1 = arith.constant 0 : i32
    return %c0_i32, %c0_i32_0 : i32, i32
  }
  func.func @transform_19(%arg0: i32) -> (i32, i32) {
    %c0_i32 = arith.constant 0 : i32
    %c0_i32_0 = arith.constant 0 : i32
    return %arg0, %c0_i32 : i32, i32
  }
}

</mosaic_0001>

<llo_original>
// kernel: tpu_custom_call.1
$region0: #{tpu_custom_call.1}
  #allocation0 [shape = 'u32[]', space=smem, size = 0x4, offset = 0x4, fixed_abs, tag = 'smem constant byte address 0x4 - core index']
  #allocation1 [shape = 'u32[144,128]{1,0:T(1,128)}', space=vmem, size = 0x12000, scoped, tag = 'internal scratch']
  %s0 = inlined_call_operand.hbm [shape: f32[512,128], index: 0, kind: input, shape index: {}]
  %s1 = inlined_call_operand.hbm [shape: f32[512,128], index: 1, kind: input, shape index: {}]
  %s2 = inlined_call_operand.hbm [shape: f32[512,128], index: 2, kind: input, shape index: {}]
  %s3 = inlined_call_operand.hbm [shape: bf16[3,128,128], index: 3, kind: input, shape index: {}]
  %s4 = inlined_call_operand.hbm [shape: f32[1,128], index: 4, kind: input, shape index: {}]
  %s5 = inlined_call_operand.hbm [shape: bf16[2,128,128], index: 5, kind: input, shape index: {}]
  %s6 = inlined_call_operand.vmem [shape: f32[2,1,128], index: 6, kind: input, shape index: {}]
  %s7 = inlined_call_operand.hbm [shape: bf16[2,128,128], index: 7, kind: input, shape index: {}]
  %s8 = inlined_call_operand.vmem [shape: f32[2,1,128], index: 8, kind: input, shape index: {}]
  %s9 = inlined_call_operand.vmem [shape: f32[2,1,128], index: 9, kind: input, shape index: {}]
  %s10 = inlined_call_operand.vmem [shape: f32[2,1,128], index: 10, kind: input, shape index: {}]
  %s11 = inlined_call_operand.hbm [shape: bf16[2,128,512], index: 11, kind: input, shape index: {}]
  %s12 = inlined_call_operand.vmem [shape: f32[2,1,512], index: 12, kind: input, shape index: {}]
  %s13 = inlined_call_operand.hbm [shape: bf16[2,512,128], index: 13, kind: input, shape index: {}]
  %s14 = inlined_call_operand.vmem [shape: f32[2,1,128], index: 14, kind: input, shape index: {}]
  %s15 = inlined_call_operand.vmem [shape: f32[2,1,128], index: 15, kind: input, shape index: {}]
  %s16 = inlined_call_operand.vmem [shape: f32[2,1,128], index: 16, kind: input, shape index: {}]
  %s17 = inlined_call_operand.vmem [shape: f32[1,128], index: 17, kind: input, shape index: {}]
  %s18 = inlined_call_operand.vmem [shape: f32[1,128], index: 18, kind: input, shape index: {}]
  %s19 = inlined_call_operand.hbm [shape: f32[512,128], index: 19, kind: output, shape index: {}]
  %s20 = sld [smem:[#allocation0]]
  $region145: #{tpu_custom_call.1} parent=0
    _
  %s22 = ssub.s32 1, %s20
  %s23 = scalar_select 0, %s22, %s20
  $region1: #{tpu_custom_call.1} parent=0
    #allocation2 [shape = 'u8[262144]{0}', space=vmem, size = 0x40000, scoped, tag = 'input window, operand 0']
    #allocation3 [shape = 's32[2]{0}', space=sflag, size = 0x8, scoped, tag = 'scoped memory for tpu_custom_call.1']
    #allocation4 [shape = 's32[2]{0}', space=sflag, size = 0x8, scoped, tag = 'scoped memory for tpu_custom_call.1']
    #allocation5 [shape = 'u8[262144]{0}', space=vmem, size = 0x40000, scoped, tag = 'input window, operand 1']
    #allocation6 [shape = 's32[2]{0}', space=sflag, size = 0x8, scoped, tag = 'scoped memory for tpu_custom_call.1']
    #allocation7 [shape = 'u8[262144]{0}', space=vmem, size = 0x40000, scoped, tag = 'input window, operand 2']
    #allocation8 [shape = 'u8[98304]{0}', space=vmem, size = 0x18000, scoped, tag = 'input window, operand 3, single buffered']
    #allocation9 [shape = 's32[1]{0}', space=sflag, size = 0x4, scoped, tag = 'scoped memory for tpu_custom_call.1']
    #allocation10 [shape = 'u8[512]{0}', space=vmem, size = 0x400, scoped, tag = 'input window, operand 4, single buffered']
    #allocation11 [shape = 'u8[65536]{0}', space=vmem, size = 0x10000, scoped, tag = 'input window, operand 5, single buffered']
    #allocation12 [shape = 's32[1]{0}', space=sflag, size = 0x4, scoped, tag = 'scoped memory for tpu_custom_call.1']
    #allocation13 [shape = 'u8[65536]{0}', space=vmem, size = 0x10000, scoped, tag = 'input window, operand 7, single buffered']
    #allocation14 [shape = 'u8[262144]{0}', space=vmem, size = 0x40000, scoped, tag = 'input window, operand 11, single buffered']
    #allocation15 [shape = 's32[1]{0}', space=sflag, size = 0x4, scoped, tag = 'scoped memory for tpu_custom_call.1']
    #allocation16 [shape = 'u8[262144]{0}', space=vmem, size = 0x40000, scoped, tag = 'input window, operand 13, single buffered']
    #allocation17 [shape = 'u8[262144]{0}', space=vmem, size = 0x40000, scoped, tag = 'output window, operand 0']
    %24 = vsyncpa [#allocation3], 0
    %s25 = scalar_lea.sflag [#allocation3], 1
    %26 = vsyncpa %s25, 0
    %27 = vsyncpa [#allocation6], 0
    %s28 = scalar_lea.sflag [#allocation6], 1
    %29 = vsyncpa %s28, 0
    %30 = vsyncpa [#allocation9], 0
    %31 = vsyncpa [#allocation12], 0
    %32 = vsyncpa [#allocation15], 0
    %33 = vsyncpa [#allocation4], 0
    %s34 = scalar_lea.sflag [#allocation4], 1
    %35 = vsyncpa %s34, 0
    loop: start=0, step=1, limit=4
    $region2: #{tpu_custom_call.1} parent=1 // loop_pre_header
      _
    $region3: #{tpu_custom_call.1} parent=1 // loop_header
      %s37 = sphi 0, %s41
      %p38 = scmp.ge.s32.totalorder %s37, 4
      %s47 = sphi 0, %s49
      %s50 = sphi 0, %s47
      %s51 = sphi 0, %s50
      %s67 = sphi 0, %s51
      %s73 = sphi 0, %s75
      %s76 = sphi 0, %s73
      %s77 = sphi 0, %s76
      %s93 = sphi 0, %s77
      %s99 = sphi 0, %s101
      %s102 = sphi 0, %s99
      %s103 = sphi 0, %s102
      %s119 = sphi 0, %s103
      %s123 = sphi 0, %s123
      %s125 = sphi 0, %s123
      %s126 = sphi 0, %s125
      %s140 = sphi 0, %s126
      %s144 = sphi 0, %s144
      %s146 = sphi 0, %s144
      %s147 = sphi 0, %s146
      %s161 = sphi 0, %s147
      %s165 = sphi 0, %s165
      %s167 = sphi 0, %s165
      %s168 = sphi 0, %s167
      %s182 = sphi 0, %s168
      %s186 = sphi 0, %s186
      %s188 = sphi 0, %s186
      %s189 = sphi 0, %s188
      %s203 = sphi 0, %s189
      %s207 = sphi 0, %s207
      %s209 = sphi 0, %s207
      %s210 = sphi 0, %s209
      %s224 = sphi 0, %s210
      %s228 = sphi 0, %s228
      %s230 = sphi 0, %s228
      %s231 = sphi 0, %s230
      %s245 = sphi 0, %s231
      %s249 = sphi 0, %s249
      %s251 = sphi 0, %s249
      %s252 = sphi 0, %s251
      %s266 = sphi 0, %s252
      %s270 = sphi 0, %s270
      %s272 = sphi 0, %s270
      %s273 = sphi 0, %s272
      %s287 = sphi 0, %s273
      %s291 = sphi 0, %s291
      %s293 = sphi 0, %s291
      %s294 = sphi 0, %s293
      %s308 = sphi 0, %s294
      %s312 = sphi 0, %s312
      %s314 = sphi 0, %s312
      %s315 = sphi 0, %s314
      %s329 = sphi 0, %s315
      %s333 = sphi 0, %s333
      %s335 = sphi 0, %s333
      %s336 = sphi 0, %s335
      %s350 = sphi 0, %s336
      %s354 = sphi 0, %s354
      %s356 = sphi 0, %s354
      %s357 = sphi 0, %s356
      %s371 = sphi 0, %s357
      %s375 = sphi 0, %s375
      %s377 = sphi 0, %s375
      %s378 = sphi 0, %s377
      %s392 = sphi 0, %s378
      %s396 = sphi 0, %s396
      %s398 = sphi 0, %s396
      %s399 = sphi 0, %s398
      %s413 = sphi 0, %s399
      %s417 = sphi 0, %s417
      %s419 = sphi 0, %s417
      %s420 = sphi 0, %s419
      %s434 = sphi 0, %s420
      %s438 = sphi 0, %s438
      %s440 = sphi 0, %s438
      %s441 = sphi 0, %s440
      %s455 = sphi 0, %s441
      %s461 = sphi 0, %s463
      %s464 = sphi 0, %s461
      %s465 = sphi 0, %s464
      %s481 = sphi 0, %s465
    $region4: #{tpu_custom_call.1} parent=1 // loop_header_branch
      %40 = sbr.rel (%p38) target = $region8
    $region5: #{tpu_custom_call.1} parent=1 // loop_body
      %s42 = ssub.s32 %s37, 1
      %s43 = ssub.s32 %s37, 2
      %s44 = sadd.s32 %s37, 1
      %s45 = ssub.s32 %s37, %s44
      %p46 = scmp.eq.s32.totalorder %s45, 0
      %s48 = sadd.s32 %s47, 1
      %s49 = scalar_select %p46, %s47, %s48
      %p52 = pneg %p46
      %p53 = scmp.eq.s32.totalorder %s37, 1
      %p54 = por %p52, %p53
      %p55 = scmp.ne.s32.totalorder %s47, %s50
      %p56 = scmp.eq.s32.totalorder %s37, 0
      %p57 = por %p55, %p56
      %p58 = scmp.ne.s32.totalorder %s47, %s50
      %p59 = scmp.eq.s32.totalorder %s42, 1
      %p60 = por %p58, %p59
      %p61 = scmp.ne.s32.totalorder %s50, %s51
      %p62 = scmp.eq.s32.totalorder %s42, 0
      %p63 = por %p61, %p62
      %p64 = scmp.ne.s32.totalorder %s50, %s51
      %p65 = scmp.eq.s32.totalorder %s43, 1
      %p66 = por %p64, %p65
      %p68 = scmp.ne.s32.totalorder %s51, %s67
      %p69 = scmp.eq.s32.totalorder %s43, 0
      %p70 = por %p68, %p69
      %s71 = ssub.s32 %s37, %s44
      %p72 = scmp.eq.s32.totalorder %s71, 0
      %s74 = sadd.s32 %s73, 1
      %s75 = scalar_select %p72, %s73, %s74
      %p78 = pneg %p72
      %p79 = scmp.eq.s32.totalorder %s37, 1
      %p80 = por %p78, %p79
      %p81 = scmp.ne.s32.totalorder %s73, %s76
      %p82 = scmp.eq.s32.totalorder %s37, 0
      %p83 = por %p81, %p82
      %p84 = scmp.ne.s32.totalorder %s73, %s76
      %p85 = scmp.eq.s32.totalorder %s42, 1
      %p86 = por %p84, %p85
      %p87 = scmp.ne.s32.totalorder %s76, %s77
      %p88 = scmp.eq.s32.totalorder %s42, 0
      %p89 = por %p87, %p88
      %p90 = scmp.ne.s32.totalorder %s76, %s77
      %p91 = scmp.eq.s32.totalorder %s43, 1
      %p92 = por %p90, %p91
      %p94 = scmp.ne.s32.totalorder %s77, %s93
      %p95 = scmp.eq.s32.totalorder %s43, 0
      %p96 = por %p94, %p95
      %s97 = ssub.s32 %s37, %s44
      %p98 = scmp.eq.s32.totalorder %s97, 0
      %s100 = sadd.s32 %s99, 1
      %s101 = scalar_select %p98, %s99, %s100
      %p104 = pneg %p98
      %p105 = scmp.eq.s32.totalorder %s37, 1
      %p106 = por %p104, %p105
      %p107 = scmp.ne.s32.totalorder %s99, %s102
      %p108 = scmp.eq.s32.totalorder %s37, 0
      %p109 = por %p107, %p108
      %p110 = scmp.ne.s32.totalorder %s99, %s102
      %p111 = scmp.eq.s32.totalorder %s42, 1
      %p112 = por %p110, %p111
      %p113 = scmp.ne.s32.totalorder %s102, %s103
      %p114 = scmp.eq.s32.totalorder %s42, 0
      %p115 = por %p113, %p114
      %p116 = scmp.ne.s32.totalorder %s102, %s103
      %p117 = scmp.eq.s32.totalorder %s43, 1
      %p118 = por %p116, %p117
      %p120 = scmp.ne.s32.totalorder %s103, %s119
      %p121 = scmp.eq.s32.totalorder %s43, 0
      %p122 = por %p120, %p121
      %s124 = sadd.s32 %s123, 1
      %p127 = scmp.eq.s32.totalorder %s37, 1
      %p128 = scmp.ne.s32.totalorder %s123, %s125
      %p129 = scmp.eq.s32.totalorder %s37, 0
      %p130 = por %p128, %p129
      %p131 = scmp.ne.s32.totalorder %s123, %s125
      %p132 = scmp.eq.s32.totalorder %s42, 1
      %p133 = por %p131, %p132
      %p134 = scmp.ne.s32.totalorder %s125, %s126
      %p135 = scmp.eq.s32.totalorder %s42, 0
      %p136 = por %p134, %p135
      %p137 = scmp.ne.s32.totalorder %s125, %s126
      %p138 = scmp.eq.s32.totalorder %s43, 1
      %p139 = por %p137, %p138
      %p141 = scmp.ne.s32.totalorder %s126, %s140
      %p142 = scmp.eq.s32.totalorder %s43, 0
      %p143 = por %p141, %p142
      %s145 = sadd.s32 %s144, 1
      %p148 = scmp.eq.s32.totalorder %s37, 1
      %p149 = scmp.ne.s32.totalorder %s144, %s146
      %p150 = scmp.eq.s32.totalorder %s37, 0
      %p151 = por %p149, %p150
      %p152 = scmp.ne.s32.totalorder %s144, %s146
      %p153 = scmp.eq.s32.totalorder %s42, 1
      %p154 = por %p152, %p153
      %p155 = scmp.ne.s32.totalorder %s146, %s147
      %p156 = scmp.eq.s32.totalorder %s42, 0
      %p157 = por %p155, %p156
      %p158 = scmp.ne.s32.totalorder %s146, %s147
      %p159 = scmp.eq.s32.totalorder %s43, 1
      %p160 = por %p158, %p159
      %p162 = scmp.ne.s32.totalorder %s147, %s161
      %p163 = scmp.eq.s32.totalorder %s43, 0
      %p164 = por %p162, %p163
      %s166 = sadd.s32 %s165, 1
      %p169 = scmp.eq.s32.totalorder %s37, 1
      %p170 = scmp.ne.s32.totalorder %s165, %s167
      %p171 = scmp.eq.s32.totalorder %s37, 0
      %p172 = por %p170, %p171
      %p173 = scmp.ne.s32.totalorder %s165, %s167
      %p174 = scmp.eq.s32.totalorder %s42, 1
      %p175 = por %p173, %p174
      %p176 = scmp.ne.s32.totalorder %s167, %s168
      %p177 = scmp.eq.s32.totalorder %s42, 0
      %p178 = por %p176, %p177
      %p179 = scmp.ne.s32.totalorder %s167, %s168
      %p180 = scmp.eq.s32.totalorder %s43, 1
      %p181 = por %p179, %p180
      %p183 = scmp.ne.s32.totalorder %s168, %s182
      %p184 = scmp.eq.s32.totalorder %s43, 0
      %p185 = por %p183, %p184
      %s187 = sadd.s32 %s186, 1
      %p190 = scmp.eq.s32.totalorder %s37, 1
      %p191 = scmp.ne.s32.totalorder %s186, %s188
      %p192 = scmp.eq.s32.totalorder %s37, 0
      %p193 = por %p191, %p192
      %p194 = scmp.ne.s32.totalorder %s186, %s188
      %p195 = scmp.eq.s32.totalorder %s42, 1
      %p196 = por %p194, %p195
      %p197 = scmp.ne.s32.totalorder %s188, %s189
      %p198 = scmp.eq.s32.totalorder %s42, 0
      %p199 = por %p197, %p198
      %p200 = scmp.ne.s32.totalorder %s188, %s189
      %p201 = scmp.eq.s32.totalorder %s43, 1
      %p202 = por %p200, %p201
      %p204 = scmp.ne.s32.totalorder %s189, %s203
      %p205 = scmp.eq.s32.totalorder %s43, 0
      %p206 = por %p204, %p205
      %s208 = sadd.s32 %s207, 1
      %p211 = scmp.eq.s32.totalorder %s37, 1
      %p212 = scmp.ne.s32.totalorder %s207, %s209
      %p213 = scmp.eq.s32.totalorder %s37, 0
      %p214 = por %p212, %p213
      %p215 = scmp.ne.s32.totalorder %s207, %s209
      %p216 = scmp.eq.s32.totalorder %s42, 1
      %p217 = por %p215, %p216
      %p218 = scmp.ne.s32.totalorder %s209, %s210
      %p219 = scmp.eq.s32.totalorder %s42, 0
      %p220 = por %p218, %p219
      %p221 = scmp.ne.s32.totalorder %s209, %s210
      %p222 = scmp.eq.s32.totalorder %s43, 1
      %p223 = por %p221, %p222
      %p225 = scmp.ne.s32.totalorder %s210, %s224
      %p226 = scmp.eq.s32.totalorder %s43, 0
      %p227 = por %p225, %p226
      %s229 = sadd.s32 %s228, 1
      %p232 = scmp.eq.s32.totalorder %s37, 1
      %p233 = scmp.ne.s32.totalorder %s228, %s230
      %p234 = scmp.eq.s32.totalorder %s37, 0
      %p235 = por %p233, %p234
      %p236 = scmp.ne.s32.totalorder %s228, %s230
      %p237 = scmp.eq.s32.totalorder %s42, 1
      %p238 = por %p236, %p237
      %p239 = scmp.ne.s32.totalorder %s230, %s231
      %p240 = scmp.eq.s32.totalorder %s42, 0
      %p241 = por %p239, %p240
      %p242 = scmp.ne.s32.totalorder %s230, %s231
      %p243 = scmp.eq.s32.totalorder %s43, 1
      %p244 = por %p242, %p243
      %p246 = scmp.ne.s32.totalorder %s231, %s245
      %p247 = scmp.eq.s32.totalorder %s43, 0
      %p248 = por %p246, %p247
      %s250 = sadd.s32 %s249, 1
      %p253 = scmp.eq.s32.totalorder %s37, 1
      %p254 = scmp.ne.s32.totalorder %s249, %s251
      %p255 = scmp.eq.s32.totalorder %s37, 0
      %p256 = por %p254, %p255
      %p257 = scmp.ne.s32.totalorder %s249, %s251
      %p258 = scmp.eq.s32.totalorder %s42, 1
      %p259 = por %p257, %p258
      %p260 = scmp.ne.s32.totalorder %s251, %s252
      %p261 = scmp.eq.s32.totalorder %s42, 0
      %p262 = por %p260, %p261
      %p263 = scmp.ne.s32.totalorder %s251, %s252
      %p264 = scmp.eq.s32.totalorder %s43, 1
      %p265 = por %p263, %p264
      %p267 = scmp.ne.s32.totalorder %s252, %s266
      %p268 = scmp.eq.s32.totalorder %s43, 0
      %p269 = por %p267, %p268
      %s271 = sadd.s32 %s270, 1
      %p274 = scmp.eq.s32.totalorder %s37, 1
      %p275 = scmp.ne.s32.totalorder %s270, %s272
      %p276 = scmp.eq.s32.totalorder %s37, 0
      %p277 = por %p275, %p276
      %p278 = scmp.ne.s32.totalorder %s270, %s272
      %p279 = scmp.eq.s32.totalorder %s42, 1
      %p280 = por %p278, %p279
      %p281 = scmp.ne.s32.totalorder %s272, %s273
      %p282 = scmp.eq.s32.totalorder %s42, 0
      %p283 = por %p281, %p282
      %p284 = scmp.ne.s32.totalorder %s272, %s273
      %p285 = scmp.eq.s32.totalorder %s43, 1
      %p286 = por %p284, %p285
      %p288 = scmp.ne.s32.totalorder %s273, %s287
      %p289 = scmp.eq.s32.totalorder %s43, 0
      %p290 = por %p288, %p289
      %s292 = sadd.s32 %s291, 1
      %p295 = scmp.eq.s32.totalorder %s37, 1
      %p296 = scmp.ne.s32.totalorder %s291, %s293
      %p297 = scmp.eq.s32.totalorder %s37, 0
      %p298 = por %p296, %p297
      %p299 = scmp.ne.s32.totalorder %s291, %s293
      %p300 = scmp.eq.s32.totalorder %s42, 1
      %p301 = por %p299, %p300
      %p302 = scmp.ne.s32.totalorder %s293, %s294
      %p303 = scmp.eq.s32.totalorder %s42, 0
      %p304 = por %p302, %p303
      %p305 = scmp.ne.s32.totalorder %s293, %s294
      %p306 = scmp.eq.s32.totalorder %s43, 1
      %p307 = por %p305, %p306
      %p309 = scmp.ne.s32.totalorder %s294, %s308
      %p310 = scmp.eq.s32.totalorder %s43, 0
      %p311 = por %p309, %p310
      %s313 = sadd.s32 %s312, 1
      %p316 = scmp.eq.s32.totalorder %s37, 1
      %p317 = scmp.ne.s32.totalorder %s312, %s314
      %p318 = scmp.eq.s32.totalorder %s37, 0
      %p319 = por %p317, %p318
      %p320 = scmp.ne.s32.totalorder %s312, %s314
      %p321 = scmp.eq.s32.totalorder %s42, 1
      %p322 = por %p320, %p321
      %p323 = scmp.ne.s32.totalorder %s314, %s315
      %p324 = scmp.eq.s32.totalorder %s42, 0
      %p325 = por %p323, %p324
      %p326 = scmp.ne.s32.totalorder %s314, %s315
      %p327 = scmp.eq.s32.totalorder %s43, 1
      %p328 = por %p326, %p327
      %p330 = scmp.ne.s32.totalorder %s315, %s329
      %p331 = scmp.eq.s32.totalorder %s43, 0
      %p332 = por %p330, %p331
      %s334 = sadd.s32 %s333, 1
      %p337 = scmp.eq.s32.totalorder %s37, 1
      %p338 = scmp.ne.s32.totalorder %s333, %s335
      %p339 = scmp.eq.s32.totalorder %s37, 0
      %p340 = por %p338, %p339
      %p341 = scmp.ne.s32.totalorder %s333, %s335
      %p342 = scmp.eq.s32.totalorder %s42, 1
      %p343 = por %p341, %p342
      %p344 = scmp.ne.s32.totalorder %s335, %s336
      %p345 = scmp.eq.s32.totalorder %s42, 0
      %p346 = por %p344, %p345
      %p347 = scmp.ne.s32.totalorder %s335, %s336
      %p348 = scmp.eq.s32.totalorder %s43, 1
      %p349 = por %p347, %p348
      %p351 = scmp.ne.s32.totalorder %s336, %s350
      %p352 = scmp.eq.s32.totalorder %s43, 0
      %p353 = por %p351, %p352
      %s355 = sadd.s32 %s354, 1
      %p358 = scmp.eq.s32.totalorder %s37, 1
      %p359 = scmp.ne.s32.totalorder %s354, %s356
      %p360 = scmp.eq.s32.totalorder %s37, 0
      %p361 = por %p359, %p360
      %p362 = scmp.ne.s32.totalorder %s354, %s356
      %p363 = scmp.eq.s32.totalorder %s42, 1
      %p364 = por %p362, %p363
      %p365 = scmp.ne.s32.totalorder %s356, %s357
      %p366 = scmp.eq.s32.totalorder %s42, 0
      %p367 = por %p365, %p366
      %p368 = scmp.ne.s32.totalorder %s356, %s357
      %p369 = scmp.eq.s32.totalorder %s43, 1
      %p370 = por %p368, %p369
      %p372 = scmp.ne.s32.totalorder %s357, %s371
      %p373 = scmp.eq.s32.totalorder %s43, 0
      %p374 = por %p372, %p373
      %s376 = sadd.s32 %s375, 1
      %p379 = scmp.eq.s32.totalorder %s37, 1
      %p380 = scmp.ne.s32.totalorder %s375, %s377
      %p381 = scmp.eq.s32.totalorder %s37, 0
      %p382 = por %p380, %p381
      %p383 = scmp.ne.s32.totalorder %s375, %s377
      %p384 = scmp.eq.s32.totalorder %s42, 1
      %p385 = por %p383, %p384
      %p386 = scmp.ne.s32.totalorder %s377, %s378
      %p387 = scmp.eq.s32.totalorder %s42, 0
      %p388 = por %p386, %p387
      %p389 = scmp.ne.s32.totalorder %s377, %s378
      %p390 = scmp.eq.s32.totalorder %s43, 1
      %p391 = por %p389, %p390
      %p393 = scmp.ne.s32.totalorder %s378, %s392
      %p394 = scmp.eq.s32.totalorder %s43, 0
      %p395 = por %p393, %p394
      %s397 = sadd.s32 %s396, 1
      %p400 = scmp.eq.s32.totalorder %s37, 1
      %p401 = scmp.ne.s32.totalorder %s396, %s398
      %p402 = scmp.eq.s32.totalorder %s37, 0
      %p403 = por %p401, %p402
      %p404 = scmp.ne.s32.totalorder %s396, %s398
      %p405 = scmp.eq.s32.totalorder %s42, 1
      %p406 = por %p404, %p405
      %p407 = scmp.ne.s32.totalorder %s398, %s399
      %p408 = scmp.eq.s32.totalorder %s42, 0
      %p409 = por %p407, %p408
      %p410 = scmp.ne.s32.totalorder %s398, %s399
      %p411 = scmp.eq.s32.totalorder %s43, 1
      %p412 = por %p410, %p411
      %p414 = scmp.ne.s32.totalorder %s399, %s413
      %p415 = scmp.eq.s32.totalorder %s43, 0
      %p416 = por %p414, %p415
      %s418 = sadd.s32 %s417, 1
      %p421 = scmp.eq.s32.totalorder %s37, 1
      %p422 = scmp.ne.s32.totalorder %s417, %s419
      %p423 = scmp.eq.s32.totalorder %s37, 0
      %p424 = por %p422, %p423
      %p425 = scmp.ne.s32.totalorder %s417, %s419
      %p426 = scmp.eq.s32.totalorder %s42, 1
      %p427 = por %p425, %p426
      %p428 = scmp.ne.s32.totalorder %s419, %s420
      %p429 = scmp.eq.s32.totalorder %s42, 0
      %p430 = por %p428, %p429
      %p431 = scmp.ne.s32.totalorder %s419, %s420
      %p432 = scmp.eq.s32.totalorder %s43, 1
      %p433 = por %p431, %p432
      %p435 = scmp.ne.s32.totalorder %s420, %s434
      %p436 = scmp.eq.s32.totalorder %s43, 0
      %p437 = por %p435, %p436
      %s439 = sadd.s32 %s438, 1
      %p442 = scmp.eq.s32.totalorder %s37, 1
      %p443 = scmp.ne.s32.totalorder %s438, %s440
      %p444 = scmp.eq.s32.totalorder %s37, 0
      %p445 = por %p443, %p444
      %p446 = scmp.ne.s32.totalorder %s438, %s440
      %p447 = scmp.eq.s32.totalorder %s42, 1
      %p448 = por %p446, %p447
      %p449 = scmp.ne.s32.totalorder %s440, %s441
      %p450 = scmp.eq.s32.totalorder %s42, 0
      %p451 = por %p449, %p450
      %p452 = scmp.ne.s32.totalorder %s440, %s441
      %p453 = scmp.eq.s32.totalorder %s43, 1
      %p454 = por %p452, %p453
      %p456 = scmp.ne.s32.totalorder %s441, %s455
      %p457 = scmp.eq.s32.totalorder %s43, 0
      %p458 = por %p456, %p457
      %s459 = ssub.s32 %s37, %s44
      %p460 = scmp.eq.s32.totalorder %s459, 0
      %s462 = sadd.s32 %s461, 1
      %s463 = scalar_select %p460, %s461, %s462
      %p466 = pneg %p460
      %p467 = scmp.eq.s32.totalorder %s37, 1
      %p468 = por %p466, %p467
      %p469 = scmp.ne.s32.totalorder %s461, %s464
      %p470 = scmp.eq.s32.totalorder %s37, 0
      %p471 = por %p469, %p470
      %p472 = scmp.ne.s32.totalorder %s461, %s464
      %p473 = scmp.eq.s32.totalorder %s42, 1
      %p474 = por %p472, %p473
      %p475 = scmp.ne.s32.totalorder %s464, %s465
      %p476 = scmp.eq.s32.totalorder %s42, 0
      %p477 = por %p475, %p476
      %p478 = scmp.ne.s32.totalorder %s464, %s465
      %p479 = scmp.eq.s32.totalorder %s43, 1
      %p480 = por %p478, %p479
      %p482 = scmp.ne.s32.totalorder %s465, %s481
      %p483 = scmp.eq.s32.totalorder %s43, 0
      %p484 = por %p482, %p483
      %p485 = scmp.le.s32.totalorder 1, %s37
      %p486 = scmp.lt.s32.totalorder %s37, 3
      %p487 = pnand %p485, %p486
      %p488 = pneg %p487
      // Predicated region
      $region9: #{tpu_custom_call.1} parent=5 // pred_check
        _
      $region10: #{tpu_custom_call.1} parent=5 // pred_check_branch
        %490 = sbr.rel (%p487) target = $region12
      $region11: #{tpu_custom_call.1} parent=5 // pred_region
        %s491 = ssub.s32 %s37, 1
        // Predicated region
        $region13: #{tpu_custom_call.1} parent=11 // pred_check
          %p492 = pneg %p136
        $region14: #{tpu_custom_call.1} parent=11 // pred_check_branch
          %494 = sbr.rel (%p492) target = $region16
        $region15: #{tpu_custom_call.1} parent=11 // pred_region
          %s496 = ssub.s32 3072, 3072
          %497 = vsyncadd [#allocation9], %s496
          %s498 = sshll.u32 [#allocation8], 4
          %s499 = int_to_ptr.vmem [resolvable:$true] %s498
          %504 = dma.hbm_to_vmem [thread:$0]  %s3, 3072, %s499, [#allocation9], 64, 64, 4
        $region16: #{tpu_custom_call.1} parent=11 // pred_fallthru
          _
        // Predicated region
        $region17: #{tpu_custom_call.1} parent=11 // pred_check
          %p505 = pneg %p157
        $region18: #{tpu_custom_call.1} parent=11 // pred_check_branch
          %507 = sbr.rel (%p505) target = $region20
        $region19: #{tpu_custom_call.1} parent=11 // pred_region
          %s509 = ssub.s32 16, 16
          %510 = vsyncadd [#allocation9], %s509
          %s512 = sshll.u32 [#allocation10], 4
          %s513 = int_to_ptr.vmem [resolvable:$true] %s512
          %515 = dma.hbm_to_vmem [thread:$0]  %s4, 16, %s513, [#allocation9]
        $region20: #{tpu_custom_call.1} parent=11 // pred_fallthru
          _
        // Predicated region
        $region21: #{tpu_custom_call.1} parent=11 // pred_check
          %p516 = pneg %p178
        $region22: #{tpu_custom_call.1} parent=11 // pred_check_branch
          %518 = sbr.rel (%p516) target = $region24
        $region23: #{tpu_custom_call.1} parent=11 // pred_region
          %s520 = ssub.s32 2048, 2048
          %521 = vsyncadd [#allocation12], %s520
          %s522 = sshll.u32 [#allocation11], 4
          %s523 = int_to_ptr.vmem [resolvable:$true] %s522
          %528 = dma.hbm_to_vmem [thread:$0]  %s5, 2048, %s523, [#allocation12], 64, 64, 4
        $region24: #{tpu_custom_call.1} parent=11 // pred_fallthru
          _
        // Predicated region
        $region25: #{tpu_custom_call.1} parent=11 // pred_check
          %p529 = pneg %p199
        $region26: #{tpu_custom_call.1} parent=11 // pred_check_branch
          %531 = sbr.rel (%p529) target = $region28
        $region27: #{tpu_custom_call.1} parent=11 // pred_region
          _
        $region28: #{tpu_custom_call.1} parent=11 // pred_fallthru
          _
        // Predicated region
        $region29: #{tpu_custom_call.1} parent=11 // pred_check
          %p532 = pneg %p220
        $region30: #{tpu_custom_call.1} parent=11 // pred_check_branch
          %534 = sbr.rel (%p532) target = $region32
        $region31: #{tpu_custom_call.1} parent=11 // pred_region
          %s536 = ssub.s32 2048, 2048
          %537 = vsyncadd [#allocation12], %s536
          %s538 = sshll.u32 [#allocation13], 4
          %s539 = int_to_ptr.vmem [resolvable:$true] %s538
          %544 = dma.hbm_to_vmem [thread:$0]  %s7, 2048, %s539, [#allocation12], 64, 64, 4
        $region32: #{tpu_custom_call.1} parent=11 // pred_fallthru
          _
        // Predicated region
        $region33: #{tpu_custom_call.1} parent=11 // pred_check
          %p545 = pneg %p241
        $region34: #{tpu_custom_call.1} parent=11 // pred_check_branch
          %547 = sbr.rel (%p545) target = $region36
        $region35: #{tpu_custom_call.1} parent=11 // pred_region
          _
        $region36: #{tpu_custom_call.1} parent=11 // pred_fallthru
          _
        // Predicated region
        $region37: #{tpu_custom_call.1} parent=11 // pred_check
          %p548 = pneg %p262
        $region38: #{tpu_custom_call.1} parent=11 // pred_check_branch
          %550 = sbr.rel (%p548) target = $region40
        $region39: #{tpu_custom_call.1} parent=11 // pred_region
          _
        $region40: #{tpu_custom_call.1} parent=11 // pred_fallthru
          _
        // Predicated region
        $region41: #{tpu_custom_call.1} parent=11 // pred_check
          %p551 = pneg %p283
        $region42: #{tpu_custom_call.1} parent=11 // pred_check_branch
          %553 = sbr.rel (%p551) target = $region44
        $region43: #{tpu_custom_call.1} parent=11 // pred_region
          _
        $region44: #{tpu_custom_call.1} parent=11 // pred_fallthru
          _
        // Predicated region
        $region45: #{tpu_custom_call.1} parent=11 // pred_check
          %p554 = pneg %p304
        $region46: #{tpu_custom_call.1} parent=11 // pred_check_branch
          %556 = sbr.rel (%p554) target = $region48
        $region47: #{tpu_custom_call.1} parent=11 // pred_region
          %s558 = ssub.s32 8192, 8192
          %559 = vsyncadd [#allocation15], %s558
          %s560 = sshll.u32 [#allocation14], 4
          %s561 = int_to_ptr.vmem [resolvable:$true] %s560
          %566 = dma.hbm_to_vmem [thread:$0]  %s11, 8192, %s561, [#allocation15], 256, 256, 16
        $region48: #{tpu_custom_call.1} parent=11 // pred_fallthru
          _
        // Predicated region
        $region49: #{tpu_custom_call.1} parent=11 // pred_check
          %p567 = pneg %p325
        $region50: #{tpu_custom_call.1} parent=11 // pred_check_branch
          %569 = sbr.rel (%p567) target = $region52
        $region51: #{tpu_custom_call.1} parent=11 // pred_region
          _
        $region52: #{tpu_custom_call.1} parent=11 // pred_fallthru
          _
        // Predicated region
        $region53: #{tpu_custom_call.1} parent=11 // pred_check
          %p570 = pneg %p346
        $region54: #{tpu_custom_call.1} parent=11 // pred_check_branch
          %572 = sbr.rel (%p570) target = $region56
        $region55: #{tpu_custom_call.1} parent=11 // pred_region
          %s574 = ssub.s32 8192, 8192
          %575 = vsyncadd [#allocation15], %s574
          %s576 = sshll.u32 [#allocation16], 4
          %s577 = int_to_ptr.vmem [resolvable:$true] %s576
          %582 = dma.hbm_to_vmem [thread:$0]  %s13, 8192, %s577, [#allocation15], 64, 64, 4
        $region56: #{tpu_custom_call.1} parent=11 // pred_fallthru
          _
        // Predicated region
        $region57: #{tpu_custom_call.1} parent=11 // pred_check
          %p583 = pneg %p367
        $region58: #{tpu_custom_call.1} parent=11 // pred_check_branch
          %585 = sbr.rel (%p583) target = $region60
        $region59: #{tpu_custom_call.1} parent=11 // pred_region
          _
        $region60: #{tpu_custom_call.1} parent=11 // pred_fallthru
          _
        // Predicated region
        $region61: #{tpu_custom_call.1} parent=11 // pred_check
          %p586 = pneg %p388
        $region62: #{tpu_custom_call.1} parent=11 // pred_check_branch
          %588 = sbr.rel (%p586) target = $region64
        $region63: #{tpu_custom_call.1} parent=11 // pred_region
          _
        $region64: #{tpu_custom_call.1} parent=11 // pred_fallthru
          _
        // Predicated region
        $region65: #{tpu_custom_call.1} parent=11 // pred_check
          %p589 = pneg %p409
        $region66: #{tpu_custom_call.1} parent=11 // pred_check_branch
          %591 = sbr.rel (%p589) target = $region68
        $region67: #{tpu_custom_call.1} parent=11 // pred_region
          _
        $region68: #{tpu_custom_call.1} parent=11 // pred_fallthru
          _
        // Predicated region
        $region69: #{tpu_custom_call.1} parent=11 // pred_check
          %p592 = pneg %p430
        $region70: #{tpu_custom_call.1} parent=11 // pred_check_branch
          %594 = sbr.rel (%p592) target = $region72
        $region71: #{tpu_custom_call.1} parent=11 // pred_region
          _
        $region72: #{tpu_custom_call.1} parent=11 // pred_fallthru
          _
        // Predicated region
        $region73: #{tpu_custom_call.1} parent=11 // pred_check
          %p595 = pneg %p451
        $region74: #{tpu_custom_call.1} parent=11 // pred_check_branch
          %597 = sbr.rel (%p595) target = $region76
        $region75: #{tpu_custom_call.1} parent=11 // pred_region
          _
        $region76: #{tpu_custom_call.1} parent=11 // pred_fallthru
          _
      $region12: #{tpu_custom_call.1} parent=5 // pred_fallthru
        _
      %p598 = scmp.lt.s32.totalorder %s37, 2
      // Predicated region
      $region77: #{tpu_custom_call.1} parent=5 // pred_check
        %p599 = pneg %p598
      $region78: #{tpu_custom_call.1} parent=5 // pred_check_branch
        %601 = sbr.rel (%p599) target = $region80
      $region79: #{tpu_custom_call.1} parent=5 // pred_region
        // Predicated region
        $region81: #{tpu_custom_call.1} parent=79 // pred_check
          %p602 = pneg %p57
        $region82: #{tpu_custom_call.1} parent=79 // pred_check_branch
          %604 = sbr.rel (%p602) target = $region84
        $region83: #{tpu_custom_call.1} parent=79 // pred_region
          %s605 = sand.u32 %s47, 1
          %s606 = scalar_lea.sflag [#allocation3], %s605
          %s607 = sand.u32 %s47, 1
          %s608 = smul.addr %s607, 256
          %s609 = scalar_lea.vmem [#allocation2], %s608
          %s610 = smul.u32 32, %s37
          %s612 = ssub.s32 4096, 4096
          %613 = vsyncadd %s606, %s612
          %s614 = smul.addr %s610, 128
          %s615 = scalar_lea.hbm %s0, %s614
          %s616 = sshll.u32 %s609, 4
          %s617 = int_to_ptr.vmem [resolvable:$true] %s616
          %622 = dma.hbm_to_vmem [thread:$0]  %s615, 4096, %s617, %s606, 128, 128, 8
        $region84: #{tpu_custom_call.1} parent=79 // pred_fallthru
          _
        // Predicated region
        $region85: #{tpu_custom_call.1} parent=79 // pred_check
          %p623 = pneg %p83
        $region86: #{tpu_custom_call.1} parent=79 // pred_check_branch
          %625 = sbr.rel (%p623) target = $region88
        $region87: #{tpu_custom_call.1} parent=79 // pred_region
          %s626 = sand.u32 %s37, 1
          %s627 = scalar_lea.sflag [#allocation6], %s626
          %s628 = sand.u32 %s73, 1
          %s629 = smul.addr %s628, 256
          %s630 = scalar_lea.vmem [#allocation5], %s629
          %s631 = smul.u32 32, %s37
          %s633 = ssub.s32 4096, 4096
          %634 = vsyncadd %s627, %s633
          %s635 = smul.addr %s631, 128
          %s636 = scalar_lea.hbm %s1, %s635
          %s637 = sshll.u32 %s630, 4
          %s638 = int_to_ptr.vmem [resolvable:$true] %s637
          %643 = dma.hbm_to_vmem [thread:$0]  %s636, 4096, %s638, %s627, 128, 128, 8
        $region88: #{tpu_custom_call.1} parent=79 // pred_fallthru
          _
        // Predicated region
        $region89: #{tpu_custom_call.1} parent=79 // pred_check
          %p644 = pneg %p109
        $region90: #{tpu_custom_call.1} parent=79 // pred_check_branch
          %646 = sbr.rel (%p644) target = $region92
        $region91: #{tpu_custom_call.1} parent=79 // pred_region
          %s647 = sand.u32 %s37, 1
          %s648 = scalar_lea.sflag [#allocation6], %s647
          %s649 = sand.u32 %s99, 1
          %s650 = smul.addr %s649, 256
          %s651 = scalar_lea.vmem [#allocation7], %s650
          %s652 = smul.u32 32, %s37
          %s654 = ssub.s32 4096, 4096
          %655 = vsyncadd %s648, %s654
          %s656 = smul.addr %s652, 128
          %s657 = scalar_lea.hbm %s2, %s656
          %s658 = sshll.u32 %s651, 4
          %s659 = int_to_ptr.vmem [resolvable:$true] %s658
          %664 = dma.hbm_to_vmem [thread:$0]  %s657, 4096, %s659, %s648, 128, 128, 8
        $region92: #{tpu_custom_call.1} parent=79 // pred_fallthru
          _
      $region80: #{tpu_custom_call.1} parent=5 // pred_fallthru
        _
      %p665 = scmp.le.s32.totalorder 1, %s37
      %p666 = scmp.lt.s32.totalorder %s37, 3
      %p667 = pnand %p665, %p666
      %p668 = pneg %p667
      // Predicated region
      $region93: #{tpu_custom_call.1} parent=5 // pred_check
        _
      $region94: #{tpu_custom_call.1} parent=5 // pred_check_branch
        %670 = sbr.rel (%p667) target = $region96
      $region95: #{tpu_custom_call.1} parent=5 // pred_region
        %s671 = ssub.s32 %s37, 1
        %s672 = sand.u32 %s50, 1
        %s673 = scalar_lea.sflag [#allocation3], %s672
        %s674 = sand.u32 %s50, 1
        %s675 = smul.addr %s674, 256
        %s676 = scalar_lea.vmem [#allocation2], %s675
        // Predicated region
        $region97: #{tpu_custom_call.1} parent=95 // pred_check
          %p677 = pneg %p63
        $region98: #{tpu_custom_call.1} parent=95 // pred_check_branch
          %679 = sbr.rel (%p677) target = $region100
        $region99: #{tpu_custom_call.1} parent=95 // pred_region
          %680 = dma.done %s673, 4096
        $region100: #{tpu_custom_call.1} parent=95 // pred_fallthru
          _
        %s681 = sand.u32 %s42, 1
        %s682 = scalar_lea.sflag [#allocation6], %s681
        %s683 = sand.u32 %s76, 1
        %s684 = smul.addr %s683, 256
        %s685 = scalar_lea.vmem [#allocation5], %s684
        // Predicated region
        $region101: #{tpu_custom_call.1} parent=95 // pred_check
          %p686 = pneg %p89
        $region102: #{tpu_custom_call.1} parent=95 // pred_check_branch
          %688 = sbr.rel (%p686) target = $region104
        $region103: #{tpu_custom_call.1} parent=95 // pred_region
          %689 = dma.done %s682, 4096
        $region104: #{tpu_custom_call.1} parent=95 // pred_fallthru
          _
        %s690 = sand.u32 %s42, 1
        %s691 = scalar_lea.sflag [#allocation6], %s690
        %s692 = sand.u32 %s102, 1
        %s693 = smul.addr %s692, 256
        %s694 = scalar_lea.vmem [#allocation7], %s693
        // Predicated region
        $region105: #{tpu_custom_call.1} parent=95 // pred_check
          %p695 = pneg %p115
        $region106: #{tpu_custom_call.1} parent=95 // pred_check_branch
          %697 = sbr.rel (%p695) target = $region108
        $region107: #{tpu_custom_call.1} parent=95 // pred_region
          %698 = dma.done %s691, 4096
        $region108: #{tpu_custom_call.1} parent=95 // pred_fallthru
          _
        // Predicated region
        $region109: #{tpu_custom_call.1} parent=95 // pred_check
          %p699 = pneg %p136
        $region110: #{tpu_custom_call.1} parent=95 // pred_check_branch
          %701 = sbr.rel (%p699) target = $region112
        $region111: #{tpu_custom_call.1} parent=95 // pred_region
          %702 = dma.done [#allocation9], 3072
        $region112: #{tpu_custom_call.1} parent=95 // pred_fallthru
          _
        // Predicated region
        $region113: #{tpu_custom_call.1} parent=95 // pred_check
          %p703 = pneg %p157
        $region114: #{tpu_custom_call.1} parent=95 // pred_check_branch
          %705 = sbr.rel (%p703) target = $region116
        $region115: #{tpu_custom_call.1} parent=95 // pred_region
          %706 = dma.done [#allocation9], 16
        $region116: #{tpu_custom_call.1} parent=95 // pred_fallthru
          _
        // Predicated region
        $region117: #{tpu_custom_call.1} parent=95 // pred_check
          %p707 = pneg %p178
        $region118: #{tpu_custom_call.1} parent=95 // pred_check_branch
          %709 = sbr.rel (%p707) target = $region120
        $region119: #{tpu_custom_call.1} parent=95 // pred_region
          %710 = dma.done [#allocation12], 2048
        $region120: #{tpu_custom_call.1} parent=95 // pred_fallthru
          _
        // Predicated region
        $region121: #{tpu_custom_call.1} parent=95 // pred_check
          %p711 = pneg %p220
        $region122: #{tpu_custom_call.1} parent=95 // pred_check_branch
          %713 = sbr.rel (%p711) target = $region124
        $region123: #{tpu_custom_call.1} parent=95 // pred_region
          %714 = dma.done [#allocation12], 2048
        $region124: #{tpu_custom_call.1} parent=95 // pred_fallthru
          _
        // Predicated region
        $region125: #{tpu_custom_call.1} parent=95 // pred_check
          %p715 = pneg %p304
        $region126: #{tpu_custom_call.1} parent=95 // pred_check_branch
          %717 = sbr.rel (%p715) target = $region128
        $region127: #{tpu_custom_call.1} parent=95 // pred_region
          %718 = dma.done [#allocation15], 8192
        $region128: #{tpu_custom_call.1} parent=95 // pred_fallthru
          _
        // Predicated region
        $region129: #{tpu_custom_call.1} parent=95 // pred_check
          %p719 = pneg %p346
        $region130: #{tpu_custom_call.1} parent=95 // pred_check_branch
          %721 = sbr.rel (%p719) target = $region132
        $region131: #{tpu_custom_call.1} parent=95 // pred_region
          %722 = dma.done [#allocation15], 8192
        $region132: #{tpu_custom_call.1} parent=95 // pred_fallthru
          _
        %s723 = sand.u32 %s50, 1
        %s724 = scalar_lea.sflag [#allocation3], %s723
        %s725 = sand.u32 %s50, 1
        %s726 = smul.addr %s725, 256
        %s727 = scalar_lea.vmem [#allocation2], %s726
        %p728 = pneg %p63
        %p729 = pneg %p60
        %s730 = sand.u32 %s42, 1
        %s731 = scalar_lea.sflag [#allocation6], %s730
        %s732 = sand.u32 %s76, 1
        %s733 = smul.addr %s732, 256
        %s734 = scalar_lea.vmem [#allocation5], %s733
        %p735 = pneg %p89
        %p736 = pneg %p86
        %s737 = sand.u32 %s42, 1
        %s738 = scalar_lea.sflag [#allocation6], %s737
        %s739 = sand.u32 %s102, 1
        %s740 = smul.addr %s739, 256
        %s741 = scalar_lea.vmem [#allocation7], %s740
        %p742 = pneg %p115
        %p743 = pneg %p112
        %p744 = pneg %p136
        %p745 = pneg %p133
        %p746 = pneg %p157
        %p747 = pneg %p154
        %p748 = pneg %p178
        %p749 = pneg %p175
        %p750 = pneg %p199
        %p751 = pneg %p196
        %p752 = pneg %p220
        %p753 = pneg %p217
        %p754 = pneg %p241
        %p755 = pneg %p238
        %p756 = pneg %p262
        %p757 = pneg %p259
        %p758 = pneg %p283
        %p759 = pneg %p280
        %p760 = pneg %p304
        %p761 = pneg %p301
        %p762 = pneg %p325
        %p763 = pneg %p322
        %p764 = pneg %p346
        %p765 = pneg %p343
        %p766 = pneg %p367
        %p767 = pneg %p364
        %p768 = pneg %p388
        %p769 = pneg %p385
        %p770 = pneg %p409
        %p771 = pneg %p406
        %p772 = pneg %p430
        %p773 = pneg %p427
        %p774 = pneg %p451
        %p775 = pneg %p448
        %p776 = pneg %p477
        %p777 = pneg %p474
        %s778 = sand.u32 %s464, 1
        %s779 = scalar_lea.sflag [#allocation4], %s778
        %s780 = sand.u32 %s464, 1
        %s781 = smul.addr %s780, 256
        %s782 = scalar_lea.vmem [#allocation17], %s781
        %s783 = smul.u32 32, %s42
        %s784 = smul.u32 32, %s42
        %s785 = smul.u32 32, %s42
        %s786 = smul.u32 32, %s42
        %v788 = vld [vmem:[%s676] sm:$0xff]
        %v789 = vld [vmem:[%s676 + $0x8] sm:$0xff]
        %v790 = vld [vmem:[%s676 + $0x10] sm:$0xff]
        %v791 = vld [vmem:[%s676 + $0x18] sm:$0xff]
        %v792 = vld [vmem:[%s676 + $0x20] sm:$0xff]
        %v793 = vld [vmem:[%s676 + $0x28] sm:$0xff]
        %v794 = vld [vmem:[%s676 + $0x30] sm:$0xff]
        %v795 = vld [vmem:[%s676 + $0x38] sm:$0xff]
        %v796 = vld [vmem:[%s676 + $0x40] sm:$0xff]
        %v797 = vld [vmem:[%s676 + $0x48] sm:$0xff]
        %v798 = vld [vmem:[%s676 + $0x50] sm:$0xff]
        %v799 = vld [vmem:[%s676 + $0x58] sm:$0xff]
        %v800 = vld [vmem:[%s676 + $0x60] sm:$0xff]
        %v801 = vld [vmem:[%s676 + $0x68] sm:$0xff]
        %v802 = vld [vmem:[%s676 + $0x70] sm:$0xff]
        %v803 = vld [vmem:[%s676 + $0x78] sm:$0xff]
        %v804 = vld [vmem:[%s676 + $0x80] sm:$0xff]
        %v805 = vld [vmem:[%s676 + $0x88] sm:$0xff]
        %v806 = vld [vmem:[%s676 + $0x90] sm:$0xff]
        %v807 = vld [vmem:[%s676 + $0x98] sm:$0xff]
        %v808 = vld [vmem:[%s676 + $0xa0] sm:$0xff]
        %v809 = vld [vmem:[%s676 + $0xa8] sm:$0xff]
        %v810 = vld [vmem:[%s676 + $0xb0] sm:$0xff]
        %v811 = vld [vmem:[%s676 + $0xb8] sm:$0xff]
        %v812 = vld [vmem:[%s676 + $0xc0] sm:$0xff]
        %v813 = vld [vmem:[%s676 + $0xc8] sm:$0xff]
        %v814 = vld [vmem:[%s676 + $0xd0] sm:$0xff]
        %v815 = vld [vmem:[%s676 + $0xd8] sm:$0xff]
        %v816 = vld [vmem:[%s676 + $0xe0] sm:$0xff]
        %v817 = vld [vmem:[%s676 + $0xe8] sm:$0xff]
        %v818 = vld [vmem:[%s676 + $0xf0] sm:$0xff]
        %v819 = vld [vmem:[%s676 + $0xf8] sm:$0xff]
        %v820 = vpack.c.bf16 %v789, %v788
        %v821 = vpack.c.bf16 %v791, %v790
        %v822 = vpack.c.bf16 %v793, %v792
        %v823 = vpack.c.bf16 %v795, %v794
        %v824 = vpack.c.bf16 %v797, %v796
        %v825 = vpack.c.bf16 %v799, %v798
        %v826 = vpack.c.bf16 %v801, %v800
        %v827 = vpack.c.bf16 %v803, %v802
        %v828 = vpack.c.bf16 %v805, %v804
        %v829 = vpack.c.bf16 %v807, %v806
        %v830 = vpack.c.bf16 %v809, %v808
        %v831 = vpack.c.bf16 %v811, %v810
        %v832 = vpack.c.bf16 %v813, %v812
        %v833 = vpack.c.bf16 %v815, %v814
        %v834 = vpack.c.bf16 %v817, %v816
        %v835 = vpack.c.bf16 %v819, %v818
        %v836 = vld [vmem:[#allocation8] sm:$0xf]
        %v837 = vld [vmem:[#allocation8 + $0x4] sm:$0xf]
        %v838 = vld [vmem:[#allocation8 + $0x8] sm:$0xf]
        %v839 = vld [vmem:[#allocation8 + $0xc] sm:$0xf]
        %v840 = vld [vmem:[#allocation8 + $0x10] sm:$0xf]
        %v841 = vld [vmem:[#allocation8 + $0x14] sm:$0xf]
        %v842 = vld [vmem:[#allocation8 + $0x18] sm:$0xf]
        %v843 = vld [vmem:[#allocation8 + $0x1c] sm:$0xf]
        %v844 = vld [vmem:[#allocation8 + $0x20] sm:$0xf]
        %v845 = vld [vmem:[#allocation8 + $0x24] sm:$0xf]
        %v846 = vld [vmem:[#allocation8 + $0x28] sm:$0xf]
        %v847 = vld [vmem:[#allocation8 + $0x2c] sm:$0xf]
        %v848 = vld [vmem:[#allocation8 + $0x30] sm:$0xf]
        %v849 = vld [vmem:[#allocation8 + $0x34] sm:$0xf]
        %v850 = vld [vmem:[#allocation8 + $0x38] sm:$0xf]
        %v851 = vld [vmem:[#allocation8 + $0x3c] sm:$0xf]
        %v852 = vld [vmem:[%s685] sm:$0xff]
        %v853 = vld [vmem:[%s685 + $0x8] sm:$0xff]
        %v854 = vld [vmem:[%s685 + $0x10] sm:$0xff]
        %v855 = vld [vmem:[%s685 + $0x18] sm:$0xff]
        %v856 = vld [vmem:[%s685 + $0x20] sm:$0xff]
        %v857 = vld [vmem:[%s685 + $0x28] sm:$0xff]
        %v858 = vld [vmem:[%s685 + $0x30] sm:$0xff]
        %v859 = vld [vmem:[%s685 + $0x38] sm:$0xff]
        %v860 = vld [vmem:[%s685 + $0x40] sm:$0xff]
        %v861 = vld [vmem:[%s685 + $0x48] sm:$0xff]
        %v862 = vld [vmem:[%s685 + $0x50] sm:$0xff]
        %v863 = vld [vmem:[%s685 + $0x58] sm:$0xff]
        %v864 = vld [vmem:[%s685 + $0x60] sm:$0xff]
        %v865 = vld [vmem:[%s685 + $0x68] sm:$0xff]
        %v866 = vld [vmem:[%s685 + $0x70] sm:$0xff]
        %v867 = vld [vmem:[%s685 + $0x78] sm:$0xff]
        %v868 = vld [vmem:[%s685 + $0x80] sm:$0xff]
        %v869 = vld [vmem:[%s685 + $0x88] sm:$0xff]
        %v870 = vld [vmem:[%s685 + $0x90] sm:$0xff]
        %v871 = vld [vmem:[%s685 + $0x98] sm:$0xff]
        %v872 = vld [vmem:[%s685 + $0xa0] sm:$0xff]
        %v873 = vld [vmem:[%s685 + $0xa8] sm:$0xff]
        %v874 = vld [vmem:[%s685 + $0xb0] sm:$0xff]
        %v875 = vld [vmem:[%s685 + $0xb8] sm:$0xff]
        %v876 = vld [vmem:[%s685 + $0xc0] sm:$0xff]
        %v877 = vld [vmem:[%s685 + $0xc8] sm:$0xff]
        %v878 = vld [vmem:[%s685 + $0xd0] sm:$0xff]
        %v879 = vld [vmem:[%s685 + $0xd8] sm:$0xff]
        %v880 = vld [vmem:[%s685 + $0xe0] sm:$0xff]
        %v881 = vld [vmem:[%s685 + $0xe8] sm:$0xff]
        %v882 = vld [vmem:[%s685 + $0xf0] sm:$0xff]
        %v883 = vld [vmem:[%s685 + $0xf8] sm:$0xff]
        %v884 = vpack.c.bf16 %v853, %v852
        %v885 = vpack.c.bf16 %v855, %v854
        %v886 = vpack.c.bf16 %v857, %v856
        %v887 = vpack.c.bf16 %v859, %v858
        %v888 = vpack.c.bf16 %v861, %v860
        %v889 = vpack.c.bf16 %v863, %v862
        %v890 = vpack.c.bf16 %v865, %v864
        %v891 = vpack.c.bf16 %v867, %v866
        %v892 = vpack.c.bf16 %v869, %v868
        %v893 = vpack.c.bf16 %v871, %v870
        %v894 = vpack.c.bf16 %v873, %v872
        %v895 = vpack.c.bf16 %v875, %v874
        %v896 = vpack.c.bf16 %v877, %v876
        %v897 = vpack.c.bf16 %v879, %v878
        %v898 = vpack.c.bf16 %v881, %v880
        %v899 = vpack.c.bf16 %v883, %v882
        %s900 = scalar_lea.vmem [#allocation8], 64
        %v901 = vld [vmem:[%s900] sm:$0xf]
        %v902 = vld [vmem:[%s900 + $0x4] sm:$0xf]
        %v903 = vld [vmem:[%s900 + $0x8] sm:$0xf]
        %v904 = vld [vmem:[%s900 + $0xc] sm:$0xf]
        %v905 = vld [vmem:[%s900 + $0x10] sm:$0xf]
        %v906 = vld [vmem:[%s900 + $0x14] sm:$0xf]
        %v907 = vld [vmem:[%s900 + $0x18] sm:$0xf]
        %v908 = vld [vmem:[%s900 + $0x1c] sm:$0xf]
        %v909 = vld [vmem:[%s900 + $0x20] sm:$0xf]
        %v910 = vld [vmem:[%s900 + $0x24] sm:$0xf]
        %v911 = vld [vmem:[%s900 + $0x28] sm:$0xf]
        %v912 = vld [vmem:[%s900 + $0x2c] sm:$0xf]
        %v913 = vld [vmem:[%s900 + $0x30] sm:$0xf]
        %v914 = vld [vmem:[%s900 + $0x34] sm:$0xf]
        %v915 = vld [vmem:[%s900 + $0x38] sm:$0xf]
        %v916 = vld [vmem:[%s900 + $0x3c] sm:$0xf]
        %v933 = vunpack.c.l.b16 %v901
        %v934 = vunpack.c.l.b16 %v902
        %v935 = vunpack.c.l.b16 %v903
        %v936 = vunpack.c.l.b16 %v904
        %v937 = vunpack.c.l.b16 %v905
        %v938 = vunpack.c.l.b16 %v906
        %v939 = vunpack.c.l.b16 %v907
        %v940 = vunpack.c.l.b16 %v908
        %v941 = vunpack.c.l.b16 %v909
        %v942 = vunpack.c.l.b16 %v910
        %v943 = vunpack.c.l.b16 %v911
        %v944 = vunpack.c.l.b16 %v912
        %v945 = vunpack.c.l.b16 %v913
        %v946 = vunpack.c.l.b16 %v914
        %v947 = vunpack.c.l.b16 %v915
        %v948 = vunpack.c.l.b16 %v916
        %v949 = vpack.c.b16 %v934, %v933
        %v950 = vpack.c.b16 %v936, %v935
        %v951 = vpack.c.b16 %v938, %v937
        %v952 = vpack.c.b16 %v940, %v939
        %v953 = vpack.c.b16 %v942, %v941
        %v954 = vpack.c.b16 %v944, %v943
        %v955 = vpack.c.b16 %v946, %v945
        %v956 = vpack.c.b16 %v948, %v947
        %965 = vmatprep.subr.bf16.mxu0 0
        %966 = vmatpush1.bf16.msra.mxu0 %v949
        %967 = vmatprep.subr.bf16.mxu0 0
        %968 = vmatpush1.bf16.msra.mxu0 %v950
        %969 = vmatprep.subr.bf16.mxu0 0
        %970 = vmatpush1.bf16.msra.mxu0 %v951
        %971 = vmatprep.subr.bf16.mxu0 0
        %972 = vmatpush1.bf16.msra.mxu0 %v952
        %973 = vmatprep.subr.bf16.mxu0 0
        %974 = vmatpush1.bf16.msra.mxu0 %v953
        %975 = vmatprep.subr.bf16.mxu0 0
        %976 = vmatpush1.bf16.msra.mxu0 %v954
        %977 = vmatprep.subr.bf16.mxu0 0
        %978 = vmatpush1.bf16.msra.mxu0 %v955
        %979 = vmatprep.subr.bf16.mxu0 0
        %980 = vmatpush1.bf16.msra.mxu0 %v956
        %981 = vmatprep.subr.bf16.mxu0 0
        %982 = vmatpush1.bf16.msra.mxu0 0
        %983 = vmatprep.subr.bf16.mxu0 0
        %984 = vmatpush1.bf16.msra.mxu0 0
        %985 = vmatprep.subr.bf16.mxu0 0
        %986 = vmatpush1.bf16.msra.mxu0 0
        %987 = vmatprep.subr.bf16.mxu0 0
        %988 = vmatpush1.bf16.msra.mxu0 0
        %989 = vmatprep.subr.bf16.mxu0 0
        %990 = vmatpush1.bf16.msra.mxu0 0
        %991 = vmatprep.subr.bf16.mxu0 0
        %992 = vmatpush1.bf16.msra.mxu0 0
        %993 = vmatprep.subr.bf16.mxu0 0
        %994 = vmatpush1.bf16.msra.mxu0 0
        %995 = vmatprep.subr.bf16.mxu0 0
        %996 = vmatpush1.bf16.msra.mxu0 0
        %997 = vmatprep.mubr.bf16.mxu0 0
        %998 = vmatmul.mubr.bf16.gmra.mrb[0].mxu0 %v884
        %v999 = vpop.f32.mrb[0].mxu0
        %v1000 = vadd.f32 0.0, %v999
        %v1001 = vpop.f32.mrb[0].mxu0
        %v1002 = vpop.f32.mrb[0].mxu0
        %v1003 = vadd.f32 0.0, %v1002
        %v1004 = vpop.f32.mrb[0].mxu0
        %1005 = vmatprep.mubr.bf16.mxu0 0
        %1006 = vmatmul.mubr.bf16.gmra.mrb[0].mxu0 %v885
        %v1007 = vpop.f32.mrb[0].mxu0
        %v1008 = vadd.f32 0.0, %v1007
        %v1009 = vpop.f32.mrb[0].mxu0
        %v1010 = vpop.f32.mrb[0].mxu0
        %v1011 = vadd.f32 0.0, %v1010
        %v1012 = vpop.f32.mrb[0].mxu0
        %1013 = vmatprep.mubr.bf16.mxu0 0
        %1014 = vmatmul.mubr.bf16.gmra.mrb[0].mxu0 %v886
        %v1015 = vpop.f32.mrb[0].mxu0
        %v1016 = vadd.f32 0.0, %v1015
        %v1017 = vpop.f32.mrb[0].mxu0
        %v1018 = vpop.f32.mrb[0].mxu0
        %v1019 = vadd.f32 0.0, %v1018
        %v1020 = vpop.f32.mrb[0].mxu0
        %1021 = vmatprep.mubr.bf16.mxu0 0
        %1022 = vmatmul.mubr.bf16.gmra.mrb[0].mxu0 %v887
        %v1023 = vpop.f32.mrb[0].mxu0
        %v1024 = vadd.f32 0.0, %v1023
        %v1025 = vpop.f32.mrb[0].mxu0
        %v1026 = vpop.f32.mrb[0].mxu0
        %v1027 = vadd.f32 0.0, %v1026
        %v1028 = vpop.f32.mrb[0].mxu0
        %1029 = vmatprep.mubr.bf16.mxu0 0
        %1030 = vmatmul.mubr.bf16.gmra.mrb[0].mxu0 %v888
        %v1031 = vpop.f32.mrb[0].mxu0
        %v1032 = vadd.f32 0.0, %v1031
        %v1033 = vpop.f32.mrb[0].mxu0
        %v1034 = vpop.f32.mrb[0].mxu0
        %v1035 = vadd.f32 0.0, %v1034
        %v1036 = vpop.f32.mrb[0].mxu0
        %1037 = vmatprep.mubr.bf16.mxu0 0
        %1038 = vmatmul.mubr.bf16.gmra.mrb[0].mxu0 %v889
        %v1039 = vpop.f32.mrb[0].mxu0
        %v1040 = vadd.f32 0.0, %v1039
        %v1041 = vpop.f32.mrb[0].mxu0
        %v1042 = vpop.f32.mrb[0].mxu0
        %v1043 = vadd.f32 0.0, %v1042
        %v1044 = vpop.f32.mrb[0].mxu0
        %1045 = vmatprep.mubr.bf16.mxu0 0
        %1046 = vmatmul.mubr.bf16.gmra.mrb[0].mxu0 %v890
        %v1047 = vpop.f32.mrb[0].mxu0
        %v1048 = vadd.f32 0.0, %v1047
        %v1049 = vpop.f32.mrb[0].mxu0
        %v1050 = vpop.f32.mrb[0].mxu0
        %v1051 = vadd.f32 0.0, %v1050
        %v1052 = vpop.f32.mrb[0].mxu0
        %1053 = vmatprep.mubr.bf16.mxu0 0
        %1054 = vmatmul.mubr.bf16.gmra.mrb[0].mxu0 %v891
        %v1055 = vpop.f32.mrb[0].mxu0
        %v1056 = vadd.f32 0.0, %v1055
        %v1057 = vpop.f32.mrb[0].mxu0
        %v1058 = vpop.f32.mrb[0].mxu0
        %v1059 = vadd.f32 0.0, %v1058
        %v1060 = vpop.f32.mrb[0].mxu0
        %1061 = vmatprep.mubr.bf16.mxu0 0
        %1062 = vmatmul.mubr.bf16.gmra.mrb[0].mxu0 %v892
        %v1063 = vpop.f32.mrb[0].mxu0
        %v1064 = vadd.f32 0.0, %v1063
        %v1065 = vpop.f32.mrb[0].mxu0
        %v1066 = vpop.f32.mrb[0].mxu0
        %v1067 = vadd.f32 0.0, %v1066
        %v1068 = vpop.f32.mrb[0].mxu0
        %1069 = vmatprep.mubr.bf16.mxu0 0
        %1070 = vmatmul.mubr.bf16.gmra.mrb[0].mxu0 %v893
        %v1071 = vpop.f32.mrb[0].mxu0
        %v1072 = vadd.f32 0.0, %v1071
        %v1073 = vpop.f32.mrb[0].mxu0
        %v1074 = vpop.f32.mrb[0].mxu0
        %v1075 = vadd.f32 0.0, %v1074
        %v1076 = vpop.f32.mrb[0].mxu0
        %1077 = vmatprep.mubr.bf16.mxu0 0
        %1078 = vmatmul.mubr.bf16.gmra.mrb[0].mxu0 %v894
        %v1079 = vpop.f32.mrb[0].mxu0
        %v1080 = vadd.f32 0.0, %v1079
        %v1081 = vpop.f32.mrb[0].mxu0
        %v1082 = vpop.f32.mrb[0].mxu0
        %v1083 = vadd.f32 0.0, %v1082
        %v1084 = vpop.f32.mrb[0].mxu0
        %1085 = vmatprep.mubr.bf16.mxu0 0
        %1086 = vmatmul.mubr.bf16.gmra.mrb[0].mxu0 %v895
        %v1087 = vpop.f32.mrb[0].mxu0
        %v1088 = vadd.f32 0.0, %v1087
        %v1089 = vpop.f32.mrb[0].mxu0
        %v1090 = vpop.f32.mrb[0].mxu0
        %v1091 = vadd.f32 0.0, %v1090
        %v1092 = vpop.f32.mrb[0].mxu0
        %1093 = vmatprep.mubr.bf16.mxu0 0
        %1094 = vmatmul.mubr.bf16.gmra.mrb[0].mxu0 %v896
        %v1095 = vpop.f32.mrb[0].mxu0
        %v1096 = vadd.f32 0.0, %v1095
        %v1097 = vpop.f32.mrb[0].mxu0
        %v1098 = vpop.f32.mrb[0].mxu0
        %v1099 = vadd.f32 0.0, %v1098
        %v1100 = vpop.f32.mrb[0].mxu0
        %1101 = vmatprep.mubr.bf16.mxu0 0
        %1102 = vmatmul.mubr.bf16.gmra.mrb[0].mxu0 %v897
        %v1103 = vpop.f32.mrb[0].mxu0
        %v1104 = vadd.f32 0.0, %v1103
        %v1105 = vpop.f32.mrb[0].mxu0
        %v1106 = vpop.f32.mrb[0].mxu0
        %v1107 = vadd.f32 0.0, %v1106
        %v1108 = vpop.f32.mrb[0].mxu0
        %1109 = vmatprep.mubr.bf16.mxu0 0
        %1110 = vmatmul.mubr.bf16.gmra.mrb[0].mxu0 %v898
        %v1111 = vpop.f32.mrb[0].mxu0
        %v1112 = vadd.f32 0.0, %v1111
        %v1113 = vpop.f32.mrb[0].mxu0
        %v1114 = vpop.f32.mrb[0].mxu0
        %v1115 = vadd.f32 0.0, %v1114
        %v1116 = vpop.f32.mrb[0].mxu0
        %1117 = vmatprep.mubr.bf16.mxu0 0
        %1118 = vmatmul.mubr.bf16.gmra.mrb[0].mxu0 %v899
        %v1119 = vpop.f32.mrb[0].mxu0
        %v1120 = vadd.f32 0.0, %v1119
        %v1121 = vpop.f32.mrb[0].mxu0
        %v1122 = vpop.f32.mrb[0].mxu0
        %v1123 = vadd.f32 0.0, %v1122
        %v1124 = vpop.f32.mrb[0].mxu0
        %1125 = vdwg.mxu0
        %v1142 = vunpack.c.l.b16 %v836
        %v1143 = vunpack.c.l.b16 %v837
        %v1144 = vunpack.c.l.b16 %v838
        %v1145 = vunpack.c.l.b16 %v839
        %v1146 = vunpack.c.l.b16 %v840
        %v1147 = vunpack.c.l.b16 %v841
        %v1148 = vunpack.c.l.b16 %v842
        %v1149 = vunpack.c.l.b16 %v843
        %v1150 = vunpack.c.l.b16 %v844
        %v1151 = vunpack.c.l.b16 %v845
        %v1152 = vunpack.c.l.b16 %v846
        %v1153 = vunpack.c.l.b16 %v847
        %v1154 = vunpack.c.l.b16 %v848
        %v1155 = vunpack.c.l.b16 %v849
        %v1156 = vunpack.c.l.b16 %v850
        %v1157 = vunpack.c.l.b16 %v851
        %v1158 = vpack.c.b16 %v1143, %v1142
        %v1159 = vpack.c.b16 %v1145, %v1144
        %v1160 = vpack.c.b16 %v1147, %v1146
        %v1161 = vpack.c.b16 %v1149, %v1148
        %v1162 = vpack.c.b16 %v1151, %v1150
        %v1163 = vpack.c.b16 %v1153, %v1152
        %v1164 = vpack.c.b16 %v1155, %v1154
        %v1165 = vpack.c.b16 %v1157, %v1156
        %1174 = vmatprep.subr.bf16.mxu0 0
        %1175 = vmatpush1.bf16.msra.mxu0 %v1158
        %1176 = vmatprep.subr.bf16.mxu0 0
        %1177 = vmatpush1.bf16.msra.mxu0 %v1159
        %1178 = vmatprep.subr.bf16.mxu0 0
        %1179 = vmatpush1.bf16.msra.mxu0 %v1160
        %1180 = vmatprep.subr.bf16.mxu0 0
        %1181 = vmatpush1.bf16.msra.mxu0 %v1161
        %1182 = vmatprep.subr.bf16.mxu0 0
        %1183 = vmatpush1.bf16.msra.mxu0 %v1162
        %1184 = vmatprep.subr.bf16.mxu0 0
        %1185 = vmatpush1.bf16.msra.mxu0 %v1163
        %1186 = vmatprep.subr.bf16.mxu0 0
        %1187 = vmatpush1.bf16.msra.mxu0 %v1164
        %1188 = vmatprep.subr.bf16.mxu0 0
        %1189 = vmatpush1.bf16.msra.mxu0 %v1165
        %1190 = vmatprep.subr.bf16.mxu0 0
        %1191 = vmatpush1.bf16.msra.mxu0 0
        %1192 = vmatprep.subr.bf16.mxu0 0
        %1193 = vmatpush1.bf16.msra.mxu0 0
        %1194 = vmatprep.subr.bf16.mxu0 0
        %1195 = vmatpush1.bf16.msra.mxu0 0
        %1196 = vmatprep.subr.bf16.mxu0 0
        %1197 = vmatpush1.bf16.msra.mxu0 0
        %1198 = vmatprep.subr.bf16.mxu0 0
        %1199 = vmatpush1.bf16.msra.mxu0 0
        %1200 = vmatprep.subr.bf16.mxu0 0
        %1201 = vmatpush1.bf16.msra.mxu0 0
        %1202 = vmatprep.subr.bf16.mxu0 0
        %1203 = vmatpush1.bf16.msra.mxu0 0
        %1204 = vmatprep.subr.bf16.mxu0 0
        %1205 = vmatpush1.bf16.msra.mxu0 0
        %1206 = vmatprep.mubr.bf16.mxu0 0
        %1207 = vmatmul.mubr.bf16.gmra.mrb[0].mxu0 %v820
        %v1208 = vpop.f32.mrb[0].mxu0
        %v1209 = vadd.f32 %v1000, %v1208
        %v1210 = vpop.f32.mrb[0].mxu0
        %v1211 = vpop.f32.mrb[0].mxu0
        %v1212 = vadd.f32 %v1003, %v1211
        %v1213 = vpop.f32.mrb[0].mxu0
        %1214 = vmatprep.mubr.bf16.mxu0 0
        %1215 = vmatmul.mubr.bf16.gmra.mrb[0].mxu0 %v821
        %v1216 = vpop.f32.mrb[0].mxu0
        %v1217 = vadd.f32 %v1008, %v1216
        %v1218 = vpop.f32.mrb[0].mxu0
        %v1219 = vpop.f32.mrb[0].mxu0
        %v1220 = vadd.f32 %v1011, %v1219
        %v1221 = vpop.f32.mrb[0].mxu0
        %1222 = vmatprep.mubr.bf16.mxu0 0
        %1223 = vmatmul.mubr.bf16.gmra.mrb[0].mxu0 %v822
        %v1224 = vpop.f32.mrb[0].mxu0
        %v1225 = vadd.f32 %v1016, %v1224
        %v1226 = vpop.f32.mrb[0].mxu0
        %v1227 = vpop.f32.mrb[0].mxu0
        %v1228 = vadd.f32 %v1019, %v1227
        %v1229 = vpop.f32.mrb[0].mxu0
        %1230 = vmatprep.mubr.bf16.mxu0 0
        %1231 = vmatmul.mubr.bf16.gmra.mrb[0].mxu0 %v823
        %v1232 = vpop.f32.mrb[0].mxu0
        %v1233 = vadd.f32 %v1024, %v1232
        %v1234 = vpop.f32.mrb[0].mxu0
        %v1235 = vpop.f32.mrb[0].mxu0
        %v1236 = vadd.f32 %v1027, %v1235
        %v1237 = vpop.f32.mrb[0].mxu0
        %1238 = vmatprep.mubr.bf16.mxu0 0
        %1239 = vmatmul.mubr.bf16.gmra.mrb[0].mxu0 %v824
        %v1240 = vpop.f32.mrb[0].mxu0
        %v1241 = vadd.f32 %v1032, %v1240
        %v1242 = vpop.f32.mrb[0].mxu0
        %v1243 = vpop.f32.mrb[0].mxu0
        %v1244 = vadd.f32 %v1035, %v1243
        %v1245 = vpop.f32.mrb[0].mxu0
        %1246 = vmatprep.mubr.bf16.mxu0 0
        %1247 = vmatmul.mubr.bf16.gmra.mrb[0].mxu0 %v825
        %v1248 = vpop.f32.mrb[0].mxu0
        %v1249 = vadd.f32 %v1040, %v1248
        %v1250 = vpop.f32.mrb[0].mxu0
        %v1251 = vpop.f32.mrb[0].mxu0
        %v1252 = vadd.f32 %v1043, %v1251
        %v1253 = vpop.f32.mrb[0].mxu0
        %1254 = vmatprep.mubr.bf16.mxu0 0
        %1255 = vmatmul.mubr.bf16.gmra.mrb[0].mxu0 %v826
        %v1256 = vpop.f32.mrb[0].mxu0
        %v1257 = vadd.f32 %v1048, %v1256
        %v1258 = vpop.f32.mrb[0].mxu0
        %v1259 = vpop.f32.mrb[0].mxu0
        %v1260 = vadd.f32 %v1051, %v1259
        %v1261 = vpop.f32.mrb[0].mxu0
        %1262 = vmatprep.mubr.bf16.mxu0 0
        %1263 = vmatmul.mubr.bf16.gmra.mrb[0].mxu0 %v827
        %v1264 = vpop.f32.mrb[0].mxu0
        %v1265 = vadd.f32 %v1056, %v1264
        %v1266 = vpop.f32.mrb[0].mxu0
        %v1267 = vpop.f32.mrb[0].mxu0
        %v1268 = vadd.f32 %v1059, %v1267
        %v1269 = vpop.f32.mrb[0].mxu0
        %1270 = vmatprep.mubr.bf16.mxu0 0
        %1271 = vmatmul.mubr.bf16.gmra.mrb[0].mxu0 %v828
        %v1272 = vpop.f32.mrb[0].mxu0
        %v1273 = vadd.f32 %v1064, %v1272
        %v1274 = vpop.f32.mrb[0].mxu0
        %v1275 = vpop.f32.mrb[0].mxu0
        %v1276 = vadd.f32 %v1067, %v1275
        %v1277 = vpop.f32.mrb[0].mxu0
        %1278 = vmatprep.mubr.bf16.mxu0 0
        %1279 = vmatmul.mubr.bf16.gmra.mrb[0].mxu0 %v829
        %v1280 = vpop.f32.mrb[0].mxu0
        %v1281 = vadd.f32 %v1072, %v1280
        %v1282 = vpop.f32.mrb[0].mxu0
        %v1283 = vpop.f32.mrb[0].mxu0
        %v1284 = vadd.f32 %v1075, %v1283
        %v1285 = vpop.f32.mrb[0].mxu0
        %1286 = vmatprep.mubr.bf16.mxu0 0
        %1287 = vmatmul.mubr.bf16.gmra.mrb[0].mxu0 %v830
        %v1288 = vpop.f32.mrb[0].mxu0
        %v1289 = vadd.f32 %v1080, %v1288
        %v1290 = vpop.f32.mrb[0].mxu0
        %v1291 = vpop.f32.mrb[0].mxu0
        %v1292 = vadd.f32 %v1083, %v1291
        %v1293 = vpop.f32.mrb[0].mxu0
        %1294 = vmatprep.mubr.bf16.mxu0 0
        %1295 = vmatmul.mubr.bf16.gmra.mrb[0].mxu0 %v831
        %v1296 = vpop.f32.mrb[0].mxu0
        %v1297 = vadd.f32 %v1088, %v1296
        %v1298 = vpop.f32.mrb[0].mxu0
        %v1299 = vpop.f32.mrb[0].mxu0
        %v1300 = vadd.f32 %v1091, %v1299
        %v1301 = vpop.f32.mrb[0].mxu0
        %1302 = vmatprep.mubr.bf16.mxu0 0
        %1303 = vmatmul.mubr.bf16.gmra.mrb[0].mxu0 %v832
        %v1304 = vpop.f32.mrb[0].mxu0
        %v1305 = vadd.f32 %v1096, %v1304
        %v1306 = vpop.f32.mrb[0].mxu0
        %v1307 = vpop.f32.mrb[0].mxu0
        %v1308 = vadd.f32 %v1099, %v1307
        %v1309 = vpop.f32.mrb[0].mxu0
        %1310 = vmatprep.mubr.bf16.mxu0 0
        %1311 = vmatmul.mubr.bf16.gmra.mrb[0].mxu0 %v833
        %v1312 = vpop.f32.mrb[0].mxu0
        %v1313 = vadd.f32 %v1104, %v1312
        %v1314 = vpop.f32.mrb[0].mxu0
        %v1315 = vpop.f32.mrb[0].mxu0
        %v1316 = vadd.f32 %v1107, %v1315
        %v1317 = vpop.f32.mrb[0].mxu0
        %1318 = vmatprep.mubr.bf16.mxu0 0
        %1319 = vmatmul.mubr.bf16.gmra.mrb[0].mxu0 %v834
        %v1320 = vpop.f32.mrb[0].mxu0
        %v1321 = vadd.f32 %v1112, %v1320
        %v1322 = vpop.f32.mrb[0].mxu0
        %v1323 = vpop.f32.mrb[0].mxu0
        %v1324 = vadd.f32 %v1115, %v1323
        %v1325 = vpop.f32.mrb[0].mxu0
        %1326 = vmatprep.mubr.bf16.mxu0 0
        %1327 = vmatmul.mubr.bf16.gmra.mrb[0].mxu0 %v835
        %v1328 = vpop.f32.mrb[0].mxu0
        %v1329 = vadd.f32 %v1120, %v1328
        %v1330 = vpop.f32.mrb[0].mxu0
        %v1331 = vpop.f32.mrb[0].mxu0
        %v1332 = vadd.f32 %v1123, %v1331
        %v1333 = vpop.f32.mrb[0].mxu0
        %1334 = vdwg.mxu0
        %v1335 = vld [vmem:[%s694] sm:$0xff]
        %v1336 = vld [vmem:[%s694 + $0x8] sm:$0xff]
        %v1337 = vld [vmem:[%s694 + $0x10] sm:$0xff]
        %v1338 = vld [vmem:[%s694 + $0x18] sm:$0xff]
        %v1339 = vld [vmem:[%s694 + $0x20] sm:$0xff]
        %v1340 = vld [vmem:[%s694 + $0x28] sm:$0xff]
        %v1341 = vld [vmem:[%s694 + $0x30] sm:$0xff]
        %v1342 = vld [vmem:[%s694 + $0x38] sm:$0xff]
        %v1343 = vld [vmem:[%s694 + $0x40] sm:$0xff]
        %v1344 = vld [vmem:[%s694 + $0x48] sm:$0xff]
        %v1345 = vld [vmem:[%s694 + $0x50] sm:$0xff]
        %v1346 = vld [vmem:[%s694 + $0x58] sm:$0xff]
        %v1347 = vld [vmem:[%s694 + $0x60] sm:$0xff]
        %v1348 = vld [vmem:[%s694 + $0x68] sm:$0xff]
        %v1349 = vld [vmem:[%s694 + $0x70] sm:$0xff]
        %v1350 = vld [vmem:[%s694 + $0x78] sm:$0xff]
        %v1351 = vld [vmem:[%s694 + $0x80] sm:$0xff]
        %v1352 = vld [vmem:[%s694 + $0x88] sm:$0xff]
        %v1353 = vld [vmem:[%s694 + $0x90] sm:$0xff]
        %v1354 = vld [vmem:[%s694 + $0x98] sm:$0xff]
        %v1355 = vld [vmem:[%s694 + $0xa0] sm:$0xff]
        %v1356 = vld [vmem:[%s694 + $0xa8] sm:$0xff]
        %v1357 = vld [vmem:[%s694 + $0xb0] sm:$0xff]
        %v1358 = vld [vmem:[%s694 + $0xb8] sm:$0xff]
        %v1359 = vld [vmem:[%s694 + $0xc0] sm:$0xff]
        %v1360 = vld [vmem:[%s694 + $0xc8] sm:$0xff]
        %v1361 = vld [vmem:[%s694 + $0xd0] sm:$0xff]
        %v1362 = vld [vmem:[%s694 + $0xd8] sm:$0xff]
        %v1363 = vld [vmem:[%s694 + $0xe0] sm:$0xff]
        %v1364 = vld [vmem:[%s694 + $0xe8] sm:$0xff]
        %v1365 = vld [vmem:[%s694 + $0xf0] sm:$0xff]
        %v1366 = vld [vmem:[%s694 + $0xf8] sm:$0xff]
        %v1367 = vpack.c.bf16 %v1336, %v1335
        %v1368 = vpack.c.bf16 %v1338, %v1337
        %v1369 = vpack.c.bf16 %v1340, %v1339
        %v1370 = vpack.c.bf16 %v1342, %v1341
        %v1371 = vpack.c.bf16 %v1344, %v1343
        %v1372 = vpack.c.bf16 %v1346, %v1345
        %v1373 = vpack.c.bf16 %v1348, %v1347
        %v1374 = vpack.c.bf16 %v1350, %v1349
        %v1375 = vpack.c.bf16 %v1352, %v1351
        %v1376 = vpack.c.bf16 %v1354, %v1353
        %v1377 = vpack.c.bf16 %v1356, %v1355
        %v1378 = vpack.c.bf16 %v1358, %v1357
        %v1379 = vpack.c.bf16 %v1360, %v1359
        %v1380 = vpack.c.bf16 %v1362, %v1361
        %v1381 = vpack.c.bf16 %v1364, %v1363
        %v1382 = vpack.c.bf16 %v1366, %v1365
        %s1383 = scalar_lea.vmem [#allocation8], 128
        %v1384 = vld [vmem:[%s1383] sm:$0xf]
        %v1385 = vld [vmem:[%s1383 + $0x4] sm:$0xf]
        %v1386 = vld [vmem:[%s1383 + $0x8] sm:$0xf]
        %v1387 = vld [vmem:[%s1383 + $0xc] sm:$0xf]
        %v1388 = vld [vmem:[%s1383 + $0x10] sm:$0xf]
        %v1389 = vld [vmem:[%s1383 + $0x14] sm:$0xf]
        %v1390 = vld [vmem:[%s1383 + $0x18] sm:$0xf]
        %v1391 = vld [vmem:[%s1383 + $0x1c] sm:$0xf]
        %v1392 = vld [vmem:[%s1383 + $0x20] sm:$0xf]
        %v1393 = vld [vmem:[%s1383 + $0x24] sm:$0xf]
        %v1394 = vld [vmem:[%s1383 + $0x28] sm:$0xf]
        %v1395 = vld [vmem:[%s1383 + $0x2c] sm:$0xf]
        %v1396 = vld [vmem:[%s1383 + $0x30] sm:$0xf]
        %v1397 = vld [vmem:[%s1383 + $0x34] sm:$0xf]
        %v1398 = vld [vmem:[%s1383 + $0x38] sm:$0xf]
        %v1399 = vld [vmem:[%s1383 + $0x3c] sm:$0xf]
        %v1416 = vunpack.c.l.b16 %v1384
        %v1417 = vunpack.c.l.b16 %v1385
        %v1418 = vunpack.c.l.b16 %v1386
        %v1419 = vunpack.c.l.b16 %v1387
        %v1420 = vunpack.c.l.b16 %v1388
        %v1421 = vunpack.c.l.b16 %v1389
        %v1422 = vunpack.c.l.b16 %v1390
        %v1423 = vunpack.c.l.b16 %v1391
        %v1424 = vunpack.c.l.b16 %v1392
        %v1425 = vunpack.c.l.b16 %v1393
        %v1426 = vunpack.c.l.b16 %v1394
        %v1427 = vunpack.c.l.b16 %v1395
        %v1428 = vunpack.c.l.b16 %v1396
        %v1429 = vunpack.c.l.b16 %v1397
        %v1430 = vunpack.c.l.b16 %v1398
        %v1431 = vunpack.c.l.b16 %v1399
        %v1432 = vpack.c.b16 %v1417, %v1416
        %v1433 = vpack.c.b16 %v1419, %v1418
        %v1434 = vpack.c.b16 %v1421, %v1420
        %v1435 = vpack.c.b16 %v1423, %v1422
        %v1436 = vpack.c.b16 %v1425, %v1424
        %v1437 = vpack.c.b16 %v1427, %v1426
        %v1438 = vpack.c.b16 %v1429, %v1428
        %v1439 = vpack.c.b16 %v1431, %v1430
        %1448 = vmatprep.subr.bf16.mxu0 0
        %1449 = vmatpush1.bf16.msra.mxu0 %v1432
        %1450 = vmatprep.subr.bf16.mxu0 0
        %1451 = vmatpush1.bf16.msra.mxu0 %v1433
        %1452 = vmatprep.subr.bf16.mxu0 0
        %1453 = vmatpush1.bf16.msra.mxu0 %v1434
        %1454 = vmatprep.subr.bf16.mxu0 0
        %1455 = vmatpush1.bf16.msra.mxu0 %v1435
        %1456 = vmatprep.subr.bf16.mxu0 0
        %1457 = vmatpush1.bf16.msra.mxu0 %v1436
        %1458 = vmatprep.subr.bf16.mxu0 0
        %1459 = vmatpush1.bf16.msra.mxu0 %v1437
        %1460 = vmatprep.subr.bf16.mxu0 0
        %1461 = vmatpush1.bf16.msra.mxu0 %v1438
        %1462 = vmatprep.subr.bf16.mxu0 0
        %1463 = vmatpush1.bf16.msra.mxu0 %v1439
        %1464 = vmatprep.subr.bf16.mxu0 0
        %1465 = vmatpush1.bf16.msra.mxu0 0
        %1466 = vmatprep.subr.bf16.mxu0 0
        %1467 = vmatpush1.bf16.msra.mxu0 0
        %1468 = vmatprep.subr.bf16.mxu0 0
        %1469 = vmatpush1.bf16.msra.mxu0 0
        %1470 = vmatprep.subr.bf16.mxu0 0
        %1471 = vmatpush1.bf16.msra.mxu0 0
        %1472 = vmatprep.subr.bf16.mxu0 0
        %1473 = vmatpush1.bf16.msra.mxu0 0
        %1474 = vmatprep.subr.bf16.mxu0 0
        %1475 = vmatpush1.bf16.msra.mxu0 0
        %1476 = vmatprep.subr.bf16.mxu0 0
        %1477 = vmatpush1.bf16.msra.mxu0 0
        %1478 = vmatprep.subr.bf16.mxu0 0
        %1479 = vmatpush1.bf16.msra.mxu0 0
        %1480 = vmatprep.mubr.bf16.mxu0 0
        %1481 = vmatmul.mubr.bf16.gmra.mrb[0].mxu0 %v1367
        %v1482 = vpop.f32.mrb[0].mxu0
        %v1483 = vadd.f32 0.0, %v1482
        %v1484 = vpop.f32.mrb[0].mxu0
        %v1485 = vpop.f32.mrb[0].mxu0
        %v1486 = vadd.f32 0.0, %v1485
        %v1487 = vpop.f32.mrb[0].mxu0
        %1488 = vmatprep.mubr.bf16.mxu0 0
        %1489 = vmatmul.mubr.bf16.gmra.mrb[0].mxu0 %v1368
        %v1490 = vpop.f32.mrb[0].mxu0
        %v1491 = vadd.f32 0.0, %v1490
        %v1492 = vpop.f32.mrb[0].mxu0
        %v1493 = vpop.f32.mrb[0].mxu0
        %v1494 = vadd.f32 0.0, %v1493
        %v1495 = vpop.f32.mrb[0].mxu0
        %1496 = vmatprep.mubr.bf16.mxu0 0
        %1497 = vmatmul.mubr.bf16.gmra.mrb[0].mxu0 %v1369
        %v1498 = vpop.f32.mrb[0].mxu0
        %v1499 = vadd.f32 0.0, %v1498
        %v1500 = vpop.f32.mrb[0].mxu0
        %v1501 = vpop.f32.mrb[0].mxu0
        %v1502 = vadd.f32 0.0, %v1501
        %v1503 = vpop.f32.mrb[0].mxu0
        %1504 = vmatprep.mubr.bf16.mxu0 0
        %1505 = vmatmul.mubr.bf16.gmra.mrb[0].mxu0 %v1370
        %v1506 = vpop.f32.mrb[0].mxu0
        %v1507 = vadd.f32 0.0, %v1506
        %v1508 = vpop.f32.mrb[0].mxu0
        %v1509 = vpop.f32.mrb[0].mxu0
        %v1510 = vadd.f32 0.0, %v1509
        %v1511 = vpop.f32.mrb[0].mxu0
        %1512 = vmatprep.mubr.bf16.mxu0 0
        %1513 = vmatmul.mubr.bf16.gmra.mrb[0].mxu0 %v1371
        %v1514 = vpop.f32.mrb[0].mxu0
        %v1515 = vadd.f32 0.0, %v1514
        %v1516 = vpop.f32.mrb[0].mxu0
        %v1517 = vpop.f32.mrb[0].mxu0
        %v1518 = vadd.f32 0.0, %v1517
        %v1519 = vpop.f32.mrb[0].mxu0
        %1520 = vmatprep.mubr.bf16.mxu0 0
        %1521 = vmatmul.mubr.bf16.gmra.mrb[0].mxu0 %v1372
        %v1522 = vpop.f32.mrb[0].mxu0
        %v1523 = vadd.f32 0.0, %v1522
        %v1524 = vpop.f32.mrb[0].mxu0
        %v1525 = vpop.f32.mrb[0].mxu0
        %v1526 = vadd.f32 0.0, %v1525
        %v1527 = vpop.f32.mrb[0].mxu0
        %1528 = vmatprep.mubr.bf16.mxu0 0
        %1529 = vmatmul.mubr.bf16.gmra.mrb[0].mxu0 %v1373
        %v1530 = vpop.f32.mrb[0].mxu0
        %v1531 = vadd.f32 0.0, %v1530
        %v1532 = vpop.f32.mrb[0].mxu0
        %v1533 = vpop.f32.mrb[0].mxu0
        %v1534 = vadd.f32 0.0, %v1533
        %v1535 = vpop.f32.mrb[0].mxu0
        %1536 = vmatprep.mubr.bf16.mxu0 0
        %1537 = vmatmul.mubr.bf16.gmra.mrb[0].mxu0 %v1374
        %v1538 = vpop.f32.mrb[0].mxu0
        %v1539 = vadd.f32 0.0, %v1538
        %v1540 = vpop.f32.mrb[0].mxu0
        %v1541 = vpop.f32.mrb[0].mxu0
        %v1542 = vadd.f32 0.0, %v1541
        %v1543 = vpop.f32.mrb[0].mxu0
        %1544 = vmatprep.mubr.bf16.mxu0 0
        %1545 = vmatmul.mubr.bf16.gmra.mrb[0].mxu0 %v1375
        %v1546 = vpop.f32.mrb[0].mxu0
        %v1547 = vadd.f32 0.0, %v1546
        %v1548 = vpop.f32.mrb[0].mxu0
        %v1549 = vpop.f32.mrb[0].mxu0
        %v1550 = vadd.f32 0.0, %v1549
        %v1551 = vpop.f32.mrb[0].mxu0
        %1552 = vmatprep.mubr.bf16.mxu0 0
        %1553 = vmatmul.mubr.bf16.gmra.mrb[0].mxu0 %v1376
        %v1554 = vpop.f32.mrb[0].mxu0
        %v1555 = vadd.f32 0.0, %v1554
        %v1556 = vpop.f32.mrb[0].mxu0
        %v1557 = vpop.f32.mrb[0].mxu0
        %v1558 = vadd.f32 0.0, %v1557
        %v1559 = vpop.f32.mrb[0].mxu0
        %1560 = vmatprep.mubr.bf16.mxu0 0
        %1561 = vmatmul.mubr.bf16.gmra.mrb[0].mxu0 %v1377
        %v1562 = vpop.f32.mrb[0].mxu0
        %v1563 = vadd.f32 0.0, %v1562
        %v1564 = vpop.f32.mrb[0].mxu0
        %v1565 = vpop.f32.mrb[0].mxu0
        %v1566 = vadd.f32 0.0, %v1565
        %v1567 = vpop.f32.mrb[0].mxu0
        %1568 = vmatprep.mubr.bf16.mxu0 0
        %1569 = vmatmul.mubr.bf16.gmra.mrb[0].mxu0 %v1378
        %v1570 = vpop.f32.mrb[0].mxu0
        %v1571 = vadd.f32 0.0, %v1570
        %v1572 = vpop.f32.mrb[0].mxu0
        %v1573 = vpop.f32.mrb[0].mxu0
        %v1574 = vadd.f32 0.0, %v1573
        %v1575 = vpop.f32.mrb[0].mxu0
        %1576 = vmatprep.mubr.bf16.mxu0 0
        %1577 = vmatmul.mubr.bf16.gmra.mrb[0].mxu0 %v1379
        %v1578 = vpop.f32.mrb[0].mxu0
        %v1579 = vadd.f32 0.0, %v1578
        %v1580 = vpop.f32.mrb[0].mxu0
        %v1581 = vpop.f32.mrb[0].mxu0
        %v1582 = vadd.f32 0.0, %v1581
        %v1583 = vpop.f32.mrb[0].mxu0
        %1584 = vmatprep.mubr.bf16.mxu0 0
        %1585 = vmatmul.mubr.bf16.gmra.mrb[0].mxu0 %v1380
        %v1586 = vpop.f32.mrb[0].mxu0
        %v1587 = vadd.f32 0.0, %v1586
        %v1588 = vpop.f32.mrb[0].mxu0
        %v1589 = vpop.f32.mrb[0].mxu0
        %v1590 = vadd.f32 0.0, %v1589
        %v1591 = vpop.f32.mrb[0].mxu0
        %1592 = vmatprep.mubr.bf16.mxu0 0
        %1593 = vmatmul.mubr.bf16.gmra.mrb[0].mxu0 %v1381
        %v1594 = vpop.f32.mrb[0].mxu0
        %v1595 = vadd.f32 0.0, %v1594
        %v1596 = vpop.f32.mrb[0].mxu0
        %v1597 = vpop.f32.mrb[0].mxu0
        %v1598 = vadd.f32 0.0, %v1597
        %v1599 = vpop.f32.mrb[0].mxu0
        %1600 = vmatprep.mubr.bf16.mxu0 0
        %1601 = vmatmul.mubr.bf16.gmra.mrb[0].mxu0 %v1382
        %v1602 = vpop.f32.mrb[0].mxu0
        %v1603 = vadd.f32 0.0, %v1602
        %v1604 = vpop.f32.mrb[0].mxu0
        %v1605 = vpop.f32.mrb[0].mxu0
        %v1606 = vadd.f32 0.0, %v1605
        %v1607 = vpop.f32.mrb[0].mxu0
        %1608 = vdwg.mxu0
        %v1609 = vadd.f32 %v1209, %v1483
        %v1610 = vadd.f32 %v1212, %v1486
        %v1611 = vadd.f32 %v1217, %v1491
        %v1612 = vadd.f32 %v1220, %v1494
        %v1613 = vadd.f32 %v1225, %v1499
        %v1614 = vadd.f32 %v1228, %v1502
        %v1615 = vadd.f32 %v1233, %v1507
        %v1616 = vadd.f32 %v1236, %v1510
        %v1617 = vadd.f32 %v1241, %v1515
        %v1618 = vadd.f32 %v1244, %v1518
        %v1619 = vadd.f32 %v1249, %v1523
        %v1620 = vadd.f32 %v1252, %v1526
        %v1621 = vadd.f32 %v1257, %v1531
        %v1622 = vadd.f32 %v1260, %v1534
        %v1623 = vadd.f32 %v1265, %v1539
        %v1624 = vadd.f32 %v1268, %v1542
        %v1625 = vadd.f32 %v1273, %v1547
        %v1626 = vadd.f32 %v1276, %v1550
        %v1627 = vadd.f32 %v1281, %v1555
        %v1628 = vadd.f32 %v1284, %v1558
        %v1629 = vadd.f32 %v1289, %v1563
        %v1630 = vadd.f32 %v1292, %v1566
        %v1631 = vadd.f32 %v1297, %v1571
        %v1632 = vadd.f32 %v1300, %v1574
        %v1633 = vadd.f32 %v1305, %v1579
        %v1634 = vadd.f32 %v1308, %v1582
        %v1635 = vadd.f32 %v1313, %v1587
        %v1636 = vadd.f32 %v1316, %v1590
        %v1637 = vadd.f32 %v1321, %v1595
        %v1638 = vadd.f32 %v1324, %v1598
        %v1639 = vadd.f32 %v1329, %v1603
        %v1640 = vadd.f32 %v1332, %v1606
        %v1641 = vld [vmem:[#allocation10] sm:$0x1]
        %v1643 = vlaneseq
        %v1644 = vshrl.u32 %v1643, 7
        %v1645 = vsub.s32 0, %v1644
        %v1646 = vrot.slane %v1641, %v1645
        %v1648 = vadd.f32 %v1609, %v1646
        %v1649 = vadd.f32 %v1610, %v1646
        %v1650 = vadd.f32 %v1611, %v1646
        %v1651 = vadd.f32 %v1612, %v1646
        %v1652 = vadd.f32 %v1613, %v1646
        %v1653 = vadd.f32 %v1614, %v1646
        %v1654 = vadd.f32 %v1615, %v1646
        %v1655 = vadd.f32 %v1616, %v1646
        %v1656 = vadd.f32 %v1617, %v1646
        %v1657 = vadd.f32 %v1618, %v1646
        %v1658 = vadd.f32 %v1619, %v1646
        %v1659 = vadd.f32 %v1620, %v1646
        %v1660 = vadd.f32 %v1621, %v1646
        %v1661 = vadd.f32 %v1622, %v1646
        %v1662 = vadd.f32 %v1623, %v1646
        %v1663 = vadd.f32 %v1624, %v1646
        %v1664 = vadd.f32 %v1625, %v1646
        %v1665 = vadd.f32 %v1626, %v1646
        %v1666 = vadd.f32 %v1627, %v1646
        %v1667 = vadd.f32 %v1628, %v1646
        %v1668 = vadd.f32 %v1629, %v1646
        %v1669 = vadd.f32 %v1630, %v1646
        %v1670 = vadd.f32 %v1631, %v1646
        %v1671 = vadd.f32 %v1632, %v1646
        %v1672 = vadd.f32 %v1633, %v1646
        %v1673 = vadd.f32 %v1634, %v1646
        %v1674 = vadd.f32 %v1635, %v1646
        %v1675 = vadd.f32 %v1636, %v1646
        %v1676 = vadd.f32 %v1637, %v1646
        %v1677 = vadd.f32 %v1638, %v1646
        %v1678 = vadd.f32 %v1639, %v1646
        %v1679 = vadd.f32 %v1640, %v1646
        %v1680 = vld [vmem:[%s6] sm:$0x1]
        %v1681 = vld [vmem:[%s8] sm:$0x1]
        %v1682 = vld [vmem:[%s9] sm:$0x1]
        %v1683 = vld [vmem:[%s10] sm:$0x1]
        %v1684 = vld [vmem:[%s12] sm:$0xf]
        %v1685 = vld [vmem:[%s14] sm:$0x1]
        %v1686 = vld [vmem:[%s15] sm:$0x1]
        %v1687 = vld [vmem:[%s16] sm:$0x1]
        %v1688 = vpack.c.bf16 %v1649, %v1648
        %v1689 = vpack.c.bf16 %v1651, %v1650
        %v1690 = vpack.c.bf16 %v1653, %v1652
        %v1691 = vpack.c.bf16 %v1655, %v1654
        %v1692 = vpack.c.bf16 %v1657, %v1656
        %v1693 = vpack.c.bf16 %v1659, %v1658
        %v1694 = vpack.c.bf16 %v1661, %v1660
        %v1695 = vpack.c.bf16 %v1663, %v1662
        %v1696 = vpack.c.bf16 %v1665, %v1664
        %v1697 = vpack.c.bf16 %v1667, %v1666
        %v1698 = vpack.c.bf16 %v1669, %v1668
        %v1699 = vpack.c.bf16 %v1671, %v1670
        %v1700 = vpack.c.bf16 %v1673, %v1672
        %v1701 = vpack.c.bf16 %v1675, %v1674
        %v1702 = vpack.c.bf16 %v1677, %v1676
        %v1703 = vpack.c.bf16 %v1679, %v1678
        %v1704 = vld [vmem:[#allocation11] sm:$0xf]
        %v1705 = vld [vmem:[#allocation11 + $0x4] sm:$0xf]
        %v1706 = vld [vmem:[#allocation11 + $0x8] sm:$0xf]
        %v1707 = vld [vmem:[#allocation11 + $0xc] sm:$0xf]
        %v1708 = vld [vmem:[#allocation11 + $0x10] sm:$0xf]
        %v1709 = vld [vmem:[#allocation11 + $0x14] sm:$0xf]
        %v1710 = vld [vmem:[#allocation11 + $0x18] sm:$0xf]
        %v1711 = vld [vmem:[#allocation11 + $0x1c] sm:$0xf]
        %v1712 = vld [vmem:[#allocation11 + $0x20] sm:$0xf]
        %v1713 = vld [vmem:[#allocation11 + $0x24] sm:$0xf]
        %v1714 = vld [vmem:[#allocation11 + $0x28] sm:$0xf]
        %v1715 = vld [vmem:[#allocation11 + $0x2c] sm:$0xf]
        %v1716 = vld [vmem:[#allocation11 + $0x30] sm:$0xf]
        %v1717 = vld [vmem:[#allocation11 + $0x34] sm:$0xf]
        %v1718 = vld [vmem:[#allocation11 + $0x38] sm:$0xf]
        %v1719 = vld [vmem:[#allocation11 + $0x3c] sm:$0xf]
        %v1721 = vlaneseq
        %v1722 = vshrl.u32 %v1721, 7
        %v1723 = vsub.s32 0, %v1722
        %v1724 = vrot.slane %v1680, %v1723
        %v1742 = vunpack.c.l.b16 %v1704
        %v1743 = vunpack.c.l.b16 %v1705
        %v1744 = vunpack.c.l.b16 %v1706
        %v1745 = vunpack.c.l.b16 %v1707
        %v1746 = vunpack.c.l.b16 %v1708
        %v1747 = vunpack.c.l.b16 %v1709
        %v1748 = vunpack.c.l.b16 %v1710
        %v1749 = vunpack.c.l.b16 %v1711
        %v1750 = vunpack.c.l.b16 %v1712
        %v1751 = vunpack.c.l.b16 %v1713
        %v1752 = vunpack.c.l.b16 %v1714
        %v1753 = vunpack.c.l.b16 %v1715
        %v1754 = vunpack.c.l.b16 %v1716
        %v1755 = vunpack.c.l.b16 %v1717
        %v1756 = vunpack.c.l.b16 %v1718
        %v1757 = vunpack.c.l.b16 %v1719
        %v1758 = vpack.c.b16 %v1743, %v1742
        %v1759 = vpack.c.b16 %v1745, %v1744
        %v1760 = vpack.c.b16 %v1747, %v1746
        %v1761 = vpack.c.b16 %v1749, %v1748
        %v1762 = vpack.c.b16 %v1751, %v1750
        %v1763 = vpack.c.b16 %v1753, %v1752
        %v1764 = vpack.c.b16 %v1755, %v1754
        %v1765 = vpack.c.b16 %v1757, %v1756
        %1774 = vmatprep.subr.bf16.mxu0 0
        %1775 = vmatpush1.bf16.msra.mxu0 %v1758
        %1776 = vmatprep.subr.bf16.mxu0 0
        %1777 = vmatpush1.bf16.msra.mxu0 %v1759
        %1778 = vmatprep.subr.bf16.mxu0 0
        %1779 = vmatpush1.bf16.msra.mxu0 %v1760
        %1780 = vmatprep.subr.bf16.mxu0 0
        %1781 = vmatpush1.bf16.msra.mxu0 %v1761
        %1782 = vmatprep.subr.bf16.mxu0 0
        %1783 = vmatpush1.bf16.msra.mxu0 %v1762
        %1784 = vmatprep.subr.bf16.mxu0 0
        %1785 = vmatpush1.bf16.msra.mxu0 %v1763
        %1786 = vmatprep.subr.bf16.mxu0 0
        %1787 = vmatpush1.bf16.msra.mxu0 %v1764
        %1788 = vmatprep.subr.bf16.mxu0 0
        %1789 = vmatpush1.bf16.msra.mxu0 %v1765
        %1790 = vmatprep.subr.bf16.mxu0 0
        %1791 = vmatpush1.bf16.msra.mxu0 0
        %1792 = vmatprep.subr.bf16.mxu0 0
        %1793 = vmatpush1.bf16.msra.mxu0 0
        %1794 = vmatprep.subr.bf16.mxu0 0
        %1795 = vmatpush1.bf16.msra.mxu0 0
        %1796 = vmatprep.subr.bf16.mxu0 0
        %1797 = vmatpush1.bf16.msra.mxu0 0
        %1798 = vmatprep.subr.bf16.mxu0 0
        %1799 = vmatpush1.bf16.msra.mxu0 0
        %1800 = vmatprep.subr.bf16.mxu0 0
        %1801 = vmatpush1.bf16.msra.mxu0 0
        %1802 = vmatprep.subr.bf16.mxu0 0
        %1803 = vmatpush1.bf16.msra.mxu0 0
        %1804 = vmatprep.subr.bf16.mxu0 0
        %1805 = vmatpush1.bf16.msra.mxu0 0
        %1806 = vmatprep.mubr.bf16.mxu0 0
        %1807 = vmatmul.mubr.bf16.gmra.mrb[0].mxu0 %v1688
        %v1808 = vpop.f32.mrb[0].mxu0
        %v1809 = vadd.f32 %v1724, %v1808
        %v1810 = vpop.f32.mrb[0].mxu0
        %v1811 = vpop.f32.mrb[0].mxu0
        %v1812 = vadd.f32 %v1724, %v1811
        %v1813 = vpop.f32.mrb[0].mxu0
        %1814 = vmatprep.mubr.bf16.mxu0 0
        %1815 = vmatmul.mubr.bf16.gmra.mrb[0].mxu0 %v1689
        %v1816 = vpop.f32.mrb[0].mxu0
        %v1817 = vadd.f32 %v1724, %v1816
        %v1818 = vpop.f32.mrb[0].mxu0
        %v1819 = vpop.f32.mrb[0].mxu0
        %v1820 = vadd.f32 %v1724, %v1819
        %v1821 = vpop.f32.mrb[0].mxu0
        %1822 = vmatprep.mubr.bf16.mxu0 0
        %1823 = vmatmul.mubr.bf16.gmra.mrb[0].mxu0 %v1690
        %v1824 = vpop.f32.mrb[0].mxu0
        %v1825 = vadd.f32 %v1724, %v1824
        %v1826 = vpop.f32.mrb[0].mxu0
        %v1827 = vpop.f32.mrb[0].mxu0
        %v1828 = vadd.f32 %v1724, %v1827
        %v1829 = vpop.f32.mrb[0].mxu0
        %1830 = vmatprep.mubr.bf16.mxu0 0
        %1831 = vmatmul.mubr.bf16.gmra.mrb[0].mxu0 %v1691
        %v1832 = vpop.f32.mrb[0].mxu0
        %v1833 = vadd.f32 %v1724, %v1832
        %v1834 = vpop.f32.mrb[0].mxu0
        %v1835 = vpop.f32.mrb[0].mxu0
        %v1836 = vadd.f32 %v1724, %v1835
        %v1837 = vpop.f32.mrb[0].mxu0
        %1838 = vmatprep.mubr.bf16.mxu0 0
        %1839 = vmatmul.mubr.bf16.gmra.mrb[0].mxu0 %v1692
        %v1840 = vpop.f32.mrb[0].mxu0
        %v1841 = vadd.f32 %v1724, %v1840
        %v1842 = vpop.f32.mrb[0].mxu0
        %v1843 = vpop.f32.mrb[0].mxu0
        %v1844 = vadd.f32 %v1724, %v1843
        %v1845 = vpop.f32.mrb[0].mxu0
        %1846 = vmatprep.mubr.bf16.mxu0 0
        %1847 = vmatmul.mubr.bf16.gmra.mrb[0].mxu0 %v1693
        %v1848 = vpop.f32.mrb[0].mxu0
        %v1849 = vadd.f32 %v1724, %v1848
        %v1850 = vpop.f32.mrb[0].mxu0
        %v1851 = vpop.f32.mrb[0].mxu0
        %v1852 = vadd.f32 %v1724, %v1851
        %v1853 = vpop.f32.mrb[0].mxu0
        %1854 = vmatprep.mubr.bf16.mxu0 0
        %1855 = vmatmul.mubr.bf16.gmra.mrb[0].mxu0 %v1694
        %v1856 = vpop.f32.mrb[0].mxu0
        %v1857 = vadd.f32 %v1724, %v1856
        %v1858 = vpop.f32.mrb[0].mxu0
        %v1859 = vpop.f32.mrb[0].mxu0
        %v1860 = vadd.f32 %v1724, %v1859
        %v1861 = vpop.f32.mrb[0].mxu0
        %1862 = vmatprep.mubr.bf16.mxu0 0
        %1863 = vmatmul.mubr.bf16.gmra.mrb[0].mxu0 %v1695
        %v1864 = vpop.f32.mrb[0].mxu0
        %v1865 = vadd.f32 %v1724, %v1864
        %v1866 = vpop.f32.mrb[0].mxu0
        %v1867 = vpop.f32.mrb[0].mxu0
        %v1868 = vadd.f32 %v1724, %v1867
        %v1869 = vpop.f32.mrb[0].mxu0
        %1870 = vmatprep.mubr.bf16.mxu0 0
        %1871 = vmatmul.mubr.bf16.gmra.mrb[0].mxu0 %v1696
        %v1872 = vpop.f32.mrb[0].mxu0
        %v1873 = vadd.f32 %v1724, %v1872
        %v1874 = vpop.f32.mrb[0].mxu0
        %v1875 = vpop.f32.mrb[0].mxu0
        %v1876 = vadd.f32 %v1724, %v1875
        %v1877 = vpop.f32.mrb[0].mxu0
        %1878 = vmatprep.mubr.bf16.mxu0 0
        %1879 = vmatmul.mubr.bf16.gmra.mrb[0].mxu0 %v1697
        %v1880 = vpop.f32.mrb[0].mxu0
        %v1881 = vadd.f32 %v1724, %v1880
        %v1882 = vpop.f32.mrb[0].mxu0
        %v1883 = vpop.f32.mrb[0].mxu0
        %v1884 = vadd.f32 %v1724, %v1883
        %v1885 = vpop.f32.mrb[0].mxu0
        %1886 = vmatprep.mubr.bf16.mxu0 0
        %1887 = vmatmul.mubr.bf16.gmra.mrb[0].mxu0 %v1698
        %v1888 = vpop.f32.mrb[0].mxu0
        %v1889 = vadd.f32 %v1724, %v1888
        %v1890 = vpop.f32.mrb[0].mxu0
        %v1891 = vpop.f32.mrb[0].mxu0
        %v1892 = vadd.f32 %v1724, %v1891
        %v1893 = vpop.f32.mrb[0].mxu0
        %1894 = vmatprep.mubr.bf16.mxu0 0
        %1895 = vmatmul.mubr.bf16.gmra.mrb[0].mxu0 %v1699
        %v1896 = vpop.f32.mrb[0].mxu0
        %v1897 = vadd.f32 %v1724, %v1896
        %v1898 = vpop.f32.mrb[0].mxu0
        %v1899 = vpop.f32.mrb[0].mxu0
        %v1900 = vadd.f32 %v1724, %v1899
        %v1901 = vpop.f32.mrb[0].mxu0
        %1902 = vmatprep.mubr.bf16.mxu0 0
        %1903 = vmatmul.mubr.bf16.gmra.mrb[0].mxu0 %v1700
        %v1904 = vpop.f32.mrb[0].mxu0
        %v1905 = vadd.f32 %v1724, %v1904
        %v1906 = vpop.f32.mrb[0].mxu0
        %v1907 = vpop.f32.mrb[0].mxu0
        %v1908 = vadd.f32 %v1724, %v1907
        %v1909 = vpop.f32.mrb[0].mxu0
        %1910 = vmatprep.mubr.bf16.mxu0 0
        %1911 = vmatmul.mubr.bf16.gmra.mrb[0].mxu0 %v1701
        %v1912 = vpop.f32.mrb[0].mxu0
        %v1913 = vadd.f32 %v1724, %v1912
        %v1914 = vpop.f32.mrb[0].mxu0
        %v1915 = vpop.f32.mrb[0].mxu0
        %v1916 = vadd.f32 %v1724, %v1915
        %v1917 = vpop.f32.mrb[0].mxu0
        %1918 = vmatprep.mubr.bf16.mxu0 0
        %1919 = vmatmul.mubr.bf16.gmra.mrb[0].mxu0 %v1702
        %v1920 = vpop.f32.mrb[0].mxu0
        %v1921 = vadd.f32 %v1724, %v1920
        %v1922 = vpop.f32.mrb[0].mxu0
        %v1923 = vpop.f32.mrb[0].mxu0
        %v1924 = vadd.f32 %v1724, %v1923
        %v1925 = vpop.f32.mrb[0].mxu0
        %1926 = vmatprep.mubr.bf16.mxu0 0
        %1927 = vmatmul.mubr.bf16.gmra.mrb[0].mxu0 %v1703
        %v1928 = vpop.f32.mrb[0].mxu0
        %v1929 = vadd.f32 %v1724, %v1928
        %v1930 = vpop.f32.mrb[0].mxu0
        %v1931 = vpop.f32.mrb[0].mxu0
        %v1932 = vadd.f32 %v1724, %v1931
        %v1933 = vpop.f32.mrb[0].mxu0
        %1934 = vdwg.mxu0
        %v1935 = vpack.c.bf16 %v1812, %v1809
        %v1936 = vpack.c.bf16 %v1820, %v1817
        %v1937 = vpack.c.bf16 %v1828, %v1825
        %v1938 = vpack.c.bf16 %v1836, %v1833
        %v1939 = vpack.c.bf16 %v1844, %v1841
        %v1940 = vpack.c.bf16 %v1852, %v1849
        %v1941 = vpack.c.bf16 %v1860, %v1857
        %v1942 = vpack.c.bf16 %v1868, %v1865
        %v1943 = vpack.c.bf16 %v1876, %v1873
        %v1944 = vpack.c.bf16 %v1884, %v1881
        %v1945 = vpack.c.bf16 %v1892, %v1889
        %v1946 = vpack.c.bf16 %v1900, %v1897
        %v1947 = vpack.c.bf16 %v1908, %v1905
        %v1948 = vpack.c.bf16 %v1916, %v1913
        %v1949 = vpack.c.bf16 %v1924, %v1921
        %v1950 = vpack.c.bf16 %v1932, %v1929
        %v1951 = vld [vmem:[#allocation13] sm:$0xf]
        %v1952 = vld [vmem:[#allocation13 + $0x4] sm:$0xf]
        %v1953 = vld [vmem:[#allocation13 + $0x8] sm:$0xf]
        %v1954 = vld [vmem:[#allocation13 + $0xc] sm:$0xf]
        %v1955 = vld [vmem:[#allocation13 + $0x10] sm:$0xf]
        %v1956 = vld [vmem:[#allocation13 + $0x14] sm:$0xf]
        %v1957 = vld [vmem:[#allocation13 + $0x18] sm:$0xf]
        %v1958 = vld [vmem:[#allocation13 + $0x1c] sm:$0xf]
        %v1959 = vld [vmem:[#allocation13 + $0x20] sm:$0xf]
        %v1960 = vld [vmem:[#allocation13 + $0x24] sm:$0xf]
        %v1961 = vld [vmem:[#allocation13 + $0x28] sm:$0xf]
        %v1962 = vld [vmem:[#allocation13 + $0x2c] sm:$0xf]
        %v1963 = vld [vmem:[#allocation13 + $0x30] sm:$0xf]
        %v1964 = vld [vmem:[#allocation13 + $0x34] sm:$0xf]
        %v1965 = vld [vmem:[#allocation13 + $0x38] sm:$0xf]
        %v1966 = vld [vmem:[#allocation13 + $0x3c] sm:$0xf]
        %v1968 = vlaneseq
        %v1969 = vshrl.u32 %v1968, 7
        %v1970 = vsub.s32 0, %v1969
        %v1971 = vrot.slane %v1681, %v1970
        %v1989 = vunpack.c.l.b16 %v1951
        %v1990 = vunpack.c.l.b16 %v1952
        %v1991 = vunpack.c.l.b16 %v1953
        %v1992 = vunpack.c.l.b16 %v1954
        %v1993 = vunpack.c.l.b16 %v1955
        %v1994 = vunpack.c.l.b16 %v1956
        %v1995 = vunpack.c.l.b16 %v1957
        %v1996 = vunpack.c.l.b16 %v1958
        %v1997 = vunpack.c.l.b16 %v1959
        %v1998 = vunpack.c.l.b16 %v1960
        %v1999 = vunpack.c.l.b16 %v1961
        %v2000 = vunpack.c.l.b16 %v1962
        %v2001 = vunpack.c.l.b16 %v1963
        %v2002 = vunpack.c.l.b16 %v1964
        %v2003 = vunpack.c.l.b16 %v1965
        %v2004 = vunpack.c.l.b16 %v1966
        %v2005 = vpack.c.b16 %v1990, %v1989
        %v2006 = vpack.c.b16 %v1992, %v1991
        %v2007 = vpack.c.b16 %v1994, %v1993
        %v2008 = vpack.c.b16 %v1996, %v1995
        %v2009 = vpack.c.b16 %v1998, %v1997
        %v2010 = vpack.c.b16 %v2000, %v1999
        %v2011 = vpack.c.b16 %v2002, %v2001
        %v2012 = vpack.c.b16 %v2004, %v2003
        %2021 = vmatprep.subr.bf16.mxu0 0
        %2022 = vmatpush1.bf16.msra.mxu0 %v2005
        %2023 = vmatprep.subr.bf16.mxu0 0
        %2024 = vmatpush1.bf16.msra.mxu0 %v2006
        %2025 = vmatprep.subr.bf16.mxu0 0
        %2026 = vmatpush1.bf16.msra.mxu0 %v2007
        %2027 = vmatprep.subr.bf16.mxu0 0
        %2028 = vmatpush1.bf16.msra.mxu0 %v2008
        %2029 = vmatprep.subr.bf16.mxu0 0
        %2030 = vmatpush1.bf16.msra.mxu0 %v2009
        %2031 = vmatprep.subr.bf16.mxu0 0
        %2032 = vmatpush1.bf16.msra.mxu0 %v2010
        %2033 = vmatprep.subr.bf16.mxu0 0
        %2034 = vmatpush1.bf16.msra.mxu0 %v2011
        %2035 = vmatprep.subr.bf16.mxu0 0
        %2036 = vmatpush1.bf16.msra.mxu0 %v2012
        %2037 = vmatprep.subr.bf16.mxu0 0
        %2038 = vmatpush1.bf16.msra.mxu0 0
        %2039 = vmatprep.subr.bf16.mxu0 0
        %2040 = vmatpush1.bf16.msra.mxu0 0
        %2041 = vmatprep.subr.bf16.mxu0 0
        %2042 = vmatpush1.bf16.msra.mxu0 0
        %2043 = vmatprep.subr.bf16.mxu0 0
        %2044 = vmatpush1.bf16.msra.mxu0 0
        %2045 = vmatprep.subr.bf16.mxu0 0
        %2046 = vmatpush1.bf16.msra.mxu0 0
        %2047 = vmatprep.subr.bf16.mxu0 0
        %2048 = vmatpush1.bf16.msra.mxu0 0
        %2049 = vmatprep.subr.bf16.mxu0 0
        %2050 = vmatpush1.bf16.msra.mxu0 0
        %2051 = vmatprep.subr.bf16.mxu0 0
        %2052 = vmatpush1.bf16.msra.mxu0 0
        %2053 = vmatprep.mubr.bf16.mxu0 0
        %2054 = vmatmul.mubr.bf16.gmra.mrb[0].mxu0 %v1935
        %v2055 = vpop.f32.mrb[0].mxu0
        %v2056 = vadd.f32 %v1971, %v2055
        %v2057 = vpop.f32.mrb[0].mxu0
        %v2058 = vpop.f32.mrb[0].mxu0
        %v2059 = vadd.f32 %v1971, %v2058
        %v2060 = vpop.f32.mrb[0].mxu0
        %2061 = vmatprep.mubr.bf16.mxu0 0
        %2062 = vmatmul.mubr.bf16.gmra.mrb[0].mxu0 %v1936
        %v2063 = vpop.f32.mrb[0].mxu0
        %v2064 = vadd.f32 %v1971, %v2063
        %v2065 = vpop.f32.mrb[0].mxu0
        %v2066 = vpop.f32.mrb[0].mxu0
        %v2067 = vadd.f32 %v1971, %v2066
        %v2068 = vpop.f32.mrb[0].mxu0
        %2069 = vmatprep.mubr.bf16.mxu0 0
        %2070 = vmatmul.mubr.bf16.gmra.mrb[0].mxu0 %v1937
        %v2071 = vpop.f32.mrb[0].mxu0
        %v2072 = vadd.f32 %v1971, %v2071
        %v2073 = vpop.f32.mrb[0].mxu0
        %v2074 = vpop.f32.mrb[0].mxu0
        %v2075 = vadd.f32 %v1971, %v2074
        %v2076 = vpop.f32.mrb[0].mxu0
        %2077 = vmatprep.mubr.bf16.mxu0 0
        %2078 = vmatmul.mubr.bf16.gmra.mrb[0].mxu0 %v1938
        %v2079 = vpop.f32.mrb[0].mxu0
        %v2080 = vadd.f32 %v1971, %v2079
        %v2081 = vpop.f32.mrb[0].mxu0
        %v2082 = vpop.f32.mrb[0].mxu0
        %v2083 = vadd.f32 %v1971, %v2082
        %v2084 = vpop.f32.mrb[0].mxu0
        %2085 = vmatprep.mubr.bf16.mxu0 0
        %2086 = vmatmul.mubr.bf16.gmra.mrb[0].mxu0 %v1939
        %v2087 = vpop.f32.mrb[0].mxu0
        %v2088 = vadd.f32 %v1971, %v2087
        %v2089 = vpop.f32.mrb[0].mxu0
        %v2090 = vpop.f32.mrb[0].mxu0
        %v2091 = vadd.f32 %v1971, %v2090
        %v2092 = vpop.f32.mrb[0].mxu0
        %2093 = vmatprep.mubr.bf16.mxu0 0
        %2094 = vmatmul.mubr.bf16.gmra.mrb[0].mxu0 %v1940
        %v2095 = vpop.f32.mrb[0].mxu0
        %v2096 = vadd.f32 %v1971, %v2095
        %v2097 = vpop.f32.mrb[0].mxu0
        %v2098 = vpop.f32.mrb[0].mxu0
        %v2099 = vadd.f32 %v1971, %v2098
        %v2100 = vpop.f32.mrb[0].mxu0
        %2101 = vmatprep.mubr.bf16.mxu0 0
        %2102 = vmatmul.mubr.bf16.gmra.mrb[0].mxu0 %v1941
        %v2103 = vpop.f32.mrb[0].mxu0
        %v2104 = vadd.f32 %v1971, %v2103
        %v2105 = vpop.f32.mrb[0].mxu0
        %v2106 = vpop.f32.mrb[0].mxu0
        %v2107 = vadd.f32 %v1971, %v2106
        %v2108 = vpop.f32.mrb[0].mxu0
        %2109 = vmatprep.mubr.bf16.mxu0 0
        %2110 = vmatmul.mubr.bf16.gmra.mrb[0].mxu0 %v1942
        %v2111 = vpop.f32.mrb[0].mxu0
        %v2112 = vadd.f32 %v1971, %v2111
        %v2113 = vpop.f32.mrb[0].mxu0
        %v2114 = vpop.f32.mrb[0].mxu0
        %v2115 = vadd.f32 %v1971, %v2114
        %v2116 = vpop.f32.mrb[0].mxu0
        %2117 = vmatprep.mubr.bf16.mxu0 0
        %2118 = vmatmul.mubr.bf16.gmra.mrb[0].mxu0 %v1943
        %v2119 = vpop.f32.mrb[0].mxu0
        %v2120 = vadd.f32 %v1971, %v2119
        %v2121 = vpop.f32.mrb[0].mxu0
        %v2122 = vpop.f32.mrb[0].mxu0
        %v2123 = vadd.f32 %v1971, %v2122
        %v2124 = vpop.f32.mrb[0].mxu0
        %2125 = vmatprep.mubr.bf16.mxu0 0
        %2126 = vmatmul.mubr.bf16.gmra.mrb[0].mxu0 %v1944
        %v2127 = vpop.f32.mrb[0].mxu0
        %v2128 = vadd.f32 %v1971, %v2127
        %v2129 = vpop.f32.mrb[0].mxu0
        %v2130 = vpop.f32.mrb[0].mxu0
        %v2131 = vadd.f32 %v1971, %v2130
        %v2132 = vpop.f32.mrb[0].mxu0
        %2133 = vmatprep.mubr.bf16.mxu0 0
        %2134 = vmatmul.mubr.bf16.gmra.mrb[0].mxu0 %v1945
        %v2135 = vpop.f32.mrb[0].mxu0
        %v2136 = vadd.f32 %v1971, %v2135
        %v2137 = vpop.f32.mrb[0].mxu0
        %v2138 = vpop.f32.mrb[0].mxu0
        %v2139 = vadd.f32 %v1971, %v2138
        %v2140 = vpop.f32.mrb[0].mxu0
        %2141 = vmatprep.mubr.bf16.mxu0 0
        %2142 = vmatmul.mubr.bf16.gmra.mrb[0].mxu0 %v1946
        %v2143 = vpop.f32.mrb[0].mxu0
        %v2144 = vadd.f32 %v1971, %v2143
        %v2145 = vpop.f32.mrb[0].mxu0
        %v2146 = vpop.f32.mrb[0].mxu0
        %v2147 = vadd.f32 %v1971, %v2146
        %v2148 = vpop.f32.mrb[0].mxu0
        %2149 = vmatprep.mubr.bf16.mxu0 0
        %2150 = vmatmul.mubr.bf16.gmra.mrb[0].mxu0 %v1947
        %v2151 = vpop.f32.mrb[0].mxu0
        %v2152 = vadd.f32 %v1971, %v2151
        %v2153 = vpop.f32.mrb[0].mxu0
        %v2154 = vpop.f32.mrb[0].mxu0
        %v2155 = vadd.f32 %v1971, %v2154
        %v2156 = vpop.f32.mrb[0].mxu0
        %2157 = vmatprep.mubr.bf16.mxu0 0
        %2158 = vmatmul.mubr.bf16.gmra.mrb[0].mxu0 %v1948
        %v2159 = vpop.f32.mrb[0].mxu0
        %v2160 = vadd.f32 %v1971, %v2159
        %v2161 = vpop.f32.mrb[0].mxu0
        %v2162 = vpop.f32.mrb[0].mxu0
        %v2163 = vadd.f32 %v1971, %v2162
        %v2164 = vpop.f32.mrb[0].mxu0
        %2165 = vmatprep.mubr.bf16.mxu0 0
        %2166 = vmatmul.mubr.bf16.gmra.mrb[0].mxu0 %v1949
        %v2167 = vpop.f32.mrb[0].mxu0
        %v2168 = vadd.f32 %v1971, %v2167
        %v2169 = vpop.f32.mrb[0].mxu0
        %v2170 = vpop.f32.mrb[0].mxu0
        %v2171 = vadd.f32 %v1971, %v2170
        %v2172 = vpop.f32.mrb[0].mxu0
        %2173 = vmatprep.mubr.bf16.mxu0 0
        %2174 = vmatmul.mubr.bf16.gmra.mrb[0].mxu0 %v1950
        %v2175 = vpop.f32.mrb[0].mxu0
        %v2176 = vadd.f32 %v1971, %v2175
        %v2177 = vpop.f32.mrb[0].mxu0
        %v2178 = vpop.f32.mrb[0].mxu0
        %v2179 = vadd.f32 %v1971, %v2178
        %v2180 = vpop.f32.mrb[0].mxu0
        %2181 = vdwg.mxu0
        %v2182 = vadd.f32 %v1648, %v2056
        %v2183 = vadd.f32 %v1649, %v2059
        %v2184 = vadd.f32 %v1650, %v2064
        %v2185 = vadd.f32 %v1651, %v2067
        %v2186 = vadd.f32 %v1652, %v2072
        %v2187 = vadd.f32 %v1653, %v2075
        %v2188 = vadd.f32 %v1654, %v2080
        %v2189 = vadd.f32 %v1655, %v2083
        %v2190 = vadd.f32 %v1656, %v2088
        %v2191 = vadd.f32 %v1657, %v2091
        %v2192 = vadd.f32 %v1658, %v2096
        %v2193 = vadd.f32 %v1659, %v2099
        %v2194 = vadd.f32 %v1660, %v2104
        %v2195 = vadd.f32 %v1661, %v2107
        %v2196 = vadd.f32 %v1662, %v2112
        %v2197 = vadd.f32 %v1663, %v2115
        %v2198 = vadd.f32 %v1664, %v2120
        %v2199 = vadd.f32 %v1665, %v2123
        %v2200 = vadd.f32 %v1666, %v2128
        %v2201 = vadd.f32 %v1667, %v2131
        %v2202 = vadd.f32 %v1668, %v2136
        %v2203 = vadd.f32 %v1669, %v2139
        %v2204 = vadd.f32 %v1670, %v2144
        %v2205 = vadd.f32 %v1671, %v2147
        %v2206 = vadd.f32 %v1672, %v2152
        %v2207 = vadd.f32 %v1673, %v2155
        %v2208 = vadd.f32 %v1674, %v2160
        %v2209 = vadd.f32 %v1675, %v2163
        %v2210 = vadd.f32 %v1676, %v2168
        %v2211 = vadd.f32 %v1677, %v2171
        %v2212 = vadd.f32 %v1678, %v2176
        %v2213 = vadd.f32 %v1679, %v2179
        %2214 = vadd.xlane.f32.xlu0 %v2182
        %v2215 = vpop.xlane.xlu0 %2214
        %2216 = vadd.xlane.f32.xlu0 %v2183
        %v2217 = vpop.xlane.xlu0 %2216
        %2218 = vadd.xlane.f32.xlu0 %v2184
        %v2219 = vpop.xlane.xlu0 %2218
        %2220 = vadd.xlane.f32.xlu0 %v2185
        %v2221 = vpop.xlane.xlu0 %2220
        %2222 = vadd.xlane.f32.xlu0 %v2186
        %v2223 = vpop.xlane.xlu0 %2222
        %2224 = vadd.xlane.f32.xlu0 %v2187
        %v2225 = vpop.xlane.xlu0 %2224
        %2226 = vadd.xlane.f32.xlu0 %v2188
        %v2227 = vpop.xlane.xlu0 %2226
        %2228 = vadd.xlane.f32.xlu0 %v2189
        %v2229 = vpop.xlane.xlu0 %2228
        %2230 = vadd.xlane.f32.xlu0 %v2190
        %v2231 = vpop.xlane.xlu0 %2230
        %2232 = vadd.xlane.f32.xlu0 %v2191
        %v2233 = vpop.xlane.xlu0 %2232
        %2234 = vadd.xlane.f32.xlu0 %v2192
        %v2235 = vpop.xlane.xlu0 %2234
        %2236 = vadd.xlane.f32.xlu0 %v2193
        %v2237 = vpop.xlane.xlu0 %2236
        %2238 = vadd.xlane.f32.xlu0 %v2194
        %v2239 = vpop.xlane.xlu0 %2238
        %2240 = vadd.xlane.f32.xlu0 %v2195
        %v2241 = vpop.xlane.xlu0 %2240
        %2242 = vadd.xlane.f32.xlu0 %v2196
        %v2243 = vpop.xlane.xlu0 %2242
        %2244 = vadd.xlane.f32.xlu0 %v2197
        %v2245 = vpop.xlane.xlu0 %2244
        %2246 = vadd.xlane.f32.xlu0 %v2198
        %v2247 = vpop.xlane.xlu0 %2246
        %2248 = vadd.xlane.f32.xlu0 %v2199
        %v2249 = vpop.xlane.xlu0 %2248
        %2250 = vadd.xlane.f32.xlu0 %v2200
        %v2251 = vpop.xlane.xlu0 %2250
        %2252 = vadd.xlane.f32.xlu0 %v2201
        %v2253 = vpop.xlane.xlu0 %2252
        %2254 = vadd.xlane.f32.xlu0 %v2202
        %v2255 = vpop.xlane.xlu0 %2254
        %2256 = vadd.xlane.f32.xlu0 %v2203
        %v2257 = vpop.xlane.xlu0 %2256
        %2258 = vadd.xlane.f32.xlu0 %v2204
        %v2259 = vpop.xlane.xlu0 %2258
        %2260 = vadd.xlane.f32.xlu0 %v2205
        %v2261 = vpop.xlane.xlu0 %2260
        %2262 = vadd.xlane.f32.xlu0 %v2206
        %v2263 = vpop.xlane.xlu0 %2262
        %2264 = vadd.xlane.f32.xlu0 %v2207
        %v2265 = vpop.xlane.xlu0 %2264
        %2266 = vadd.xlane.f32.xlu0 %v2208
        %v2267 = vpop.xlane.xlu0 %2266
        %2268 = vadd.xlane.f32.xlu0 %v2209
        %v2269 = vpop.xlane.xlu0 %2268
        %2270 = vadd.xlane.f32.xlu0 %v2210
        %v2271 = vpop.xlane.xlu0 %2270
        %2272 = vadd.xlane.f32.xlu0 %v2211
        %v2273 = vpop.xlane.xlu0 %2272
        %2274 = vadd.xlane.f32.xlu0 %v2212
        %v2275 = vpop.xlane.xlu0 %2274
        %2276 = vadd.xlane.f32.xlu0 %v2213
        %v2277 = vpop.xlane.xlu0 %2276
        %v2278 = vrcp.pop 128.0
        %v2279 = vmul.f32 %v2215, %v2278
        %v2280 = vmul.f32 %v2217, %v2278
        %v2281 = vmul.f32 %v2219, %v2278
        %v2282 = vmul.f32 %v2221, %v2278
        %v2283 = vmul.f32 %v2223, %v2278
        %v2284 = vmul.f32 %v2225, %v2278
        %v2285 = vmul.f32 %v2227, %v2278
        %v2286 = vmul.f32 %v2229, %v2278
        %v2287 = vmul.f32 %v2231, %v2278
        %v2288 = vmul.f32 %v2233, %v2278
        %v2289 = vmul.f32 %v2235, %v2278
        %v2290 = vmul.f32 %v2237, %v2278
        %v2291 = vmul.f32 %v2239, %v2278
        %v2292 = vmul.f32 %v2241, %v2278
        %v2293 = vmul.f32 %v2243, %v2278
        %v2294 = vmul.f32 %v2245, %v2278
        %v2295 = vmul.f32 %v2247, %v2278
        %v2296 = vmul.f32 %v2249, %v2278
        %v2297 = vmul.f32 %v2251, %v2278
        %v2298 = vmul.f32 %v2253, %v2278
        %v2299 = vmul.f32 %v2255, %v2278
        %v2300 = vmul.f32 %v2257, %v2278
        %v2301 = vmul.f32 %v2259, %v2278
        %v2302 = vmul.f32 %v2261, %v2278
        %v2303 = vmul.f32 %v2263, %v2278
        %v2304 = vmul.f32 %v2265, %v2278
        %v2305 = vmul.f32 %v2267, %v2278
        %v2306 = vmul.f32 %v2269, %v2278
        %v2307 = vmul.f32 %v2271, %v2278
        %v2308 = vmul.f32 %v2273, %v2278
        %v2309 = vmul.f32 %v2275, %v2278
        %v2310 = vmul.f32 %v2277, %v2278
        %v2311 = vsub.f32 %v2182, %v2279
        %v2312 = vsub.f32 %v2183, %v2280
        %v2313 = vsub.f32 %v2184, %v2281
        %v2314 = vsub.f32 %v2185, %v2282
        %v2315 = vsub.f32 %v2186, %v2283
        %v2316 = vsub.f32 %v2187, %v2284
        %v2317 = vsub.f32 %v2188, %v2285
        %v2318 = vsub.f32 %v2189, %v2286
        %v2319 = vsub.f32 %v2190, %v2287
        %v2320 = vsub.f32 %v2191, %v2288
        %v2321 = vsub.f32 %v2192, %v2289
        %v2322 = vsub.f32 %v2193, %v2290
        %v2323 = vsub.f32 %v2194, %v2291
        %v2324 = vsub.f32 %v2195, %v2292
        %v2325 = vsub.f32 %v2196, %v2293
        %v2326 = vsub.f32 %v2197, %v2294
        %v2327 = vsub.f32 %v2198, %v2295
        %v2328 = vsub.f32 %v2199, %v2296
        %v2329 = vsub.f32 %v2200, %v2297
        %v2330 = vsub.f32 %v2201, %v2298
        %v2331 = vsub.f32 %v2202, %v2299
        %v2332 = vsub.f32 %v2203, %v2300
        %v2333 = vsub.f32 %v2204, %v2301
        %v2334 = vsub.f32 %v2205, %v2302
        %v2335 = vsub.f32 %v2206, %v2303
        %v2336 = vsub.f32 %v2207, %v2304
        %v2337 = vsub.f32 %v2208, %v2305
        %v2338 = vsub.f32 %v2209, %v2306
        %v2339 = vsub.f32 %v2210, %v2307
        %v2340 = vsub.f32 %v2211, %v2308
        %v2341 = vsub.f32 %v2212, %v2309
        %v2342 = vsub.f32 %v2213, %v2310
        %v2343 = vmul.f32 %v2311, %v2311
        %v2344 = vmul.f32 %v2312, %v2312
        %v2345 = vmul.f32 %v2313, %v2313
        %v2346 = vmul.f32 %v2314, %v2314
        %v2347 = vmul.f32 %v2315, %v2315
        %v2348 = vmul.f32 %v2316, %v2316
        %v2349 = vmul.f32 %v2317, %v2317
        %v2350 = vmul.f32 %v2318, %v2318
        %v2351 = vmul.f32 %v2319, %v2319
        %v2352 = vmul.f32 %v2320, %v2320
        %v2353 = vmul.f32 %v2321, %v2321
        %v2354 = vmul.f32 %v2322, %v2322
        %v2355 = vmul.f32 %v2323, %v2323
        %v2356 = vmul.f32 %v2324, %v2324
        %v2357 = vmul.f32 %v2325, %v2325
        %v2358 = vmul.f32 %v2326, %v2326
        %v2359 = vmul.f32 %v2327, %v2327
        %v2360 = vmul.f32 %v2328, %v2328
        %v2361 = vmul.f32 %v2329, %v2329
        %v2362 = vmul.f32 %v2330, %v2330
        %v2363 = vmul.f32 %v2331, %v2331
        %v2364 = vmul.f32 %v2332, %v2332
        %v2365 = vmul.f32 %v2333, %v2333
        %v2366 = vmul.f32 %v2334, %v2334
        %v2367 = vmul.f32 %v2335, %v2335
        %v2368 = vmul.f32 %v2336, %v2336
        %v2369 = vmul.f32 %v2337, %v2337
        %v2370 = vmul.f32 %v2338, %v2338
        %v2371 = vmul.f32 %v2339, %v2339
        %v2372 = vmul.f32 %v2340, %v2340
        %v2373 = vmul.f32 %v2341, %v2341
        %v2374 = vmul.f32 %v2342, %v2342
        %2375 = vadd.xlane.f32.xlu0 %v2343
        %v2376 = vpop.xlane.xlu0 %2375
        %2377 = vadd.xlane.f32.xlu0 %v2344
        %v2378 = vpop.xlane.xlu0 %2377
        %2379 = vadd.xlane.f32.xlu0 %v2345
        %v2380 = vpop.xlane.xlu0 %2379
        %2381 = vadd.xlane.f32.xlu0 %v2346
        %v2382 = vpop.xlane.xlu0 %2381
        %2383 = vadd.xlane.f32.xlu0 %v2347
        %v2384 = vpop.xlane.xlu0 %2383
        %2385 = vadd.xlane.f32.xlu0 %v2348
        %v2386 = vpop.xlane.xlu0 %2385
        %2387 = vadd.xlane.f32.xlu0 %v2349
        %v2388 = vpop.xlane.xlu0 %2387
        %2389 = vadd.xlane.f32.xlu0 %v2350
        %v2390 = vpop.xlane.xlu0 %2389
        %2391 = vadd.xlane.f32.xlu0 %v2351
        %v2392 = vpop.xlane.xlu0 %2391
        %2393 = vadd.xlane.f32.xlu0 %v2352
        %v2394 = vpop.xlane.xlu0 %2393
        %2395 = vadd.xlane.f32.xlu0 %v2353
        %v2396 = vpop.xlane.xlu0 %2395
        %2397 = vadd.xlane.f32.xlu0 %v2354
        %v2398 = vpop.xlane.xlu0 %2397
        %2399 = vadd.xlane.f32.xlu0 %v2355
        %v2400 = vpop.xlane.xlu0 %2399
        %2401 = vadd.xlane.f32.xlu0 %v2356
        %v2402 = vpop.xlane.xlu0 %2401
        %2403 = vadd.xlane.f32.xlu0 %v2357
        %v2404 = vpop.xlane.xlu0 %2403
        %2405 = vadd.xlane.f32.xlu0 %v2358
        %v2406 = vpop.xlane.xlu0 %2405
        %2407 = vadd.xlane.f32.xlu0 %v2359
        %v2408 = vpop.xlane.xlu0 %2407
        %2409 = vadd.xlane.f32.xlu0 %v2360
        %v2410 = vpop.xlane.xlu0 %2409
        %2411 = vadd.xlane.f32.xlu0 %v2361
        %v2412 = vpop.xlane.xlu0 %2411
        %2413 = vadd.xlane.f32.xlu0 %v2362
        %v2414 = vpop.xlane.xlu0 %2413
        %2415 = vadd.xlane.f32.xlu0 %v2363
        %v2416 = vpop.xlane.xlu0 %2415
        %2417 = vadd.xlane.f32.xlu0 %v2364
        %v2418 = vpop.xlane.xlu0 %2417
        %2419 = vadd.xlane.f32.xlu0 %v2365
        %v2420 = vpop.xlane.xlu0 %2419
        %2421 = vadd.xlane.f32.xlu0 %v2366
        %v2422 = vpop.xlane.xlu0 %2421
        %2423 = vadd.xlane.f32.xlu0 %v2367
        %v2424 = vpop.xlane.xlu0 %2423
        %2425 = vadd.xlane.f32.xlu0 %v2368
        %v2426 = vpop.xlane.xlu0 %2425
        %2427 = vadd.xlane.f32.xlu0 %v2369
        %v2428 = vpop.xlane.xlu0 %2427
        %2429 = vadd.xlane.f32.xlu0 %v2370
        %v2430 = vpop.xlane.xlu0 %2429
        %2431 = vadd.xlane.f32.xlu0 %v2371
        %v2432 = vpop.xlane.xlu0 %2431
        %2433 = vadd.xlane.f32.xlu0 %v2372
        %v2434 = vpop.xlane.xlu0 %2433
        %2435 = vadd.xlane.f32.xlu0 %v2373
        %v2436 = vpop.xlane.xlu0 %2435
        %2437 = vadd.xlane.f32.xlu0 %v2374
        %v2438 = vpop.xlane.xlu0 %2437
        %v2439 = vmul.f32 %v2376, %v2278
        %v2440 = vmul.f32 %v2378, %v2278
        %v2441 = vmul.f32 %v2380, %v2278
        %v2442 = vmul.f32 %v2382, %v2278
        %v2443 = vmul.f32 %v2384, %v2278
        %v2444 = vmul.f32 %v2386, %v2278
        %v2445 = vmul.f32 %v2388, %v2278
        %v2446 = vmul.f32 %v2390, %v2278
        %v2447 = vmul.f32 %v2392, %v2278
        %v2448 = vmul.f32 %v2394, %v2278
        %v2449 = vmul.f32 %v2396, %v2278
        %v2450 = vmul.f32 %v2398, %v2278
        %v2451 = vmul.f32 %v2400, %v2278
        %v2452 = vmul.f32 %v2402, %v2278
        %v2453 = vmul.f32 %v2404, %v2278
        %v2454 = vmul.f32 %v2406, %v2278
        %v2455 = vmul.f32 %v2408, %v2278
        %v2456 = vmul.f32 %v2410, %v2278
        %v2457 = vmul.f32 %v2412, %v2278
        %v2458 = vmul.f32 %v2414, %v2278
        %v2459 = vmul.f32 %v2416, %v2278
        %v2460 = vmul.f32 %v2418, %v2278
        %v2461 = vmul.f32 %v2420, %v2278
        %v2462 = vmul.f32 %v2422, %v2278
        %v2463 = vmul.f32 %v2424, %v2278
        %v2464 = vmul.f32 %v2426, %v2278
        %v2465 = vmul.f32 %v2428, %v2278
        %v2466 = vmul.f32 %v2430, %v2278
        %v2467 = vmul.f32 %v2432, %v2278
        %v2468 = vmul.f32 %v2434, %v2278
        %v2469 = vmul.f32 %v2436, %v2278
        %v2470 = vmul.f32 %v2438, %v2278
        %v2471 = vadd.f32 %v2439, 1e-05
        %v2472 = vadd.f32 %v2440, 1e-05
        %v2473 = vadd.f32 %v2441, 1e-05
        %v2474 = vadd.f32 %v2442, 1e-05
        %v2475 = vadd.f32 %v2443, 1e-05
        %v2476 = vadd.f32 %v2444, 1e-05
        %v2477 = vadd.f32 %v2445, 1e-05
        %v2478 = vadd.f32 %v2446, 1e-05
        %v2479 = vadd.f32 %v2447, 1e-05
        %v2480 = vadd.f32 %v2448, 1e-05
        %v2481 = vadd.f32 %v2449, 1e-05
        %v2482 = vadd.f32 %v2450, 1e-05
        %v2483 = vadd.f32 %v2451, 1e-05
        %v2484 = vadd.f32 %v2452, 1e-05
        %v2485 = vadd.f32 %v2453, 1e-05
        %v2486 = vadd.f32 %v2454, 1e-05
        %v2487 = vadd.f32 %v2455, 1e-05
        %v2488 = vadd.f32 %v2456, 1e-05
        %v2489 = vadd.f32 %v2457, 1e-05
        %v2490 = vadd.f32 %v2458, 1e-05
        %v2491 = vadd.f32 %v2459, 1e-05
        %v2492 = vadd.f32 %v2460, 1e-05
        %v2493 = vadd.f32 %v2461, 1e-05
        %v2494 = vadd.f32 %v2462, 1e-05
        %v2495 = vadd.f32 %v2463, 1e-05
        %v2496 = vadd.f32 %v2464, 1e-05
        %v2497 = vadd.f32 %v2465, 1e-05
        %v2498 = vadd.f32 %v2466, 1e-05
        %v2499 = vadd.f32 %v2467, 1e-05
        %v2500 = vadd.f32 %v2468, 1e-05
        %v2501 = vadd.f32 %v2469, 1e-05
        %v2502 = vadd.f32 %v2470, 1e-05
        %v2503 = vrsqrt.pop %v2471
        %v2504 = vrsqrt.pop %v2472
        %v2505 = vrsqrt.pop %v2473
        %v2506 = vrsqrt.pop %v2474
        %v2507 = vrsqrt.pop %v2475
        %v2508 = vrsqrt.pop %v2476
        %v2509 = vrsqrt.pop %v2477
        %v2510 = vrsqrt.pop %v2478
        %v2511 = vrsqrt.pop %v2479
        %v2512 = vrsqrt.pop %v2480
        %v2513 = vrsqrt.pop %v2481
        %v2514 = vrsqrt.pop %v2482
        %v2515 = vrsqrt.pop %v2483
        %v2516 = vrsqrt.pop %v2484
        %v2517 = vrsqrt.pop %v2485
        %v2518 = vrsqrt.pop %v2486
        %v2519 = vrsqrt.pop %v2487
        %v2520 = vrsqrt.pop %v2488
        %v2521 = vrsqrt.pop %v2489
        %v2522 = vrsqrt.pop %v2490
        %v2523 = vrsqrt.pop %v2491
        %v2524 = vrsqrt.pop %v2492
        %v2525 = vrsqrt.pop %v2493
        %v2526 = vrsqrt.pop %v2494
        %v2527 = vrsqrt.pop %v2495
        %v2528 = vrsqrt.pop %v2496
        %v2529 = vrsqrt.pop %v2497
        %v2530 = vrsqrt.pop %v2498
        %v2531 = vrsqrt.pop %v2499
        %v2532 = vrsqrt.pop %v2500
        %v2533 = vrsqrt.pop %v2501
        %v2534 = vrsqrt.pop %v2502
        %v2535 = vmul.f32 %v2311, %v2503
        %v2536 = vmul.f32 %v2312, %v2504
        %v2537 = vmul.f32 %v2313, %v2505
        %v2538 = vmul.f32 %v2314, %v2506
        %v2539 = vmul.f32 %v2315, %v2507
        %v2540 = vmul.f32 %v2316, %v2508
        %v2541 = vmul.f32 %v2317, %v2509
        %v2542 = vmul.f32 %v2318, %v2510
        %v2543 = vmul.f32 %v2319, %v2511
        %v2544 = vmul.f32 %v2320, %v2512
        %v2545 = vmul.f32 %v2321, %v2513
        %v2546 = vmul.f32 %v2322, %v2514
        %v2547 = vmul.f32 %v2323, %v2515
        %v2548 = vmul.f32 %v2324, %v2516
        %v2549 = vmul.f32 %v2325, %v2517
        %v2550 = vmul.f32 %v2326, %v2518
        %v2551 = vmul.f32 %v2327, %v2519
        %v2552 = vmul.f32 %v2328, %v2520
        %v2553 = vmul.f32 %v2329, %v2521
        %v2554 = vmul.f32 %v2330, %v2522
        %v2555 = vmul.f32 %v2331, %v2523
        %v2556 = vmul.f32 %v2332, %v2524
        %v2557 = vmul.f32 %v2333, %v2525
        %v2558 = vmul.f32 %v2334, %v2526
        %v2559 = vmul.f32 %v2335, %v2527
        %v2560 = vmul.f32 %v2336, %v2528
        %v2561 = vmul.f32 %v2337, %v2529
        %v2562 = vmul.f32 %v2338, %v2530
        %v2563 = vmul.f32 %v2339, %v2531
        %v2564 = vmul.f32 %v2340, %v2532
        %v2565 = vmul.f32 %v2341, %v2533
        %v2566 = vmul.f32 %v2342, %v2534
        %v2568 = vlaneseq
        %v2569 = vshrl.u32 %v2568, 7
        %v2570 = vsub.s32 0, %v2569
        %v2571 = vrot.slane %v1682, %v2570
        %v2573 = vmul.f32 %v2535, %v2571
        %v2574 = vmul.f32 %v2536, %v2571
        %v2575 = vmul.f32 %v2537, %v2571
        %v2576 = vmul.f32 %v2538, %v2571
        %v2577 = vmul.f32 %v2539, %v2571
        %v2578 = vmul.f32 %v2540, %v2571
        %v2579 = vmul.f32 %v2541, %v2571
        %v2580 = vmul.f32 %v2542, %v2571
        %v2581 = vmul.f32 %v2543, %v2571
        %v2582 = vmul.f32 %v2544, %v2571
        %v2583 = vmul.f32 %v2545, %v2571
        %v2584 = vmul.f32 %v2546, %v2571
        %v2585 = vmul.f32 %v2547, %v2571
        %v2586 = vmul.f32 %v2548, %v2571
        %v2587 = vmul.f32 %v2549, %v2571
        %v2588 = vmul.f32 %v2550, %v2571
        %v2589 = vmul.f32 %v2551, %v2571
        %v2590 = vmul.f32 %v2552, %v2571
        %v2591 = vmul.f32 %v2553, %v2571
        %v2592 = vmul.f32 %v2554, %v2571
        %v2593 = vmul.f32 %v2555, %v2571
        %v2594 = vmul.f32 %v2556, %v2571
        %v2595 = vmul.f32 %v2557, %v2571
        %v2596 = vmul.f32 %v2558, %v2571
        %v2597 = vmul.f32 %v2559, %v2571
        %v2598 = vmul.f32 %v2560, %v2571
        %v2599 = vmul.f32 %v2561, %v2571
        %v2600 = vmul.f32 %v2562, %v2571
        %v2601 = vmul.f32 %v2563, %v2571
        %v2602 = vmul.f32 %v2564, %v2571
        %v2603 = vmul.f32 %v2565, %v2571
        %v2604 = vmul.f32 %v2566, %v2571
        %v2606 = vlaneseq
        %v2607 = vshrl.u32 %v2606, 7
        %v2608 = vsub.s32 0, %v2607
        %v2609 = vrot.slane %v1683, %v2608
        %v2611 = vadd.f32 %v2573, %v2609
        %v2612 = vadd.f32 %v2574, %v2609
        %v2613 = vadd.f32 %v2575, %v2609
        %v2614 = vadd.f32 %v2576, %v2609
        %v2615 = vadd.f32 %v2577, %v2609
        %v2616 = vadd.f32 %v2578, %v2609
        %v2617 = vadd.f32 %v2579, %v2609
        %v2618 = vadd.f32 %v2580, %v2609
        %v2619 = vadd.f32 %v2581, %v2609
        %v2620 = vadd.f32 %v2582, %v2609
        %v2621 = vadd.f32 %v2583, %v2609
        %v2622 = vadd.f32 %v2584, %v2609
        %v2623 = vadd.f32 %v2585, %v2609
        %v2624 = vadd.f32 %v2586, %v2609
        %v2625 = vadd.f32 %v2587, %v2609
        %v2626 = vadd.f32 %v2588, %v2609
        %v2627 = vadd.f32 %v2589, %v2609
        %v2628 = vadd.f32 %v2590, %v2609
        %v2629 = vadd.f32 %v2591, %v2609
        %v2630 = vadd.f32 %v2592, %v2609
        %v2631 = vadd.f32 %v2593, %v2609
        %v2632 = vadd.f32 %v2594, %v2609
        %v2633 = vadd.f32 %v2595, %v2609
        %v2634 = vadd.f32 %v2596, %v2609
        %v2635 = vadd.f32 %v2597, %v2609
        %v2636 = vadd.f32 %v2598, %v2609
        %v2637 = vadd.f32 %v2599, %v2609
        %v2638 = vadd.f32 %v2600, %v2609
        %v2639 = vadd.f32 %v2601, %v2609
        %v2640 = vadd.f32 %v2602, %v2609
        %v2641 = vadd.f32 %v2603, %v2609
        %v2642 = vadd.f32 %v2604, %v2609
        %v2643 = vpack.c.bf16 %v2612, %v2611
        %v2644 = vpack.c.bf16 %v2614, %v2613
        %v2645 = vpack.c.bf16 %v2616, %v2615
        %v2646 = vpack.c.bf16 %v2618, %v2617
        %v2647 = vpack.c.bf16 %v2620, %v2619
        %v2648 = vpack.c.bf16 %v2622, %v2621
        %v2649 = vpack.c.bf16 %v2624, %v2623
        %v2650 = vpack.c.bf16 %v2626, %v2625
        %v2651 = vpack.c.bf16 %v2628, %v2627
        %v2652 = vpack.c.bf16 %v2630, %v2629
        %v2653 = vpack.c.bf16 %v2632, %v2631
        %v2654 = vpack.c.bf16 %v2634, %v2633
        %v2655 = vpack.c.bf16 %v2636, %v2635
        %v2656 = vpack.c.bf16 %v2638, %v2637
        %v2657 = vpack.c.bf16 %v2640, %v2639
        %v2658 = vpack.c.bf16 %v2642, %v2641
        %v2659 = vld [vmem:[#allocation14] sm:$0xff]
        %v2660 = vld [vmem:[#allocation14 + $0x8] sm:$0xff]
        %v2661 = vld [vmem:[#allocation14 + $0x10] sm:$0xff]
        %v2662 = vld [vmem:[#allocation14 + $0x18] sm:$0xff]
        %v2663 = vld [vmem:[#allocation14 + $0x20] sm:$0xff]
        %v2664 = vld [vmem:[#allocation14 + $0x28] sm:$0xff]
        %v2665 = vld [vmem:[#allocation14 + $0x30] sm:$0xff]
        %v2666 = vld [vmem:[#allocation14 + $0x38] sm:$0xff]
        %v2667 = vld [vmem:[#allocation14 + $0x40] sm:$0xff]
        %v2668 = vld [vmem:[#allocation14 + $0x48] sm:$0xff]
        %v2669 = vld [vmem:[#allocation14 + $0x50] sm:$0xff]
        %v2670 = vld [vmem:[#allocation14 + $0x58] sm:$0xff]
        %v2671 = vld [vmem:[#allocation14 + $0x60] sm:$0xff]
        %v2672 = vld [vmem:[#allocation14 + $0x68] sm:$0xff]
        %v2673 = vld [vmem:[#allocation14 + $0x70] sm:$0xff]
        %v2674 = vld [vmem:[#allocation14 + $0x78] sm:$0xff]
        %v2675 = vld [vmem:[#allocation14 + $0x80] sm:$0xff]
        %v2676 = vld [vmem:[#allocation14 + $0x88] sm:$0xff]
        %v2677 = vld [vmem:[#allocation14 + $0x90] sm:$0xff]
        %v2678 = vld [vmem:[#allocation14 + $0x98] sm:$0xff]
        %v2679 = vld [vmem:[#allocation14 + $0xa0] sm:$0xff]
        %v2680 = vld [vmem:[#allocation14 + $0xa8] sm:$0xff]
        %v2681 = vld [vmem:[#allocation14 + $0xb0] sm:$0xff]
        %v2682 = vld [vmem:[#allocation14 + $0xb8] sm:$0xff]
        %v2683 = vld [vmem:[#allocation14 + $0xc0] sm:$0xff]
        %v2684 = vld [vmem:[#allocation14 + $0xc8] sm:$0xff]
        %v2685 = vld [vmem:[#allocation14 + $0xd0] sm:$0xff]
        %v2686 = vld [vmem:[#allocation14 + $0xd8] sm:$0xff]
        %v2687 = vld [vmem:[#allocation14 + $0xe0] sm:$0xff]
        %v2688 = vld [vmem:[#allocation14 + $0xe8] sm:$0xff]
        %v2689 = vld [vmem:[#allocation14 + $0xf0] sm:$0xff]
        %v2690 = vld [vmem:[#allocation14 + $0xf8] sm:$0xff]
        %v2692 = vlaneseq
        %v2693 = vshrl.u32 %v2692, 7
        %v2694 = vsub.s32 0, %v2693
        %v2695 = vrot.slane %v1684, %v2694
        %v2696 = vlaneseq
        %v2697 = vshrl.u32 %v2696, 7
        %v2698 = vsub.s32 1, %v2697
        %v2699 = vrot.slane %v1684, %v2698
        %v2700 = vlaneseq
        %v2701 = vshrl.u32 %v2700, 7
        %v2702 = vsub.s32 2, %v2701
        %v2703 = vrot.slane %v1684, %v2702
        %v2704 = vlaneseq
        %v2705 = vshrl.u32 %v2704, 7
        %v2706 = vsub.s32 3, %v2705
        %v2707 = vrot.slane %v1684, %v2706
        %v2744 = vunpack.c.l.b16 %v2659
        %v2745 = vunpack.c.h.b16 %v2659
        %v2746 = vunpack.c.l.b16 %v2660
        %v2747 = vunpack.c.h.b16 %v2660
        %v2748 = vunpack.c.l.b16 %v2661
        %v2749 = vunpack.c.h.b16 %v2661
        %v2750 = vunpack.c.l.b16 %v2662
        %v2751 = vunpack.c.h.b16 %v2662
        %v2752 = vunpack.c.l.b16 %v2663
        %v2753 = vunpack.c.h.b16 %v2663
        %v2754 = vunpack.c.l.b16 %v2664
        %v2755 = vunpack.c.h.b16 %v2664
        %v2756 = vunpack.c.l.b16 %v2665
        %v2757 = vunpack.c.h.b16 %v2665
        %v2758 = vunpack.c.l.b16 %v2666
        %v2759 = vunpack.c.h.b16 %v2666
        %v2760 = vunpack.c.l.b16 %v2667
        %v2761 = vunpack.c.h.b16 %v2667
        %v2762 = vunpack.c.l.b16 %v2668
        %v2763 = vunpack.c.h.b16 %v2668
        %v2764 = vunpack.c.l.b16 %v2669
        %v2765 = vunpack.c.h.b16 %v2669
        %v2766 = vunpack.c.l.b16 %v2670
        %v2767 = vunpack.c.h.b16 %v2670
        %v2768 = vunpack.c.l.b16 %v2671
        %v2769 = vunpack.c.h.b16 %v2671
        %v2770 = vunpack.c.l.b16 %v2672
        %v2771 = vunpack.c.h.b16 %v2672
        %v2772 = vunpack.c.l.b16 %v2673
        %v2773 = vunpack.c.h.b16 %v2673
        %v2774 = vunpack.c.l.b16 %v2674
        %v2775 = vunpack.c.h.b16 %v2674
        %v2776 = vunpack.c.l.b16 %v2675
        %v2777 = vunpack.c.h.b16 %v2675
        %v2778 = vunpack.c.l.b16 %v2676
        %v2779 = vunpack.c.h.b16 %v2676
        %v2780 = vunpack.c.l.b16 %v2677
        %v2781 = vunpack.c.h.b16 %v2677
        %v2782 = vunpack.c.l.b16 %v2678
        %v2783 = vunpack.c.h.b16 %v2678
        %v2784 = vunpack.c.l.b16 %v2679
        %v2785 = vunpack.c.h.b16 %v2679
        %v2786 = vunpack.c.l.b16 %v2680
        %v2787 = vunpack.c.h.b16 %v2680
        %v2788 = vunpack.c.l.b16 %v2681
        %v2789 = vunpack.c.h.b16 %v2681
        %v2790 = vunpack.c.l.b16 %v2682
        %v2791 = vunpack.c.h.b16 %v2682
        %v2792 = vunpack.c.l.b16 %v2683
        %v2793 = vunpack.c.h.b16 %v2683
        %v2794 = vunpack.c.l.b16 %v2684
        %v2795 = vunpack.c.h.b16 %v2684
        %v2796 = vunpack.c.l.b16 %v2685
        %v2797 = vunpack.c.h.b16 %v2685
        %v2798 = vunpack.c.l.b16 %v2686
        %v2799 = vunpack.c.h.b16 %v2686
        %v2800 = vunpack.c.l.b16 %v2687
        %v2801 = vunpack.c.h.b16 %v2687
        %v2802 = vunpack.c.l.b16 %v2688
        %v2803 = vunpack.c.h.b16 %v2688
        %v2804 = vunpack.c.l.b16 %v2689
        %v2805 = vunpack.c.h.b16 %v2689
        %v2806 = vunpack.c.l.b16 %v2690
        %v2807 = vunpack.c.h.b16 %v2690
        %v2808 = vpack.c.b16 %v2748, %v2744
        %v2809 = vpack.c.b16 %v2749, %v2745
        %v2810 = vpack.c.b16 %v2750, %v2746
        %v2811 = vpack.c.b16 %v2751, %v2747
        %v2812 = vpack.c.b16 %v2756, %v2752
        %v2813 = vpack.c.b16 %v2757, %v2753
        %v2814 = vpack.c.b16 %v2758, %v2754
        %v2815 = vpack.c.b16 %v2759, %v2755
        %v2816 = vpack.c.b16 %v2764, %v2760
        %v2817 = vpack.c.b16 %v2765, %v2761
        %v2818 = vpack.c.b16 %v2766, %v2762
        %v2819 = vpack.c.b16 %v2767, %v2763
        %v2820 = vpack.c.b16 %v2772, %v2768
        %v2821 = vpack.c.b16 %v2773, %v2769
        %v2822 = vpack.c.b16 %v2774, %v2770
        %v2823 = vpack.c.b16 %v2775, %v2771
        %v2824 = vpack.c.b16 %v2780, %v2776
        %v2825 = vpack.c.b16 %v2781, %v2777
        %v2826 = vpack.c.b16 %v2782, %v2778
        %v2827 = vpack.c.b16 %v2783, %v2779
        %v2828 = vpack.c.b16 %v2788, %v2784
        %v2829 = vpack.c.b16 %v2789, %v2785
        %v2830 = vpack.c.b16 %v2790, %v2786
        %v2831 = vpack.c.b16 %v2791, %v2787
        %v2832 = vpack.c.b16 %v2796, %v2792
        %v2833 = vpack.c.b16 %v2797, %v2793
        %v2834 = vpack.c.b16 %v2798, %v2794
        %v2835 = vpack.c.b16 %v2799, %v2795
        %v2836 = vpack.c.b16 %v2804, %v2800
        %v2837 = vpack.c.b16 %v2805, %v2801
        %v2838 = vpack.c.b16 %v2806, %v2802
        %v2839 = vpack.c.b16 %v2807, %v2803
        %2872 = vmatprep.subr.bf16.mxu0 %v2809
        %2873 = vmatpush1.bf16.msra.mxu0 %v2808
        %2874 = vmatprep.subr.bf16.mxu0 %v2813
        %2875 = vmatpush1.bf16.msra.mxu0 %v2812
        %2876 = vmatprep.subr.bf16.mxu0 %v2817
        %2877 = vmatpush1.bf16.msra.mxu0 %v2816
        %2878 = vmatprep.subr.bf16.mxu0 %v2821
        %2879 = vmatpush1.bf16.msra.mxu0 %v2820
        %2880 = vmatprep.subr.bf16.mxu0 %v2825
        %2881 = vmatpush1.bf16.msra.mxu0 %v2824
        %2882 = vmatprep.subr.bf16.mxu0 %v2829
        %2883 = vmatpush1.bf16.msra.mxu0 %v2828
        %2884 = vmatprep.subr.bf16.mxu0 %v2833
        %2885 = vmatpush1.bf16.msra.mxu0 %v2832
        %2886 = vmatprep.subr.bf16.mxu0 %v2837
        %2887 = vmatpush1.bf16.msra.mxu0 %v2836
        %2888 = vmatprep.subr.bf16.mxu0 0
        %2889 = vmatpush1.bf16.msra.mxu0 0
        %2890 = vmatprep.subr.bf16.mxu0 0
        %2891 = vmatpush1.bf16.msra.mxu0 0
        %2892 = vmatprep.subr.bf16.mxu0 0
        %2893 = vmatpush1.bf16.msra.mxu0 0
        %2894 = vmatprep.subr.bf16.mxu0 0
        %2895 = vmatpush1.bf16.msra.mxu0 0
        %2896 = vmatprep.subr.bf16.mxu0 0
        %2897 = vmatpush1.bf16.msra.mxu0 0
        %2898 = vmatprep.subr.bf16.mxu0 0
        %2899 = vmatpush1.bf16.msra.mxu0 0
        %2900 = vmatprep.subr.bf16.mxu0 0
        %2901 = vmatpush1.bf16.msra.mxu0 0
        %2902 = vmatprep.subr.bf16.mxu0 0
        %2903 = vmatpush1.bf16.msra.mxu0 0
        %2904 = vmatprep.mubr.bf16.mxu0 0
        %2905 = vmatmul.mubr.bf16.gmra.mrb[0].mxu0 %v2643
        %v2906 = vpop.f32.mrb[0].mxu0
        %v2907 = vadd.f32 %v2695, %v2906
        %v2908 = vpop.f32.mrb[0].mxu0
        %v2909 = vadd.f32 %v2699, %v2908
        %v2910 = vpop.f32.mrb[0].mxu0
        %v2911 = vadd.f32 %v2695, %v2910
        %v2912 = vpop.f32.mrb[0].mxu0
        %v2913 = vadd.f32 %v2699, %v2912
        %2914 = vmatprep.mubr.bf16.mxu0 0
        %2915 = vmatmul.mubr.bf16.gmra.mrb[0].mxu0 %v2644
        %v2916 = vpop.f32.mrb[0].mxu0
        %v2917 = vadd.f32 %v2695, %v2916
        %v2918 = vpop.f32.mrb[0].mxu0
        %v2919 = vadd.f32 %v2699, %v2918
        %v2920 = vpop.f32.mrb[0].mxu0
        %v2921 = vadd.f32 %v2695, %v2920
        %v2922 = vpop.f32.mrb[0].mxu0
        %v2923 = vadd.f32 %v2699, %v2922
        %2924 = vmatprep.mubr.bf16.mxu0 0
        %2925 = vmatmul.mubr.bf16.gmra.mrb[0].mxu0 %v2645
        %v2926 = vpop.f32.mrb[0].mxu0
        %v2927 = vadd.f32 %v2695, %v2926
        %v2928 = vpop.f32.mrb[0].mxu0
        %v2929 = vadd.f32 %v2699, %v2928
        %v2930 = vpop.f32.mrb[0].mxu0
        %v2931 = vadd.f32 %v2695, %v2930
        %v2932 = vpop.f32.mrb[0].mxu0
        %v2933 = vadd.f32 %v2699, %v2932
        %2934 = vmatprep.mubr.bf16.mxu0 0
        %2935 = vmatmul.mubr.bf16.gmra.mrb[0].mxu0 %v2646
        %v2936 = vpop.f32.mrb[0].mxu0
        %v2937 = vadd.f32 %v2695, %v2936
        %v2938 = vpop.f32.mrb[0].mxu0
        %v2939 = vadd.f32 %v2699, %v2938
        %v2940 = vpop.f32.mrb[0].mxu0
        %v2941 = vadd.f32 %v2695, %v2940
        %v2942 = vpop.f32.mrb[0].mxu0
        %v2943 = vadd.f32 %v2699, %v2942
        %2944 = vmatprep.mubr.bf16.mxu0 0
        %2945 = vmatmul.mubr.bf16.gmra.mrb[0].mxu0 %v2647
        %v2946 = vpop.f32.mrb[0].mxu0
        %v2947 = vadd.f32 %v2695, %v2946
        %v2948 = vpop.f32.mrb[0].mxu0
        %v2949 = vadd.f32 %v2699, %v2948
        %v2950 = vpop.f32.mrb[0].mxu0
        %v2951 = vadd.f32 %v2695, %v2950
        %v2952 = vpop.f32.mrb[0].mxu0
        %v2953 = vadd.f32 %v2699, %v2952
        %2954 = vmatprep.mubr.bf16.mxu0 0
        %2955 = vmatmul.mubr.bf16.gmra.mrb[0].mxu0 %v2648
        %v2956 = vpop.f32.mrb[0].mxu0
        %v2957 = vadd.f32 %v2695, %v2956
        %v2958 = vpop.f32.mrb[0].mxu0
        %v2959 = vadd.f32 %v2699, %v2958
        %v2960 = vpop.f32.mrb[0].mxu0
        %v2961 = vadd.f32 %v2695, %v2960
        %v2962 = vpop.f32.mrb[0].mxu0
        %v2963 = vadd.f32 %v2699, %v2962
        %2964 = vmatprep.mubr.bf16.mxu0 0
        %2965 = vmatmul.mubr.bf16.gmra.mrb[0].mxu0 %v2649
        %v2966 = vpop.f32.mrb[0].mxu0
        %v2967 = vadd.f32 %v2695, %v2966
        %v2968 = vpop.f32.mrb[0].mxu0
        %v2969 = vadd.f32 %v2699, %v2968
        %v2970 = vpop.f32.mrb[0].mxu0
        %v2971 = vadd.f32 %v2695, %v2970
        %v2972 = vpop.f32.mrb[0].mxu0
        %v2973 = vadd.f32 %v2699, %v2972
        %2974 = vmatprep.mubr.bf16.mxu0 0
        %2975 = vmatmul.mubr.bf16.gmra.mrb[0].mxu0 %v2650
        %v2976 = vpop.f32.mrb[0].mxu0
        %v2977 = vadd.f32 %v2695, %v2976
        %v2978 = vpop.f32.mrb[0].mxu0
        %v2979 = vadd.f32 %v2699, %v2978
        %v2980 = vpop.f32.mrb[0].mxu0
        %v2981 = vadd.f32 %v2695, %v2980
        %v2982 = vpop.f32.mrb[0].mxu0
        %v2983 = vadd.f32 %v2699, %v2982
        %2984 = vmatprep.mubr.bf16.mxu0 0
        %2985 = vmatmul.mubr.bf16.gmra.mrb[0].mxu0 %v2651
        %v2986 = vpop.f32.mrb[0].mxu0
        %v2987 = vadd.f32 %v2695, %v2986
        %v2988 = vpop.f32.mrb[0].mxu0
        %v2989 = vadd.f32 %v2699, %v2988
        %v2990 = vpop.f32.mrb[0].mxu0
        %v2991 = vadd.f32 %v2695, %v2990
        %v2992 = vpop.f32.mrb[0].mxu0
        %v2993 = vadd.f32 %v2699, %v2992
        %2994 = vmatprep.mubr.bf16.mxu0 0
        %2995 = vmatmul.mubr.bf16.gmra.mrb[0].mxu0 %v2652
        %v2996 = vpop.f32.mrb[0].mxu0
        %v2997 = vadd.f32 %v2695, %v2996
        %v2998 = vpop.f32.mrb[0].mxu0
        %v2999 = vadd.f32 %v2699, %v2998
        %v3000 = vpop.f32.mrb[0].mxu0
        %v3001 = vadd.f32 %v2695, %v3000
        %v3002 = vpop.f32.mrb[0].mxu0
        %v3003 = vadd.f32 %v2699, %v3002
        %3004 = vmatprep.mubr.bf16.mxu0 0
        %3005 = vmatmul.mubr.bf16.gmra.mrb[0].mxu0 %v2653
        %v3006 = vpop.f32.mrb[0].mxu0
        %v3007 = vadd.f32 %v2695, %v3006
        %v3008 = vpop.f32.mrb[0].mxu0
        %v3009 = vadd.f32 %v2699, %v3008
        %v3010 = vpop.f32.mrb[0].mxu0
        %v3011 = vadd.f32 %v2695, %v3010
        %v3012 = vpop.f32.mrb[0].mxu0
        %v3013 = vadd.f32 %v2699, %v3012
        %3014 = vmatprep.mubr.bf16.mxu0 0
        %3015 = vmatmul.mubr.bf16.gmra.mrb[0].mxu0 %v2654
        %v3016 = vpop.f32.mrb[0].mxu0
        %v3017 = vadd.f32 %v2695, %v3016
        %v3018 = vpop.f32.mrb[0].mxu0
        %v3019 = vadd.f32 %v2699, %v3018
        %v3020 = vpop.f32.mrb[0].mxu0
        %v3021 = vadd.f32 %v2695, %v3020
        %v3022 = vpop.f32.mrb[0].mxu0
        %v3023 = vadd.f32 %v2699, %v3022
        %3024 = vmatprep.mubr.bf16.mxu0 0
        %3025 = vmatmul.mubr.bf16.gmra.mrb[0].mxu0 %v2655
        %v3026 = vpop.f32.mrb[0].mxu0
        %v3027 = vadd.f32 %v2695, %v3026
        %v3028 = vpop.f32.mrb[0].mxu0
        %v3029 = vadd.f32 %v2699, %v3028
        %v3030 = vpop.f32.mrb[0].mxu0
        %v3031 = vadd.f32 %v2695, %v3030
        %v3032 = vpop.f32.mrb[0].mxu0
        %v3033 = vadd.f32 %v2699, %v3032
        %3034 = vmatprep.mubr.bf16.mxu0 0
        %3035 = vmatmul.mubr.bf16.gmra.mrb[0].mxu0 %v2656
        %v3036 = vpop.f32.mrb[0].mxu0
        %v3037 = vadd.f32 %v2695, %v3036
        %v3038 = vpop.f32.mrb[0].mxu0
        %v3039 = vadd.f32 %v2699, %v3038
        %v3040 = vpop.f32.mrb[0].mxu0
        %v3041 = vadd.f32 %v2695, %v3040
        %v3042 = vpop.f32.mrb[0].mxu0
        %v3043 = vadd.f32 %v2699, %v3042
        %3044 = vmatprep.mubr.bf16.mxu0 0
        %3045 = vmatmul.mubr.bf16.gmra.mrb[0].mxu0 %v2657
        %v3046 = vpop.f32.mrb[0].mxu0
        %v3047 = vadd.f32 %v2695, %v3046
        %v3048 = vpop.f32.mrb[0].mxu0
        %v3049 = vadd.f32 %v2699, %v3048
        %v3050 = vpop.f32.mrb[0].mxu0
        %v3051 = vadd.f32 %v2695, %v3050
        %v3052 = vpop.f32.mrb[0].mxu0
        %v3053 = vadd.f32 %v2699, %v3052
        %3054 = vmatprep.mubr.bf16.mxu0 0
        %3055 = vmatmul.mubr.bf16.gmra.mrb[0].mxu0 %v2658
        %v3056 = vpop.f32.mrb[0].mxu0
        %v3057 = vadd.f32 %v2695, %v3056
        %v3058 = vpop.f32.mrb[0].mxu0
        %v3059 = vadd.f32 %v2699, %v3058
        %v3060 = vpop.f32.mrb[0].mxu0
        %v3061 = vadd.f32 %v2695, %v3060
        %v3062 = vpop.f32.mrb[0].mxu0
        %v3063 = vadd.f32 %v2699, %v3062
        %3064 = vdwg.mxu0
        %3065 = vmatprep.subr.bf16.mxu0 %v2811
        %3066 = vmatpush1.bf16.msra.mxu0 %v2810
        %3067 = vmatprep.subr.bf16.mxu0 %v2815
        %3068 = vmatpush1.bf16.msra.mxu0 %v2814
        %3069 = vmatprep.subr.bf16.mxu0 %v2819
        %3070 = vmatpush1.bf16.msra.mxu0 %v2818
        %3071 = vmatprep.subr.bf16.mxu0 %v2823
        %3072 = vmatpush1.bf16.msra.mxu0 %v2822
        %3073 = vmatprep.subr.bf16.mxu0 %v2827
        %3074 = vmatpush1.bf16.msra.mxu0 %v2826
        %3075 = vmatprep.subr.bf16.mxu0 %v2831
        %3076 = vmatpush1.bf16.msra.mxu0 %v2830
        %3077 = vmatprep.subr.bf16.mxu0 %v2835
        %3078 = vmatpush1.bf16.msra.mxu0 %v2834
        %3079 = vmatprep.subr.bf16.mxu0 %v2839
        %3080 = vmatpush1.bf16.msra.mxu0 %v2838
        %3081 = vmatprep.subr.bf16.mxu0 0
        %3082 = vmatpush1.bf16.msra.mxu0 0
        %3083 = vmatprep.subr.bf16.mxu0 0
        %3084 = vmatpush1.bf16.msra.mxu0 0
        %3085 = vmatprep.subr.bf16.mxu0 0
        %3086 = vmatpush1.bf16.msra.mxu0 0
        %3087 = vmatprep.subr.bf16.mxu0 0
        %3088 = vmatpush1.bf16.msra.mxu0 0
        %3089 = vmatprep.subr.bf16.mxu0 0
        %3090 = vmatpush1.bf16.msra.mxu0 0
        %3091 = vmatprep.subr.bf16.mxu0 0
        %3092 = vmatpush1.bf16.msra.mxu0 0
        %3093 = vmatprep.subr.bf16.mxu0 0
        %3094 = vmatpush1.bf16.msra.mxu0 0
        %3095 = vmatprep.subr.bf16.mxu0 0
        %3096 = vmatpush1.bf16.msra.mxu0 0
        %3097 = vmatprep.mubr.bf16.mxu0 0
        %3098 = vmatmul.mubr.bf16.gmra.mrb[0].mxu0 %v2643
        %v3099 = vpop.f32.mrb[0].mxu0
        %v3100 = vadd.f32 %v2703, %v3099
        %v3101 = vpop.f32.mrb[0].mxu0
        %v3102 = vadd.f32 %v2707, %v3101
        %v3103 = vpop.f32.mrb[0].mxu0
        %v3104 = vadd.f32 %v2703, %v3103
        %v3105 = vpop.f32.mrb[0].mxu0
        %v3106 = vadd.f32 %v2707, %v3105
        %3107 = vmatprep.mubr.bf16.mxu0 0
        %3108 = vmatmul.mubr.bf16.gmra.mrb[0].mxu0 %v2644
        %v3109 = vpop.f32.mrb[0].mxu0
        %v3110 = vadd.f32 %v2703, %v3109
        %v3111 = vpop.f32.mrb[0].mxu0
        %v3112 = vadd.f32 %v2707, %v3111
        %v3113 = vpop.f32.mrb[0].mxu0
        %v3114 = vadd.f32 %v2703, %v3113
        %v3115 = vpop.f32.mrb[0].mxu0
        %v3116 = vadd.f32 %v2707, %v3115
        %3117 = vmatprep.mubr.bf16.mxu0 0
        %3118 = vmatmul.mubr.bf16.gmra.mrb[0].mxu0 %v2645
        %v3119 = vpop.f32.mrb[0].mxu0
        %v3120 = vadd.f32 %v2703, %v3119
        %v3121 = vpop.f32.mrb[0].mxu0
        %v3122 = vadd.f32 %v2707, %v3121
        %v3123 = vpop.f32.mrb[0].mxu0
        %v3124 = vadd.f32 %v2703, %v3123
        %v3125 = vpop.f32.mrb[0].mxu0
        %v3126 = vadd.f32 %v2707, %v3125
        %3127 = vmatprep.mubr.bf16.mxu0 0
        %3128 = vmatmul.mubr.bf16.gmra.mrb[0].mxu0 %v2646
        %v3129 = vpop.f32.mrb[0].mxu0
        %v3130 = vadd.f32 %v2703, %v3129
        %v3131 = vpop.f32.mrb[0].mxu0
        %v3132 = vadd.f32 %v2707, %v3131
        %v3133 = vpop.f32.mrb[0].mxu0
        %v3134 = vadd.f32 %v2703, %v3133
        %v3135 = vpop.f32.mrb[0].mxu0
        %v3136 = vadd.f32 %v2707, %v3135
        %3137 = vmatprep.mubr.bf16.mxu0 0
        %3138 = vmatmul.mubr.bf16.gmra.mrb[0].mxu0 %v2647
        %v3139 = vpop.f32.mrb[0].mxu0
        %v3140 = vadd.f32 %v2703, %v3139
        %v3141 = vpop.f32.mrb[0].mxu0
        %v3142 = vadd.f32 %v2707, %v3141
        %v3143 = vpop.f32.mrb[0].mxu0
        %v3144 = vadd.f32 %v2703, %v3143
        %v3145 = vpop.f32.mrb[0].mxu0
        %v3146 = vadd.f32 %v2707, %v3145
        %3147 = vmatprep.mubr.bf16.mxu0 0
        %3148 = vmatmul.mubr.bf16.gmra.mrb[0].mxu0 %v2648
        %v3149 = vpop.f32.mrb[0].mxu0
        %v3150 = vadd.f32 %v2703, %v3149
        %v3151 = vpop.f32.mrb[0].mxu0
        %v3152 = vadd.f32 %v2707, %v3151
        %v3153 = vpop.f32.mrb[0].mxu0
        %v3154 = vadd.f32 %v2703, %v3153
        %v3155 = vpop.f32.mrb[0].mxu0
        %v3156 = vadd.f32 %v2707, %v3155
        %3157 = vmatprep.mubr.bf16.mxu0 0
        %3158 = vmatmul.mubr.bf16.gmra.mrb[0].mxu0 %v2649
        %v3159 = vpop.f32.mrb[0].mxu0
        %v3160 = vadd.f32 %v2703, %v3159
        %v3161 = vpop.f32.mrb[0].mxu0
        %v3162 = vadd.f32 %v2707, %v3161
        %v3163 = vpop.f32.mrb[0].mxu0
        %v3164 = vadd.f32 %v2703, %v3163
        %v3165 = vpop.f32.mrb[0].mxu0
        %v3166 = vadd.f32 %v2707, %v3165
        %3167 = vmatprep.mubr.bf16.mxu0 0
        %3168 = vmatmul.mubr.bf16.gmra.mrb[0].mxu0 %v2650
        %v3169 = vpop.f32.mrb[0].mxu0
        %v3170 = vadd.f32 %v2703, %v3169
        %v3171 = vpop.f32.mrb[0].mxu0
        %v3172 = vadd.f32 %v2707, %v3171
        %v3173 = vpop.f32.mrb[0].mxu0
        %v3174 = vadd.f32 %v2703, %v3173
        %v3175 = vpop.f32.mrb[0].mxu0
        %v3176 = vadd.f32 %v2707, %v3175
        %3177 = vmatprep.mubr.bf16.mxu0 0
        %3178 = vmatmul.mubr.bf16.gmra.mrb[0].mxu0 %v2651
        %v3179 = vpop.f32.mrb[0].mxu0
        %v3180 = vadd.f32 %v2703, %v3179
        %v3181 = vpop.f32.mrb[0].mxu0
        %v3182 = vadd.f32 %v2707, %v3181
        %v3183 = vpop.f32.mrb[0].mxu0
        %v3184 = vadd.f32 %v2703, %v3183
        %v3185 = vpop.f32.mrb[0].mxu0
        %v3186 = vadd.f32 %v2707, %v3185
        %3187 = vmatprep.mubr.bf16.mxu0 0
        %3188 = vmatmul.mubr.bf16.gmra.mrb[0].mxu0 %v2652
        %v3189 = vpop.f32.mrb[0].mxu0
        %v3190 = vadd.f32 %v2703, %v3189
        %v3191 = vpop.f32.mrb[0].mxu0
        %v3192 = vadd.f32 %v2707, %v3191
        %v3193 = vpop.f32.mrb[0].mxu0
        %v3194 = vadd.f32 %v2703, %v3193
        %v3195 = vpop.f32.mrb[0].mxu0
        %v3196 = vadd.f32 %v2707, %v3195
        %3197 = vmatprep.mubr.bf16.mxu0 0
        %3198 = vmatmul.mubr.bf16.gmra.mrb[0].mxu0 %v2653
        %v3199 = vpop.f32.mrb[0].mxu0
        %v3200 = vadd.f32 %v2703, %v3199
        %v3201 = vpop.f32.mrb[0].mxu0
        %v3202 = vadd.f32 %v2707, %v3201
        %v3203 = vpop.f32.mrb[0].mxu0
        %v3204 = vadd.f32 %v2703, %v3203
        %v3205 = vpop.f32.mrb[0].mxu0
        %v3206 = vadd.f32 %v2707, %v3205
        %3207 = vmatprep.mubr.bf16.mxu0 0
        %3208 = vmatmul.mubr.bf16.gmra.mrb[0].mxu0 %v2654
        %v3209 = vpop.f32.mrb[0].mxu0
        %v3210 = vadd.f32 %v2703, %v3209
        %v3211 = vpop.f32.mrb[0].mxu0
        %v3212 = vadd.f32 %v2707, %v3211
        %v3213 = vpop.f32.mrb[0].mxu0
        %v3214 = vadd.f32 %v2703, %v3213
        %v3215 = vpop.f32.mrb[0].mxu0
        %v3216 = vadd.f32 %v2707, %v3215
        %3217 = vmatprep.mubr.bf16.mxu0 0
        %3218 = vmatmul.mubr.bf16.gmra.mrb[0].mxu0 %v2655
        %v3219 = vpop.f32.mrb[0].mxu0
        %v3220 = vadd.f32 %v2703, %v3219
        %v3221 = vpop.f32.mrb[0].mxu0
        %v3222 = vadd.f32 %v2707, %v3221
        %v3223 = vpop.f32.mrb[0].mxu0
        %v3224 = vadd.f32 %v2703, %v3223
        %v3225 = vpop.f32.mrb[0].mxu0
        %v3226 = vadd.f32 %v2707, %v3225
        %3227 = vmatprep.mubr.bf16.mxu0 0
        %3228 = vmatmul.mubr.bf16.gmra.mrb[0].mxu0 %v2656
        %v3229 = vpop.f32.mrb[0].mxu0
        %v3230 = vadd.f32 %v2703, %v3229
        %v3231 = vpop.f32.mrb[0].mxu0
        %v3232 = vadd.f32 %v2707, %v3231
        %v3233 = vpop.f32.mrb[0].mxu0
        %v3234 = vadd.f32 %v2703, %v3233
        %v3235 = vpop.f32.mrb[0].mxu0
        %v3236 = vadd.f32 %v2707, %v3235
        %3237 = vmatprep.mubr.bf16.mxu0 0
        %3238 = vmatmul.mubr.bf16.gmra.mrb[0].mxu0 %v2657
        %v3239 = vpop.f32.mrb[0].mxu0
        %v3240 = vadd.f32 %v2703, %v3239
        %v3241 = vpop.f32.mrb[0].mxu0
        %v3242 = vadd.f32 %v2707, %v3241
        %v3243 = vpop.f32.mrb[0].mxu0
        %v3244 = vadd.f32 %v2703, %v3243
        %v3245 = vpop.f32.mrb[0].mxu0
        %v3246 = vadd.f32 %v2707, %v3245
        %3247 = vmatprep.mubr.bf16.mxu0 0
        %3248 = vmatmul.mubr.bf16.gmra.mrb[0].mxu0 %v2658
        %v3249 = vpop.f32.mrb[0].mxu0
        %v3250 = vadd.f32 %v2703, %v3249
        %v3251 = vpop.f32.mrb[0].mxu0
        %v3252 = vadd.f32 %v2707, %v3251
        %v3253 = vpop.f32.mrb[0].mxu0
        %v3254 = vadd.f32 %v2703, %v3253
        %v3255 = vpop.f32.mrb[0].mxu0
        %v3256 = vadd.f32 %v2707, %v3255
        %3257 = vdwg.mxu0
        %v3258 = vmul.f32 %v2907, 0.5
        %v3259 = vmul.f32 %v2909, 0.5
        %v3260 = vmul.f32 %v3100, 0.5
        %v3261 = vmul.f32 %v3102, 0.5
        %v3262 = vmul.f32 %v2911, 0.5
        %v3263 = vmul.f32 %v2913, 0.5
        %v3264 = vmul.f32 %v3104, 0.5
        %v3265 = vmul.f32 %v3106, 0.5
        %v3266 = vmul.f32 %v2917, 0.5
        %v3267 = vmul.f32 %v2919, 0.5
        %v3268 = vmul.f32 %v3110, 0.5
        %v3269 = vmul.f32 %v3112, 0.5
        %v3270 = vmul.f32 %v2921, 0.5
        %v3271 = vmul.f32 %v2923, 0.5
        %v3272 = vmul.f32 %v3114, 0.5
        %v3273 = vmul.f32 %v3116, 0.5
        %v3274 = vmul.f32 %v2927, 0.5
        %v3275 = vmul.f32 %v2929, 0.5
        %v3276 = vmul.f32 %v3120, 0.5
        %v3277 = vmul.f32 %v3122, 0.5
        %v3278 = vmul.f32 %v2931, 0.5
        %v3279 = vmul.f32 %v2933, 0.5
        %v3280 = vmul.f32 %v3124, 0.5
        %v3281 = vmul.f32 %v3126, 0.5
        %v3282 = vmul.f32 %v2937, 0.5
        %v3283 = vmul.f32 %v2939, 0.5
        %v3284 = vmul.f32 %v3130, 0.5
        %v3285 = vmul.f32 %v3132, 0.5
        %v3286 = vmul.f32 %v2941, 0.5
        %v3287 = vmul.f32 %v2943, 0.5
        %v3288 = vmul.f32 %v3134, 0.5
        %v3289 = vmul.f32 %v3136, 0.5
        %v3290 = vmul.f32 %v2947, 0.5
        %v3291 = vmul.f32 %v2949, 0.5
        %v3292 = vmul.f32 %v3140, 0.5
        %v3293 = vmul.f32 %v3142, 0.5
        %v3294 = vmul.f32 %v2951, 0.5
        %v3295 = vmul.f32 %v2953, 0.5
        %v3296 = vmul.f32 %v3144, 0.5
        %v3297 = vmul.f32 %v3146, 0.5
        %v3298 = vmul.f32 %v2957, 0.5
        %v3299 = vmul.f32 %v2959, 0.5
        %v3300 = vmul.f32 %v3150, 0.5
        %v3301 = vmul.f32 %v3152, 0.5
        %v3302 = vmul.f32 %v2961, 0.5
        %v3303 = vmul.f32 %v2963, 0.5
        %v3304 = vmul.f32 %v3154, 0.5
        %v3305 = vmul.f32 %v3156, 0.5
        %v3306 = vmul.f32 %v2967, 0.5
        %v3307 = vmul.f32 %v2969, 0.5
        %v3308 = vmul.f32 %v3160, 0.5
        %v3309 = vmul.f32 %v3162, 0.5
        %v3310 = vmul.f32 %v2971, 0.5
        %v3311 = vmul.f32 %v2973, 0.5
        %v3312 = vmul.f32 %v3164, 0.5
        %v3313 = vmul.f32 %v3166, 0.5
        %v3314 = vmul.f32 %v2977, 0.5
        %v3315 = vmul.f32 %v2979, 0.5
        %v3316 = vmul.f32 %v3170, 0.5
        %v3317 = vmul.f32 %v3172, 0.5
        %v3318 = vmul.f32 %v2981, 0.5
        %v3319 = vmul.f32 %v2983, 0.5
        %v3320 = vmul.f32 %v3174, 0.5
        %v3321 = vmul.f32 %v3176, 0.5
        %v3322 = vmul.f32 %v2987, 0.5
        %v3323 = vmul.f32 %v2989, 0.5
        %v3324 = vmul.f32 %v3180, 0.5
        %v3325 = vmul.f32 %v3182, 0.5
        %v3326 = vmul.f32 %v2991, 0.5
        %v3327 = vmul.f32 %v2993, 0.5
        %v3328 = vmul.f32 %v3184, 0.5
        %v3329 = vmul.f32 %v3186, 0.5
        %v3330 = vmul.f32 %v2997, 0.5
        %v3331 = vmul.f32 %v2999, 0.5
        %v3332 = vmul.f32 %v3190, 0.5
        %v3333 = vmul.f32 %v3192, 0.5
        %v3334 = vmul.f32 %v3001, 0.5
        %v3335 = vmul.f32 %v3003, 0.5
        %v3336 = vmul.f32 %v3194, 0.5
        %v3337 = vmul.f32 %v3196, 0.5
        %v3338 = vmul.f32 %v3007, 0.5
        %v3339 = vmul.f32 %v3009, 0.5
        %v3340 = vmul.f32 %v3200, 0.5
        %v3341 = vmul.f32 %v3202, 0.5
        %v3342 = vmul.f32 %v3011, 0.5
        %v3343 = vmul.f32 %v3013, 0.5
        %v3344 = vmul.f32 %v3204, 0.5
        %v3345 = vmul.f32 %v3206, 0.5
        %v3346 = vmul.f32 %v3017, 0.5
        %v3347 = vmul.f32 %v3019, 0.5
        %v3348 = vmul.f32 %v3210, 0.5
        %v3349 = vmul.f32 %v3212, 0.5
        %v3350 = vmul.f32 %v3021, 0.5
        %v3351 = vmul.f32 %v3023, 0.5
        %v3352 = vmul.f32 %v3214, 0.5
        %v3353 = vmul.f32 %v3216, 0.5
        %v3354 = vmul.f32 %v3027, 0.5
        %v3355 = vmul.f32 %v3029, 0.5
        %v3356 = vmul.f32 %v3220, 0.5
        %v3357 = vmul.f32 %v3222, 0.5
        %v3358 = vmul.f32 %v3031, 0.5
        %v3359 = vmul.f32 %v3033, 0.5
        %v3360 = vmul.f32 %v3224, 0.5
        %v3361 = vmul.f32 %v3226, 0.5
        %v3362 = vmul.f32 %v3037, 0.5
        %v3363 = vmul.f32 %v3039, 0.5
        %v3364 = vmul.f32 %v3230, 0.5
        %v3365 = vmul.f32 %v3232, 0.5
        %v3366 = vmul.f32 %v3041, 0.5
        %v3367 = vmul.f32 %v3043, 0.5
        %v3368 = vmul.f32 %v3234, 0.5
        %v3369 = vmul.f32 %v3236, 0.5
        %v3370 = vmul.f32 %v3047, 0.5
        %v3371 = vmul.f32 %v3049, 0.5
        %v3372 = vmul.f32 %v3240, 0.5
        %v3373 = vmul.f32 %v3242, 0.5
        %v3374 = vmul.f32 %v3051, 0.5
        %v3375 = vmul.f32 %v3053, 0.5
        %v3376 = vmul.f32 %v3244, 0.5
        %v3377 = vmul.f32 %v3246, 0.5
        %v3378 = vmul.f32 %v3057, 0.5
        %v3379 = vmul.f32 %v3059, 0.5
        %v3380 = vmul.f32 %v3250, 0.5
        %v3381 = vmul.f32 %v3252, 0.5
        %v3382 = vmul.f32 %v3061, 0.5
        %v3383 = vmul.f32 %v3063, 0.5
        %v3384 = vmul.f32 %v3254, 0.5
        %v3385 = vmul.f32 %v3256, 0.5
        %v3386 = vmul.f32 %v2907, 0.70710677
        %v3387 = vmul.f32 %v2909, 0.70710677
        %v3388 = vmul.f32 %v3100, 0.70710677
        %v3389 = vmul.f32 %v3102, 0.70710677
        %v3390 = vmul.f32 %v2911, 0.70710677
        %v3391 = vmul.f32 %v2913, 0.70710677
        %v3392 = vmul.f32 %v3104, 0.70710677
        %v3393 = vmul.f32 %v3106, 0.70710677
        %v3394 = vmul.f32 %v2917, 0.70710677
        %v3395 = vmul.f32 %v2919, 0.70710677
        %v3396 = vmul.f32 %v3110, 0.70710677
        %v3397 = vmul.f32 %v3112, 0.70710677
        %v3398 = vmul.f32 %v2921, 0.70710677
        %v3399 = vmul.f32 %v2923, 0.70710677
        %v3400 = vmul.f32 %v3114, 0.70710677
        %v3401 = vmul.f32 %v3116, 0.70710677
        %v3402 = vmul.f32 %v2927, 0.70710677
        %v3403 = vmul.f32 %v2929, 0.70710677
        %v3404 = vmul.f32 %v3120, 0.70710677
        %v3405 = vmul.f32 %v3122, 0.70710677
        %v3406 = vmul.f32 %v2931, 0.70710677
        %v3407 = vmul.f32 %v2933, 0.70710677
        %v3408 = vmul.f32 %v3124, 0.70710677
        %v3409 = vmul.f32 %v3126, 0.70710677
        %v3410 = vmul.f32 %v2937, 0.70710677
        %v3411 = vmul.f32 %v2939, 0.70710677
        %v3412 = vmul.f32 %v3130, 0.70710677
        %v3413 = vmul.f32 %v3132, 0.70710677
        %v3414 = vmul.f32 %v2941, 0.70710677
        %v3415 = vmul.f32 %v2943, 0.70710677
        %v3416 = vmul.f32 %v3134, 0.70710677
        %v3417 = vmul.f32 %v3136, 0.70710677
        %v3418 = vmul.f32 %v2947, 0.70710677
        %v3419 = vmul.f32 %v2949, 0.70710677
        %v3420 = vmul.f32 %v3140, 0.70710677
        %v3421 = vmul.f32 %v3142, 0.70710677
        %v3422 = vmul.f32 %v2951, 0.70710677
        %v3423 = vmul.f32 %v2953, 0.70710677
        %v3424 = vmul.f32 %v3144, 0.70710677
        %v3425 = vmul.f32 %v3146, 0.70710677
        %v3426 = vmul.f32 %v2957, 0.70710677
        %v3427 = vmul.f32 %v2959, 0.70710677
        %v3428 = vmul.f32 %v3150, 0.70710677
        %v3429 = vmul.f32 %v3152, 0.70710677
        %v3430 = vmul.f32 %v2961, 0.70710677
        %v3431 = vmul.f32 %v2963, 0.70710677
        %v3432 = vmul.f32 %v3154, 0.70710677
        %v3433 = vmul.f32 %v3156, 0.70710677
        %v3434 = vmul.f32 %v2967, 0.70710677
        %v3435 = vmul.f32 %v2969, 0.70710677
        %v3436 = vmul.f32 %v3160, 0.70710677
        %v3437 = vmul.f32 %v3162, 0.70710677
        %v3438 = vmul.f32 %v2971, 0.70710677
        %v3439 = vmul.f32 %v2973, 0.70710677
        %v3440 = vmul.f32 %v3164, 0.70710677
        %v3441 = vmul.f32 %v3166, 0.70710677
        %v3442 = vmul.f32 %v2977, 0.70710677
        %v3443 = vmul.f32 %v2979, 0.70710677
        %v3444 = vmul.f32 %v3170, 0.70710677
        %v3445 = vmul.f32 %v3172, 0.70710677
        %v3446 = vmul.f32 %v2981, 0.70710677
        %v3447 = vmul.f32 %v2983, 0.70710677
        %v3448 = vmul.f32 %v3174, 0.70710677
        %v3449 = vmul.f32 %v3176, 0.70710677
        %v3450 = vmul.f32 %v2987, 0.70710677
        %v3451 = vmul.f32 %v2989, 0.70710677
        %v3452 = vmul.f32 %v3180, 0.70710677
        %v3453 = vmul.f32 %v3182, 0.70710677
        %v3454 = vmul.f32 %v2991, 0.70710677
        %v3455 = vmul.f32 %v2993, 0.70710677
        %v3456 = vmul.f32 %v3184, 0.70710677
        %v3457 = vmul.f32 %v3186, 0.70710677
        %v3458 = vmul.f32 %v2997, 0.70710677
        %v3459 = vmul.f32 %v2999, 0.70710677
        %v3460 = vmul.f32 %v3190, 0.70710677
        %v3461 = vmul.f32 %v3192, 0.70710677
        %v3462 = vmul.f32 %v3001, 0.70710677
        %v3463 = vmul.f32 %v3003, 0.70710677
        %v3464 = vmul.f32 %v3194, 0.70710677
        %v3465 = vmul.f32 %v3196, 0.70710677
        %v3466 = vmul.f32 %v3007, 0.70710677
        %v3467 = vmul.f32 %v3009, 0.70710677
        %v3468 = vmul.f32 %v3200, 0.70710677
        %v3469 = vmul.f32 %v3202, 0.70710677
        %v3470 = vmul.f32 %v3011, 0.70710677
        %v3471 = vmul.f32 %v3013, 0.70710677
        %v3472 = vmul.f32 %v3204, 0.70710677
        %v3473 = vmul.f32 %v3206, 0.70710677
        %v3474 = vmul.f32 %v3017, 0.70710677
        %v3475 = vmul.f32 %v3019, 0.70710677
        %v3476 = vmul.f32 %v3210, 0.70710677
        %v3477 = vmul.f32 %v3212, 0.70710677
        %v3478 = vmul.f32 %v3021, 0.70710677
        %v3479 = vmul.f32 %v3023, 0.70710677
        %v3480 = vmul.f32 %v3214, 0.70710677
        %v3481 = vmul.f32 %v3216, 0.70710677
        %v3482 = vmul.f32 %v3027, 0.70710677
        %v3483 = vmul.f32 %v3029, 0.70710677
        %v3484 = vmul.f32 %v3220, 0.70710677
        %v3485 = vmul.f32 %v3222, 0.70710677
        %v3486 = vmul.f32 %v3031, 0.70710677
        %v3487 = vmul.f32 %v3033, 0.70710677
        %v3488 = vmul.f32 %v3224, 0.70710677
        %v3489 = vmul.f32 %v3226, 0.70710677
        %v3490 = vmul.f32 %v3037, 0.70710677
        %v3491 = vmul.f32 %v3039, 0.70710677
        %v3492 = vmul.f32 %v3230, 0.70710677
        %v3493 = vmul.f32 %v3232, 0.70710677
        %v3494 = vmul.f32 %v3041, 0.70710677
        %v3495 = vmul.f32 %v3043, 0.70710677
        %v3496 = vmul.f32 %v3234, 0.70710677
        %v3497 = vmul.f32 %v3236, 0.70710677
        %v3498 = vmul.f32 %v3047, 0.70710677
        %v3499 = vmul.f32 %v3049, 0.70710677
        %v3500 = vmul.f32 %v3240, 0.70710677
        %v3501 = vmul.f32 %v3242, 0.70710677
        %v3502 = vmul.f32 %v3051, 0.70710677
        %v3503 = vmul.f32 %v3053, 0.70710677
        %v3504 = vmul.f32 %v3244, 0.70710677
        %v3505 = vmul.f32 %v3246, 0.70710677
        %v3506 = vmul.f32 %v3057, 0.70710677
        %v3507 = vmul.f32 %v3059, 0.70710677
        %v3508 = vmul.f32 %v3250, 0.70710677
        %v3509 = vmul.f32 %v3252, 0.70710677
        %v3510 = vmul.f32 %v3061, 0.70710677
        %v3511 = vmul.f32 %v3063, 0.70710677
        %v3512 = vmul.f32 %v3254, 0.70710677
        %v3513 = vmul.f32 %v3256, 0.70710677
        %v3514 = verf.f32.pop %v3386
        %v3515 = verf.f32.pop %v3387
        %v3516 = verf.f32.pop %v3388
        %v3517 = verf.f32.pop %v3389
        %v3518 = verf.f32.pop %v3390
        %v3519 = verf.f32.pop %v3391
        %v3520 = verf.f32.pop %v3392
        %v3521 = verf.f32.pop %v3393
        %v3522 = verf.f32.pop %v3394
        %v3523 = verf.f32.pop %v3395
        %v3524 = verf.f32.pop %v3396
        %v3525 = verf.f32.pop %v3397
        %v3526 = verf.f32.pop %v3398
        %v3527 = verf.f32.pop %v3399
        %v3528 = verf.f32.pop %v3400
        %v3529 = verf.f32.pop %v3401
        %v3530 = verf.f32.pop %v3402
        %v3531 = verf.f32.pop %v3403
        %v3532 = verf.f32.pop %v3404
        %v3533 = verf.f32.pop %v3405
        %v3534 = verf.f32.pop %v3406
        %v3535 = verf.f32.pop %v3407
        %v3536 = verf.f32.pop %v3408
        %v3537 = verf.f32.pop %v3409
        %v3538 = verf.f32.pop %v3410
        %v3539 = verf.f32.pop %v3411
        %v3540 = verf.f32.pop %v3412
        %v3541 = verf.f32.pop %v3413
        %v3542 = verf.f32.pop %v3414
        %v3543 = verf.f32.pop %v3415
        %v3544 = verf.f32.pop %v3416
        %v3545 = verf.f32.pop %v3417
        %v3546 = verf.f32.pop %v3418
        %v3547 = verf.f32.pop %v3419
        %v3548 = verf.f32.pop %v3420
        %v3549 = verf.f32.pop %v3421
        %v3550 = verf.f32.pop %v3422
        %v3551 = verf.f32.pop %v3423
        %v3552 = verf.f32.pop %v3424
        %v3553 = verf.f32.pop %v3425
        %v3554 = verf.f32.pop %v3426
        %v3555 = verf.f32.pop %v3427
        %v3556 = verf.f32.pop %v3428
        %v3557 = verf.f32.pop %v3429
        %v3558 = verf.f32.pop %v3430
        %v3559 = verf.f32.pop %v3431
        %v3560 = verf.f32.pop %v3432
        %v3561 = verf.f32.pop %v3433
        %v3562 = verf.f32.pop %v3434
        %v3563 = verf.f32.pop %v3435
        %v3564 = verf.f32.pop %v3436
        %v3565 = verf.f32.pop %v3437
        %v3566 = verf.f32.pop %v3438
        %v3567 = verf.f32.pop %v3439
        %v3568 = verf.f32.pop %v3440
        %v3569 = verf.f32.pop %v3441
        %v3570 = verf.f32.pop %v3442
        %v3571 = verf.f32.pop %v3443
        %v3572 = verf.f32.pop %v3444
        %v3573 = verf.f32.pop %v3445
        %v3574 = verf.f32.pop %v3446
        %v3575 = verf.f32.pop %v3447
        %v3576 = verf.f32.pop %v3448
        %v3577 = verf.f32.pop %v3449
        %v3578 = verf.f32.pop %v3450
        %v3579 = verf.f32.pop %v3451
        %v3580 = verf.f32.pop %v3452
        %v3581 = verf.f32.pop %v3453
        %v3582 = verf.f32.pop %v3454
        %v3583 = verf.f32.pop %v3455
        %v3584 = verf.f32.pop %v3456
        %v3585 = verf.f32.pop %v3457
        %v3586 = verf.f32.pop %v3458
        %v3587 = verf.f32.pop %v3459
        %v3588 = verf.f32.pop %v3460
        %v3589 = verf.f32.pop %v3461
        %v3590 = verf.f32.pop %v3462
        %v3591 = verf.f32.pop %v3463
        %v3592 = verf.f32.pop %v3464
        %v3593 = verf.f32.pop %v3465
        %v3594 = verf.f32.pop %v3466
        %v3595 = verf.f32.pop %v3467
        %v3596 = verf.f32.pop %v3468
        %v3597 = verf.f32.pop %v3469
        %v3598 = verf.f32.pop %v3470
        %v3599 = verf.f32.pop %v3471
        %v3600 = verf.f32.pop %v3472
        %v3601 = verf.f32.pop %v3473
        %v3602 = verf.f32.pop %v3474
        %v3603 = verf.f32.pop %v3475
        %v3604 = verf.f32.pop %v3476
        %v3605 = verf.f32.pop %v3477
        %v3606 = verf.f32.pop %v3478
        %v3607 = verf.f32.pop %v3479
        %v3608 = verf.f32.pop %v3480
        %v3609 = verf.f32.pop %v3481
        %v3610 = verf.f32.pop %v3482
        %v3611 = verf.f32.pop %v3483
        %v3612 = verf.f32.pop %v3484
        %v3613 = verf.f32.pop %v3485
        %v3614 = verf.f32.pop %v3486
        %v3615 = verf.f32.pop %v3487
        %v3616 = verf.f32.pop %v3488
        %v3617 = verf.f32.pop %v3489
        %v3618 = verf.f32.pop %v3490
        %v3619 = verf.f32.pop %v3491
        %v3620 = verf.f32.pop %v3492
        %v3621 = verf.f32.pop %v3493
        %v3622 = verf.f32.pop %v3494
        %v3623 = verf.f32.pop %v3495
        %v3624 = verf.f32.pop %v3496
        %v3625 = verf.f32.pop %v3497
        %v3626 = verf.f32.pop %v3498
        %v3627 = verf.f32.pop %v3499
        %v3628 = verf.f32.pop %v3500
        %v3629 = verf.f32.pop %v3501
        %v3630 = verf.f32.pop %v3502
        %v3631 = verf.f32.pop %v3503
        %v3632 = verf.f32.pop %v3504
        %v3633 = verf.f32.pop %v3505
        %v3634 = verf.f32.pop %v3506
        %v3635 = verf.f32.pop %v3507
        %v3636 = verf.f32.pop %v3508
        %v3637 = verf.f32.pop %v3509
        %v3638 = verf.f32.pop %v3510
        %v3639 = verf.f32.pop %v3511
        %v3640 = verf.f32.pop %v3512
        %v3641 = verf.f32.pop %v3513
        %v3642 = vadd.f32 %v3514, 1.0
        %v3643 = vadd.f32 %v3515, 1.0
        %v3644 = vadd.f32 %v3516, 1.0
        %v3645 = vadd.f32 %v3517, 1.0
        %v3646 = vadd.f32 %v3518, 1.0
        %v3647 = vadd.f32 %v3519, 1.0
        %v3648 = vadd.f32 %v3520, 1.0
        %v3649 = vadd.f32 %v3521, 1.0
        %v3650 = vadd.f32 %v3522, 1.0
        %v3651 = vadd.f32 %v3523, 1.0
        %v3652 = vadd.f32 %v3524, 1.0
        %v3653 = vadd.f32 %v3525, 1.0
        %v3654 = vadd.f32 %v3526, 1.0
        %v3655 = vadd.f32 %v3527, 1.0
        %v3656 = vadd.f32 %v3528, 1.0
        %v3657 = vadd.f32 %v3529, 1.0
        %v3658 = vadd.f32 %v3530, 1.0
        %v3659 = vadd.f32 %v3531, 1.0
        %v3660 = vadd.f32 %v3532, 1.0
        %v3661 = vadd.f32 %v3533, 1.0
        %v3662 = vadd.f32 %v3534, 1.0
        %v3663 = vadd.f32 %v3535, 1.0
        %v3664 = vadd.f32 %v3536, 1.0
        %v3665 = vadd.f32 %v3537, 1.0
        %v3666 = vadd.f32 %v3538, 1.0
        %v3667 = vadd.f32 %v3539, 1.0
        %v3668 = vadd.f32 %v3540, 1.0
        %v3669 = vadd.f32 %v3541, 1.0
        %v3670 = vadd.f32 %v3542, 1.0
        %v3671 = vadd.f32 %v3543, 1.0
        %v3672 = vadd.f32 %v3544, 1.0
        %v3673 = vadd.f32 %v3545, 1.0
        %v3674 = vadd.f32 %v3546, 1.0
        %v3675 = vadd.f32 %v3547, 1.0
        %v3676 = vadd.f32 %v3548, 1.0
        %v3677 = vadd.f32 %v3549, 1.0
        %v3678 = vadd.f32 %v3550, 1.0
        %v3679 = vadd.f32 %v3551, 1.0
        %v3680 = vadd.f32 %v3552, 1.0
        %v3681 = vadd.f32 %v3553, 1.0
        %v3682 = vadd.f32 %v3554, 1.0
        %v3683 = vadd.f32 %v3555, 1.0
        %v3684 = vadd.f32 %v3556, 1.0
        %v3685 = vadd.f32 %v3557, 1.0
        %v3686 = vadd.f32 %v3558, 1.0
        %v3687 = vadd.f32 %v3559, 1.0
        %v3688 = vadd.f32 %v3560, 1.0
        %v3689 = vadd.f32 %v3561, 1.0
        %v3690 = vadd.f32 %v3562, 1.0
        %v3691 = vadd.f32 %v3563, 1.0
        %v3692 = vadd.f32 %v3564, 1.0
        %v3693 = vadd.f32 %v3565, 1.0
        %v3694 = vadd.f32 %v3566, 1.0
        %v3695 = vadd.f32 %v3567, 1.0
        %v3696 = vadd.f32 %v3568, 1.0
        %v3697 = vadd.f32 %v3569, 1.0
        %v3698 = vadd.f32 %v3570, 1.0
        %v3699 = vadd.f32 %v3571, 1.0
        %v3700 = vadd.f32 %v3572, 1.0
        %v3701 = vadd.f32 %v3573, 1.0
        %v3702 = vadd.f32 %v3574, 1.0
        %v3703 = vadd.f32 %v3575, 1.0
        %v3704 = vadd.f32 %v3576, 1.0
        %v3705 = vadd.f32 %v3577, 1.0
        %v3706 = vadd.f32 %v3578, 1.0
        %v3707 = vadd.f32 %v3579, 1.0
        %v3708 = vadd.f32 %v3580, 1.0
        %v3709 = vadd.f32 %v3581, 1.0
        %v3710 = vadd.f32 %v3582, 1.0
        %v3711 = vadd.f32 %v3583, 1.0
        %v3712 = vadd.f32 %v3584, 1.0
        %v3713 = vadd.f32 %v3585, 1.0
        %v3714 = vadd.f32 %v3586, 1.0
        %v3715 = vadd.f32 %v3587, 1.0
        %v3716 = vadd.f32 %v3588, 1.0
        %v3717 = vadd.f32 %v3589, 1.0
        %v3718 = vadd.f32 %v3590, 1.0
        %v3719 = vadd.f32 %v3591, 1.0
        %v3720 = vadd.f32 %v3592, 1.0
        %v3721 = vadd.f32 %v3593, 1.0
        %v3722 = vadd.f32 %v3594, 1.0
        %v3723 = vadd.f32 %v3595, 1.0
        %v3724 = vadd.f32 %v3596, 1.0
        %v3725 = vadd.f32 %v3597, 1.0
        %v3726 = vadd.f32 %v3598, 1.0
        %v3727 = vadd.f32 %v3599, 1.0
        %v3728 = vadd.f32 %v3600, 1.0
        %v3729 = vadd.f32 %v3601, 1.0
        %v3730 = vadd.f32 %v3602, 1.0
        %v3731 = vadd.f32 %v3603, 1.0
        %v3732 = vadd.f32 %v3604, 1.0
        %v3733 = vadd.f32 %v3605, 1.0
        %v3734 = vadd.f32 %v3606, 1.0
        %v3735 = vadd.f32 %v3607, 1.0
        %v3736 = vadd.f32 %v3608, 1.0
        %v3737 = vadd.f32 %v3609, 1.0
        %v3738 = vadd.f32 %v3610, 1.0
        %v3739 = vadd.f32 %v3611, 1.0
        %v3740 = vadd.f32 %v3612, 1.0
        %v3741 = vadd.f32 %v3613, 1.0
        %v3742 = vadd.f32 %v3614, 1.0
        %v3743 = vadd.f32 %v3615, 1.0
        %v3744 = vadd.f32 %v3616, 1.0
        %v3745 = vadd.f32 %v3617, 1.0
        %v3746 = vadd.f32 %v3618, 1.0
        %v3747 = vadd.f32 %v3619, 1.0
        %v3748 = vadd.f32 %v3620, 1.0
        %v3749 = vadd.f32 %v3621, 1.0
        %v3750 = vadd.f32 %v3622, 1.0
        %v3751 = vadd.f32 %v3623, 1.0
        %v3752 = vadd.f32 %v3624, 1.0
        %v3753 = vadd.f32 %v3625, 1.0
        %v3754 = vadd.f32 %v3626, 1.0
        %v3755 = vadd.f32 %v3627, 1.0
        %v3756 = vadd.f32 %v3628, 1.0
        %v3757 = vadd.f32 %v3629, 1.0
        %v3758 = vadd.f32 %v3630, 1.0
        %v3759 = vadd.f32 %v3631, 1.0
        %v3760 = vadd.f32 %v3632, 1.0
        %v3761 = vadd.f32 %v3633, 1.0
        %v3762 = vadd.f32 %v3634, 1.0
        %v3763 = vadd.f32 %v3635, 1.0
        %v3764 = vadd.f32 %v3636, 1.0
        %v3765 = vadd.f32 %v3637, 1.0
        %v3766 = vadd.f32 %v3638, 1.0
        %v3767 = vadd.f32 %v3639, 1.0
        %v3768 = vadd.f32 %v3640, 1.0
        %v3769 = vadd.f32 %v3641, 1.0
        %v3770 = vmul.f32 %v3258, %v3642
        %v3771 = vmul.f32 %v3259, %v3643
        %v3772 = vmul.f32 %v3260, %v3644
        %v3773 = vmul.f32 %v3261, %v3645
        %v3774 = vmul.f32 %v3262, %v3646
        %v3775 = vmul.f32 %v3263, %v3647
        %v3776 = vmul.f32 %v3264, %v3648
        %v3777 = vmul.f32 %v3265, %v3649
        %v3778 = vmul.f32 %v3266, %v3650
        %v3779 = vmul.f32 %v3267, %v3651
        %v3780 = vmul.f32 %v3268, %v3652
        %v3781 = vmul.f32 %v3269, %v3653
        %v3782 = vmul.f32 %v3270, %v3654
        %v3783 = vmul.f32 %v3271, %v3655
        %v3784 = vmul.f32 %v3272, %v3656
        %v3785 = vmul.f32 %v3273, %v3657
        %v3786 = vmul.f32 %v3274, %v3658
        %v3787 = vmul.f32 %v3275, %v3659
        %v3788 = vmul.f32 %v3276, %v3660
        %v3789 = vmul.f32 %v3277, %v3661
        %v3790 = vmul.f32 %v3278, %v3662
        %v3791 = vmul.f32 %v3279, %v3663
        %v3792 = vmul.f32 %v3280, %v3664
        %v3793 = vmul.f32 %v3281, %v3665
        %v3794 = vmul.f32 %v3282, %v3666
        %v3795 = vmul.f32 %v3283, %v3667
        %v3796 = vmul.f32 %v3284, %v3668
        %v3797 = vmul.f32 %v3285, %v3669
        %v3798 = vmul.f32 %v3286, %v3670
        %v3799 = vmul.f32 %v3287, %v3671
        %v3800 = vmul.f32 %v3288, %v3672
        %v3801 = vmul.f32 %v3289, %v3673
        %v3802 = vmul.f32 %v3290, %v3674
        %v3803 = vmul.f32 %v3291, %v3675
        %v3804 = vmul.f32 %v3292, %v3676
        %v3805 = vmul.f32 %v3293, %v3677
        %v3806 = vmul.f32 %v3294, %v3678
        %v3807 = vmul.f32 %v3295, %v3679
        %v3808 = vmul.f32 %v3296, %v3680
        %v3809 = vmul.f32 %v3297, %v3681
        %v3810 = vmul.f32 %v3298, %v3682
        %v3811 = vmul.f32 %v3299, %v3683
        %v3812 = vmul.f32 %v3300, %v3684
        %v3813 = vmul.f32 %v3301, %v3685
        %v3814 = vmul.f32 %v3302, %v3686
        %v3815 = vmul.f32 %v3303, %v3687
        %v3816 = vmul.f32 %v3304, %v3688
        %v3817 = vmul.f32 %v3305, %v3689
        %v3818 = vmul.f32 %v3306, %v3690
        %v3819 = vmul.f32 %v3307, %v3691
        %v3820 = vmul.f32 %v3308, %v3692
        %v3821 = vmul.f32 %v3309, %v3693
        %v3822 = vmul.f32 %v3310, %v3694
        %v3823 = vmul.f32 %v3311, %v3695
        %v3824 = vmul.f32 %v3312, %v3696
        %v3825 = vmul.f32 %v3313, %v3697
        %v3826 = vmul.f32 %v3314, %v3698
        %v3827 = vmul.f32 %v3315, %v3699
        %v3828 = vmul.f32 %v3316, %v3700
        %v3829 = vmul.f32 %v3317, %v3701
        %v3830 = vmul.f32 %v3318, %v3702
        %v3831 = vmul.f32 %v3319, %v3703
        %v3832 = vmul.f32 %v3320, %v3704
        %v3833 = vmul.f32 %v3321, %v3705
        %v3834 = vmul.f32 %v3322, %v3706
        %v3835 = vmul.f32 %v3323, %v3707
        %v3836 = vmul.f32 %v3324, %v3708
        %v3837 = vmul.f32 %v3325, %v3709
        %v3838 = vmul.f32 %v3326, %v3710
        %v3839 = vmul.f32 %v3327, %v3711
        %v3840 = vmul.f32 %v3328, %v3712
        %v3841 = vmul.f32 %v3329, %v3713
        %v3842 = vmul.f32 %v3330, %v3714
        %v3843 = vmul.f32 %v3331, %v3715
        %v3844 = vmul.f32 %v3332, %v3716
        %v3845 = vmul.f32 %v3333, %v3717
        %v3846 = vmul.f32 %v3334, %v3718
        %v3847 = vmul.f32 %v3335, %v3719
        %v3848 = vmul.f32 %v3336, %v3720
        %v3849 = vmul.f32 %v3337, %v3721
        %v3850 = vmul.f32 %v3338, %v3722
        %v3851 = vmul.f32 %v3339, %v3723
        %v3852 = vmul.f32 %v3340, %v3724
        %v3853 = vmul.f32 %v3341, %v3725
        %v3854 = vmul.f32 %v3342, %v3726
        %v3855 = vmul.f32 %v3343, %v3727
        %v3856 = vmul.f32 %v3344, %v3728
        %v3857 = vmul.f32 %v3345, %v3729
        %v3858 = vmul.f32 %v3346, %v3730
        %v3859 = vmul.f32 %v3347, %v3731
        %v3860 = vmul.f32 %v3348, %v3732
        %v3861 = vmul.f32 %v3349, %v3733
        %v3862 = vmul.f32 %v3350, %v3734
        %v3863 = vmul.f32 %v3351, %v3735
        %v3864 = vmul.f32 %v3352, %v3736
        %v3865 = vmul.f32 %v3353, %v3737
        %v3866 = vmul.f32 %v3354, %v3738
        %v3867 = vmul.f32 %v3355, %v3739
        %v3868 = vmul.f32 %v3356, %v3740
        %v3869 = vmul.f32 %v3357, %v3741
        %v3870 = vmul.f32 %v3358, %v3742
        %v3871 = vmul.f32 %v3359, %v3743
        %v3872 = vmul.f32 %v3360, %v3744
        %v3873 = vmul.f32 %v3361, %v3745
        %v3874 = vmul.f32 %v3362, %v3746
        %v3875 = vmul.f32 %v3363, %v3747
        %v3876 = vmul.f32 %v3364, %v3748
        %v3877 = vmul.f32 %v3365, %v3749
        %v3878 = vmul.f32 %v3366, %v3750
        %v3879 = vmul.f32 %v3367, %v3751
        %v3880 = vmul.f32 %v3368, %v3752
        %v3881 = vmul.f32 %v3369, %v3753
        %v3882 = vmul.f32 %v3370, %v3754
        %v3883 = vmul.f32 %v3371, %v3755
        %v3884 = vmul.f32 %v3372, %v3756
        %v3885 = vmul.f32 %v3373, %v3757
        %v3886 = vmul.f32 %v3374, %v3758
        %v3887 = vmul.f32 %v3375, %v3759
        %v3888 = vmul.f32 %v3376, %v3760
        %v3889 = vmul.f32 %v3377, %v3761
        %v3890 = vmul.f32 %v3378, %v3762
        %v3891 = vmul.f32 %v3379, %v3763
        %v3892 = vmul.f32 %v3380, %v3764
        %v3893 = vmul.f32 %v3381, %v3765
        %v3894 = vmul.f32 %v3382, %v3766
        %v3895 = vmul.f32 %v3383, %v3767
        %v3896 = vmul.f32 %v3384, %v3768
        %v3897 = vmul.f32 %v3385, %v3769
        %v3898 = vpack.c.bf16 %v3774, %v3770
        %v3899 = vpack.c.bf16 %v3775, %v3771
        %v3900 = vpack.c.bf16 %v3776, %v3772
        %v3901 = vpack.c.bf16 %v3777, %v3773
        %v3902 = vpack.c.bf16 %v3782, %v3778
        %v3903 = vpack.c.bf16 %v3783, %v3779
        %v3904 = vpack.c.bf16 %v3784, %v3780
        %v3905 = vpack.c.bf16 %v3785, %v3781
        %v3906 = vpack.c.bf16 %v3790, %v3786
        %v3907 = vpack.c.bf16 %v3791, %v3787
        %v3908 = vpack.c.bf16 %v3792, %v3788
        %v3909 = vpack.c.bf16 %v3793, %v3789
        %v3910 = vpack.c.bf16 %v3798, %v3794
        %v3911 = vpack.c.bf16 %v3799, %v3795
        %v3912 = vpack.c.bf16 %v3800, %v3796
        %v3913 = vpack.c.bf16 %v3801, %v3797
        %v3914 = vpack.c.bf16 %v3806, %v3802
        %v3915 = vpack.c.bf16 %v3807, %v3803
        %v3916 = vpack.c.bf16 %v3808, %v3804
        %v3917 = vpack.c.bf16 %v3809, %v3805
        %v3918 = vpack.c.bf16 %v3814, %v3810
        %v3919 = vpack.c.bf16 %v3815, %v3811
        %v3920 = vpack.c.bf16 %v3816, %v3812
        %v3921 = vpack.c.bf16 %v3817, %v3813
        %v3922 = vpack.c.bf16 %v3822, %v3818
        %v3923 = vpack.c.bf16 %v3823, %v3819
        %v3924 = vpack.c.bf16 %v3824, %v3820
        %v3925 = vpack.c.bf16 %v3825, %v3821
        %v3926 = vpack.c.bf16 %v3830, %v3826
        %v3927 = vpack.c.bf16 %v3831, %v3827
        %v3928 = vpack.c.bf16 %v3832, %v3828
        %v3929 = vpack.c.bf16 %v3833, %v3829
        %v3930 = vpack.c.bf16 %v3838, %v3834
        %v3931 = vpack.c.bf16 %v3839, %v3835
        %v3932 = vpack.c.bf16 %v3840, %v3836
        %v3933 = vpack.c.bf16 %v3841, %v3837
        %v3934 = vpack.c.bf16 %v3846, %v3842
        %v3935 = vpack.c.bf16 %v3847, %v3843
        %v3936 = vpack.c.bf16 %v3848, %v3844
        %v3937 = vpack.c.bf16 %v3849, %v3845
        %v3938 = vpack.c.bf16 %v3854, %v3850
        %v3939 = vpack.c.bf16 %v3855, %v3851
        %v3940 = vpack.c.bf16 %v3856, %v3852
        %v3941 = vpack.c.bf16 %v3857, %v3853
        %v3942 = vpack.c.bf16 %v3862, %v3858
        %v3943 = vpack.c.bf16 %v3863, %v3859
        %v3944 = vpack.c.bf16 %v3864, %v3860
        %v3945 = vpack.c.bf16 %v3865, %v3861
        %v3946 = vpack.c.bf16 %v3870, %v3866
        %v3947 = vpack.c.bf16 %v3871, %v3867
        %v3948 = vpack.c.bf16 %v3872, %v3868
        %v3949 = vpack.c.bf16 %v3873, %v3869
        %v3950 = vpack.c.bf16 %v3878, %v3874
        %v3951 = vpack.c.bf16 %v3879, %v3875
        %v3952 = vpack.c.bf16 %v3880, %v3876
        %v3953 = vpack.c.bf16 %v3881, %v3877
        %v3954 = vpack.c.bf16 %v3886, %v3882
        %v3955 = vpack.c.bf16 %v3887, %v3883
        %v3956 = vpack.c.bf16 %v3888, %v3884
        %v3957 = vpack.c.bf16 %v3889, %v3885
        %v3958 = vpack.c.bf16 %v3894, %v3890
        %v3959 = vpack.c.bf16 %v3895, %v3891
        %v3960 = vpack.c.bf16 %v3896, %v3892
        %v3961 = vpack.c.bf16 %v3897, %v3893
        %v3962 = vld [vmem:[#allocation16] sm:$0xf]
        %v3963 = vld [vmem:[#allocation16 + $0x4] sm:$0xf]
        %v3964 = vld [vmem:[#allocation16 + $0x8] sm:$0xf]
        %v3965 = vld [vmem:[#allocation16 + $0xc] sm:$0xf]
        %v3966 = vld [vmem:[#allocation16 + $0x10] sm:$0xf]
        %v3967 = vld [vmem:[#allocation16 + $0x14] sm:$0xf]
        %v3968 = vld [vmem:[#allocation16 + $0x18] sm:$0xf]
        %v3969 = vld [vmem:[#allocation16 + $0x1c] sm:$0xf]
        %v3970 = vld [vmem:[#allocation16 + $0x20] sm:$0xf]
        %v3971 = vld [vmem:[#allocation16 + $0x24] sm:$0xf]
        %v3972 = vld [vmem:[#allocation16 + $0x28] sm:$0xf]
        %v3973 = vld [vmem:[#allocation16 + $0x2c] sm:$0xf]
        %v3974 = vld [vmem:[#allocation16 + $0x30] sm:$0xf]
        %v3975 = vld [vmem:[#allocation16 + $0x34] sm:$0xf]
        %v3976 = vld [vmem:[#allocation16 + $0x38] sm:$0xf]
        %v3977 = vld [vmem:[#allocation16 + $0x3c] sm:$0xf]
        %v3978 = vld [vmem:[#allocation16 + $0x40] sm:$0xf]
        %v3979 = vld [vmem:[#allocation16 + $0x44] sm:$0xf]
        %v3980 = vld [vmem:[#allocation16 + $0x48] sm:$0xf]
        %v3981 = vld [vmem:[#allocation16 + $0x4c] sm:$0xf]
        %v3982 = vld [vmem:[#allocation16 + $0x50] sm:$0xf]
        %v3983 = vld [vmem:[#allocation16 + $0x54] sm:$0xf]
        %v3984 = vld [vmem:[#allocation16 + $0x58] sm:$0xf]
        %v3985 = vld [vmem:[#allocation16 + $0x5c] sm:$0xf]
        %v3986 = vld [vmem:[#allocation16 + $0x60] sm:$0xf]
        %v3987 = vld [vmem:[#allocation16 + $0x64] sm:$0xf]
        %v3988 = vld [vmem:[#allocation16 + $0x68] sm:$0xf]
        %v3989 = vld [vmem:[#allocation16 + $0x6c] sm:$0xf]
        %v3990 = vld [vmem:[#allocation16 + $0x70] sm:$0xf]
        %v3991 = vld [vmem:[#allocation16 + $0x74] sm:$0xf]
        %v3992 = vld [vmem:[#allocation16 + $0x78] sm:$0xf]
        %v3993 = vld [vmem:[#allocation16 + $0x7c] sm:$0xf]
        %v3994 = vld [vmem:[#allocation16 + $0x80] sm:$0xf]
        %v3995 = vld [vmem:[#allocation16 + $0x84] sm:$0xf]
        %v3996 = vld [vmem:[#allocation16 + $0x88] sm:$0xf]
        %v3997 = vld [vmem:[#allocation16 + $0x8c] sm:$0xf]
        %v3998 = vld [vmem:[#allocation16 + $0x90] sm:$0xf]
        %v3999 = vld [vmem:[#allocation16 + $0x94] sm:$0xf]
        %v4000 = vld [vmem:[#allocation16 + $0x98] sm:$0xf]
        %v4001 = vld [vmem:[#allocation16 + $0x9c] sm:$0xf]
        %v4002 = vld [vmem:[#allocation16 + $0xa0] sm:$0xf]
        %v4003 = vld [vmem:[#allocation16 + $0xa4] sm:$0xf]
        %v4004 = vld [vmem:[#allocation16 + $0xa8] sm:$0xf]
        %v4005 = vld [vmem:[#allocation16 + $0xac] sm:$0xf]
        %v4006 = vld [vmem:[#allocation16 + $0xb0] sm:$0xf]
        %v4007 = vld [vmem:[#allocation16 + $0xb4] sm:$0xf]
        %v4008 = vld [vmem:[#allocation16 + $0xb8] sm:$0xf]
        %v4009 = vld [vmem:[#allocation16 + $0xbc] sm:$0xf]
        %v4010 = vld [vmem:[#allocation16 + $0xc0] sm:$0xf]
        %v4011 = vld [vmem:[#allocation16 + $0xc4] sm:$0xf]
        %v4012 = vld [vmem:[#allocation16 + $0xc8] sm:$0xf]
        %v4013 = vld [vmem:[#allocation16 + $0xcc] sm:$0xf]
        %v4014 = vld [vmem:[#allocation16 + $0xd0] sm:$0xf]
        %v4015 = vld [vmem:[#allocation16 + $0xd4] sm:$0xf]
        %v4016 = vld [vmem:[#allocation16 + $0xd8] sm:$0xf]
        %v4017 = vld [vmem:[#allocation16 + $0xdc] sm:$0xf]
        %v4018 = vld [vmem:[#allocation16 + $0xe0] sm:$0xf]
        %v4019 = vld [vmem:[#allocation16 + $0xe4] sm:$0xf]
        %v4020 = vld [vmem:[#allocation16 + $0xe8] sm:$0xf]
        %v4021 = vld [vmem:[#allocation16 + $0xec] sm:$0xf]
        %v4022 = vld [vmem:[#allocation16 + $0xf0] sm:$0xf]
        %v4023 = vld [vmem:[#allocation16 + $0xf4] sm:$0xf]
        %v4024 = vld [vmem:[#allocation16 + $0xf8] sm:$0xf]
        %v4025 = vld [vmem:[#allocation16 + $0xfc] sm:$0xf]
        %v4027 = vlaneseq
        %v4028 = vshrl.u32 %v4027, 7
        %v4029 = vsub.s32 0, %v4028
        %v4030 = vrot.slane %v1685, %v4029
        %v4096 = vunpack.c.l.b16 %v3962
        %v4097 = vunpack.c.l.b16 %v3963
        %v4098 = vunpack.c.l.b16 %v3964
        %v4099 = vunpack.c.l.b16 %v3965
        %v4100 = vunpack.c.l.b16 %v3966
        %v4101 = vunpack.c.l.b16 %v3967
        %v4102 = vunpack.c.l.b16 %v3968
        %v4103 = vunpack.c.l.b16 %v3969
        %v4104 = vunpack.c.l.b16 %v3970
        %v4105 = vunpack.c.l.b16 %v3971
        %v4106 = vunpack.c.l.b16 %v3972
        %v4107 = vunpack.c.l.b16 %v3973
        %v4108 = vunpack.c.l.b16 %v3974
        %v4109 = vunpack.c.l.b16 %v3975
        %v4110 = vunpack.c.l.b16 %v3976
        %v4111 = vunpack.c.l.b16 %v3977
        %v4112 = vunpack.c.l.b16 %v3978
        %v4113 = vunpack.c.l.b16 %v3979
        %v4114 = vunpack.c.l.b16 %v3980
        %v4115 = vunpack.c.l.b16 %v3981
        %v4116 = vunpack.c.l.b16 %v3982
        %v4117 = vunpack.c.l.b16 %v3983
        %v4118 = vunpack.c.l.b16 %v3984
        %v4119 = vunpack.c.l.b16 %v3985
        %v4120 = vunpack.c.l.b16 %v3986
        %v4121 = vunpack.c.l.b16 %v3987
        %v4122 = vunpack.c.l.b16 %v3988
        %v4123 = vunpack.c.l.b16 %v3989
        %v4124 = vunpack.c.l.b16 %v3990
        %v4125 = vunpack.c.l.b16 %v3991
        %v4126 = vunpack.c.l.b16 %v3992
        %v4127 = vunpack.c.l.b16 %v3993
        %v4128 = vunpack.c.l.b16 %v3994
        %v4129 = vunpack.c.l.b16 %v3995
        %v4130 = vunpack.c.l.b16 %v3996
        %v4131 = vunpack.c.l.b16 %v3997
        %v4132 = vunpack.c.l.b16 %v3998
        %v4133 = vunpack.c.l.b16 %v3999
        %v4134 = vunpack.c.l.b16 %v4000
        %v4135 = vunpack.c.l.b16 %v4001
        %v4136 = vunpack.c.l.b16 %v4002
        %v4137 = vunpack.c.l.b16 %v4003
        %v4138 = vunpack.c.l.b16 %v4004
        %v4139 = vunpack.c.l.b16 %v4005
        %v4140 = vunpack.c.l.b16 %v4006
        %v4141 = vunpack.c.l.b16 %v4007
        %v4142 = vunpack.c.l.b16 %v4008
        %v4143 = vunpack.c.l.b16 %v4009
        %v4144 = vunpack.c.l.b16 %v4010
        %v4145 = vunpack.c.l.b16 %v4011
        %v4146 = vunpack.c.l.b16 %v4012
        %v4147 = vunpack.c.l.b16 %v4013
        %v4148 = vunpack.c.l.b16 %v4014
        %v4149 = vunpack.c.l.b16 %v4015
        %v4150 = vunpack.c.l.b16 %v4016
        %v4151 = vunpack.c.l.b16 %v4017
        %v4152 = vunpack.c.l.b16 %v4018
        %v4153 = vunpack.c.l.b16 %v4019
        %v4154 = vunpack.c.l.b16 %v4020
        %v4155 = vunpack.c.l.b16 %v4021
        %v4156 = vunpack.c.l.b16 %v4022
        %v4157 = vunpack.c.l.b16 %v4023
        %v4158 = vunpack.c.l.b16 %v4024
        %v4159 = vunpack.c.l.b16 %v4025
        %v4160 = vpack.c.b16 %v4097, %v4096
        %v4161 = vpack.c.b16 %v4099, %v4098
        %v4162 = vpack.c.b16 %v4101, %v4100
        %v4163 = vpack.c.b16 %v4103, %v4102
        %v4164 = vpack.c.b16 %v4105, %v4104
        %v4165 = vpack.c.b16 %v4107, %v4106
        %v4166 = vpack.c.b16 %v4109, %v4108
        %v4167 = vpack.c.b16 %v4111, %v4110
        %v4168 = vpack.c.b16 %v4113, %v4112
        %v4169 = vpack.c.b16 %v4115, %v4114
        %v4170 = vpack.c.b16 %v4117, %v4116
        %v4171 = vpack.c.b16 %v4119, %v4118
        %v4172 = vpack.c.b16 %v4121, %v4120
        %v4173 = vpack.c.b16 %v4123, %v4122
        %v4174 = vpack.c.b16 %v4125, %v4124
        %v4175 = vpack.c.b16 %v4127, %v4126
        %v4176 = vpack.c.b16 %v4129, %v4128
        %v4177 = vpack.c.b16 %v4131, %v4130
        %v4178 = vpack.c.b16 %v4133, %v4132
        %v4179 = vpack.c.b16 %v4135, %v4134
        %v4180 = vpack.c.b16 %v4137, %v4136
        %v4181 = vpack.c.b16 %v4139, %v4138
        %v4182 = vpack.c.b16 %v4141, %v4140
        %v4183 = vpack.c.b16 %v4143, %v4142
        %v4184 = vpack.c.b16 %v4145, %v4144
        %v4185 = vpack.c.b16 %v4147, %v4146
        %v4186 = vpack.c.b16 %v4149, %v4148
        %v4187 = vpack.c.b16 %v4151, %v4150
        %v4188 = vpack.c.b16 %v4153, %v4152
        %v4189 = vpack.c.b16 %v4155, %v4154
        %v4190 = vpack.c.b16 %v4157, %v4156
        %v4191 = vpack.c.b16 %v4159, %v4158
        %4224 = vmatprep.subr.bf16.mxu0 0
        %4225 = vmatpush1.bf16.msra.mxu0 %v4160
        %4226 = vmatprep.subr.bf16.mxu0 0
        %4227 = vmatpush1.bf16.msra.mxu0 %v4161
        %4228 = vmatprep.subr.bf16.mxu0 0
        %4229 = vmatpush1.bf16.msra.mxu0 %v4162
        %4230 = vmatprep.subr.bf16.mxu0 0
        %4231 = vmatpush1.bf16.msra.mxu0 %v4163
        %4232 = vmatprep.subr.bf16.mxu0 0
        %4233 = vmatpush1.bf16.msra.mxu0 %v4164
        %4234 = vmatprep.subr.bf16.mxu0 0
        %4235 = vmatpush1.bf16.msra.mxu0 %v4165
        %4236 = vmatprep.subr.bf16.mxu0 0
        %4237 = vmatpush1.bf16.msra.mxu0 %v4166
        %4238 = vmatprep.subr.bf16.mxu0 0
        %4239 = vmatpush1.bf16.msra.mxu0 %v4167
        %4240 = vmatprep.subr.bf16.mxu0 0
        %4241 = vmatpush1.bf16.msra.mxu0 %v4168
        %4242 = vmatprep.subr.bf16.mxu0 0
        %4243 = vmatpush1.bf16.msra.mxu0 %v4169
        %4244 = vmatprep.subr.bf16.mxu0 0
        %4245 = vmatpush1.bf16.msra.mxu0 %v4170
        %4246 = vmatprep.subr.bf16.mxu0 0
        %4247 = vmatpush1.bf16.msra.mxu0 %v4171
        %4248 = vmatprep.subr.bf16.mxu0 0
        %4249 = vmatpush1.bf16.msra.mxu0 %v4172
        %4250 = vmatprep.subr.bf16.mxu0 0
        %4251 = vmatpush1.bf16.msra.mxu0 %v4173
        %4252 = vmatprep.subr.bf16.mxu0 0
        %4253 = vmatpush1.bf16.msra.mxu0 %v4174
        %4254 = vmatprep.subr.bf16.mxu0 0
        %4255 = vmatpush1.bf16.msra.mxu0 %v4175
        %4256 = vmatprep.mubr.bf16.mxu0 %v3899
        %4257 = vmatmul.mubr.bf16.gmra.mrb[0].mxu0 %v3898
        %v4258 = vpop.f32.mrb[0].mxu0
        %v4259 = vadd.f32 %v4030, %v4258
        %v4260 = vpop.f32.mrb[0].mxu0
        %v4261 = vpop.f32.mrb[0].mxu0
        %v4262 = vadd.f32 %v4030, %v4261
        %v4263 = vpop.f32.mrb[0].mxu0
        %4264 = vmatprep.mubr.bf16.mxu0 %v3903
        %4265 = vmatmul.mubr.bf16.gmra.mrb[0].mxu0 %v3902
        %v4266 = vpop.f32.mrb[0].mxu0
        %v4267 = vadd.f32 %v4030, %v4266
        %v4268 = vpop.f32.mrb[0].mxu0
        %v4269 = vpop.f32.mrb[0].mxu0
        %v4270 = vadd.f32 %v4030, %v4269
        %v4271 = vpop.f32.mrb[0].mxu0
        %4272 = vmatprep.mubr.bf16.mxu0 %v3907
        %4273 = vmatmul.mubr.bf16.gmra.mrb[0].mxu0 %v3906
        %v4274 = vpop.f32.mrb[0].mxu0
        %v4275 = vadd.f32 %v4030, %v4274
        %v4276 = vpop.f32.mrb[0].mxu0
        %v4277 = vpop.f32.mrb[0].mxu0
        %v4278 = vadd.f32 %v4030, %v4277
        %v4279 = vpop.f32.mrb[0].mxu0
        %4280 = vmatprep.mubr.bf16.mxu0 %v3911
        %4281 = vmatmul.mubr.bf16.gmra.mrb[0].mxu0 %v3910
        %v4282 = vpop.f32.mrb[0].mxu0
        %v4283 = vadd.f32 %v4030, %v4282
        %v4284 = vpop.f32.mrb[0].mxu0
        %v4285 = vpop.f32.mrb[0].mxu0
        %v4286 = vadd.f32 %v4030, %v4285
        %v4287 = vpop.f32.mrb[0].mxu0
        %4288 = vmatprep.mubr.bf16.mxu0 %v3915
        %4289 = vmatmul.mubr.bf16.gmra.mrb[0].mxu0 %v3914
        %v4290 = vpop.f32.mrb[0].mxu0
        %v4291 = vadd.f32 %v4030, %v4290
        %v4292 = vpop.f32.mrb[0].mxu0
        %v4293 = vpop.f32.mrb[0].mxu0
        %v4294 = vadd.f32 %v4030, %v4293
        %v4295 = vpop.f32.mrb[0].mxu0
        %4296 = vmatprep.mubr.bf16.mxu0 %v3919
        %4297 = vmatmul.mubr.bf16.gmra.mrb[0].mxu0 %v3918
        %v4298 = vpop.f32.mrb[0].mxu0
        %v4299 = vadd.f32 %v4030, %v4298
        %v4300 = vpop.f32.mrb[0].mxu0
        %v4301 = vpop.f32.mrb[0].mxu0
        %v4302 = vadd.f32 %v4030, %v4301
        %v4303 = vpop.f32.mrb[0].mxu0
        %4304 = vmatprep.mubr.bf16.mxu0 %v3923
        %4305 = vmatmul.mubr.bf16.gmra.mrb[0].mxu0 %v3922
        %v4306 = vpop.f32.mrb[0].mxu0
        %v4307 = vadd.f32 %v4030, %v4306
        %v4308 = vpop.f32.mrb[0].mxu0
        %v4309 = vpop.f32.mrb[0].mxu0
        %v4310 = vadd.f32 %v4030, %v4309
        %v4311 = vpop.f32.mrb[0].mxu0
        %4312 = vmatprep.mubr.bf16.mxu0 %v3927
        %4313 = vmatmul.mubr.bf16.gmra.mrb[0].mxu0 %v3926
        %v4314 = vpop.f32.mrb[0].mxu0
        %v4315 = vadd.f32 %v4030, %v4314
        %v4316 = vpop.f32.mrb[0].mxu0
        %v4317 = vpop.f32.mrb[0].mxu0
        %v4318 = vadd.f32 %v4030, %v4317
        %v4319 = vpop.f32.mrb[0].mxu0
        %4320 = vmatprep.mubr.bf16.mxu0 %v3931
        %4321 = vmatmul.mubr.bf16.gmra.mrb[0].mxu0 %v3930
        %v4322 = vpop.f32.mrb[0].mxu0
        %v4323 = vadd.f32 %v4030, %v4322
        %v4324 = vpop.f32.mrb[0].mxu0
        %v4325 = vpop.f32.mrb[0].mxu0
        %v4326 = vadd.f32 %v4030, %v4325
        %v4327 = vpop.f32.mrb[0].mxu0
        %4328 = vmatprep.mubr.bf16.mxu0 %v3935
        %4329 = vmatmul.mubr.bf16.gmra.mrb[0].mxu0 %v3934
        %v4330 = vpop.f32.mrb[0].mxu0
        %v4331 = vadd.f32 %v4030, %v4330
        %v4332 = vpop.f32.mrb[0].mxu0
        %v4333 = vpop.f32.mrb[0].mxu0
        %v4334 = vadd.f32 %v4030, %v4333
        %v4335 = vpop.f32.mrb[0].mxu0
        %4336 = vmatprep.mubr.bf16.mxu0 %v3939
        %4337 = vmatmul.mubr.bf16.gmra.mrb[0].mxu0 %v3938
        %v4338 = vpop.f32.mrb[0].mxu0
        %v4339 = vadd.f32 %v4030, %v4338
        %v4340 = vpop.f32.mrb[0].mxu0
        %v4341 = vpop.f32.mrb[0].mxu0
        %v4342 = vadd.f32 %v4030, %v4341
        %v4343 = vpop.f32.mrb[0].mxu0
        %4344 = vmatprep.mubr.bf16.mxu0 %v3943
        %4345 = vmatmul.mubr.bf16.gmra.mrb[0].mxu0 %v3942
        %v4346 = vpop.f32.mrb[0].mxu0
        %v4347 = vadd.f32 %v4030, %v4346
        %v4348 = vpop.f32.mrb[0].mxu0
        %v4349 = vpop.f32.mrb[0].mxu0
        %v4350 = vadd.f32 %v4030, %v4349
        %v4351 = vpop.f32.mrb[0].mxu0
        %4352 = vmatprep.mubr.bf16.mxu0 %v3947
        %4353 = vmatmul.mubr.bf16.gmra.mrb[0].mxu0 %v3946
        %v4354 = vpop.f32.mrb[0].mxu0
        %v4355 = vadd.f32 %v4030, %v4354
        %v4356 = vpop.f32.mrb[0].mxu0
        %v4357 = vpop.f32.mrb[0].mxu0
        %v4358 = vadd.f32 %v4030, %v4357
        %v4359 = vpop.f32.mrb[0].mxu0
        %4360 = vmatprep.mubr.bf16.mxu0 %v3951
        %4361 = vmatmul.mubr.bf16.gmra.mrb[0].mxu0 %v3950
        %v4362 = vpop.f32.mrb[0].mxu0
        %v4363 = vadd.f32 %v4030, %v4362
        %v4364 = vpop.f32.mrb[0].mxu0
        %v4365 = vpop.f32.mrb[0].mxu0
        %v4366 = vadd.f32 %v4030, %v4365
        %v4367 = vpop.f32.mrb[0].mxu0
        %4368 = vmatprep.mubr.bf16.mxu0 %v3955
        %4369 = vmatmul.mubr.bf16.gmra.mrb[0].mxu0 %v3954
        %v4370 = vpop.f32.mrb[0].mxu0
        %v4371 = vadd.f32 %v4030, %v4370
        %v4372 = vpop.f32.mrb[0].mxu0
        %v4373 = vpop.f32.mrb[0].mxu0
        %v4374 = vadd.f32 %v4030, %v4373
        %v4375 = vpop.f32.mrb[0].mxu0
        %4376 = vmatprep.mubr.bf16.mxu0 %v3959
        %4377 = vmatmul.mubr.bf16.gmra.mrb[0].mxu0 %v3958
        %v4378 = vpop.f32.mrb[0].mxu0
        %v4379 = vadd.f32 %v4030, %v4378
        %v4380 = vpop.f32.mrb[0].mxu0
        %v4381 = vpop.f32.mrb[0].mxu0
        %v4382 = vadd.f32 %v4030, %v4381
        %v4383 = vpop.f32.mrb[0].mxu0
        %4384 = vdwg.mxu0
        %4385 = vmatprep.subr.bf16.mxu0 0
        %4386 = vmatpush1.bf16.msra.mxu0 %v4176
        %4387 = vmatprep.subr.bf16.mxu0 0
        %4388 = vmatpush1.bf16.msra.mxu0 %v4177
        %4389 = vmatprep.subr.bf16.mxu0 0
        %4390 = vmatpush1.bf16.msra.mxu0 %v4178
        %4391 = vmatprep.subr.bf16.mxu0 0
        %4392 = vmatpush1.bf16.msra.mxu0 %v4179
        %4393 = vmatprep.subr.bf16.mxu0 0
        %4394 = vmatpush1.bf16.msra.mxu0 %v4180
        %4395 = vmatprep.subr.bf16.mxu0 0
        %4396 = vmatpush1.bf16.msra.mxu0 %v4181
        %4397 = vmatprep.subr.bf16.mxu0 0
        %4398 = vmatpush1.bf16.msra.mxu0 %v4182
        %4399 = vmatprep.subr.bf16.mxu0 0
        %4400 = vmatpush1.bf16.msra.mxu0 %v4183
        %4401 = vmatprep.subr.bf16.mxu0 0
        %4402 = vmatpush1.bf16.msra.mxu0 %v4184
        %4403 = vmatprep.subr.bf16.mxu0 0
        %4404 = vmatpush1.bf16.msra.mxu0 %v4185
        %4405 = vmatprep.subr.bf16.mxu0 0
        %4406 = vmatpush1.bf16.msra.mxu0 %v4186
        %4407 = vmatprep.subr.bf16.mxu0 0
        %4408 = vmatpush1.bf16.msra.mxu0 %v4187
        %4409 = vmatprep.subr.bf16.mxu0 0
        %4410 = vmatpush1.bf16.msra.mxu0 %v4188
        %4411 = vmatprep.subr.bf16.mxu0 0
        %4412 = vmatpush1.bf16.msra.mxu0 %v4189
        %4413 = vmatprep.subr.bf16.mxu0 0
        %4414 = vmatpush1.bf16.msra.mxu0 %v4190
        %4415 = vmatprep.subr.bf16.mxu0 0
        %4416 = vmatpush1.bf16.msra.mxu0 %v4191
        %4417 = vmatprep.mubr.bf16.mxu0 %v3901
        %4418 = vmatmul.mubr.bf16.gmra.mrb[0].mxu0 %v3900
        %v4419 = vpop.f32.mrb[0].mxu0
        %v4420 = vadd.f32 %v4259, %v4419
        %v4421 = vpop.f32.mrb[0].mxu0
        %v4422 = vpop.f32.mrb[0].mxu0
        %v4423 = vadd.f32 %v4262, %v4422
        %v4424 = vpop.f32.mrb[0].mxu0
        %4425 = vmatprep.mubr.bf16.mxu0 %v3905
        %4426 = vmatmul.mubr.bf16.gmra.mrb[0].mxu0 %v3904
        %v4427 = vpop.f32.mrb[0].mxu0
        %v4428 = vadd.f32 %v4267, %v4427
        %v4429 = vpop.f32.mrb[0].mxu0
        %v4430 = vpop.f32.mrb[0].mxu0
        %v4431 = vadd.f32 %v4270, %v4430
        %v4432 = vpop.f32.mrb[0].mxu0
        %4433 = vmatprep.mubr.bf16.mxu0 %v3909
        %4434 = vmatmul.mubr.bf16.gmra.mrb[0].mxu0 %v3908
        %v4435 = vpop.f32.mrb[0].mxu0
        %v4436 = vadd.f32 %v4275, %v4435
        %v4437 = vpop.f32.mrb[0].mxu0
        %v4438 = vpop.f32.mrb[0].mxu0
        %v4439 = vadd.f32 %v4278, %v4438
        %v4440 = vpop.f32.mrb[0].mxu0
        %4441 = vmatprep.mubr.bf16.mxu0 %v3913
        %4442 = vmatmul.mubr.bf16.gmra.mrb[0].mxu0 %v3912
        %v4443 = vpop.f32.mrb[0].mxu0
        %v4444 = vadd.f32 %v4283, %v4443
        %v4445 = vpop.f32.mrb[0].mxu0
        %v4446 = vpop.f32.mrb[0].mxu0
        %v4447 = vadd.f32 %v4286, %v4446
        %v4448 = vpop.f32.mrb[0].mxu0
        %4449 = vmatprep.mubr.bf16.mxu0 %v3917
        %4450 = vmatmul.mubr.bf16.gmra.mrb[0].mxu0 %v3916
        %v4451 = vpop.f32.mrb[0].mxu0
        %v4452 = vadd.f32 %v4291, %v4451
        %v4453 = vpop.f32.mrb[0].mxu0
        %v4454 = vpop.f32.mrb[0].mxu0
        %v4455 = vadd.f32 %v4294, %v4454
        %v4456 = vpop.f32.mrb[0].mxu0
        %4457 = vmatprep.mubr.bf16.mxu0 %v3921
        %4458 = vmatmul.mubr.bf16.gmra.mrb[0].mxu0 %v3920
        %v4459 = vpop.f32.mrb[0].mxu0
        %v4460 = vadd.f32 %v4299, %v4459
        %v4461 = vpop.f32.mrb[0].mxu0
        %v4462 = vpop.f32.mrb[0].mxu0
        %v4463 = vadd.f32 %v4302, %v4462
        %v4464 = vpop.f32.mrb[0].mxu0
        %4465 = vmatprep.mubr.bf16.mxu0 %v3925
        %4466 = vmatmul.mubr.bf16.gmra.mrb[0].mxu0 %v3924
        %v4467 = vpop.f32.mrb[0].mxu0
        %v4468 = vadd.f32 %v4307, %v4467
        %v4469 = vpop.f32.mrb[0].mxu0
        %v4470 = vpop.f32.mrb[0].mxu0
        %v4471 = vadd.f32 %v4310, %v4470
        %v4472 = vpop.f32.mrb[0].mxu0
        %4473 = vmatprep.mubr.bf16.mxu0 %v3929
        %4474 = vmatmul.mubr.bf16.gmra.mrb[0].mxu0 %v3928
        %v4475 = vpop.f32.mrb[0].mxu0
        %v4476 = vadd.f32 %v4315, %v4475
        %v4477 = vpop.f32.mrb[0].mxu0
        %v4478 = vpop.f32.mrb[0].mxu0
        %v4479 = vadd.f32 %v4318, %v4478
        %v4480 = vpop.f32.mrb[0].mxu0
        %4481 = vmatprep.mubr.bf16.mxu0 %v3933
        %4482 = vmatmul.mubr.bf16.gmra.mrb[0].mxu0 %v3932
        %v4483 = vpop.f32.mrb[0].mxu0
        %v4484 = vadd.f32 %v4323, %v4483
        %v4485 = vpop.f32.mrb[0].mxu0
        %v4486 = vpop.f32.mrb[0].mxu0
        %v4487 = vadd.f32 %v4326, %v4486
        %v4488 = vpop.f32.mrb[0].mxu0
        %4489 = vmatprep.mubr.bf16.mxu0 %v3937
        %4490 = vmatmul.mubr.bf16.gmra.mrb[0].mxu0 %v3936
        %v4491 = vpop.f32.mrb[0].mxu0
        %v4492 = vadd.f32 %v4331, %v4491
        %v4493 = vpop.f32.mrb[0].mxu0
        %v4494 = vpop.f32.mrb[0].mxu0
        %v4495 = vadd.f32 %v4334, %v4494
        %v4496 = vpop.f32.mrb[0].mxu0
        %4497 = vmatprep.mubr.bf16.mxu0 %v3941
        %4498 = vmatmul.mubr.bf16.gmra.mrb[0].mxu0 %v3940
        %v4499 = vpop.f32.mrb[0].mxu0
        %v4500 = vadd.f32 %v4339, %v4499
        %v4501 = vpop.f32.mrb[0].mxu0
        %v4502 = vpop.f32.mrb[0].mxu0
        %v4503 = vadd.f32 %v4342, %v4502
        %v4504 = vpop.f32.mrb[0].mxu0
        %4505 = vmatprep.mubr.bf16.mxu0 %v3945
        %4506 = vmatmul.mubr.bf16.gmra.mrb[0].mxu0 %v3944
        %v4507 = vpop.f32.mrb[0].mxu0
        %v4508 = vadd.f32 %v4347, %v4507
        %v4509 = vpop.f32.mrb[0].mxu0
        %v4510 = vpop.f32.mrb[0].mxu0
        %v4511 = vadd.f32 %v4350, %v4510
        %v4512 = vpop.f32.mrb[0].mxu0
        %4513 = vmatprep.mubr.bf16.mxu0 %v3949
        %4514 = vmatmul.mubr.bf16.gmra.mrb[0].mxu0 %v3948
        %v4515 = vpop.f32.mrb[0].mxu0
        %v4516 = vadd.f32 %v4355, %v4515
        %v4517 = vpop.f32.mrb[0].mxu0
        %v4518 = vpop.f32.mrb[0].mxu0
        %v4519 = vadd.f32 %v4358, %v4518
        %v4520 = vpop.f32.mrb[0].mxu0
        %4521 = vmatprep.mubr.bf16.mxu0 %v3953
        %4522 = vmatmul.mubr.bf16.gmra.mrb[0].mxu0 %v3952
        %v4523 = vpop.f32.mrb[0].mxu0
        %v4524 = vadd.f32 %v4363, %v4523
        %v4525 = vpop.f32.mrb[0].mxu0
        %v4526 = vpop.f32.mrb[0].mxu0
        %v4527 = vadd.f32 %v4366, %v4526
        %v4528 = vpop.f32.mrb[0].mxu0
        %4529 = vmatprep.mubr.bf16.mxu0 %v3957
        %4530 = vmatmul.mubr.bf16.gmra.mrb[0].mxu0 %v3956
        %v4531 = vpop.f32.mrb[0].mxu0
        %v4532 = vadd.f32 %v4371, %v4531
        %v4533 = vpop.f32.mrb[0].mxu0
        %v4534 = vpop.f32.mrb[0].mxu0
        %v4535 = vadd.f32 %v4374, %v4534
        %v4536 = vpop.f32.mrb[0].mxu0
        %4537 = vmatprep.mubr.bf16.mxu0 %v3961
        %4538 = vmatmul.mubr.bf16.gmra.mrb[0].mxu0 %v3960
        %v4539 = vpop.f32.mrb[0].mxu0
        %v4540 = vadd.f32 %v4379, %v4539
        %v4541 = vpop.f32.mrb[0].mxu0
        %v4542 = vpop.f32.mrb[0].mxu0
        %v4543 = vadd.f32 %v4382, %v4542
        %v4544 = vpop.f32.mrb[0].mxu0
        %4545 = vdwg.mxu0
        %v4546 = vadd.f32 %v2611, %v4420
        %v4547 = vadd.f32 %v2612, %v4423
        %v4548 = vadd.f32 %v2613, %v4428
        %v4549 = vadd.f32 %v2614, %v4431
        %v4550 = vadd.f32 %v2615, %v4436
        %v4551 = vadd.f32 %v2616, %v4439
        %v4552 = vadd.f32 %v2617, %v4444
        %v4553 = vadd.f32 %v2618, %v4447
        %v4554 = vadd.f32 %v2619, %v4452
        %v4555 = vadd.f32 %v2620, %v4455
        %v4556 = vadd.f32 %v2621, %v4460
        %v4557 = vadd.f32 %v2622, %v4463
        %v4558 = vadd.f32 %v2623, %v4468
        %v4559 = vadd.f32 %v2624, %v4471
        %v4560 = vadd.f32 %v2625, %v4476
        %v4561 = vadd.f32 %v2626, %v4479
        %v4562 = vadd.f32 %v2627, %v4484
        %v4563 = vadd.f32 %v2628, %v4487
        %v4564 = vadd.f32 %v2629, %v4492
        %v4565 = vadd.f32 %v2630, %v4495
        %v4566 = vadd.f32 %v2631, %v4500
        %v4567 = vadd.f32 %v2632, %v4503
        %v4568 = vadd.f32 %v2633, %v4508
        %v4569 = vadd.f32 %v2634, %v4511
        %v4570 = vadd.f32 %v2635, %v4516
        %v4571 = vadd.f32 %v2636, %v4519
        %v4572 = vadd.f32 %v2637, %v4524
        %v4573 = vadd.f32 %v2638, %v4527
        %v4574 = vadd.f32 %v2639, %v4532
        %v4575 = vadd.f32 %v2640, %v4535
        %v4576 = vadd.f32 %v2641, %v4540
        %v4577 = vadd.f32 %v2642, %v4543
        %4578 = vadd.xlane.f32.xlu0 %v4546
        %v4579 = vpop.xlane.xlu0 %4578
        %4580 = vadd.xlane.f32.xlu0 %v4547
        %v4581 = vpop.xlane.xlu0 %4580
        %4582 = vadd.xlane.f32.xlu0 %v4548
        %v4583 = vpop.xlane.xlu0 %4582
        %4584 = vadd.xlane.f32.xlu0 %v4549
        %v4585 = vpop.xlane.xlu0 %4584
        %4586 = vadd.xlane.f32.xlu0 %v4550
        %v4587 = vpop.xlane.xlu0 %4586
        %4588 = vadd.xlane.f32.xlu0 %v4551
        %v4589 = vpop.xlane.xlu0 %4588
        %4590 = vadd.xlane.f32.xlu0 %v4552
        %v4591 = vpop.xlane.xlu0 %4590
        %4592 = vadd.xlane.f32.xlu0 %v4553
        %v4593 = vpop.xlane.xlu0 %4592
        %4594 = vadd.xlane.f32.xlu0 %v4554
        %v4595 = vpop.xlane.xlu0 %4594
        %4596 = vadd.xlane.f32.xlu0 %v4555
        %v4597 = vpop.xlane.xlu0 %4596
        %4598 = vadd.xlane.f32.xlu0 %v4556
        %v4599 = vpop.xlane.xlu0 %4598
        %4600 = vadd.xlane.f32.xlu0 %v4557
        %v4601 = vpop.xlane.xlu0 %4600
        %4602 = vadd.xlane.f32.xlu0 %v4558
        %v4603 = vpop.xlane.xlu0 %4602
        %4604 = vadd.xlane.f32.xlu0 %v4559
        %v4605 = vpop.xlane.xlu0 %4604
        %4606 = vadd.xlane.f32.xlu0 %v4560
        %v4607 = vpop.xlane.xlu0 %4606
        %4608 = vadd.xlane.f32.xlu0 %v4561
        %v4609 = vpop.xlane.xlu0 %4608
        %4610 = vadd.xlane.f32.xlu0 %v4562
        %v4611 = vpop.xlane.xlu0 %4610
        %4612 = vadd.xlane.f32.xlu0 %v4563
        %v4613 = vpop.xlane.xlu0 %4612
        %4614 = vadd.xlane.f32.xlu0 %v4564
        %v4615 = vpop.xlane.xlu0 %4614
        %4616 = vadd.xlane.f32.xlu0 %v4565
        %v4617 = vpop.xlane.xlu0 %4616
        %4618 = vadd.xlane.f32.xlu0 %v4566
        %v4619 = vpop.xlane.xlu0 %4618
        %4620 = vadd.xlane.f32.xlu0 %v4567
        %v4621 = vpop.xlane.xlu0 %4620
        %4622 = vadd.xlane.f32.xlu0 %v4568
        %v4623 = vpop.xlane.xlu0 %4622
        %4624 = vadd.xlane.f32.xlu0 %v4569
        %v4625 = vpop.xlane.xlu0 %4624
        %4626 = vadd.xlane.f32.xlu0 %v4570
        %v4627 = vpop.xlane.xlu0 %4626
        %4628 = vadd.xlane.f32.xlu0 %v4571
        %v4629 = vpop.xlane.xlu0 %4628
        %4630 = vadd.xlane.f32.xlu0 %v4572
        %v4631 = vpop.xlane.xlu0 %4630
        %4632 = vadd.xlane.f32.xlu0 %v4573
        %v4633 = vpop.xlane.xlu0 %4632
        %4634 = vadd.xlane.f32.xlu0 %v4574
        %v4635 = vpop.xlane.xlu0 %4634
        %4636 = vadd.xlane.f32.xlu0 %v4575
        %v4637 = vpop.xlane.xlu0 %4636
        %4638 = vadd.xlane.f32.xlu0 %v4576
        %v4639 = vpop.xlane.xlu0 %4638
        %4640 = vadd.xlane.f32.xlu0 %v4577
        %v4641 = vpop.xlane.xlu0 %4640
        %v4642 = vmul.f32 %v4579, %v2278
        %v4643 = vmul.f32 %v4581, %v2278
        %v4644 = vmul.f32 %v4583, %v2278
        %v4645 = vmul.f32 %v4585, %v2278
        %v4646 = vmul.f32 %v4587, %v2278
        %v4647 = vmul.f32 %v4589, %v2278
        %v4648 = vmul.f32 %v4591, %v2278
        %v4649 = vmul.f32 %v4593, %v2278
        %v4650 = vmul.f32 %v4595, %v2278
        %v4651 = vmul.f32 %v4597, %v2278
        %v4652 = vmul.f32 %v4599, %v2278
        %v4653 = vmul.f32 %v4601, %v2278
        %v4654 = vmul.f32 %v4603, %v2278
        %v4655 = vmul.f32 %v4605, %v2278
        %v4656 = vmul.f32 %v4607, %v2278
        %v4657 = vmul.f32 %v4609, %v2278
        %v4658 = vmul.f32 %v4611, %v2278
        %v4659 = vmul.f32 %v4613, %v2278
        %v4660 = vmul.f32 %v4615, %v2278
        %v4661 = vmul.f32 %v4617, %v2278
        %v4662 = vmul.f32 %v4619, %v2278
        %v4663 = vmul.f32 %v4621, %v2278
        %v4664 = vmul.f32 %v4623, %v2278
        %v4665 = vmul.f32 %v4625, %v2278
        %v4666 = vmul.f32 %v4627, %v2278
        %v4667 = vmul.f32 %v4629, %v2278
        %v4668 = vmul.f32 %v4631, %v2278
        %v4669 = vmul.f32 %v4633, %v2278
        %v4670 = vmul.f32 %v4635, %v2278
        %v4671 = vmul.f32 %v4637, %v2278
        %v4672 = vmul.f32 %v4639, %v2278
        %v4673 = vmul.f32 %v4641, %v2278
        %v4674 = vsub.f32 %v4546, %v4642
        %v4675 = vsub.f32 %v4547, %v4643
        %v4676 = vsub.f32 %v4548, %v4644
        %v4677 = vsub.f32 %v4549, %v4645
        %v4678 = vsub.f32 %v4550, %v4646
        %v4679 = vsub.f32 %v4551, %v4647
        %v4680 = vsub.f32 %v4552, %v4648
        %v4681 = vsub.f32 %v4553, %v4649
        %v4682 = vsub.f32 %v4554, %v4650
        %v4683 = vsub.f32 %v4555, %v4651
        %v4684 = vsub.f32 %v4556, %v4652
        %v4685 = vsub.f32 %v4557, %v4653
        %v4686 = vsub.f32 %v4558, %v4654
        %v4687 = vsub.f32 %v4559, %v4655
        %v4688 = vsub.f32 %v4560, %v4656
        %v4689 = vsub.f32 %v4561, %v4657
        %v4690 = vsub.f32 %v4562, %v4658
        %v4691 = vsub.f32 %v4563, %v4659
        %v4692 = vsub.f32 %v4564, %v4660
        %v4693 = vsub.f32 %v4565, %v4661
        %v4694 = vsub.f32 %v4566, %v4662
        %v4695 = vsub.f32 %v4567, %v4663
        %v4696 = vsub.f32 %v4568, %v4664
        %v4697 = vsub.f32 %v4569, %v4665
        %v4698 = vsub.f32 %v4570, %v4666
        %v4699 = vsub.f32 %v4571, %v4667
        %v4700 = vsub.f32 %v4572, %v4668
        %v4701 = vsub.f32 %v4573, %v4669
        %v4702 = vsub.f32 %v4574, %v4670
        %v4703 = vsub.f32 %v4575, %v4671
        %v4704 = vsub.f32 %v4576, %v4672
        %v4705 = vsub.f32 %v4577, %v4673
        %v4706 = vmul.f32 %v4674, %v4674
        %v4707 = vmul.f32 %v4675, %v4675
        %v4708 = vmul.f32 %v4676, %v4676
        %v4709 = vmul.f32 %v4677, %v4677
        %v4710 = vmul.f32 %v4678, %v4678
        %v4711 = vmul.f32 %v4679, %v4679
        %v4712 = vmul.f32 %v4680, %v4680
        %v4713 = vmul.f32 %v4681, %v4681
        %v4714 = vmul.f32 %v4682, %v4682
        %v4715 = vmul.f32 %v4683, %v4683
        %v4716 = vmul.f32 %v4684, %v4684
        %v4717 = vmul.f32 %v4685, %v4685
        %v4718 = vmul.f32 %v4686, %v4686
        %v4719 = vmul.f32 %v4687, %v4687
        %v4720 = vmul.f32 %v4688, %v4688
        %v4721 = vmul.f32 %v4689, %v4689
        %v4722 = vmul.f32 %v4690, %v4690
        %v4723 = vmul.f32 %v4691, %v4691
        %v4724 = vmul.f32 %v4692, %v4692
        %v4725 = vmul.f32 %v4693, %v4693
        %v4726 = vmul.f32 %v4694, %v4694
        %v4727 = vmul.f32 %v4695, %v4695
        %v4728 = vmul.f32 %v4696, %v4696
        %v4729 = vmul.f32 %v4697, %v4697
        %v4730 = vmul.f32 %v4698, %v4698
        %v4731 = vmul.f32 %v4699, %v4699
        %v4732 = vmul.f32 %v4700, %v4700
        %v4733 = vmul.f32 %v4701, %v4701
        %v4734 = vmul.f32 %v4702, %v4702
        %v4735 = vmul.f32 %v4703, %v4703
        %v4736 = vmul.f32 %v4704, %v4704
        %v4737 = vmul.f32 %v4705, %v4705
        %4738 = vadd.xlane.f32.xlu0 %v4706
        %v4739 = vpop.xlane.xlu0 %4738
        %4740 = vadd.xlane.f32.xlu0 %v4707
        %v4741 = vpop.xlane.xlu0 %4740
        %4742 = vadd.xlane.f32.xlu0 %v4708
        %v4743 = vpop.xlane.xlu0 %4742
        %4744 = vadd.xlane.f32.xlu0 %v4709
        %v4745 = vpop.xlane.xlu0 %4744
        %4746 = vadd.xlane.f32.xlu0 %v4710
        %v4747 = vpop.xlane.xlu0 %4746
        %4748 = vadd.xlane.f32.xlu0 %v4711
        %v4749 = vpop.xlane.xlu0 %4748
        %4750 = vadd.xlane.f32.xlu0 %v4712
        %v4751 = vpop.xlane.xlu0 %4750
        %4752 = vadd.xlane.f32.xlu0 %v4713
        %v4753 = vpop.xlane.xlu0 %4752
        %4754 = vadd.xlane.f32.xlu0 %v4714
        %v4755 = vpop.xlane.xlu0 %4754
        %4756 = vadd.xlane.f32.xlu0 %v4715
        %v4757 = vpop.xlane.xlu0 %4756
        %4758 = vadd.xlane.f32.xlu0 %v4716
        %v4759 = vpop.xlane.xlu0 %4758
        %4760 = vadd.xlane.f32.xlu0 %v4717
        %v4761 = vpop.xlane.xlu0 %4760
        %4762 = vadd.xlane.f32.xlu0 %v4718
        %v4763 = vpop.xlane.xlu0 %4762
        %4764 = vadd.xlane.f32.xlu0 %v4719
        %v4765 = vpop.xlane.xlu0 %4764
        %4766 = vadd.xlane.f32.xlu0 %v4720
        %v4767 = vpop.xlane.xlu0 %4766
        %4768 = vadd.xlane.f32.xlu0 %v4721
        %v4769 = vpop.xlane.xlu0 %4768
        %4770 = vadd.xlane.f32.xlu0 %v4722
        %v4771 = vpop.xlane.xlu0 %4770
        %4772 = vadd.xlane.f32.xlu0 %v4723
        %v4773 = vpop.xlane.xlu0 %4772
        %4774 = vadd.xlane.f32.xlu0 %v4724
        %v4775 = vpop.xlane.xlu0 %4774
        %4776 = vadd.xlane.f32.xlu0 %v4725
        %v4777 = vpop.xlane.xlu0 %4776
        %4778 = vadd.xlane.f32.xlu0 %v4726
        %v4779 = vpop.xlane.xlu0 %4778
        %4780 = vadd.xlane.f32.xlu0 %v4727
        %v4781 = vpop.xlane.xlu0 %4780
        %4782 = vadd.xlane.f32.xlu0 %v4728
        %v4783 = vpop.xlane.xlu0 %4782
        %4784 = vadd.xlane.f32.xlu0 %v4729
        %v4785 = vpop.xlane.xlu0 %4784
        %4786 = vadd.xlane.f32.xlu0 %v4730
        %v4787 = vpop.xlane.xlu0 %4786
        %4788 = vadd.xlane.f32.xlu0 %v4731
        %v4789 = vpop.xlane.xlu0 %4788
        %4790 = vadd.xlane.f32.xlu0 %v4732
        %v4791 = vpop.xlane.xlu0 %4790
        %4792 = vadd.xlane.f32.xlu0 %v4733
        %v4793 = vpop.xlane.xlu0 %4792
        %4794 = vadd.xlane.f32.xlu0 %v4734
        %v4795 = vpop.xlane.xlu0 %4794
        %4796 = vadd.xlane.f32.xlu0 %v4735
        %v4797 = vpop.xlane.xlu0 %4796
        %4798 = vadd.xlane.f32.xlu0 %v4736
        %v4799 = vpop.xlane.xlu0 %4798
        %4800 = vadd.xlane.f32.xlu0 %v4737
        %v4801 = vpop.xlane.xlu0 %4800
        %v4802 = vmul.f32 %v4739, %v2278
        %v4803 = vmul.f32 %v4741, %v2278
        %v4804 = vmul.f32 %v4743, %v2278
        %v4805 = vmul.f32 %v4745, %v2278
        %v4806 = vmul.f32 %v4747, %v2278
        %v4807 = vmul.f32 %v4749, %v2278
        %v4808 = vmul.f32 %v4751, %v2278
        %v4809 = vmul.f32 %v4753, %v2278
        %v4810 = vmul.f32 %v4755, %v2278
        %v4811 = vmul.f32 %v4757, %v2278
        %v4812 = vmul.f32 %v4759, %v2278
        %v4813 = vmul.f32 %v4761, %v2278
        %v4814 = vmul.f32 %v4763, %v2278
        %v4815 = vmul.f32 %v4765, %v2278
        %v4816 = vmul.f32 %v4767, %v2278
        %v4817 = vmul.f32 %v4769, %v2278
        %v4818 = vmul.f32 %v4771, %v2278
        %v4819 = vmul.f32 %v4773, %v2278
        %v4820 = vmul.f32 %v4775, %v2278
        %v4821 = vmul.f32 %v4777, %v2278
        %v4822 = vmul.f32 %v4779, %v2278
        %v4823 = vmul.f32 %v4781, %v2278
        %v4824 = vmul.f32 %v4783, %v2278
        %v4825 = vmul.f32 %v4785, %v2278
        %v4826 = vmul.f32 %v4787, %v2278
        %v4827 = vmul.f32 %v4789, %v2278
        %v4828 = vmul.f32 %v4791, %v2278
        %v4829 = vmul.f32 %v4793, %v2278
        %v4830 = vmul.f32 %v4795, %v2278
        %v4831 = vmul.f32 %v4797, %v2278
        %v4832 = vmul.f32 %v4799, %v2278
        %v4833 = vmul.f32 %v4801, %v2278
        %v4834 = vadd.f32 %v4802, 1e-05
        %v4835 = vadd.f32 %v4803, 1e-05
        %v4836 = vadd.f32 %v4804, 1e-05
        %v4837 = vadd.f32 %v4805, 1e-05
        %v4838 = vadd.f32 %v4806, 1e-05
        %v4839 = vadd.f32 %v4807, 1e-05
        %v4840 = vadd.f32 %v4808, 1e-05
        %v4841 = vadd.f32 %v4809, 1e-05
        %v4842 = vadd.f32 %v4810, 1e-05
        %v4843 = vadd.f32 %v4811, 1e-05
        %v4844 = vadd.f32 %v4812, 1e-05
        %v4845 = vadd.f32 %v4813, 1e-05
        %v4846 = vadd.f32 %v4814, 1e-05
        %v4847 = vadd.f32 %v4815, 1e-05
        %v4848 = vadd.f32 %v4816, 1e-05
        %v4849 = vadd.f32 %v4817, 1e-05
        %v4850 = vadd.f32 %v4818, 1e-05
        %v4851 = vadd.f32 %v4819, 1e-05
        %v4852 = vadd.f32 %v4820, 1e-05
        %v4853 = vadd.f32 %v4821, 1e-05
        %v4854 = vadd.f32 %v4822, 1e-05
        %v4855 = vadd.f32 %v4823, 1e-05
        %v4856 = vadd.f32 %v4824, 1e-05
        %v4857 = vadd.f32 %v4825, 1e-05
        %v4858 = vadd.f32 %v4826, 1e-05
        %v4859 = vadd.f32 %v4827, 1e-05
        %v4860 = vadd.f32 %v4828, 1e-05
        %v4861 = vadd.f32 %v4829, 1e-05
        %v4862 = vadd.f32 %v4830, 1e-05
        %v4863 = vadd.f32 %v4831, 1e-05
        %v4864 = vadd.f32 %v4832, 1e-05
        %v4865 = vadd.f32 %v4833, 1e-05
        %v4866 = vrsqrt.pop %v4834
        %v4867 = vrsqrt.pop %v4835
        %v4868 = vrsqrt.pop %v4836
        %v4869 = vrsqrt.pop %v4837
        %v4870 = vrsqrt.pop %v4838
        %v4871 = vrsqrt.pop %v4839
        %v4872 = vrsqrt.pop %v4840
        %v4873 = vrsqrt.pop %v4841
        %v4874 = vrsqrt.pop %v4842
        %v4875 = vrsqrt.pop %v4843
        %v4876 = vrsqrt.pop %v4844
        %v4877 = vrsqrt.pop %v4845
        %v4878 = vrsqrt.pop %v4846
        %v4879 = vrsqrt.pop %v4847
        %v4880 = vrsqrt.pop %v4848
        %v4881 = vrsqrt.pop %v4849
        %v4882 = vrsqrt.pop %v4850
        %v4883 = vrsqrt.pop %v4851
        %v4884 = vrsqrt.pop %v4852
        %v4885 = vrsqrt.pop %v4853
        %v4886 = vrsqrt.pop %v4854
        %v4887 = vrsqrt.pop %v4855
        %v4888 = vrsqrt.pop %v4856
        %v4889 = vrsqrt.pop %v4857
        %v4890 = vrsqrt.pop %v4858
        %v4891 = vrsqrt.pop %v4859
        %v4892 = vrsqrt.pop %v4860
        %v4893 = vrsqrt.pop %v4861
        %v4894 = vrsqrt.pop %v4862
        %v4895 = vrsqrt.pop %v4863
        %v4896 = vrsqrt.pop %v4864
        %v4897 = vrsqrt.pop %v4865
        %v4898 = vmul.f32 %v4674, %v4866
        %v4899 = vmul.f32 %v4675, %v4867
        %v4900 = vmul.f32 %v4676, %v4868
        %v4901 = vmul.f32 %v4677, %v4869
        %v4902 = vmul.f32 %v4678, %v4870
        %v4903 = vmul.f32 %v4679, %v4871
        %v4904 = vmul.f32 %v4680, %v4872
        %v4905 = vmul.f32 %v4681, %v4873
        %v4906 = vmul.f32 %v4682, %v4874
        %v4907 = vmul.f32 %v4683, %v4875
        %v4908 = vmul.f32 %v4684, %v4876
        %v4909 = vmul.f32 %v4685, %v4877
        %v4910 = vmul.f32 %v4686, %v4878
        %v4911 = vmul.f32 %v4687, %v4879
        %v4912 = vmul.f32 %v4688, %v4880
        %v4913 = vmul.f32 %v4689, %v4881
        %v4914 = vmul.f32 %v4690, %v4882
        %v4915 = vmul.f32 %v4691, %v4883
        %v4916 = vmul.f32 %v4692, %v4884
        %v4917 = vmul.f32 %v4693, %v4885
        %v4918 = vmul.f32 %v4694, %v4886
        %v4919 = vmul.f32 %v4695, %v4887
        %v4920 = vmul.f32 %v4696, %v4888
        %v4921 = vmul.f32 %v4697, %v4889
        %v4922 = vmul.f32 %v4698, %v4890
        %v4923 = vmul.f32 %v4699, %v4891
        %v4924 = vmul.f32 %v4700, %v4892
        %v4925 = vmul.f32 %v4701, %v4893
        %v4926 = vmul.f32 %v4702, %v4894
        %v4927 = vmul.f32 %v4703, %v4895
        %v4928 = vmul.f32 %v4704, %v4896
        %v4929 = vmul.f32 %v4705, %v4897
        %v4931 = vlaneseq
        %v4932 = vshrl.u32 %v4931, 7
        %v4933 = vsub.s32 0, %v4932
        %v4934 = vrot.slane %v1686, %v4933
        %v4936 = vmul.f32 %v4898, %v4934
        %v4937 = vmul.f32 %v4899, %v4934
        %v4938 = vmul.f32 %v4900, %v4934
        %v4939 = vmul.f32 %v4901, %v4934
        %v4940 = vmul.f32 %v4902, %v4934
        %v4941 = vmul.f32 %v4903, %v4934
        %v4942 = vmul.f32 %v4904, %v4934
        %v4943 = vmul.f32 %v4905, %v4934
        %v4944 = vmul.f32 %v4906, %v4934
        %v4945 = vmul.f32 %v4907, %v4934
        %v4946 = vmul.f32 %v4908, %v4934
        %v4947 = vmul.f32 %v4909, %v4934
        %v4948 = vmul.f32 %v4910, %v4934
        %v4949 = vmul.f32 %v4911, %v4934
        %v4950 = vmul.f32 %v4912, %v4934
        %v4951 = vmul.f32 %v4913, %v4934
        %v4952 = vmul.f32 %v4914, %v4934
        %v4953 = vmul.f32 %v4915, %v4934
        %v4954 = vmul.f32 %v4916, %v4934
        %v4955 = vmul.f32 %v4917, %v4934
        %v4956 = vmul.f32 %v4918, %v4934
        %v4957 = vmul.f32 %v4919, %v4934
        %v4958 = vmul.f32 %v4920, %v4934
        %v4959 = vmul.f32 %v4921, %v4934
        %v4960 = vmul.f32 %v4922, %v4934
        %v4961 = vmul.f32 %v4923, %v4934
        %v4962 = vmul.f32 %v4924, %v4934
        %v4963 = vmul.f32 %v4925, %v4934
        %v4964 = vmul.f32 %v4926, %v4934
        %v4965 = vmul.f32 %v4927, %v4934
        %v4966 = vmul.f32 %v4928, %v4934
        %v4967 = vmul.f32 %v4929, %v4934
        %v4969 = vlaneseq
        %v4970 = vshrl.u32 %v4969, 7
        %v4971 = vsub.s32 0, %v4970
        %v4972 = vrot.slane %v1687, %v4971
        %v4974 = vadd.f32 %v4936, %v4972
        %v4975 = vadd.f32 %v4937, %v4972
        %v4976 = vadd.f32 %v4938, %v4972
        %v4977 = vadd.f32 %v4939, %v4972
        %v4978 = vadd.f32 %v4940, %v4972
        %v4979 = vadd.f32 %v4941, %v4972
        %v4980 = vadd.f32 %v4942, %v4972
        %v4981 = vadd.f32 %v4943, %v4972
        %v4982 = vadd.f32 %v4944, %v4972
        %v4983 = vadd.f32 %v4945, %v4972
        %v4984 = vadd.f32 %v4946, %v4972
        %v4985 = vadd.f32 %v4947, %v4972
        %v4986 = vadd.f32 %v4948, %v4972
        %v4987 = vadd.f32 %v4949, %v4972
        %v4988 = vadd.f32 %v4950, %v4972
        %v4989 = vadd.f32 %v4951, %v4972
        %v4990 = vadd.f32 %v4952, %v4972
        %v4991 = vadd.f32 %v4953, %v4972
        %v4992 = vadd.f32 %v4954, %v4972
        %v4993 = vadd.f32 %v4955, %v4972
        %v4994 = vadd.f32 %v4956, %v4972
        %v4995 = vadd.f32 %v4957, %v4972
        %v4996 = vadd.f32 %v4958, %v4972
        %v4997 = vadd.f32 %v4959, %v4972
        %v4998 = vadd.f32 %v4960, %v4972
        %v4999 = vadd.f32 %v4961, %v4972
        %v5000 = vadd.f32 %v4962, %v4972
        %v5001 = vadd.f32 %v4963, %v4972
        %v5002 = vadd.f32 %v4964, %v4972
        %v5003 = vadd.f32 %v4965, %v4972
        %v5004 = vadd.f32 %v4966, %v4972
        %v5005 = vadd.f32 %v4967, %v4972
        %s5006 = scalar_lea.vmem %s6, 1
        %v5007 = vld [vmem:[%s5006] sm:$0x1]
        %s5008 = scalar_lea.vmem %s8, 1
        %v5009 = vld [vmem:[%s5008] sm:$0x1]
        %s5010 = scalar_lea.vmem %s9, 1
        %v5011 = vld [vmem:[%s5010] sm:$0x1]
        %s5012 = scalar_lea.vmem %s10, 1
        %v5013 = vld [vmem:[%s5012] sm:$0x1]
        %s5014 = scalar_lea.vmem %s12, 4
        %v5015 = vld [vmem:[%s5014] sm:$0xf]
        %s5016 = scalar_lea.vmem %s14, 1
        %v5017 = vld [vmem:[%s5016] sm:$0x1]
        %s5018 = scalar_lea.vmem %s15, 1
        %v5019 = vld [vmem:[%s5018] sm:$0x1]
        %s5020 = scalar_lea.vmem %s16, 1
        %v5021 = vld [vmem:[%s5020] sm:$0x1]
        %v5022 = vpack.c.bf16 %v4975, %v4974
        %v5023 = vpack.c.bf16 %v4977, %v4976
        %v5024 = vpack.c.bf16 %v4979, %v4978
        %v5025 = vpack.c.bf16 %v4981, %v4980
        %v5026 = vpack.c.bf16 %v4983, %v4982
        %v5027 = vpack.c.bf16 %v4985, %v4984
        %v5028 = vpack.c.bf16 %v4987, %v4986
        %v5029 = vpack.c.bf16 %v4989, %v4988
        %v5030 = vpack.c.bf16 %v4991, %v4990
        %v5031 = vpack.c.bf16 %v4993, %v4992
        %v5032 = vpack.c.bf16 %v4995, %v4994
        %v5033 = vpack.c.bf16 %v4997, %v4996
        %v5034 = vpack.c.bf16 %v4999, %v4998
        %v5035 = vpack.c.bf16 %v5001, %v5000
        %v5036 = vpack.c.bf16 %v5003, %v5002
        %v5037 = vpack.c.bf16 %v5005, %v5004
        %s5038 = scalar_lea.vmem [#allocation11], 64
        %v5039 = vld [vmem:[%s5038] sm:$0xf]
        %v5040 = vld [vmem:[%s5038 + $0x4] sm:$0xf]
        %v5041 = vld [vmem:[%s5038 + $0x8] sm:$0xf]
        %v5042 = vld [vmem:[%s5038 + $0xc] sm:$0xf]
        %v5043 = vld [vmem:[%s5038 + $0x10] sm:$0xf]
        %v5044 = vld [vmem:[%s5038 + $0x14] sm:$0xf]
        %v5045 = vld [vmem:[%s5038 + $0x18] sm:$0xf]
        %v5046 = vld [vmem:[%s5038 + $0x1c] sm:$0xf]
        %v5047 = vld [vmem:[%s5038 + $0x20] sm:$0xf]
        %v5048 = vld [vmem:[%s5038 + $0x24] sm:$0xf]
        %v5049 = vld [vmem:[%s5038 + $0x28] sm:$0xf]
        %v5050 = vld [vmem:[%s5038 + $0x2c] sm:$0xf]
        %v5051 = vld [vmem:[%s5038 + $0x30] sm:$0xf]
        %v5052 = vld [vmem:[%s5038 + $0x34] sm:$0xf]
        %v5053 = vld [vmem:[%s5038 + $0x38] sm:$0xf]
        %v5054 = vld [vmem:[%s5038 + $0x3c] sm:$0xf]
        %v5056 = vlaneseq
        %v5057 = vshrl.u32 %v5056, 7
        %v5058 = vsub.s32 0, %v5057
        %v5059 = vrot.slane %v5007, %v5058
        %v5077 = vunpack.c.l.b16 %v5039
        %v5078 = vunpack.c.l.b16 %v5040
        %v5079 = vunpack.c.l.b16 %v5041
        %v5080 = vunpack.c.l.b16 %v5042
        %v5081 = vunpack.c.l.b16 %v5043
        %v5082 = vunpack.c.l.b16 %v5044
        %v5083 = vunpack.c.l.b16 %v5045
        %v5084 = vunpack.c.l.b16 %v5046
        %v5085 = vunpack.c.l.b16 %v5047
        %v5086 = vunpack.c.l.b16 %v5048
        %v5087 = vunpack.c.l.b16 %v5049
        %v5088 = vunpack.c.l.b16 %v5050
        %v5089 = vunpack.c.l.b16 %v5051
        %v5090 = vunpack.c.l.b16 %v5052
        %v5091 = vunpack.c.l.b16 %v5053
        %v5092 = vunpack.c.l.b16 %v5054
        %v5093 = vpack.c.b16 %v5078, %v5077
        %v5094 = vpack.c.b16 %v5080, %v5079
        %v5095 = vpack.c.b16 %v5082, %v5081
        %v5096 = vpack.c.b16 %v5084, %v5083
        %v5097 = vpack.c.b16 %v5086, %v5085
        %v5098 = vpack.c.b16 %v5088, %v5087
        %v5099 = vpack.c.b16 %v5090, %v5089
        %v5100 = vpack.c.b16 %v5092, %v5091
        %5109 = vmatprep.subr.bf16.mxu0 0
        %5110 = vmatpush1.bf16.msra.mxu0 %v5093
        %5111 = vmatprep.subr.bf16.mxu0 0
        %5112 = vmatpush1.bf16.msra.mxu0 %v5094
        %5113 = vmatprep.subr.bf16.mxu0 0
        %5114 = vmatpush1.bf16.msra.mxu0 %v5095
        %5115 = vmatprep.subr.bf16.mxu0 0
        %5116 = vmatpush1.bf16.msra.mxu0 %v5096
        %5117 = vmatprep.subr.bf16.mxu0 0
        %5118 = vmatpush1.bf16.msra.mxu0 %v5097
        %5119 = vmatprep.subr.bf16.mxu0 0
        %5120 = vmatpush1.bf16.msra.mxu0 %v5098
        %5121 = vmatprep.subr.bf16.mxu0 0
        %5122 = vmatpush1.bf16.msra.mxu0 %v5099
        %5123 = vmatprep.subr.bf16.mxu0 0
        %5124 = vmatpush1.bf16.msra.mxu0 %v5100
        %5125 = vmatprep.subr.bf16.mxu0 0
        %5126 = vmatpush1.bf16.msra.mxu0 0
        %5127 = vmatprep.subr.bf16.mxu0 0
        %5128 = vmatpush1.bf16.msra.mxu0 0
        %5129 = vmatprep.subr.bf16.mxu0 0
        %5130 = vmatpush1.bf16.msra.mxu0 0
        %5131 = vmatprep.subr.bf16.mxu0 0
        %5132 = vmatpush1.bf16.msra.mxu0 0
        %5133 = vmatprep.subr.bf16.mxu0 0
        %5134 = vmatpush1.bf16.msra.mxu0 0
        %5135 = vmatprep.subr.bf16.mxu0 0
        %5136 = vmatpush1.bf16.msra.mxu0 0
        %5137 = vmatprep.subr.bf16.mxu0 0
        %5138 = vmatpush1.bf16.msra.mxu0 0
        %5139 = vmatprep.subr.bf16.mxu0 0
        %5140 = vmatpush1.bf16.msra.mxu0 0
        %5141 = vmatprep.mubr.bf16.mxu0 0
        %5142 = vmatmul.mubr.bf16.gmra.mrb[0].mxu0 %v5022
        %v5143 = vpop.f32.mrb[0].mxu0
        %v5144 = vadd.f32 %v5059, %v5143
        %v5145 = vpop.f32.mrb[0].mxu0
        %v5146 = vpop.f32.mrb[0].mxu0
        %v5147 = vadd.f32 %v5059, %v5146
        %v5148 = vpop.f32.mrb[0].mxu0
        %5149 = vmatprep.mubr.bf16.mxu0 0
        %5150 = vmatmul.mubr.bf16.gmra.mrb[0].mxu0 %v5023
        %v5151 = vpop.f32.mrb[0].mxu0
        %v5152 = vadd.f32 %v5059, %v5151
        %v5153 = vpop.f32.mrb[0].mxu0
        %v5154 = vpop.f32.mrb[0].mxu0
        %v5155 = vadd.f32 %v5059, %v5154
        %v5156 = vpop.f32.mrb[0].mxu0
        %5157 = vmatprep.mubr.bf16.mxu0 0
        %5158 = vmatmul.mubr.bf16.gmra.mrb[0].mxu0 %v5024
        %v5159 = vpop.f32.mrb[0].mxu0
        %v5160 = vadd.f32 %v5059, %v5159
        %v5161 = vpop.f32.mrb[0].mxu0
        %v5162 = vpop.f32.mrb[0].mxu0
        %v5163 = vadd.f32 %v5059, %v5162
        %v5164 = vpop.f32.mrb[0].mxu0
        %5165 = vmatprep.mubr.bf16.mxu0 0
        %5166 = vmatmul.mubr.bf16.gmra.mrb[0].mxu0 %v5025
        %v5167 = vpop.f32.mrb[0].mxu0
        %v5168 = vadd.f32 %v5059, %v5167
        %v5169 = vpop.f32.mrb[0].mxu0
        %v5170 = vpop.f32.mrb[0].mxu0
        %v5171 = vadd.f32 %v5059, %v5170
        %v5172 = vpop.f32.mrb[0].mxu0
        %5173 = vmatprep.mubr.bf16.mxu0 0
        %5174 = vmatmul.mubr.bf16.gmra.mrb[0].mxu0 %v5026
        %v5175 = vpop.f32.mrb[0].mxu0
        %v5176 = vadd.f32 %v5059, %v5175
        %v5177 = vpop.f32.mrb[0].mxu0
        %v5178 = vpop.f32.mrb[0].mxu0
        %v5179 = vadd.f32 %v5059, %v5178
        %v5180 = vpop.f32.mrb[0].mxu0
        %5181 = vmatprep.mubr.bf16.mxu0 0
        %5182 = vmatmul.mubr.bf16.gmra.mrb[0].mxu0 %v5027
        %v5183 = vpop.f32.mrb[0].mxu0
        %v5184 = vadd.f32 %v5059, %v5183
        %v5185 = vpop.f32.mrb[0].mxu0
        %v5186 = vpop.f32.mrb[0].mxu0
        %v5187 = vadd.f32 %v5059, %v5186
        %v5188 = vpop.f32.mrb[0].mxu0
        %5189 = vmatprep.mubr.bf16.mxu0 0
        %5190 = vmatmul.mubr.bf16.gmra.mrb[0].mxu0 %v5028
        %v5191 = vpop.f32.mrb[0].mxu0
        %v5192 = vadd.f32 %v5059, %v5191
        %v5193 = vpop.f32.mrb[0].mxu0
        %v5194 = vpop.f32.mrb[0].mxu0
        %v5195 = vadd.f32 %v5059, %v5194
        %v5196 = vpop.f32.mrb[0].mxu0
        %5197 = vmatprep.mubr.bf16.mxu0 0
        %5198 = vmatmul.mubr.bf16.gmra.mrb[0].mxu0 %v5029
        %v5199 = vpop.f32.mrb[0].mxu0
        %v5200 = vadd.f32 %v5059, %v5199
        %v5201 = vpop.f32.mrb[0].mxu0
        %v5202 = vpop.f32.mrb[0].mxu0
        %v5203 = vadd.f32 %v5059, %v5202
        %v5204 = vpop.f32.mrb[0].mxu0
        %5205 = vmatprep.mubr.bf16.mxu0 0
        %5206 = vmatmul.mubr.bf16.gmra.mrb[0].mxu0 %v5030
        %v5207 = vpop.f32.mrb[0].mxu0
        %v5208 = vadd.f32 %v5059, %v5207
        %v5209 = vpop.f32.mrb[0].mxu0
        %v5210 = vpop.f32.mrb[0].mxu0
        %v5211 = vadd.f32 %v5059, %v5210
        %v5212 = vpop.f32.mrb[0].mxu0
        %5213 = vmatprep.mubr.bf16.mxu0 0
        %5214 = vmatmul.mubr.bf16.gmra.mrb[0].mxu0 %v5031
        %v5215 = vpop.f32.mrb[0].mxu0
        %v5216 = vadd.f32 %v5059, %v5215
        %v5217 = vpop.f32.mrb[0].mxu0
        %v5218 = vpop.f32.mrb[0].mxu0
        %v5219 = vadd.f32 %v5059, %v5218
        %v5220 = vpop.f32.mrb[0].mxu0
        %5221 = vmatprep.mubr.bf16.mxu0 0
        %5222 = vmatmul.mubr.bf16.gmra.mrb[0].mxu0 %v5032
        %v5223 = vpop.f32.mrb[0].mxu0
        %v5224 = vadd.f32 %v5059, %v5223
        %v5225 = vpop.f32.mrb[0].mxu0
        %v5226 = vpop.f32.mrb[0].mxu0
        %v5227 = vadd.f32 %v5059, %v5226
        %v5228 = vpop.f32.mrb[0].mxu0
        %5229 = vmatprep.mubr.bf16.mxu0 0
        %5230 = vmatmul.mubr.bf16.gmra.mrb[0].mxu0 %v5033
        %v5231 = vpop.f32.mrb[0].mxu0
        %v5232 = vadd.f32 %v5059, %v5231
        %v5233 = vpop.f32.mrb[0].mxu0
        %v5234 = vpop.f32.mrb[0].mxu0
        %v5235 = vadd.f32 %v5059, %v5234
        %v5236 = vpop.f32.mrb[0].mxu0
        %5237 = vmatprep.mubr.bf16.mxu0 0
        %5238 = vmatmul.mubr.bf16.gmra.mrb[0].mxu0 %v5034
        %v5239 = vpop.f32.mrb[0].mxu0
        %v5240 = vadd.f32 %v5059, %v5239
        %v5241 = vpop.f32.mrb[0].mxu0
        %v5242 = vpop.f32.mrb[0].mxu0
        %v5243 = vadd.f32 %v5059, %v5242
        %v5244 = vpop.f32.mrb[0].mxu0
        %5245 = vmatprep.mubr.bf16.mxu0 0
        %5246 = vmatmul.mubr.bf16.gmra.mrb[0].mxu0 %v5035
        %v5247 = vpop.f32.mrb[0].mxu0
        %v5248 = vadd.f32 %v5059, %v5247
        %v5249 = vpop.f32.mrb[0].mxu0
        %v5250 = vpop.f32.mrb[0].mxu0
        %v5251 = vadd.f32 %v5059, %v5250
        %v5252 = vpop.f32.mrb[0].mxu0
        %5253 = vmatprep.mubr.bf16.mxu0 0
        %5254 = vmatmul.mubr.bf16.gmra.mrb[0].mxu0 %v5036
        %v5255 = vpop.f32.mrb[0].mxu0
        %v5256 = vadd.f32 %v5059, %v5255
        %v5257 = vpop.f32.mrb[0].mxu0
        %v5258 = vpop.f32.mrb[0].mxu0
        %v5259 = vadd.f32 %v5059, %v5258
        %v5260 = vpop.f32.mrb[0].mxu0
        %5261 = vmatprep.mubr.bf16.mxu0 0
        %5262 = vmatmul.mubr.bf16.gmra.mrb[0].mxu0 %v5037
        %v5263 = vpop.f32.mrb[0].mxu0
        %v5264 = vadd.f32 %v5059, %v5263
        %v5265 = vpop.f32.mrb[0].mxu0
        %v5266 = vpop.f32.mrb[0].mxu0
        %v5267 = vadd.f32 %v5059, %v5266
        %v5268 = vpop.f32.mrb[0].mxu0
        %5269 = vdwg.mxu0
        %v5270 = vpack.c.bf16 %v5147, %v5144
        %v5271 = vpack.c.bf16 %v5155, %v5152
        %v5272 = vpack.c.bf16 %v5163, %v5160
        %v5273 = vpack.c.bf16 %v5171, %v5168
        %v5274 = vpack.c.bf16 %v5179, %v5176
        %v5275 = vpack.c.bf16 %v5187, %v5184
        %v5276 = vpack.c.bf16 %v5195, %v5192
        %v5277 = vpack.c.bf16 %v5203, %v5200
        %v5278 = vpack.c.bf16 %v5211, %v5208
        %v5279 = vpack.c.bf16 %v5219, %v5216
        %v5280 = vpack.c.bf16 %v5227, %v5224
        %v5281 = vpack.c.bf16 %v5235, %v5232
        %v5282 = vpack.c.bf16 %v5243, %v5240
        %v5283 = vpack.c.bf16 %v5251, %v5248
        %v5284 = vpack.c.bf16 %v5259, %v5256
        %v5285 = vpack.c.bf16 %v5267, %v5264
        %s5286 = scalar_lea.vmem [#allocation13], 64
        %v5287 = vld [vmem:[%s5286] sm:$0xf]
        %v5288 = vld [vmem:[%s5286 + $0x4] sm:$0xf]
        %v5289 = vld [vmem:[%s5286 + $0x8] sm:$0xf]
        %v5290 = vld [vmem:[%s5286 + $0xc] sm:$0xf]
        %v5291 = vld [vmem:[%s5286 + $0x10] sm:$0xf]
        %v5292 = vld [vmem:[%s5286 + $0x14] sm:$0xf]
        %v5293 = vld [vmem:[%s5286 + $0x18] sm:$0xf]
        %v5294 = vld [vmem:[%s5286 + $0x1c] sm:$0xf]
        %v5295 = vld [vmem:[%s5286 + $0x20] sm:$0xf]
        %v5296 = vld [vmem:[%s5286 + $0x24] sm:$0xf]
        %v5297 = vld [vmem:[%s5286 + $0x28] sm:$0xf]
        %v5298 = vld [vmem:[%s5286 + $0x2c] sm:$0xf]
        %v5299 = vld [vmem:[%s5286 + $0x30] sm:$0xf]
        %v5300 = vld [vmem:[%s5286 + $0x34] sm:$0xf]
        %v5301 = vld [vmem:[%s5286 + $0x38] sm:$0xf]
        %v5302 = vld [vmem:[%s5286 + $0x3c] sm:$0xf]
        %v5304 = vlaneseq
        %v5305 = vshrl.u32 %v5304, 7
        %v5306 = vsub.s32 0, %v5305
        %v5307 = vrot.slane %v5009, %v5306
        %v5325 = vunpack.c.l.b16 %v5287
        %v5326 = vunpack.c.l.b16 %v5288
        %v5327 = vunpack.c.l.b16 %v5289
        %v5328 = vunpack.c.l.b16 %v5290
        %v5329 = vunpack.c.l.b16 %v5291
        %v5330 = vunpack.c.l.b16 %v5292
        %v5331 = vunpack.c.l.b16 %v5293
        %v5332 = vunpack.c.l.b16 %v5294
        %v5333 = vunpack.c.l.b16 %v5295
        %v5334 = vunpack.c.l.b16 %v5296
        %v5335 = vunpack.c.l.b16 %v5297
        %v5336 = vunpack.c.l.b16 %v5298
        %v5337 = vunpack.c.l.b16 %v5299
        %v5338 = vunpack.c.l.b16 %v5300
        %v5339 = vunpack.c.l.b16 %v5301
        %v5340 = vunpack.c.l.b16 %v5302
        %v5341 = vpack.c.b16 %v5326, %v5325
        %v5342 = vpack.c.b16 %v5328, %v5327
        %v5343 = vpack.c.b16 %v5330, %v5329
        %v5344 = vpack.c.b16 %v5332, %v5331
        %v5345 = vpack.c.b16 %v5334, %v5333
        %v5346 = vpack.c.b16 %v5336, %v5335
        %v5347 = vpack.c.b16 %v5338, %v5337
        %v5348 = vpack.c.b16 %v5340, %v5339
        %5357 = vmatprep.subr.bf16.mxu0 0
        %5358 = vmatpush1.bf16.msra.mxu0 %v5341
        %5359 = vmatprep.subr.bf16.mxu0 0
        %5360 = vmatpush1.bf16.msra.mxu0 %v5342
        %5361 = vmatprep.subr.bf16.mxu0 0
        %5362 = vmatpush1.bf16.msra.mxu0 %v5343
        %5363 = vmatprep.subr.bf16.mxu0 0
        %5364 = vmatpush1.bf16.msra.mxu0 %v5344
        %5365 = vmatprep.subr.bf16.mxu0 0
        %5366 = vmatpush1.bf16.msra.mxu0 %v5345
        %5367 = vmatprep.subr.bf16.mxu0 0
        %5368 = vmatpush1.bf16.msra.mxu0 %v5346
        %5369 = vmatprep.subr.bf16.mxu0 0
        %5370 = vmatpush1.bf16.msra.mxu0 %v5347
        %5371 = vmatprep.subr.bf16.mxu0 0
        %5372 = vmatpush1.bf16.msra.mxu0 %v5348
        %5373 = vmatprep.subr.bf16.mxu0 0
        %5374 = vmatpush1.bf16.msra.mxu0 0
        %5375 = vmatprep.subr.bf16.mxu0 0
        %5376 = vmatpush1.bf16.msra.mxu0 0
        %5377 = vmatprep.subr.bf16.mxu0 0
        %5378 = vmatpush1.bf16.msra.mxu0 0
        %5379 = vmatprep.subr.bf16.mxu0 0
        %5380 = vmatpush1.bf16.msra.mxu0 0
        %5381 = vmatprep.subr.bf16.mxu0 0
        %5382 = vmatpush1.bf16.msra.mxu0 0
        %5383 = vmatprep.subr.bf16.mxu0 0
        %5384 = vmatpush1.bf16.msra.mxu0 0
        %5385 = vmatprep.subr.bf16.mxu0 0
        %5386 = vmatpush1.bf16.msra.mxu0 0
        %5387 = vmatprep.subr.bf16.mxu0 0
        %5388 = vmatpush1.bf16.msra.mxu0 0
        %5389 = vmatprep.mubr.bf16.mxu0 0
        %5390 = vmatmul.mubr.bf16.gmra.mrb[0].mxu0 %v5270
        %v5391 = vpop.f32.mrb[0].mxu0
        %v5392 = vadd.f32 %v5307, %v5391
        %v5393 = vpop.f32.mrb[0].mxu0
        %v5394 = vpop.f32.mrb[0].mxu0
        %v5395 = vadd.f32 %v5307, %v5394
        %v5396 = vpop.f32.mrb[0].mxu0
        %5397 = vmatprep.mubr.bf16.mxu0 0
        %5398 = vmatmul.mubr.bf16.gmra.mrb[0].mxu0 %v5271
        %v5399 = vpop.f32.mrb[0].mxu0
        %v5400 = vadd.f32 %v5307, %v5399
        %v5401 = vpop.f32.mrb[0].mxu0
        %v5402 = vpop.f32.mrb[0].mxu0
        %v5403 = vadd.f32 %v5307, %v5402
        %v5404 = vpop.f32.mrb[0].mxu0
        %5405 = vmatprep.mubr.bf16.mxu0 0
        %5406 = vmatmul.mubr.bf16.gmra.mrb[0].mxu0 %v5272
        %v5407 = vpop.f32.mrb[0].mxu0
        %v5408 = vadd.f32 %v5307, %v5407
        %v5409 = vpop.f32.mrb[0].mxu0
        %v5410 = vpop.f32.mrb[0].mxu0
        %v5411 = vadd.f32 %v5307, %v5410
        %v5412 = vpop.f32.mrb[0].mxu0
        %5413 = vmatprep.mubr.bf16.mxu0 0
        %5414 = vmatmul.mubr.bf16.gmra.mrb[0].mxu0 %v5273
        %v5415 = vpop.f32.mrb[0].mxu0
        %v5416 = vadd.f32 %v5307, %v5415
        %v5417 = vpop.f32.mrb[0].mxu0
        %v5418 = vpop.f32.mrb[0].mxu0
        %v5419 = vadd.f32 %v5307, %v5418
        %v5420 = vpop.f32.mrb[0].mxu0
        %5421 = vmatprep.mubr.bf16.mxu0 0
        %5422 = vmatmul.mubr.bf16.gmra.mrb[0].mxu0 %v5274
        %v5423 = vpop.f32.mrb[0].mxu0
        %v5424 = vadd.f32 %v5307, %v5423
        %v5425 = vpop.f32.mrb[0].mxu0
        %v5426 = vpop.f32.mrb[0].mxu0
        %v5427 = vadd.f32 %v5307, %v5426
        %v5428 = vpop.f32.mrb[0].mxu0
        %5429 = vmatprep.mubr.bf16.mxu0 0
        %5430 = vmatmul.mubr.bf16.gmra.mrb[0].mxu0 %v5275
        %v5431 = vpop.f32.mrb[0].mxu0
        %v5432 = vadd.f32 %v5307, %v5431
        %v5433 = vpop.f32.mrb[0].mxu0
        %v5434 = vpop.f32.mrb[0].mxu0
        %v5435 = vadd.f32 %v5307, %v5434
        %v5436 = vpop.f32.mrb[0].mxu0
        %5437 = vmatprep.mubr.bf16.mxu0 0
        %5438 = vmatmul.mubr.bf16.gmra.mrb[0].mxu0 %v5276
        %v5439 = vpop.f32.mrb[0].mxu0
        %v5440 = vadd.f32 %v5307, %v5439
        %v5441 = vpop.f32.mrb[0].mxu0
        %v5442 = vpop.f32.mrb[0].mxu0
        %v5443 = vadd.f32 %v5307, %v5442
        %v5444 = vpop.f32.mrb[0].mxu0
        %5445 = vmatprep.mubr.bf16.mxu0 0
        %5446 = vmatmul.mubr.bf16.gmra.mrb[0].mxu0 %v5277
        %v5447 = vpop.f32.mrb[0].mxu0
        %v5448 = vadd.f32 %v5307, %v5447
        %v5449 = vpop.f32.mrb[0].mxu0
        %v5450 = vpop.f32.mrb[0].mxu0
        %v5451 = vadd.f32 %v5307, %v5450
        %v5452 = vpop.f32.mrb[0].mxu0
        %5453 = vmatprep.mubr.bf16.mxu0 0
        %5454 = vmatmul.mubr.bf16.gmra.mrb[0].mxu0 %v5278
        %v5455 = vpop.f32.mrb[0].mxu0
        %v5456 = vadd.f32 %v5307, %v5455
        %v5457 = vpop.f32.mrb[0].mxu0
        %v5458 = vpop.f32.mrb[0].mxu0
        %v5459 = vadd.f32 %v5307, %v5458
        %v5460 = vpop.f32.mrb[0].mxu0
        %5461 = vmatprep.mubr.bf16.mxu0 0
        %5462 = vmatmul.mubr.bf16.gmra.mrb[0].mxu0 %v5279
        %v5463 = vpop.f32.mrb[0].mxu0
        %v5464 = vadd.f32 %v5307, %v5463
        %v5465 = vpop.f32.mrb[0].mxu0
        %v5466 = vpop.f32.mrb[0].mxu0
        %v5467 = vadd.f32 %v5307, %v5466
        %v5468 = vpop.f32.mrb[0].mxu0
        %5469 = vmatprep.mubr.bf16.mxu0 0
        %5470 = vmatmul.mubr.bf16.gmra.mrb[0].mxu0 %v5280
        %v5471 = vpop.f32.mrb[0].mxu0
        %v5472 = vadd.f32 %v5307, %v5471
        %v5473 = vpop.f32.mrb[0].mxu0
        %v5474 = vpop.f32.mrb[0].mxu0
        %v5475 = vadd.f32 %v5307, %v5474
        %v5476 = vpop.f32.mrb[0].mxu0
        %5477 = vmatprep.mubr.bf16.mxu0 0
        %5478 = vmatmul.mubr.bf16.gmra.mrb[0].mxu0 %v5281
        %v5479 = vpop.f32.mrb[0].mxu0
        %v5480 = vadd.f32 %v5307, %v5479
        %v5481 = vpop.f32.mrb[0].mxu0
        %v5482 = vpop.f32.mrb[0].mxu0
        %v5483 = vadd.f32 %v5307, %v5482
        %v5484 = vpop.f32.mrb[0].mxu0
        %5485 = vmatprep.mubr.bf16.mxu0 0
        %5486 = vmatmul.mubr.bf16.gmra.mrb[0].mxu0 %v5282
        %v5487 = vpop.f32.mrb[0].mxu0
        %v5488 = vadd.f32 %v5307, %v5487
        %v5489 = vpop.f32.mrb[0].mxu0
        %v5490 = vpop.f32.mrb[0].mxu0
        %v5491 = vadd.f32 %v5307, %v5490
        %v5492 = vpop.f32.mrb[0].mxu0
        %5493 = vmatprep.mubr.bf16.mxu0 0
        %5494 = vmatmul.mubr.bf16.gmra.mrb[0].mxu0 %v5283
        %v5495 = vpop.f32.mrb[0].mxu0
        %v5496 = vadd.f32 %v5307, %v5495
        %v5497 = vpop.f32.mrb[0].mxu0
        %v5498 = vpop.f32.mrb[0].mxu0
        %v5499 = vadd.f32 %v5307, %v5498
        %v5500 = vpop.f32.mrb[0].mxu0
        %5501 = vmatprep.mubr.bf16.mxu0 0
        %5502 = vmatmul.mubr.bf16.gmra.mrb[0].mxu0 %v5284
        %v5503 = vpop.f32.mrb[0].mxu0
        %v5504 = vadd.f32 %v5307, %v5503
        %v5505 = vpop.f32.mrb[0].mxu0
        %v5506 = vpop.f32.mrb[0].mxu0
        %v5507 = vadd.f32 %v5307, %v5506
        %v5508 = vpop.f32.mrb[0].mxu0
        %5509 = vmatprep.mubr.bf16.mxu0 0
        %5510 = vmatmul.mubr.bf16.gmra.mrb[0].mxu0 %v5285
        %v5511 = vpop.f32.mrb[0].mxu0
        %v5512 = vadd.f32 %v5307, %v5511
        %v5513 = vpop.f32.mrb[0].mxu0
        %v5514 = vpop.f32.mrb[0].mxu0
        %v5515 = vadd.f32 %v5307, %v5514
        %v5516 = vpop.f32.mrb[0].mxu0
        %5517 = vdwg.mxu0
        %v5518 = vadd.f32 %v4974, %v5392
        %v5519 = vadd.f32 %v4975, %v5395
        %v5520 = vadd.f32 %v4976, %v5400
        %v5521 = vadd.f32 %v4977, %v5403
        %v5522 = vadd.f32 %v4978, %v5408
        %v5523 = vadd.f32 %v4979, %v5411
        %v5524 = vadd.f32 %v4980, %v5416
        %v5525 = vadd.f32 %v4981, %v5419
        %v5526 = vadd.f32 %v4982, %v5424
        %v5527 = vadd.f32 %v4983, %v5427
        %v5528 = vadd.f32 %v4984, %v5432
        %v5529 = vadd.f32 %v4985, %v5435
        %v5530 = vadd.f32 %v4986, %v5440
        %v5531 = vadd.f32 %v4987, %v5443
        %v5532 = vadd.f32 %v4988, %v5448
        %v5533 = vadd.f32 %v4989, %v5451
        %v5534 = vadd.f32 %v4990, %v5456
        %v5535 = vadd.f32 %v4991, %v5459
        %v5536 = vadd.f32 %v4992, %v5464
        %v5537 = vadd.f32 %v4993, %v5467
        %v5538 = vadd.f32 %v4994, %v5472
        %v5539 = vadd.f32 %v4995, %v5475
        %v5540 = vadd.f32 %v4996, %v5480
        %v5541 = vadd.f32 %v4997, %v5483
        %v5542 = vadd.f32 %v4998, %v5488
        %v5543 = vadd.f32 %v4999, %v5491
        %v5544 = vadd.f32 %v5000, %v5496
        %v5545 = vadd.f32 %v5001, %v5499
        %v5546 = vadd.f32 %v5002, %v5504
        %v5547 = vadd.f32 %v5003, %v5507
        %v5548 = vadd.f32 %v5004, %v5512
        %v5549 = vadd.f32 %v5005, %v5515
        %5550 = vadd.xlane.f32.xlu0 %v5518
        %v5551 = vpop.xlane.xlu0 %5550
        %5552 = vadd.xlane.f32.xlu0 %v5519
        %v5553 = vpop.xlane.xlu0 %5552
        %5554 = vadd.xlane.f32.xlu0 %v5520
        %v5555 = vpop.xlane.xlu0 %5554
        %5556 = vadd.xlane.f32.xlu0 %v5521
        %v5557 = vpop.xlane.xlu0 %5556
        %5558 = vadd.xlane.f32.xlu0 %v5522
        %v5559 = vpop.xlane.xlu0 %5558
        %5560 = vadd.xlane.f32.xlu0 %v5523
        %v5561 = vpop.xlane.xlu0 %5560
        %5562 = vadd.xlane.f32.xlu0 %v5524
        %v5563 = vpop.xlane.xlu0 %5562
        %5564 = vadd.xlane.f32.xlu0 %v5525
        %v5565 = vpop.xlane.xlu0 %5564
        %5566 = vadd.xlane.f32.xlu0 %v5526
        %v5567 = vpop.xlane.xlu0 %5566
        %5568 = vadd.xlane.f32.xlu0 %v5527
        %v5569 = vpop.xlane.xlu0 %5568
        %5570 = vadd.xlane.f32.xlu0 %v5528
        %v5571 = vpop.xlane.xlu0 %5570
        %5572 = vadd.xlane.f32.xlu0 %v5529
        %v5573 = vpop.xlane.xlu0 %5572
        %5574 = vadd.xlane.f32.xlu0 %v5530
        %v5575 = vpop.xlane.xlu0 %5574
        %5576 = vadd.xlane.f32.xlu0 %v5531
        %v5577 = vpop.xlane.xlu0 %5576
        %5578 = vadd.xlane.f32.xlu0 %v5532
        %v5579 = vpop.xlane.xlu0 %5578
        %5580 = vadd.xlane.f32.xlu0 %v5533
        %v5581 = vpop.xlane.xlu0 %5580
        %5582 = vadd.xlane.f32.xlu0 %v5534
        %v5583 = vpop.xlane.xlu0 %5582
        %5584 = vadd.xlane.f32.xlu0 %v5535
        %v5585 = vpop.xlane.xlu0 %5584
        %5586 = vadd.xlane.f32.xlu0 %v5536
        %v5587 = vpop.xlane.xlu0 %5586
        %5588 = vadd.xlane.f32.xlu0 %v5537
        %v5589 = vpop.xlane.xlu0 %5588
        %5590 = vadd.xlane.f32.xlu0 %v5538
        %v5591 = vpop.xlane.xlu0 %5590
        %5592 = vadd.xlane.f32.xlu0 %v5539
        %v5593 = vpop.xlane.xlu0 %5592
        %5594 = vadd.xlane.f32.xlu0 %v5540
        %v5595 = vpop.xlane.xlu0 %5594
        %5596 = vadd.xlane.f32.xlu0 %v5541
        %v5597 = vpop.xlane.xlu0 %5596
        %5598 = vadd.xlane.f32.xlu0 %v5542
        %v5599 = vpop.xlane.xlu0 %5598
        %5600 = vadd.xlane.f32.xlu0 %v5543
        %v5601 = vpop.xlane.xlu0 %5600
        %5602 = vadd.xlane.f32.xlu0 %v5544
        %v5603 = vpop.xlane.xlu0 %5602
        %5604 = vadd.xlane.f32.xlu0 %v5545
        %v5605 = vpop.xlane.xlu0 %5604
        %5606 = vadd.xlane.f32.xlu0 %v5546
        %v5607 = vpop.xlane.xlu0 %5606
        %5608 = vadd.xlane.f32.xlu0 %v5547
        %v5609 = vpop.xlane.xlu0 %5608
        %5610 = vadd.xlane.f32.xlu0 %v5548
        %v5611 = vpop.xlane.xlu0 %5610
        %5612 = vadd.xlane.f32.xlu0 %v5549
        %v5613 = vpop.xlane.xlu0 %5612
        %v5614 = vmul.f32 %v5551, %v2278
        %v5615 = vmul.f32 %v5553, %v2278
        %v5616 = vmul.f32 %v5555, %v2278
        %v5617 = vmul.f32 %v5557, %v2278
        %v5618 = vmul.f32 %v5559, %v2278
        %v5619 = vmul.f32 %v5561, %v2278
        %v5620 = vmul.f32 %v5563, %v2278
        %v5621 = vmul.f32 %v5565, %v2278
        %v5622 = vmul.f32 %v5567, %v2278
        %v5623 = vmul.f32 %v5569, %v2278
        %v5624 = vmul.f32 %v5571, %v2278
        %v5625 = vmul.f32 %v5573, %v2278
        %v5626 = vmul.f32 %v5575, %v2278
        %v5627 = vmul.f32 %v5577, %v2278
        %v5628 = vmul.f32 %v5579, %v2278
        %v5629 = vmul.f32 %v5581, %v2278
        %v5630 = vmul.f32 %v5583, %v2278
        %v5631 = vmul.f32 %v5585, %v2278
        %v5632 = vmul.f32 %v5587, %v2278
        %v5633 = vmul.f32 %v5589, %v2278
        %v5634 = vmul.f32 %v5591, %v2278
        %v5635 = vmul.f32 %v5593, %v2278
        %v5636 = vmul.f32 %v5595, %v2278
        %v5637 = vmul.f32 %v5597, %v2278
        %v5638 = vmul.f32 %v5599, %v2278
        %v5639 = vmul.f32 %v5601, %v2278
        %v5640 = vmul.f32 %v5603, %v2278
        %v5641 = vmul.f32 %v5605, %v2278
        %v5642 = vmul.f32 %v5607, %v2278
        %v5643 = vmul.f32 %v5609, %v2278
        %v5644 = vmul.f32 %v5611, %v2278
        %v5645 = vmul.f32 %v5613, %v2278
        %v5646 = vsub.f32 %v5518, %v5614
        %v5647 = vsub.f32 %v5519, %v5615
        %v5648 = vsub.f32 %v5520, %v5616
        %v5649 = vsub.f32 %v5521, %v5617
        %v5650 = vsub.f32 %v5522, %v5618
        %v5651 = vsub.f32 %v5523, %v5619
        %v5652 = vsub.f32 %v5524, %v5620
        %v5653 = vsub.f32 %v5525, %v5621
        %v5654 = vsub.f32 %v5526, %v5622
        %v5655 = vsub.f32 %v5527, %v5623
        %v5656 = vsub.f32 %v5528, %v5624
        %v5657 = vsub.f32 %v5529, %v5625
        %v5658 = vsub.f32 %v5530, %v5626
        %v5659 = vsub.f32 %v5531, %v5627
        %v5660 = vsub.f32 %v5532, %v5628
        %v5661 = vsub.f32 %v5533, %v5629
        %v5662 = vsub.f32 %v5534, %v5630
        %v5663 = vsub.f32 %v5535, %v5631
        %v5664 = vsub.f32 %v5536, %v5632
        %v5665 = vsub.f32 %v5537, %v5633
        %v5666 = vsub.f32 %v5538, %v5634
        %v5667 = vsub.f32 %v5539, %v5635
        %v5668 = vsub.f32 %v5540, %v5636
        %v5669 = vsub.f32 %v5541, %v5637
        %v5670 = vsub.f32 %v5542, %v5638
        %v5671 = vsub.f32 %v5543, %v5639
        %v5672 = vsub.f32 %v5544, %v5640
        %v5673 = vsub.f32 %v5545, %v5641
        %v5674 = vsub.f32 %v5546, %v5642
        %v5675 = vsub.f32 %v5547, %v5643
        %v5676 = vsub.f32 %v5548, %v5644
        %v5677 = vsub.f32 %v5549, %v5645
        %v5678 = vmul.f32 %v5646, %v5646
        %v5679 = vmul.f32 %v5647, %v5647
        %v5680 = vmul.f32 %v5648, %v5648
        %v5681 = vmul.f32 %v5649, %v5649
        %v5682 = vmul.f32 %v5650, %v5650
        %v5683 = vmul.f32 %v5651, %v5651
        %v5684 = vmul.f32 %v5652, %v5652
        %v5685 = vmul.f32 %v5653, %v5653
        %v5686 = vmul.f32 %v5654, %v5654
        %v5687 = vmul.f32 %v5655, %v5655
        %v5688 = vmul.f32 %v5656, %v5656
        %v5689 = vmul.f32 %v5657, %v5657
        %v5690 = vmul.f32 %v5658, %v5658
        %v5691 = vmul.f32 %v5659, %v5659
        %v5692 = vmul.f32 %v5660, %v5660
        %v5693 = vmul.f32 %v5661, %v5661
        %v5694 = vmul.f32 %v5662, %v5662
        %v5695 = vmul.f32 %v5663, %v5663
        %v5696 = vmul.f32 %v5664, %v5664
        %v5697 = vmul.f32 %v5665, %v5665
        %v5698 = vmul.f32 %v5666, %v5666
        %v5699 = vmul.f32 %v5667, %v5667
        %v5700 = vmul.f32 %v5668, %v5668
        %v5701 = vmul.f32 %v5669, %v5669
        %v5702 = vmul.f32 %v5670, %v5670
        %v5703 = vmul.f32 %v5671, %v5671
        %v5704 = vmul.f32 %v5672, %v5672
        %v5705 = vmul.f32 %v5673, %v5673
        %v5706 = vmul.f32 %v5674, %v5674
        %v5707 = vmul.f32 %v5675, %v5675
        %v5708 = vmul.f32 %v5676, %v5676
        %v5709 = vmul.f32 %v5677, %v5677
        %5710 = vadd.xlane.f32.xlu0 %v5678
        %v5711 = vpop.xlane.xlu0 %5710
        %5712 = vadd.xlane.f32.xlu0 %v5679
        %v5713 = vpop.xlane.xlu0 %5712
        %5714 = vadd.xlane.f32.xlu0 %v5680
        %v5715 = vpop.xlane.xlu0 %5714
        %5716 = vadd.xlane.f32.xlu0 %v5681
        %v5717 = vpop.xlane.xlu0 %5716
        %5718 = vadd.xlane.f32.xlu0 %v5682
        %v5719 = vpop.xlane.xlu0 %5718
        %5720 = vadd.xlane.f32.xlu0 %v5683
        %v5721 = vpop.xlane.xlu0 %5720
        %5722 = vadd.xlane.f32.xlu0 %v5684
        %v5723 = vpop.xlane.xlu0 %5722
        %5724 = vadd.xlane.f32.xlu0 %v5685
        %v5725 = vpop.xlane.xlu0 %5724
        %5726 = vadd.xlane.f32.xlu0 %v5686
        %v5727 = vpop.xlane.xlu0 %5726
        %5728 = vadd.xlane.f32.xlu0 %v5687
        %v5729 = vpop.xlane.xlu0 %5728
        %5730 = vadd.xlane.f32.xlu0 %v5688
        %v5731 = vpop.xlane.xlu0 %5730
        %5732 = vadd.xlane.f32.xlu0 %v5689
        %v5733 = vpop.xlane.xlu0 %5732
        %5734 = vadd.xlane.f32.xlu0 %v5690
        %v5735 = vpop.xlane.xlu0 %5734
        %5736 = vadd.xlane.f32.xlu0 %v5691
        %v5737 = vpop.xlane.xlu0 %5736
        %5738 = vadd.xlane.f32.xlu0 %v5692
        %v5739 = vpop.xlane.xlu0 %5738
        %5740 = vadd.xlane.f32.xlu0 %v5693
        %v5741 = vpop.xlane.xlu0 %5740
        %5742 = vadd.xlane.f32.xlu0 %v5694
        %v5743 = vpop.xlane.xlu0 %5742
        %5744 = vadd.xlane.f32.xlu0 %v5695
        %v5745 = vpop.xlane.xlu0 %5744
        %5746 = vadd.xlane.f32.xlu0 %v5696
        %v5747 = vpop.xlane.xlu0 %5746
        %5748 = vadd.xlane.f32.xlu0 %v5697
        %v5749 = vpop.xlane.xlu0 %5748
        %5750 = vadd.xlane.f32.xlu0 %v5698
        %v5751 = vpop.xlane.xlu0 %5750
        %5752 = vadd.xlane.f32.xlu0 %v5699
        %v5753 = vpop.xlane.xlu0 %5752
        %5754 = vadd.xlane.f32.xlu0 %v5700
        %v5755 = vpop.xlane.xlu0 %5754
        %5756 = vadd.xlane.f32.xlu0 %v5701
        %v5757 = vpop.xlane.xlu0 %5756
        %5758 = vadd.xlane.f32.xlu0 %v5702
        %v5759 = vpop.xlane.xlu0 %5758
        %5760 = vadd.xlane.f32.xlu0 %v5703
        %v5761 = vpop.xlane.xlu0 %5760
        %5762 = vadd.xlane.f32.xlu0 %v5704
        %v5763 = vpop.xlane.xlu0 %5762
        %5764 = vadd.xlane.f32.xlu0 %v5705
        %v5765 = vpop.xlane.xlu0 %5764
        %5766 = vadd.xlane.f32.xlu0 %v5706
        %v5767 = vpop.xlane.xlu0 %5766
        %5768 = vadd.xlane.f32.xlu0 %v5707
        %v5769 = vpop.xlane.xlu0 %5768
        %5770 = vadd.xlane.f32.xlu0 %v5708
        %v5771 = vpop.xlane.xlu0 %5770
        %5772 = vadd.xlane.f32.xlu0 %v5709
        %v5773 = vpop.xlane.xlu0 %5772
        %v5774 = vmul.f32 %v5711, %v2278
        %v5775 = vmul.f32 %v5713, %v2278
        %v5776 = vmul.f32 %v5715, %v2278
        %v5777 = vmul.f32 %v5717, %v2278
        %v5778 = vmul.f32 %v5719, %v2278
        %v5779 = vmul.f32 %v5721, %v2278
        %v5780 = vmul.f32 %v5723, %v2278
        %v5781 = vmul.f32 %v5725, %v2278
        %v5782 = vmul.f32 %v5727, %v2278
        %v5783 = vmul.f32 %v5729, %v2278
        %v5784 = vmul.f32 %v5731, %v2278
        %v5785 = vmul.f32 %v5733, %v2278
        %v5786 = vmul.f32 %v5735, %v2278
        %v5787 = vmul.f32 %v5737, %v2278
        %v5788 = vmul.f32 %v5739, %v2278
        %v5789 = vmul.f32 %v5741, %v2278
        %v5790 = vmul.f32 %v5743, %v2278
        %v5791 = vmul.f32 %v5745, %v2278
        %v5792 = vmul.f32 %v5747, %v2278
        %v5793 = vmul.f32 %v5749, %v2278
        %v5794 = vmul.f32 %v5751, %v2278
        %v5795 = vmul.f32 %v5753, %v2278
        %v5796 = vmul.f32 %v5755, %v2278
        %v5797 = vmul.f32 %v5757, %v2278
        %v5798 = vmul.f32 %v5759, %v2278
        %v5799 = vmul.f32 %v5761, %v2278
        %v5800 = vmul.f32 %v5763, %v2278
        %v5801 = vmul.f32 %v5765, %v2278
        %v5802 = vmul.f32 %v5767, %v2278
        %v5803 = vmul.f32 %v5769, %v2278
        %v5804 = vmul.f32 %v5771, %v2278
        %v5805 = vmul.f32 %v5773, %v2278
        %v5806 = vadd.f32 %v5774, 1e-05
        %v5807 = vadd.f32 %v5775, 1e-05
        %v5808 = vadd.f32 %v5776, 1e-05
        %v5809 = vadd.f32 %v5777, 1e-05
        %v5810 = vadd.f32 %v5778, 1e-05
        %v5811 = vadd.f32 %v5779, 1e-05
        %v5812 = vadd.f32 %v5780, 1e-05
        %v5813 = vadd.f32 %v5781, 1e-05
        %v5814 = vadd.f32 %v5782, 1e-05
        %v5815 = vadd.f32 %v5783, 1e-05
        %v5816 = vadd.f32 %v5784, 1e-05
        %v5817 = vadd.f32 %v5785, 1e-05
        %v5818 = vadd.f32 %v5786, 1e-05
        %v5819 = vadd.f32 %v5787, 1e-05
        %v5820 = vadd.f32 %v5788, 1e-05
        %v5821 = vadd.f32 %v5789, 1e-05
        %v5822 = vadd.f32 %v5790, 1e-05
        %v5823 = vadd.f32 %v5791, 1e-05
        %v5824 = vadd.f32 %v5792, 1e-05
        %v5825 = vadd.f32 %v5793, 1e-05
        %v5826 = vadd.f32 %v5794, 1e-05
        %v5827 = vadd.f32 %v5795, 1e-05
        %v5828 = vadd.f32 %v5796, 1e-05
        %v5829 = vadd.f32 %v5797, 1e-05
        %v5830 = vadd.f32 %v5798, 1e-05
        %v5831 = vadd.f32 %v5799, 1e-05
        %v5832 = vadd.f32 %v5800, 1e-05
        %v5833 = vadd.f32 %v5801, 1e-05
        %v5834 = vadd.f32 %v5802, 1e-05
        %v5835 = vadd.f32 %v5803, 1e-05
        %v5836 = vadd.f32 %v5804, 1e-05
        %v5837 = vadd.f32 %v5805, 1e-05
        %v5838 = vrsqrt.pop %v5806
        %v5839 = vrsqrt.pop %v5807
        %v5840 = vrsqrt.pop %v5808
        %v5841 = vrsqrt.pop %v5809
        %v5842 = vrsqrt.pop %v5810
        %v5843 = vrsqrt.pop %v5811
        %v5844 = vrsqrt.pop %v5812
        %v5845 = vrsqrt.pop %v5813
        %v5846 = vrsqrt.pop %v5814
        %v5847 = vrsqrt.pop %v5815
        %v5848 = vrsqrt.pop %v5816
        %v5849 = vrsqrt.pop %v5817
        %v5850 = vrsqrt.pop %v5818
        %v5851 = vrsqrt.pop %v5819
        %v5852 = vrsqrt.pop %v5820
        %v5853 = vrsqrt.pop %v5821
        %v5854 = vrsqrt.pop %v5822
        %v5855 = vrsqrt.pop %v5823
        %v5856 = vrsqrt.pop %v5824
        %v5857 = vrsqrt.pop %v5825
        %v5858 = vrsqrt.pop %v5826
        %v5859 = vrsqrt.pop %v5827
        %v5860 = vrsqrt.pop %v5828
        %v5861 = vrsqrt.pop %v5829
        %v5862 = vrsqrt.pop %v5830
        %v5863 = vrsqrt.pop %v5831
        %v5864 = vrsqrt.pop %v5832
        %v5865 = vrsqrt.pop %v5833
        %v5866 = vrsqrt.pop %v5834
        %v5867 = vrsqrt.pop %v5835
        %v5868 = vrsqrt.pop %v5836
        %v5869 = vrsqrt.pop %v5837
        %v5870 = vmul.f32 %v5646, %v5838
        %v5871 = vmul.f32 %v5647, %v5839
        %v5872 = vmul.f32 %v5648, %v5840
        %v5873 = vmul.f32 %v5649, %v5841
        %v5874 = vmul.f32 %v5650, %v5842
        %v5875 = vmul.f32 %v5651, %v5843
        %v5876 = vmul.f32 %v5652, %v5844
        %v5877 = vmul.f32 %v5653, %v5845
        %v5878 = vmul.f32 %v5654, %v5846
        %v5879 = vmul.f32 %v5655, %v5847
        %v5880 = vmul.f32 %v5656, %v5848
        %v5881 = vmul.f32 %v5657, %v5849
        %v5882 = vmul.f32 %v5658, %v5850
        %v5883 = vmul.f32 %v5659, %v5851
        %v5884 = vmul.f32 %v5660, %v5852
        %v5885 = vmul.f32 %v5661, %v5853
        %v5886 = vmul.f32 %v5662, %v5854
        %v5887 = vmul.f32 %v5663, %v5855
        %v5888 = vmul.f32 %v5664, %v5856
        %v5889 = vmul.f32 %v5665, %v5857
        %v5890 = vmul.f32 %v5666, %v5858
        %v5891 = vmul.f32 %v5667, %v5859
        %v5892 = vmul.f32 %v5668, %v5860
        %v5893 = vmul.f32 %v5669, %v5861
        %v5894 = vmul.f32 %v5670, %v5862
        %v5895 = vmul.f32 %v5671, %v5863
        %v5896 = vmul.f32 %v5672, %v5864
        %v5897 = vmul.f32 %v5673, %v5865
        %v5898 = vmul.f32 %v5674, %v5866
        %v5899 = vmul.f32 %v5675, %v5867
        %v5900 = vmul.f32 %v5676, %v5868
        %v5901 = vmul.f32 %v5677, %v5869
        %v5903 = vlaneseq
        %v5904 = vshrl.u32 %v5903, 7
        %v5905 = vsub.s32 0, %v5904
        %v5906 = vrot.slane %v5011, %v5905
        %v5908 = vmul.f32 %v5870, %v5906
        %v5909 = vmul.f32 %v5871, %v5906
        %v5910 = vmul.f32 %v5872, %v5906
        %v5911 = vmul.f32 %v5873, %v5906
        %v5912 = vmul.f32 %v5874, %v5906
        %v5913 = vmul.f32 %v5875, %v5906
        %v5914 = vmul.f32 %v5876, %v5906
        %v5915 = vmul.f32 %v5877, %v5906
        %v5916 = vmul.f32 %v5878, %v5906
        %v5917 = vmul.f32 %v5879, %v5906
        %v5918 = vmul.f32 %v5880, %v5906
        %v5919 = vmul.f32 %v5881, %v5906
        %v5920 = vmul.f32 %v5882, %v5906
        %v5921 = vmul.f32 %v5883, %v5906
        %v5922 = vmul.f32 %v5884, %v5906
        %v5923 = vmul.f32 %v5885, %v5906
        %v5924 = vmul.f32 %v5886, %v5906
        %v5925 = vmul.f32 %v5887, %v5906
        %v5926 = vmul.f32 %v5888, %v5906
        %v5927 = vmul.f32 %v5889, %v5906
        %v5928 = vmul.f32 %v5890, %v5906
        %v5929 = vmul.f32 %v5891, %v5906
        %v5930 = vmul.f32 %v5892, %v5906
        %v5931 = vmul.f32 %v5893, %v5906
        %v5932 = vmul.f32 %v5894, %v5906
        %v5933 = vmul.f32 %v5895, %v5906
        %v5934 = vmul.f32 %v5896, %v5906
        %v5935 = vmul.f32 %v5897, %v5906
        %v5936 = vmul.f32 %v5898, %v5906
        %v5937 = vmul.f32 %v5899, %v5906
        %v5938 = vmul.f32 %v5900, %v5906
        %v5939 = vmul.f32 %v5901, %v5906
        %v5941 = vlaneseq
        %v5942 = vshrl.u32 %v5941, 7
        %v5943 = vsub.s32 0, %v5942
        %v5944 = vrot.slane %v5013, %v5943
        %v5946 = vadd.f32 %v5908, %v5944
        %v5947 = vadd.f32 %v5909, %v5944
        %v5948 = vadd.f32 %v5910, %v5944
        %v5949 = vadd.f32 %v5911, %v5944
        %v5950 = vadd.f32 %v5912, %v5944
        %v5951 = vadd.f32 %v5913, %v5944
        %v5952 = vadd.f32 %v5914, %v5944
        %v5953 = vadd.f32 %v5915, %v5944
        %v5954 = vadd.f32 %v5916, %v5944
        %v5955 = vadd.f32 %v5917, %v5944
        %v5956 = vadd.f32 %v5918, %v5944
        %v5957 = vadd.f32 %v5919, %v5944
        %v5958 = vadd.f32 %v5920, %v5944
        %v5959 = vadd.f32 %v5921, %v5944
        %v5960 = vadd.f32 %v5922, %v5944
        %v5961 = vadd.f32 %v5923, %v5944
        %v5962 = vadd.f32 %v5924, %v5944
        %v5963 = vadd.f32 %v5925, %v5944
        %v5964 = vadd.f32 %v5926, %v5944
        %v5965 = vadd.f32 %v5927, %v5944
        %v5966 = vadd.f32 %v5928, %v5944
        %v5967 = vadd.f32 %v5929, %v5944
        %v5968 = vadd.f32 %v5930, %v5944
        %v5969 = vadd.f32 %v5931, %v5944
        %v5970 = vadd.f32 %v5932, %v5944
        %v5971 = vadd.f32 %v5933, %v5944
        %v5972 = vadd.f32 %v5934, %v5944
        %v5973 = vadd.f32 %v5935, %v5944
        %v5974 = vadd.f32 %v5936, %v5944
        %v5975 = vadd.f32 %v5937, %v5944
        %v5976 = vadd.f32 %v5938, %v5944
        %v5977 = vadd.f32 %v5939, %v5944
        %v5978 = vpack.c.bf16 %v5947, %v5946
        %v5979 = vpack.c.bf16 %v5949, %v5948
        %v5980 = vpack.c.bf16 %v5951, %v5950
        %v5981 = vpack.c.bf16 %v5953, %v5952
        %v5982 = vpack.c.bf16 %v5955, %v5954
        %v5983 = vpack.c.bf16 %v5957, %v5956
        %v5984 = vpack.c.bf16 %v5959, %v5958
        %v5985 = vpack.c.bf16 %v5961, %v5960
        %v5986 = vpack.c.bf16 %v5963, %v5962
        %v5987 = vpack.c.bf16 %v5965, %v5964
        %v5988 = vpack.c.bf16 %v5967, %v5966
        %v5989 = vpack.c.bf16 %v5969, %v5968
        %v5990 = vpack.c.bf16 %v5971, %v5970
        %v5991 = vpack.c.bf16 %v5973, %v5972
        %v5992 = vpack.c.bf16 %v5975, %v5974
        %v5993 = vpack.c.bf16 %v5977, %v5976
        %s5994 = scalar_lea.vmem [#allocation14], 256
        %v5995 = vld [vmem:[%s5994] sm:$0xff]
        %v5996 = vld [vmem:[%s5994 + $0x8] sm:$0xff]
        %v5997 = vld [vmem:[%s5994 + $0x10] sm:$0xff]
        %v5998 = vld [vmem:[%s5994 + $0x18] sm:$0xff]
        %v5999 = vld [vmem:[%s5994 + $0x20] sm:$0xff]
        %v6000 = vld [vmem:[%s5994 + $0x28] sm:$0xff]
        %v6001 = vld [vmem:[%s5994 + $0x30] sm:$0xff]
        %v6002 = vld [vmem:[%s5994 + $0x38] sm:$0xff]
        %v6003 = vld [vmem:[%s5994 + $0x40] sm:$0xff]
        %v6004 = vld [vmem:[%s5994 + $0x48] sm:$0xff]
        %v6005 = vld [vmem:[%s5994 + $0x50] sm:$0xff]
        %v6006 = vld [vmem:[%s5994 + $0x58] sm:$0xff]
        %v6007 = vld [vmem:[%s5994 + $0x60] sm:$0xff]
        %v6008 = vld [vmem:[%s5994 + $0x68] sm:$0xff]
        %v6009 = vld [vmem:[%s5994 + $0x70] sm:$0xff]
        %v6010 = vld [vmem:[%s5994 + $0x78] sm:$0xff]
        %v6011 = vld [vmem:[%s5994 + $0x80] sm:$0xff]
        %v6012 = vld [vmem:[%s5994 + $0x88] sm:$0xff]
        %v6013 = vld [vmem:[%s5994 + $0x90] sm:$0xff]
        %v6014 = vld [vmem:[%s5994 + $0x98] sm:$0xff]
        %v6015 = vld [vmem:[%s5994 + $0xa0] sm:$0xff]
        %v6016 = vld [vmem:[%s5994 + $0xa8] sm:$0xff]
        %v6017 = vld [vmem:[%s5994 + $0xb0] sm:$0xff]
        %v6018 = vld [vmem:[%s5994 + $0xb8] sm:$0xff]
        %v6019 = vld [vmem:[%s5994 + $0xc0] sm:$0xff]
        %v6020 = vld [vmem:[%s5994 + $0xc8] sm:$0xff]
        %v6021 = vld [vmem:[%s5994 + $0xd0] sm:$0xff]
        %v6022 = vld [vmem:[%s5994 + $0xd8] sm:$0xff]
        %v6023 = vld [vmem:[%s5994 + $0xe0] sm:$0xff]
        %v6024 = vld [vmem:[%s5994 + $0xe8] sm:$0xff]
        %v6025 = vld [vmem:[%s5994 + $0xf0] sm:$0xff]
        %v6026 = vld [vmem:[%s5994 + $0xf8] sm:$0xff]
        %v6028 = vlaneseq
        %v6029 = vshrl.u32 %v6028, 7
        %v6030 = vsub.s32 0, %v6029
        %v6031 = vrot.slane %v5015, %v6030
        %v6032 = vlaneseq
        %v6033 = vshrl.u32 %v6032, 7
        %v6034 = vsub.s32 1, %v6033
        %v6035 = vrot.slane %v5015, %v6034
        %v6036 = vlaneseq
        %v6037 = vshrl.u32 %v6036, 7
        %v6038 = vsub.s32 2, %v6037
        %v6039 = vrot.slane %v5015, %v6038
        %v6040 = vlaneseq
        %v6041 = vshrl.u32 %v6040, 7
        %v6042 = vsub.s32 3, %v6041
        %v6043 = vrot.slane %v5015, %v6042
        %v6080 = vunpack.c.l.b16 %v5995
        %v6081 = vunpack.c.h.b16 %v5995
        %v6082 = vunpack.c.l.b16 %v5996
        %v6083 = vunpack.c.h.b16 %v5996
        %v6084 = vunpack.c.l.b16 %v5997
        %v6085 = vunpack.c.h.b16 %v5997
        %v6086 = vunpack.c.l.b16 %v5998
        %v6087 = vunpack.c.h.b16 %v5998
        %v6088 = vunpack.c.l.b16 %v5999
        %v6089 = vunpack.c.h.b16 %v5999
        %v6090 = vunpack.c.l.b16 %v6000
        %v6091 = vunpack.c.h.b16 %v6000
        %v6092 = vunpack.c.l.b16 %v6001
        %v6093 = vunpack.c.h.b16 %v6001
        %v6094 = vunpack.c.l.b16 %v6002
        %v6095 = vunpack.c.h.b16 %v6002
        %v6096 = vunpack.c.l.b16 %v6003
        %v6097 = vunpack.c.h.b16 %v6003
        %v6098 = vunpack.c.l.b16 %v6004
        %v6099 = vunpack.c.h.b16 %v6004
        %v6100 = vunpack.c.l.b16 %v6005
        %v6101 = vunpack.c.h.b16 %v6005
        %v6102 = vunpack.c.l.b16 %v6006
        %v6103 = vunpack.c.h.b16 %v6006
        %v6104 = vunpack.c.l.b16 %v6007
        %v6105 = vunpack.c.h.b16 %v6007
        %v6106 = vunpack.c.l.b16 %v6008
        %v6107 = vunpack.c.h.b16 %v6008
        %v6108 = vunpack.c.l.b16 %v6009
        %v6109 = vunpack.c.h.b16 %v6009
        %v6110 = vunpack.c.l.b16 %v6010
        %v6111 = vunpack.c.h.b16 %v6010
        %v6112 = vunpack.c.l.b16 %v6011
        %v6113 = vunpack.c.h.b16 %v6011
        %v6114 = vunpack.c.l.b16 %v6012
        %v6115 = vunpack.c.h.b16 %v6012
        %v6116 = vunpack.c.l.b16 %v6013
        %v6117 = vunpack.c.h.b16 %v6013
        %v6118 = vunpack.c.l.b16 %v6014
        %v6119 = vunpack.c.h.b16 %v6014
        %v6120 = vunpack.c.l.b16 %v6015
        %v6121 = vunpack.c.h.b16 %v6015
        %v6122 = vunpack.c.l.b16 %v6016
        %v6123 = vunpack.c.h.b16 %v6016
        %v6124 = vunpack.c.l.b16 %v6017
        %v6125 = vunpack.c.h.b16 %v6017
        %v6126 = vunpack.c.l.b16 %v6018
        %v6127 = vunpack.c.h.b16 %v6018
        %v6128 = vunpack.c.l.b16 %v6019
        %v6129 = vunpack.c.h.b16 %v6019
        %v6130 = vunpack.c.l.b16 %v6020
        %v6131 = vunpack.c.h.b16 %v6020
        %v6132 = vunpack.c.l.b16 %v6021
        %v6133 = vunpack.c.h.b16 %v6021
        %v6134 = vunpack.c.l.b16 %v6022
        %v6135 = vunpack.c.h.b16 %v6022
        %v6136 = vunpack.c.l.b16 %v6023
        %v6137 = vunpack.c.h.b16 %v6023
        %v6138 = vunpack.c.l.b16 %v6024
        %v6139 = vunpack.c.h.b16 %v6024
        %v6140 = vunpack.c.l.b16 %v6025
        %v6141 = vunpack.c.h.b16 %v6025
        %v6142 = vunpack.c.l.b16 %v6026
        %v6143 = vunpack.c.h.b16 %v6026
        %v6144 = vpack.c.b16 %v6084, %v6080
        %v6145 = vpack.c.b16 %v6085, %v6081
        %v6146 = vpack.c.b16 %v6086, %v6082
        %v6147 = vpack.c.b16 %v6087, %v6083
        %v6148 = vpack.c.b16 %v6092, %v6088
        %v6149 = vpack.c.b16 %v6093, %v6089
        %v6150 = vpack.c.b16 %v6094, %v6090
        %v6151 = vpack.c.b16 %v6095, %v6091
        %v6152 = vpack.c.b16 %v6100, %v6096
        %v6153 = vpack.c.b16 %v6101, %v6097
        %v6154 = vpack.c.b16 %v6102, %v6098
        %v6155 = vpack.c.b16 %v6103, %v6099
        %v6156 = vpack.c.b16 %v6108, %v6104
        %v6157 = vpack.c.b16 %v6109, %v6105
        %v6158 = vpack.c.b16 %v6110, %v6106
        %v6159 = vpack.c.b16 %v6111, %v6107
        %v6160 = vpack.c.b16 %v6116, %v6112
        %v6161 = vpack.c.b16 %v6117, %v6113
        %v6162 = vpack.c.b16 %v6118, %v6114
        %v6163 = vpack.c.b16 %v6119, %v6115
        %v6164 = vpack.c.b16 %v6124, %v6120
        %v6165 = vpack.c.b16 %v6125, %v6121
        %v6166 = vpack.c.b16 %v6126, %v6122
        %v6167 = vpack.c.b16 %v6127, %v6123
        %v6168 = vpack.c.b16 %v6132, %v6128
        %v6169 = vpack.c.b16 %v6133, %v6129
        %v6170 = vpack.c.b16 %v6134, %v6130
        %v6171 = vpack.c.b16 %v6135, %v6131
        %v6172 = vpack.c.b16 %v6140, %v6136
        %v6173 = vpack.c.b16 %v6141, %v6137
        %v6174 = vpack.c.b16 %v6142, %v6138
        %v6175 = vpack.c.b16 %v6143, %v6139
        %6208 = vmatprep.subr.bf16.mxu0 %v6145
        %6209 = vmatpush1.bf16.msra.mxu0 %v6144
        %6210 = vmatprep.subr.bf16.mxu0 %v6149
        %6211 = vmatpush1.bf16.msra.mxu0 %v6148
        %6212 = vmatprep.subr.bf16.mxu0 %v6153
        %6213 = vmatpush1.bf16.msra.mxu0 %v6152
        %6214 = vmatprep.subr.bf16.mxu0 %v6157
        %6215 = vmatpush1.bf16.msra.mxu0 %v6156
        %6216 = vmatprep.subr.bf16.mxu0 %v6161
        %6217 = vmatpush1.bf16.msra.mxu0 %v6160
        %6218 = vmatprep.subr.bf16.mxu0 %v6165
        %6219 = vmatpush1.bf16.msra.mxu0 %v6164
        %6220 = vmatprep.subr.bf16.mxu0 %v6169
        %6221 = vmatpush1.bf16.msra.mxu0 %v6168
        %6222 = vmatprep.subr.bf16.mxu0 %v6173
        %6223 = vmatpush1.bf16.msra.mxu0 %v6172
        %6224 = vmatprep.subr.bf16.mxu0 0
        %6225 = vmatpush1.bf16.msra.mxu0 0
        %6226 = vmatprep.subr.bf16.mxu0 0
        %6227 = vmatpush1.bf16.msra.mxu0 0
        %6228 = vmatprep.subr.bf16.mxu0 0
        %6229 = vmatpush1.bf16.msra.mxu0 0
        %6230 = vmatprep.subr.bf16.mxu0 0
        %6231 = vmatpush1.bf16.msra.mxu0 0
        %6232 = vmatprep.subr.bf16.mxu0 0
        %6233 = vmatpush1.bf16.msra.mxu0 0
        %6234 = vmatprep.subr.bf16.mxu0 0
        %6235 = vmatpush1.bf16.msra.mxu0 0
        %6236 = vmatprep.subr.bf16.mxu0 0
        %6237 = vmatpush1.bf16.msra.mxu0 0
        %6238 = vmatprep.subr.bf16.mxu0 0
        %6239 = vmatpush1.bf16.msra.mxu0 0
        %6240 = vmatprep.mubr.bf16.mxu0 0
        %6241 = vmatmul.mubr.bf16.gmra.mrb[0].mxu0 %v5978
        %v6242 = vpop.f32.mrb[0].mxu0
        %v6243 = vadd.f32 %v6031, %v6242
        %v6244 = vpop.f32.mrb[0].mxu0
        %v6245 = vadd.f32 %v6035, %v6244
        %v6246 = vpop.f32.mrb[0].mxu0
        %v6247 = vadd.f32 %v6031, %v6246
        %v6248 = vpop.f32.mrb[0].mxu0
        %v6249 = vadd.f32 %v6035, %v6248
        %6250 = vmatprep.mubr.bf16.mxu0 0
        %6251 = vmatmul.mubr.bf16.gmra.mrb[0].mxu0 %v5979
        %v6252 = vpop.f32.mrb[0].mxu0
        %v6253 = vadd.f32 %v6031, %v6252
        %v6254 = vpop.f32.mrb[0].mxu0
        %v6255 = vadd.f32 %v6035, %v6254
        %v6256 = vpop.f32.mrb[0].mxu0
        %v6257 = vadd.f32 %v6031, %v6256
        %v6258 = vpop.f32.mrb[0].mxu0
        %v6259 = vadd.f32 %v6035, %v6258
        %6260 = vmatprep.mubr.bf16.mxu0 0
        %6261 = vmatmul.mubr.bf16.gmra.mrb[0].mxu0 %v5980
        %v6262 = vpop.f32.mrb[0].mxu0
        %v6263 = vadd.f32 %v6031, %v6262
        %v6264 = vpop.f32.mrb[0].mxu0
        %v6265 = vadd.f32 %v6035, %v6264
        %v6266 = vpop.f32.mrb[0].mxu0
        %v6267 = vadd.f32 %v6031, %v6266
        %v6268 = vpop.f32.mrb[0].mxu0
        %v6269 = vadd.f32 %v6035, %v6268
        %6270 = vmatprep.mubr.bf16.mxu0 0
        %6271 = vmatmul.mubr.bf16.gmra.mrb[0].mxu0 %v5981
        %v6272 = vpop.f32.mrb[0].mxu0
        %v6273 = vadd.f32 %v6031, %v6272
        %v6274 = vpop.f32.mrb[0].mxu0
        %v6275 = vadd.f32 %v6035, %v6274
        %v6276 = vpop.f32.mrb[0].mxu0
        %v6277 = vadd.f32 %v6031, %v6276
        %v6278 = vpop.f32.mrb[0].mxu0
        %v6279 = vadd.f32 %v6035, %v6278
        %6280 = vmatprep.mubr.bf16.mxu0 0
        %6281 = vmatmul.mubr.bf16.gmra.mrb[0].mxu0 %v5982
        %v6282 = vpop.f32.mrb[0].mxu0
        %v6283 = vadd.f32 %v6031, %v6282
        %v6284 = vpop.f32.mrb[0].mxu0
        %v6285 = vadd.f32 %v6035, %v6284
        %v6286 = vpop.f32.mrb[0].mxu0
        %v6287 = vadd.f32 %v6031, %v6286
        %v6288 = vpop.f32.mrb[0].mxu0
        %v6289 = vadd.f32 %v6035, %v6288
        %6290 = vmatprep.mubr.bf16.mxu0 0
        %6291 = vmatmul.mubr.bf16.gmra.mrb[0].mxu0 %v5983
        %v6292 = vpop.f32.mrb[0].mxu0
        %v6293 = vadd.f32 %v6031, %v6292
        %v6294 = vpop.f32.mrb[0].mxu0
        %v6295 = vadd.f32 %v6035, %v6294
        %v6296 = vpop.f32.mrb[0].mxu0
        %v6297 = vadd.f32 %v6031, %v6296
        %v6298 = vpop.f32.mrb[0].mxu0
        %v6299 = vadd.f32 %v6035, %v6298
        %6300 = vmatprep.mubr.bf16.mxu0 0
        %6301 = vmatmul.mubr.bf16.gmra.mrb[0].mxu0 %v5984
        %v6302 = vpop.f32.mrb[0].mxu0
        %v6303 = vadd.f32 %v6031, %v6302
        %v6304 = vpop.f32.mrb[0].mxu0
        %v6305 = vadd.f32 %v6035, %v6304
        %v6306 = vpop.f32.mrb[0].mxu0
        %v6307 = vadd.f32 %v6031, %v6306
        %v6308 = vpop.f32.mrb[0].mxu0
        %v6309 = vadd.f32 %v6035, %v6308
        %6310 = vmatprep.mubr.bf16.mxu0 0
        %6311 = vmatmul.mubr.bf16.gmra.mrb[0].mxu0 %v5985
        %v6312 = vpop.f32.mrb[0].mxu0
        %v6313 = vadd.f32 %v6031, %v6312
        %v6314 = vpop.f32.mrb[0].mxu0
        %v6315 = vadd.f32 %v6035, %v6314
        %v6316 = vpop.f32.mrb[0].mxu0
        %v6317 = vadd.f32 %v6031, %v6316
        %v6318 = vpop.f32.mrb[0].mxu0
        %v6319 = vadd.f32 %v6035, %v6318
        %6320 = vmatprep.mubr.bf16.mxu0 0
        %6321 = vmatmul.mubr.bf16.gmra.mrb[0].mxu0 %v5986
        %v6322 = vpop.f32.mrb[0].mxu0
        %v6323 = vadd.f32 %v6031, %v6322
        %v6324 = vpop.f32.mrb[0].mxu0
        %v6325 = vadd.f32 %v6035, %v6324
        %v6326 = vpop.f32.mrb[0].mxu0
        %v6327 = vadd.f32 %v6031, %v6326
        %v6328 = vpop.f32.mrb[0].mxu0
        %v6329 = vadd.f32 %v6035, %v6328
        %6330 = vmatprep.mubr.bf16.mxu0 0
        %6331 = vmatmul.mubr.bf16.gmra.mrb[0].mxu0 %v5987
        %v6332 = vpop.f32.mrb[0].mxu0
        %v6333 = vadd.f32 %v6031, %v6332
        %v6334 = vpop.f32.mrb[0].mxu0
        %v6335 = vadd.f32 %v6035, %v6334
        %v6336 = vpop.f32.mrb[0].mxu0
        %v6337 = vadd.f32 %v6031, %v6336
        %v6338 = vpop.f32.mrb[0].mxu0
        %v6339 = vadd.f32 %v6035, %v6338
        %6340 = vmatprep.mubr.bf16.mxu0 0
        %6341 = vmatmul.mubr.bf16.gmra.mrb[0].mxu0 %v5988
        %v6342 = vpop.f32.mrb[0].mxu0
        %v6343 = vadd.f32 %v6031, %v6342
        %v6344 = vpop.f32.mrb[0].mxu0
        %v6345 = vadd.f32 %v6035, %v6344
        %v6346 = vpop.f32.mrb[0].mxu0
        %v6347 = vadd.f32 %v6031, %v6346
        %v6348 = vpop.f32.mrb[0].mxu0
        %v6349 = vadd.f32 %v6035, %v6348
        %6350 = vmatprep.mubr.bf16.mxu0 0
        %6351 = vmatmul.mubr.bf16.gmra.mrb[0].mxu0 %v5989
        %v6352 = vpop.f32.mrb[0].mxu0
        %v6353 = vadd.f32 %v6031, %v6352
        %v6354 = vpop.f32.mrb[0].mxu0
        %v6355 = vadd.f32 %v6035, %v6354
        %v6356 = vpop.f32.mrb[0].mxu0
        %v6357 = vadd.f32 %v6031, %v6356
        %v6358 = vpop.f32.mrb[0].mxu0
        %v6359 = vadd.f32 %v6035, %v6358
        %6360 = vmatprep.mubr.bf16.mxu0 0
        %6361 = vmatmul.mubr.bf16.gmra.mrb[0].mxu0 %v5990
        %v6362 = vpop.f32.mrb[0].mxu0
        %v6363 = vadd.f32 %v6031, %v6362
        %v6364 = vpop.f32.mrb[0].mxu0
        %v6365 = vadd.f32 %v6035, %v6364
        %v6366 = vpop.f32.mrb[0].mxu0
        %v6367 = vadd.f32 %v6031, %v6366
        %v6368 = vpop.f32.mrb[0].mxu0
        %v6369 = vadd.f32 %v6035, %v6368
        %6370 = vmatprep.mubr.bf16.mxu0 0
        %6371 = vmatmul.mubr.bf16.gmra.mrb[0].mxu0 %v5991
        %v6372 = vpop.f32.mrb[0].mxu0
        %v6373 = vadd.f32 %v6031, %v6372
        %v6374 = vpop.f32.mrb[0].mxu0
        %v6375 = vadd.f32 %v6035, %v6374
        %v6376 = vpop.f32.mrb[0].mxu0
        %v6377 = vadd.f32 %v6031, %v6376
        %v6378 = vpop.f32.mrb[0].mxu0
        %v6379 = vadd.f32 %v6035, %v6378
        %6380 = vmatprep.mubr.bf16.mxu0 0
        %6381 = vmatmul.mubr.bf16.gmra.mrb[0].mxu0 %v5992
        %v6382 = vpop.f32.mrb[0].mxu0
        %v6383 = vadd.f32 %v6031, %v6382
        %v6384 = vpop.f32.mrb[0].mxu0
        %v6385 = vadd.f32 %v6035, %v6384
        %v6386 = vpop.f32.mrb[0].mxu0
        %v6387 = vadd.f32 %v6031, %v6386
        %v6388 = vpop.f32.mrb[0].mxu0
        %v6389 = vadd.f32 %v6035, %v6388
        %6390 = vmatprep.mubr.bf16.mxu0 0
        %6391 = vmatmul.mubr.bf16.gmra.mrb[0].mxu0 %v5993
        %v6392 = vpop.f32.mrb[0].mxu0
        %v6393 = vadd.f32 %v6031, %v6392
        %v6394 = vpop.f32.mrb[0].mxu0
        %v6395 = vadd.f32 %v6035, %v6394
        %v6396 = vpop.f32.mrb[0].mxu0
        %v6397 = vadd.f32 %v6031, %v6396
        %v6398 = vpop.f32.mrb[0].mxu0
        %v6399 = vadd.f32 %v6035, %v6398
        %6400 = vdwg.mxu0
        %6401 = vmatprep.subr.bf16.mxu0 %v6147
        %6402 = vmatpush1.bf16.msra.mxu0 %v6146
        %6403 = vmatprep.subr.bf16.mxu0 %v6151
        %6404 = vmatpush1.bf16.msra.mxu0 %v6150
        %6405 = vmatprep.subr.bf16.mxu0 %v6155
        %6406 = vmatpush1.bf16.msra.mxu0 %v6154
        %6407 = vmatprep.subr.bf16.mxu0 %v6159
        %6408 = vmatpush1.bf16.msra.mxu0 %v6158
        %6409 = vmatprep.subr.bf16.mxu0 %v6163
        %6410 = vmatpush1.bf16.msra.mxu0 %v6162
        %6411 = vmatprep.subr.bf16.mxu0 %v6167
        %6412 = vmatpush1.bf16.msra.mxu0 %v6166
        %6413 = vmatprep.subr.bf16.mxu0 %v6171
        %6414 = vmatpush1.bf16.msra.mxu0 %v6170
        %6415 = vmatprep.subr.bf16.mxu0 %v6175
        %6416 = vmatpush1.bf16.msra.mxu0 %v6174
        %6417 = vmatprep.subr.bf16.mxu0 0
        %6418 = vmatpush1.bf16.msra.mxu0 0
        %6419 = vmatprep.subr.bf16.mxu0 0
        %6420 = vmatpush1.bf16.msra.mxu0 0
        %6421 = vmatprep.subr.bf16.mxu0 0
        %6422 = vmatpush1.bf16.msra.mxu0 0
        %6423 = vmatprep.subr.bf16.mxu0 0
        %6424 = vmatpush1.bf16.msra.mxu0 0
        %6425 = vmatprep.subr.bf16.mxu0 0
        %6426 = vmatpush1.bf16.msra.mxu0 0
        %6427 = vmatprep.subr.bf16.mxu0 0
        %6428 = vmatpush1.bf16.msra.mxu0 0
        %6429 = vmatprep.subr.bf16.mxu0 0
        %6430 = vmatpush1.bf16.msra.mxu0 0
        %6431 = vmatprep.subr.bf16.mxu0 0
        %6432 = vmatpush1.bf16.msra.mxu0 0
        %6433 = vmatprep.mubr.bf16.mxu0 0
        %6434 = vmatmul.mubr.bf16.gmra.mrb[0].mxu0 %v5978
        %v6435 = vpop.f32.mrb[0].mxu0
        %v6436 = vadd.f32 %v6039, %v6435
        %v6437 = vpop.f32.mrb[0].mxu0
        %v6438 = vadd.f32 %v6043, %v6437
        %v6439 = vpop.f32.mrb[0].mxu0
        %v6440 = vadd.f32 %v6039, %v6439
        %v6441 = vpop.f32.mrb[0].mxu0
        %v6442 = vadd.f32 %v6043, %v6441
        %6443 = vmatprep.mubr.bf16.mxu0 0
        %6444 = vmatmul.mubr.bf16.gmra.mrb[0].mxu0 %v5979
        %v6445 = vpop.f32.mrb[0].mxu0
        %v6446 = vadd.f32 %v6039, %v6445
        %v6447 = vpop.f32.mrb[0].mxu0
        %v6448 = vadd.f32 %v6043, %v6447
        %v6449 = vpop.f32.mrb[0].mxu0
        %v6450 = vadd.f32 %v6039, %v6449
        %v6451 = vpop.f32.mrb[0].mxu0
        %v6452 = vadd.f32 %v6043, %v6451
        %6453 = vmatprep.mubr.bf16.mxu0 0
        %6454 = vmatmul.mubr.bf16.gmra.mrb[0].mxu0 %v5980
        %v6455 = vpop.f32.mrb[0].mxu0
        %v6456 = vadd.f32 %v6039, %v6455
        %v6457 = vpop.f32.mrb[0].mxu0
        %v6458 = vadd.f32 %v6043, %v6457
        %v6459 = vpop.f32.mrb[0].mxu0
        %v6460 = vadd.f32 %v6039, %v6459
        %v6461 = vpop.f32.mrb[0].mxu0
        %v6462 = vadd.f32 %v6043, %v6461
        %6463 = vmatprep.mubr.bf16.mxu0 0
        %6464 = vmatmul.mubr.bf16.gmra.mrb[0].mxu0 %v5981
        %v6465 = vpop.f32.mrb[0].mxu0
        %v6466 = vadd.f32 %v6039, %v6465
        %v6467 = vpop.f32.mrb[0].mxu0
        %v6468 = vadd.f32 %v6043, %v6467
        %v6469 = vpop.f32.mrb[0].mxu0
        %v6470 = vadd.f32 %v6039, %v6469
        %v6471 = vpop.f32.mrb[0].mxu0
        %v6472 = vadd.f32 %v6043, %v6471
        %6473 = vmatprep.mubr.bf16.mxu0 0
        %6474 = vmatmul.mubr.bf16.gmra.mrb[0].mxu0 %v5982
        %v6475 = vpop.f32.mrb[0].mxu0
        %v6476 = vadd.f32 %v6039, %v6475
        %v6477 = vpop.f32.mrb[0].mxu0
        %v6478 = vadd.f32 %v6043, %v6477
        %v6479 = vpop.f32.mrb[0].mxu0
        %v6480 = vadd.f32 %v6039, %v6479
        %v6481 = vpop.f32.mrb[0].mxu0
        %v6482 = vadd.f32 %v6043, %v6481
        %6483 = vmatprep.mubr.bf16.mxu0 0
        %6484 = vmatmul.mubr.bf16.gmra.mrb[0].mxu0 %v5983
        %v6485 = vpop.f32.mrb[0].mxu0
        %v6486 = vadd.f32 %v6039, %v6485
        %v6487 = vpop.f32.mrb[0].mxu0
        %v6488 = vadd.f32 %v6043, %v6487
        %v6489 = vpop.f32.mrb[0].mxu0
        %v6490 = vadd.f32 %v6039, %v6489
        %v6491 = vpop.f32.mrb[0].mxu0
        %v6492 = vadd.f32 %v6043, %v6491
        %6493 = vmatprep.mubr.bf16.mxu0 0
        %6494 = vmatmul.mubr.bf16.gmra.mrb[0].mxu0 %v5984
        %v6495 = vpop.f32.mrb[0].mxu0
        %v6496 = vadd.f32 %v6039, %v6495
        %v6497 = vpop.f32.mrb[0].mxu0
        %v6498 = vadd.f32 %v6043, %v6497
        %v6499 = vpop.f32.mrb[0].mxu0
        %v6500 = vadd.f32 %v6039, %v6499
        %v6501 = vpop.f32.mrb[0].mxu0
        %v6502 = vadd.f32 %v6043, %v6501
        %6503 = vmatprep.mubr.bf16.mxu0 0
        %6504 = vmatmul.mubr.bf16.gmra.mrb[0].mxu0 %v5985
        %v6505 = vpop.f32.mrb[0].mxu0
        %v6506 = vadd.f32 %v6039, %v6505
        %v6507 = vpop.f32.mrb[0].mxu0
        %v6508 = vadd.f32 %v6043, %v6507
        %v6509 = vpop.f32.mrb[0].mxu0
        %v6510 = vadd.f32 %v6039, %v6509
        %v6511 = vpop.f32.mrb[0].mxu0
        %v6512 = vadd.f32 %v6043, %v6511
        %6513 = vmatprep.mubr.bf16.mxu0 0
        %6514 = vmatmul.mubr.bf16.gmra.mrb[0].mxu0 %v5986
        %v6515 = vpop.f32.mrb[0].mxu0
        %v6516 = vadd.f32 %v6039, %v6515
        %v6517 = vpop.f32.mrb[0].mxu0
        %v6518 = vadd.f32 %v6043, %v6517
        %v6519 = vpop.f32.mrb[0].mxu0
        %v6520 = vadd.f32 %v6039, %v6519
        %v6521 = vpop.f32.mrb[0].mxu0
        %v6522 = vadd.f32 %v6043, %v6521
        %6523 = vmatprep.mubr.bf16.mxu0 0
        %6524 = vmatmul.mubr.bf16.gmra.mrb[0].mxu0 %v5987
        %v6525 = vpop.f32.mrb[0].mxu0
        %v6526 = vadd.f32 %v6039, %v6525
        %v6527 = vpop.f32.mrb[0].mxu0
        %v6528 = vadd.f32 %v6043, %v6527
        %v6529 = vpop.f32.mrb[0].mxu0
        %v6530 = vadd.f32 %v6039, %v6529
        %v6531 = vpop.f32.mrb[0].mxu0
        %v6532 = vadd.f32 %v6043, %v6531
        %6533 = vmatprep.mubr.bf16.mxu0 0
        %6534 = vmatmul.mubr.bf16.gmra.mrb[0].mxu0 %v5988
        %v6535 = vpop.f32.mrb[0].mxu0
        %v6536 = vadd.f32 %v6039, %v6535
        %v6537 = vpop.f32.mrb[0].mxu0
        %v6538 = vadd.f32 %v6043, %v6537
        %v6539 = vpop.f32.mrb[0].mxu0
        %v6540 = vadd.f32 %v6039, %v6539
        %v6541 = vpop.f32.mrb[0].mxu0
        %v6542 = vadd.f32 %v6043, %v6541
        %6543 = vmatprep.mubr.bf16.mxu0 0
        %6544 = vmatmul.mubr.bf16.gmra.mrb[0].mxu0 %v5989
        %v6545 = vpop.f32.mrb[0].mxu0
        %v6546 = vadd.f32 %v6039, %v6545
        %v6547 = vpop.f32.mrb[0].mxu0
        %v6548 = vadd.f32 %v6043, %v6547
        %v6549 = vpop.f32.mrb[0].mxu0
        %v6550 = vadd.f32 %v6039, %v6549
        %v6551 = vpop.f32.mrb[0].mxu0
        %v6552 = vadd.f32 %v6043, %v6551
        %6553 = vmatprep.mubr.bf16.mxu0 0
        %6554 = vmatmul.mubr.bf16.gmra.mrb[0].mxu0 %v5990
        %v6555 = vpop.f32.mrb[0].mxu0
        %v6556 = vadd.f32 %v6039, %v6555
        %v6557 = vpop.f32.mrb[0].mxu0
        %v6558 = vadd.f32 %v6043, %v6557
        %v6559 = vpop.f32.mrb[0].mxu0
        %v6560 = vadd.f32 %v6039, %v6559
        %v6561 = vpop.f32.mrb[0].mxu0
        %v6562 = vadd.f32 %v6043, %v6561
        %6563 = vmatprep.mubr.bf16.mxu0 0
        %6564 = vmatmul.mubr.bf16.gmra.mrb[0].mxu0 %v5991
        %v6565 = vpop.f32.mrb[0].mxu0
        %v6566 = vadd.f32 %v6039, %v6565
        %v6567 = vpop.f32.mrb[0].mxu0
        %v6568 = vadd.f32 %v6043, %v6567
        %v6569 = vpop.f32.mrb[0].mxu0
        %v6570 = vadd.f32 %v6039, %v6569
        %v6571 = vpop.f32.mrb[0].mxu0
        %v6572 = vadd.f32 %v6043, %v6571
        %6573 = vmatprep.mubr.bf16.mxu0 0
        %6574 = vmatmul.mubr.bf16.gmra.mrb[0].mxu0 %v5992
        %v6575 = vpop.f32.mrb[0].mxu0
        %v6576 = vadd.f32 %v6039, %v6575
        %v6577 = vpop.f32.mrb[0].mxu0
        %v6578 = vadd.f32 %v6043, %v6577
        %v6579 = vpop.f32.mrb[0].mxu0
        %v6580 = vadd.f32 %v6039, %v6579
        %v6581 = vpop.f32.mrb[0].mxu0
        %v6582 = vadd.f32 %v6043, %v6581
        %6583 = vmatprep.mubr.bf16.mxu0 0
        %6584 = vmatmul.mubr.bf16.gmra.mrb[0].mxu0 %v5993
        %v6585 = vpop.f32.mrb[0].mxu0
        %v6586 = vadd.f32 %v6039, %v6585
        %v6587 = vpop.f32.mrb[0].mxu0
        %v6588 = vadd.f32 %v6043, %v6587
        %v6589 = vpop.f32.mrb[0].mxu0
        %v6590 = vadd.f32 %v6039, %v6589
        %v6591 = vpop.f32.mrb[0].mxu0
        %v6592 = vadd.f32 %v6043, %v6591
        %6593 = vdwg.mxu0
        %v6594 = vmul.f32 %v6243, 0.5
        %v6595 = vmul.f32 %v6245, 0.5
        %v6596 = vmul.f32 %v6436, 0.5
        %v6597 = vmul.f32 %v6438, 0.5
        %v6598 = vmul.f32 %v6247, 0.5
        %v6599 = vmul.f32 %v6249, 0.5
        %v6600 = vmul.f32 %v6440, 0.5
        %v6601 = vmul.f32 %v6442, 0.5
        %v6602 = vmul.f32 %v6253, 0.5
        %v6603 = vmul.f32 %v6255, 0.5
        %v6604 = vmul.f32 %v6446, 0.5
        %v6605 = vmul.f32 %v6448, 0.5
        %v6606 = vmul.f32 %v6257, 0.5
        %v6607 = vmul.f32 %v6259, 0.5
        %v6608 = vmul.f32 %v6450, 0.5
        %v6609 = vmul.f32 %v6452, 0.5
        %v6610 = vmul.f32 %v6263, 0.5
        %v6611 = vmul.f32 %v6265, 0.5
        %v6612 = vmul.f32 %v6456, 0.5
        %v6613 = vmul.f32 %v6458, 0.5
        %v6614 = vmul.f32 %v6267, 0.5
        %v6615 = vmul.f32 %v6269, 0.5
        %v6616 = vmul.f32 %v6460, 0.5
        %v6617 = vmul.f32 %v6462, 0.5
        %v6618 = vmul.f32 %v6273, 0.5
        %v6619 = vmul.f32 %v6275, 0.5
        %v6620 = vmul.f32 %v6466, 0.5
        %v6621 = vmul.f32 %v6468, 0.5
        %v6622 = vmul.f32 %v6277, 0.5
        %v6623 = vmul.f32 %v6279, 0.5
        %v6624 = vmul.f32 %v6470, 0.5
        %v6625 = vmul.f32 %v6472, 0.5
        %v6626 = vmul.f32 %v6283, 0.5
        %v6627 = vmul.f32 %v6285, 0.5
        %v6628 = vmul.f32 %v6476, 0.5
        %v6629 = vmul.f32 %v6478, 0.5
        %v6630 = vmul.f32 %v6287, 0.5
        %v6631 = vmul.f32 %v6289, 0.5
        %v6632 = vmul.f32 %v6480, 0.5
        %v6633 = vmul.f32 %v6482, 0.5
        %v6634 = vmul.f32 %v6293, 0.5
        %v6635 = vmul.f32 %v6295, 0.5
        %v6636 = vmul.f32 %v6486, 0.5
        %v6637 = vmul.f32 %v6488, 0.5
        %v6638 = vmul.f32 %v6297, 0.5
        %v6639 = vmul.f32 %v6299, 0.5
        %v6640 = vmul.f32 %v6490, 0.5
        %v6641 = vmul.f32 %v6492, 0.5
        %v6642 = vmul.f32 %v6303, 0.5
        %v6643 = vmul.f32 %v6305, 0.5
        %v6644 = vmul.f32 %v6496, 0.5
        %v6645 = vmul.f32 %v6498, 0.5
        %v6646 = vmul.f32 %v6307, 0.5
        %v6647 = vmul.f32 %v6309, 0.5
        %v6648 = vmul.f32 %v6500, 0.5
        %v6649 = vmul.f32 %v6502, 0.5
        %v6650 = vmul.f32 %v6313, 0.5
        %v6651 = vmul.f32 %v6315, 0.5
        %v6652 = vmul.f32 %v6506, 0.5
        %v6653 = vmul.f32 %v6508, 0.5
        %v6654 = vmul.f32 %v6317, 0.5
        %v6655 = vmul.f32 %v6319, 0.5
        %v6656 = vmul.f32 %v6510, 0.5
        %v6657 = vmul.f32 %v6512, 0.5
        %v6658 = vmul.f32 %v6323, 0.5
        %v6659 = vmul.f32 %v6325, 0.5
        %v6660 = vmul.f32 %v6516, 0.5
        %v6661 = vmul.f32 %v6518, 0.5
        %v6662 = vmul.f32 %v6327, 0.5
        %v6663 = vmul.f32 %v6329, 0.5
        %v6664 = vmul.f32 %v6520, 0.5
        %v6665 = vmul.f32 %v6522, 0.5
        %v6666 = vmul.f32 %v6333, 0.5
        %v6667 = vmul.f32 %v6335, 0.5
        %v6668 = vmul.f32 %v6526, 0.5
        %v6669 = vmul.f32 %v6528, 0.5
        %v6670 = vmul.f32 %v6337, 0.5
        %v6671 = vmul.f32 %v6339, 0.5
        %v6672 = vmul.f32 %v6530, 0.5
        %v6673 = vmul.f32 %v6532, 0.5
        %v6674 = vmul.f32 %v6343, 0.5
        %v6675 = vmul.f32 %v6345, 0.5
        %v6676 = vmul.f32 %v6536, 0.5
        %v6677 = vmul.f32 %v6538, 0.5
        %v6678 = vmul.f32 %v6347, 0.5
        %v6679 = vmul.f32 %v6349, 0.5
        %v6680 = vmul.f32 %v6540, 0.5
        %v6681 = vmul.f32 %v6542, 0.5
        %v6682 = vmul.f32 %v6353, 0.5
        %v6683 = vmul.f32 %v6355, 0.5
        %v6684 = vmul.f32 %v6546, 0.5
        %v6685 = vmul.f32 %v6548, 0.5
        %v6686 = vmul.f32 %v6357, 0.5
        %v6687 = vmul.f32 %v6359, 0.5
        %v6688 = vmul.f32 %v6550, 0.5
        %v6689 = vmul.f32 %v6552, 0.5
        %v6690 = vmul.f32 %v6363, 0.5
        %v6691 = vmul.f32 %v6365, 0.5
        %v6692 = vmul.f32 %v6556, 0.5
        %v6693 = vmul.f32 %v6558, 0.5
        %v6694 = vmul.f32 %v6367, 0.5
        %v6695 = vmul.f32 %v6369, 0.5
        %v6696 = vmul.f32 %v6560, 0.5
        %v6697 = vmul.f32 %v6562, 0.5
        %v6698 = vmul.f32 %v6373, 0.5
        %v6699 = vmul.f32 %v6375, 0.5
        %v6700 = vmul.f32 %v6566, 0.5
        %v6701 = vmul.f32 %v6568, 0.5
        %v6702 = vmul.f32 %v6377, 0.5
        %v6703 = vmul.f32 %v6379, 0.5
        %v6704 = vmul.f32 %v6570, 0.5
        %v6705 = vmul.f32 %v6572, 0.5
        %v6706 = vmul.f32 %v6383, 0.5
        %v6707 = vmul.f32 %v6385, 0.5
        %v6708 = vmul.f32 %v6576, 0.5
        %v6709 = vmul.f32 %v6578, 0.5
        %v6710 = vmul.f32 %v6387, 0.5
        %v6711 = vmul.f32 %v6389, 0.5
        %v6712 = vmul.f32 %v6580, 0.5
        %v6713 = vmul.f32 %v6582, 0.5
        %v6714 = vmul.f32 %v6393, 0.5
        %v6715 = vmul.f32 %v6395, 0.5
        %v6716 = vmul.f32 %v6586, 0.5
        %v6717 = vmul.f32 %v6588, 0.5
        %v6718 = vmul.f32 %v6397, 0.5
        %v6719 = vmul.f32 %v6399, 0.5
        %v6720 = vmul.f32 %v6590, 0.5
        %v6721 = vmul.f32 %v6592, 0.5
        %v6722 = vmul.f32 %v6243, 0.70710677
        %v6723 = vmul.f32 %v6245, 0.70710677
        %v6724 = vmul.f32 %v6436, 0.70710677
        %v6725 = vmul.f32 %v6438, 0.70710677
        %v6726 = vmul.f32 %v6247, 0.70710677
        %v6727 = vmul.f32 %v6249, 0.70710677
        %v6728 = vmul.f32 %v6440, 0.70710677
        %v6729 = vmul.f32 %v6442, 0.70710677
        %v6730 = vmul.f32 %v6253, 0.70710677
        %v6731 = vmul.f32 %v6255, 0.70710677
        %v6732 = vmul.f32 %v6446, 0.70710677
        %v6733 = vmul.f32 %v6448, 0.70710677
        %v6734 = vmul.f32 %v6257, 0.70710677
        %v6735 = vmul.f32 %v6259, 0.70710677
        %v6736 = vmul.f32 %v6450, 0.70710677
        %v6737 = vmul.f32 %v6452, 0.70710677
        %v6738 = vmul.f32 %v6263, 0.70710677
        %v6739 = vmul.f32 %v6265, 0.70710677
        %v6740 = vmul.f32 %v6456, 0.70710677
        %v6741 = vmul.f32 %v6458, 0.70710677
        %v6742 = vmul.f32 %v6267, 0.70710677
        %v6743 = vmul.f32 %v6269, 0.70710677
        %v6744 = vmul.f32 %v6460, 0.70710677
        %v6745 = vmul.f32 %v6462, 0.70710677
        %v6746 = vmul.f32 %v6273, 0.70710677
        %v6747 = vmul.f32 %v6275, 0.70710677
        %v6748 = vmul.f32 %v6466, 0.70710677
        %v6749 = vmul.f32 %v6468, 0.70710677
        %v6750 = vmul.f32 %v6277, 0.70710677
        %v6751 = vmul.f32 %v6279, 0.70710677
        %v6752 = vmul.f32 %v6470, 0.70710677
        %v6753 = vmul.f32 %v6472, 0.70710677
        %v6754 = vmul.f32 %v6283, 0.70710677
        %v6755 = vmul.f32 %v6285, 0.70710677
        %v6756 = vmul.f32 %v6476, 0.70710677
        %v6757 = vmul.f32 %v6478, 0.70710677
        %v6758 = vmul.f32 %v6287, 0.70710677
        %v6759 = vmul.f32 %v6289, 0.70710677
        %v6760 = vmul.f32 %v6480, 0.70710677
        %v6761 = vmul.f32 %v6482, 0.70710677
        %v6762 = vmul.f32 %v6293, 0.70710677
        %v6763 = vmul.f32 %v6295, 0.70710677
        %v6764 = vmul.f32 %v6486, 0.70710677
        %v6765 = vmul.f32 %v6488, 0.70710677
        %v6766 = vmul.f32 %v6297, 0.70710677
        %v6767 = vmul.f32 %v6299, 0.70710677
        %v6768 = vmul.f32 %v6490, 0.70710677
        %v6769 = vmul.f32 %v6492, 0.70710677
        %v6770 = vmul.f32 %v6303, 0.70710677
        %v6771 = vmul.f32 %v6305, 0.70710677
        %v6772 = vmul.f32 %v6496, 0.70710677
        %v6773 = vmul.f32 %v6498, 0.70710677
        %v6774 = vmul.f32 %v6307, 0.70710677
        %v6775 = vmul.f32 %v6309, 0.70710677
        %v6776 = vmul.f32 %v6500, 0.70710677
        %v6777 = vmul.f32 %v6502, 0.70710677
        %v6778 = vmul.f32 %v6313, 0.70710677
        %v6779 = vmul.f32 %v6315, 0.70710677
        %v6780 = vmul.f32 %v6506, 0.70710677
        %v6781 = vmul.f32 %v6508, 0.70710677
        %v6782 = vmul.f32 %v6317, 0.70710677
        %v6783 = vmul.f32 %v6319, 0.70710677
        %v6784 = vmul.f32 %v6510, 0.70710677
        %v6785 = vmul.f32 %v6512, 0.70710677
        %v6786 = vmul.f32 %v6323, 0.70710677
        %v6787 = vmul.f32 %v6325, 0.70710677
        %v6788 = vmul.f32 %v6516, 0.70710677
        %v6789 = vmul.f32 %v6518, 0.70710677
        %v6790 = vmul.f32 %v6327, 0.70710677
        %v6791 = vmul.f32 %v6329, 0.70710677
        %v6792 = vmul.f32 %v6520, 0.70710677
        %v6793 = vmul.f32 %v6522, 0.70710677
        %v6794 = vmul.f32 %v6333, 0.70710677
        %v6795 = vmul.f32 %v6335, 0.70710677
        %v6796 = vmul.f32 %v6526, 0.70710677
        %v6797 = vmul.f32 %v6528, 0.70710677
        %v6798 = vmul.f32 %v6337, 0.70710677
        %v6799 = vmul.f32 %v6339, 0.70710677
        %v6800 = vmul.f32 %v6530, 0.70710677
        %v6801 = vmul.f32 %v6532, 0.70710677
        %v6802 = vmul.f32 %v6343, 0.70710677
        %v6803 = vmul.f32 %v6345, 0.70710677
        %v6804 = vmul.f32 %v6536, 0.70710677
        %v6805 = vmul.f32 %v6538, 0.70710677
        %v6806 = vmul.f32 %v6347, 0.70710677
        %v6807 = vmul.f32 %v6349, 0.70710677
        %v6808 = vmul.f32 %v6540, 0.70710677
        %v6809 = vmul.f32 %v6542, 0.70710677
        %v6810 = vmul.f32 %v6353, 0.70710677
        %v6811 = vmul.f32 %v6355, 0.70710677
        %v6812 = vmul.f32 %v6546, 0.70710677
        %v6813 = vmul.f32 %v6548, 0.70710677
        %v6814 = vmul.f32 %v6357, 0.70710677
        %v6815 = vmul.f32 %v6359, 0.70710677
        %v6816 = vmul.f32 %v6550, 0.70710677
        %v6817 = vmul.f32 %v6552, 0.70710677
        %v6818 = vmul.f32 %v6363, 0.70710677
        %v6819 = vmul.f32 %v6365, 0.70710677
        %v6820 = vmul.f32 %v6556, 0.70710677
        %v6821 = vmul.f32 %v6558, 0.70710677
        %v6822 = vmul.f32 %v6367, 0.70710677
        %v6823 = vmul.f32 %v6369, 0.70710677
        %v6824 = vmul.f32 %v6560, 0.70710677
        %v6825 = vmul.f32 %v6562, 0.70710677
        %v6826 = vmul.f32 %v6373, 0.70710677
        %v6827 = vmul.f32 %v6375, 0.70710677
        %v6828 = vmul.f32 %v6566, 0.70710677
        %v6829 = vmul.f32 %v6568, 0.70710677
        %v6830 = vmul.f32 %v6377, 0.70710677
        %v6831 = vmul.f32 %v6379, 0.70710677
        %v6832 = vmul.f32 %v6570, 0.70710677
        %v6833 = vmul.f32 %v6572, 0.70710677
        %v6834 = vmul.f32 %v6383, 0.70710677
        %v6835 = vmul.f32 %v6385, 0.70710677
        %v6836 = vmul.f32 %v6576, 0.70710677
        %v6837 = vmul.f32 %v6578, 0.70710677
        %v6838 = vmul.f32 %v6387, 0.70710677
        %v6839 = vmul.f32 %v6389, 0.70710677
        %v6840 = vmul.f32 %v6580, 0.70710677
        %v6841 = vmul.f32 %v6582, 0.70710677
        %v6842 = vmul.f32 %v6393, 0.70710677
        %v6843 = vmul.f32 %v6395, 0.70710677
        %v6844 = vmul.f32 %v6586, 0.70710677
        %v6845 = vmul.f32 %v6588, 0.70710677
        %v6846 = vmul.f32 %v6397, 0.70710677
        %v6847 = vmul.f32 %v6399, 0.70710677
        %v6848 = vmul.f32 %v6590, 0.70710677
        %v6849 = vmul.f32 %v6592, 0.70710677
        %v6850 = verf.f32.pop %v6722
        %v6851 = verf.f32.pop %v6723
        %v6852 = verf.f32.pop %v6724
        %v6853 = verf.f32.pop %v6725
        %v6854 = verf.f32.pop %v6726
        %v6855 = verf.f32.pop %v6727
        %v6856 = verf.f32.pop %v6728
        %v6857 = verf.f32.pop %v6729
        %v6858 = verf.f32.pop %v6730
        %v6859 = verf.f32.pop %v6731
        %v6860 = verf.f32.pop %v6732
        %v6861 = verf.f32.pop %v6733
        %v6862 = verf.f32.pop %v6734
        %v6863 = verf.f32.pop %v6735
        %v6864 = verf.f32.pop %v6736
        %v6865 = verf.f32.pop %v6737
        %v6866 = verf.f32.pop %v6738
        %v6867 = verf.f32.pop %v6739
        %v6868 = verf.f32.pop %v6740
        %v6869 = verf.f32.pop %v6741
        %v6870 = verf.f32.pop %v6742
        %v6871 = verf.f32.pop %v6743
        %v6872 = verf.f32.pop %v6744
        %v6873 = verf.f32.pop %v6745
        %v6874 = verf.f32.pop %v6746
        %v6875 = verf.f32.pop %v6747
        %v6876 = verf.f32.pop %v6748
        %v6877 = verf.f32.pop %v6749
        %v6878 = verf.f32.pop %v6750
        %v6879 = verf.f32.pop %v6751
        %v6880 = verf.f32.pop %v6752
        %v6881 = verf.f32.pop %v6753
        %v6882 = verf.f32.pop %v6754
        %v6883 = verf.f32.pop %v6755
        %v6884 = verf.f32.pop %v6756
        %v6885 = verf.f32.pop %v6757
        %v6886 = verf.f32.pop %v6758
        %v6887 = verf.f32.pop %v6759
        %v6888 = verf.f32.pop %v6760
        %v6889 = verf.f32.pop %v6761
        %v6890 = verf.f32.pop %v6762
        %v6891 = verf.f32.pop %v6763
        %v6892 = verf.f32.pop %v6764
        %v6893 = verf.f32.pop %v6765
        %v6894 = verf.f32.pop %v6766
        %v6895 = verf.f32.pop %v6767
        %v6896 = verf.f32.pop %v6768
        %v6897 = verf.f32.pop %v6769
        %v6898 = verf.f32.pop %v6770
        %v6899 = verf.f32.pop %v6771
        %v6900 = verf.f32.pop %v6772
        %v6901 = verf.f32.pop %v6773
        %v6902 = verf.f32.pop %v6774
        %v6903 = verf.f32.pop %v6775
        %v6904 = verf.f32.pop %v6776
        %v6905 = verf.f32.pop %v6777
        %v6906 = verf.f32.pop %v6778
        %v6907 = verf.f32.pop %v6779
        %v6908 = verf.f32.pop %v6780
        %v6909 = verf.f32.pop %v6781
        %v6910 = verf.f32.pop %v6782
        %v6911 = verf.f32.pop %v6783
        %v6912 = verf.f32.pop %v6784
        %v6913 = verf.f32.pop %v6785
        %v6914 = verf.f32.pop %v6786
        %v6915 = verf.f32.pop %v6787
        %v6916 = verf.f32.pop %v6788
        %v6917 = verf.f32.pop %v6789
        %v6918 = verf.f32.pop %v6790
        %v6919 = verf.f32.pop %v6791
        %v6920 = verf.f32.pop %v6792
        %v6921 = verf.f32.pop %v6793
        %v6922 = verf.f32.pop %v6794
        %v6923 = verf.f32.pop %v6795
        %v6924 = verf.f32.pop %v6796
        %v6925 = verf.f32.pop %v6797
        %v6926 = verf.f32.pop %v6798
        %v6927 = verf.f32.pop %v6799
        %v6928 = verf.f32.pop %v6800
        %v6929 = verf.f32.pop %v6801
        %v6930 = verf.f32.pop %v6802
        %v6931 = verf.f32.pop %v6803
        %v6932 = verf.f32.pop %v6804
        %v6933 = verf.f32.pop %v6805
        %v6934 = verf.f32.pop %v6806
        %v6935 = verf.f32.pop %v6807
        %v6936 = verf.f32.pop %v6808
        %v6937 = verf.f32.pop %v6809
        %v6938 = verf.f32.pop %v6810
        %v6939 = verf.f32.pop %v6811
        %v6940 = verf.f32.pop %v6812
        %v6941 = verf.f32.pop %v6813
        %v6942 = verf.f32.pop %v6814
        %v6943 = verf.f32.pop %v6815
        %v6944 = verf.f32.pop %v6816
        %v6945 = verf.f32.pop %v6817
        %v6946 = verf.f32.pop %v6818
        %v6947 = verf.f32.pop %v6819
        %v6948 = verf.f32.pop %v6820
        %v6949 = verf.f32.pop %v6821
        %v6950 = verf.f32.pop %v6822
        %v6951 = verf.f32.pop %v6823
        %v6952 = verf.f32.pop %v6824
        %v6953 = verf.f32.pop %v6825
        %v6954 = verf.f32.pop %v6826
        %v6955 = verf.f32.pop %v6827
        %v6956 = verf.f32.pop %v6828
        %v6957 = verf.f32.pop %v6829
        %v6958 = verf.f32.pop %v6830
        %v6959 = verf.f32.pop %v6831
        %v6960 = verf.f32.pop %v6832
        %v6961 = verf.f32.pop %v6833
        %v6962 = verf.f32.pop %v6834
        %v6963 = verf.f32.pop %v6835
        %v6964 = verf.f32.pop %v6836
        %v6965 = verf.f32.pop %v6837
        %v6966 = verf.f32.pop %v6838
        %v6967 = verf.f32.pop %v6839
        %v6968 = verf.f32.pop %v6840
        %v6969 = verf.f32.pop %v6841
        %v6970 = verf.f32.pop %v6842
        %v6971 = verf.f32.pop %v6843
        %v6972 = verf.f32.pop %v6844
        %v6973 = verf.f32.pop %v6845
        %v6974 = verf.f32.pop %v6846
        %v6975 = verf.f32.pop %v6847
        %v6976 = verf.f32.pop %v6848
        %v6977 = verf.f32.pop %v6849
        %v6978 = vadd.f32 %v6850, 1.0
        %v6979 = vadd.f32 %v6851, 1.0
        %v6980 = vadd.f32 %v6852, 1.0
        %v6981 = vadd.f32 %v6853, 1.0
        %v6982 = vadd.f32 %v6854, 1.0
        %v6983 = vadd.f32 %v6855, 1.0
        %v6984 = vadd.f32 %v6856, 1.0
        %v6985 = vadd.f32 %v6857, 1.0
        %v6986 = vadd.f32 %v6858, 1.0
        %v6987 = vadd.f32 %v6859, 1.0
        %v6988 = vadd.f32 %v6860, 1.0
        %v6989 = vadd.f32 %v6861, 1.0
        %v6990 = vadd.f32 %v6862, 1.0
        %v6991 = vadd.f32 %v6863, 1.0
        %v6992 = vadd.f32 %v6864, 1.0
        %v6993 = vadd.f32 %v6865, 1.0
        %v6994 = vadd.f32 %v6866, 1.0
        %v6995 = vadd.f32 %v6867, 1.0
        %v6996 = vadd.f32 %v6868, 1.0
        %v6997 = vadd.f32 %v6869, 1.0
        %v6998 = vadd.f32 %v6870, 1.0
        %v6999 = vadd.f32 %v6871, 1.0
        %v7000 = vadd.f32 %v6872, 1.0
        %v7001 = vadd.f32 %v6873, 1.0
        %v7002 = vadd.f32 %v6874, 1.0
        %v7003 = vadd.f32 %v6875, 1.0
        %v7004 = vadd.f32 %v6876, 1.0
        %v7005 = vadd.f32 %v6877, 1.0
        %v7006 = vadd.f32 %v6878, 1.0
        %v7007 = vadd.f32 %v6879, 1.0
        %v7008 = vadd.f32 %v6880, 1.0
        %v7009 = vadd.f32 %v6881, 1.0
        %v7010 = vadd.f32 %v6882, 1.0
        %v7011 = vadd.f32 %v6883, 1.0
        %v7012 = vadd.f32 %v6884, 1.0
        %v7013 = vadd.f32 %v6885, 1.0
        %v7014 = vadd.f32 %v6886, 1.0
        %v7015 = vadd.f32 %v6887, 1.0
        %v7016 = vadd.f32 %v6888, 1.0
        %v7017 = vadd.f32 %v6889, 1.0
        %v7018 = vadd.f32 %v6890, 1.0
        %v7019 = vadd.f32 %v6891, 1.0
        %v7020 = vadd.f32 %v6892, 1.0
        %v7021 = vadd.f32 %v6893, 1.0
        %v7022 = vadd.f32 %v6894, 1.0
        %v7023 = vadd.f32 %v6895, 1.0
        %v7024 = vadd.f32 %v6896, 1.0
        %v7025 = vadd.f32 %v6897, 1.0
        %v7026 = vadd.f32 %v6898, 1.0
        %v7027 = vadd.f32 %v6899, 1.0
        %v7028 = vadd.f32 %v6900, 1.0
        %v7029 = vadd.f32 %v6901, 1.0
        %v7030 = vadd.f32 %v6902, 1.0
        %v7031 = vadd.f32 %v6903, 1.0
        %v7032 = vadd.f32 %v6904, 1.0
        %v7033 = vadd.f32 %v6905, 1.0
        %v7034 = vadd.f32 %v6906, 1.0
        %v7035 = vadd.f32 %v6907, 1.0
        %v7036 = vadd.f32 %v6908, 1.0
        %v7037 = vadd.f32 %v6909, 1.0
        %v7038 = vadd.f32 %v6910, 1.0
        %v7039 = vadd.f32 %v6911, 1.0
        %v7040 = vadd.f32 %v6912, 1.0
        %v7041 = vadd.f32 %v6913, 1.0
        %v7042 = vadd.f32 %v6914, 1.0
        %v7043 = vadd.f32 %v6915, 1.0
        %v7044 = vadd.f32 %v6916, 1.0
        %v7045 = vadd.f32 %v6917, 1.0
        %v7046 = vadd.f32 %v6918, 1.0
        %v7047 = vadd.f32 %v6919, 1.0
        %v7048 = vadd.f32 %v6920, 1.0
        %v7049 = vadd.f32 %v6921, 1.0
        %v7050 = vadd.f32 %v6922, 1.0
        %v7051 = vadd.f32 %v6923, 1.0
        %v7052 = vadd.f32 %v6924, 1.0
        %v7053 = vadd.f32 %v6925, 1.0
        %v7054 = vadd.f32 %v6926, 1.0
        %v7055 = vadd.f32 %v6927, 1.0
        %v7056 = vadd.f32 %v6928, 1.0
        %v7057 = vadd.f32 %v6929, 1.0
        %v7058 = vadd.f32 %v6930, 1.0
        %v7059 = vadd.f32 %v6931, 1.0
        %v7060 = vadd.f32 %v6932, 1.0
        %v7061 = vadd.f32 %v6933, 1.0
        %v7062 = vadd.f32 %v6934, 1.0
        %v7063 = vadd.f32 %v6935, 1.0
        %v7064 = vadd.f32 %v6936, 1.0
        %v7065 = vadd.f32 %v6937, 1.0
        %v7066 = vadd.f32 %v6938, 1.0
        %v7067 = vadd.f32 %v6939, 1.0
        %v7068 = vadd.f32 %v6940, 1.0
        %v7069 = vadd.f32 %v6941, 1.0
        %v7070 = vadd.f32 %v6942, 1.0
        %v7071 = vadd.f32 %v6943, 1.0
        %v7072 = vadd.f32 %v6944, 1.0
        %v7073 = vadd.f32 %v6945, 1.0
        %v7074 = vadd.f32 %v6946, 1.0
        %v7075 = vadd.f32 %v6947, 1.0
        %v7076 = vadd.f32 %v6948, 1.0
        %v7077 = vadd.f32 %v6949, 1.0
        %v7078 = vadd.f32 %v6950, 1.0
        %v7079 = vadd.f32 %v6951, 1.0
        %v7080 = vadd.f32 %v6952, 1.0
        %v7081 = vadd.f32 %v6953, 1.0
        %v7082 = vadd.f32 %v6954, 1.0
        %v7083 = vadd.f32 %v6955, 1.0
        %v7084 = vadd.f32 %v6956, 1.0
        %v7085 = vadd.f32 %v6957, 1.0
        %v7086 = vadd.f32 %v6958, 1.0
        %v7087 = vadd.f32 %v6959, 1.0
        %v7088 = vadd.f32 %v6960, 1.0
        %v7089 = vadd.f32 %v6961, 1.0
        %v7090 = vadd.f32 %v6962, 1.0
        %v7091 = vadd.f32 %v6963, 1.0
        %v7092 = vadd.f32 %v6964, 1.0
        %v7093 = vadd.f32 %v6965, 1.0
        %v7094 = vadd.f32 %v6966, 1.0
        %v7095 = vadd.f32 %v6967, 1.0
        %v7096 = vadd.f32 %v6968, 1.0
        %v7097 = vadd.f32 %v6969, 1.0
        %v7098 = vadd.f32 %v6970, 1.0
        %v7099 = vadd.f32 %v6971, 1.0
        %v7100 = vadd.f32 %v6972, 1.0
        %v7101 = vadd.f32 %v6973, 1.0
        %v7102 = vadd.f32 %v6974, 1.0
        %v7103 = vadd.f32 %v6975, 1.0
        %v7104 = vadd.f32 %v6976, 1.0
        %v7105 = vadd.f32 %v6977, 1.0
        %v7106 = vmul.f32 %v6594, %v6978
        %v7107 = vmul.f32 %v6595, %v6979
        %v7108 = vmul.f32 %v6596, %v6980
        %v7109 = vmul.f32 %v6597, %v6981
        %v7110 = vmul.f32 %v6598, %v6982
        %v7111 = vmul.f32 %v6599, %v6983
        %v7112 = vmul.f32 %v6600, %v6984
        %v7113 = vmul.f32 %v6601, %v6985
        %v7114 = vmul.f32 %v6602, %v6986
        %v7115 = vmul.f32 %v6603, %v6987
        %v7116 = vmul.f32 %v6604, %v6988
        %v7117 = vmul.f32 %v6605, %v6989
        %v7118 = vmul.f32 %v6606, %v6990
        %v7119 = vmul.f32 %v6607, %v6991
        %v7120 = vmul.f32 %v6608, %v6992
        %v7121 = vmul.f32 %v6609, %v6993
        %v7122 = vmul.f32 %v6610, %v6994
        %v7123 = vmul.f32 %v6611, %v6995
        %v7124 = vmul.f32 %v6612, %v6996
        %v7125 = vmul.f32 %v6613, %v6997
        %v7126 = vmul.f32 %v6614, %v6998
        %v7127 = vmul.f32 %v6615, %v6999
        %v7128 = vmul.f32 %v6616, %v7000
        %v7129 = vmul.f32 %v6617, %v7001
        %v7130 = vmul.f32 %v6618, %v7002
        %v7131 = vmul.f32 %v6619, %v7003
        %v7132 = vmul.f32 %v6620, %v7004
        %v7133 = vmul.f32 %v6621, %v7005
        %v7134 = vmul.f32 %v6622, %v7006
        %v7135 = vmul.f32 %v6623, %v7007
        %v7136 = vmul.f32 %v6624, %v7008
        %v7137 = vmul.f32 %v6625, %v7009
        %v7138 = vmul.f32 %v6626, %v7010
        %v7139 = vmul.f32 %v6627, %v7011
        %v7140 = vmul.f32 %v6628, %v7012
        %v7141 = vmul.f32 %v6629, %v7013
        %v7142 = vmul.f32 %v6630, %v7014
        %v7143 = vmul.f32 %v6631, %v7015
        %v7144 = vmul.f32 %v6632, %v7016
        %v7145 = vmul.f32 %v6633, %v7017
        %v7146 = vmul.f32 %v6634, %v7018
        %v7147 = vmul.f32 %v6635, %v7019
        %v7148 = vmul.f32 %v6636, %v7020
        %v7149 = vmul.f32 %v6637, %v7021
        %v7150 = vmul.f32 %v6638, %v7022
        %v7151 = vmul.f32 %v6639, %v7023
        %v7152 = vmul.f32 %v6640, %v7024
        %v7153 = vmul.f32 %v6641, %v7025
        %v7154 = vmul.f32 %v6642, %v7026
        %v7155 = vmul.f32 %v6643, %v7027
        %v7156 = vmul.f32 %v6644, %v7028
        %v7157 = vmul.f32 %v6645, %v7029
        %v7158 = vmul.f32 %v6646, %v7030
        %v7159 = vmul.f32 %v6647, %v7031
        %v7160 = vmul.f32 %v6648, %v7032
        %v7161 = vmul.f32 %v6649, %v7033
        %v7162 = vmul.f32 %v6650, %v7034
        %v7163 = vmul.f32 %v6651, %v7035
        %v7164 = vmul.f32 %v6652, %v7036
        %v7165 = vmul.f32 %v6653, %v7037
        %v7166 = vmul.f32 %v6654, %v7038
        %v7167 = vmul.f32 %v6655, %v7039
        %v7168 = vmul.f32 %v6656, %v7040
        %v7169 = vmul.f32 %v6657, %v7041
        %v7170 = vmul.f32 %v6658, %v7042
        %v7171 = vmul.f32 %v6659, %v7043
        %v7172 = vmul.f32 %v6660, %v7044
        %v7173 = vmul.f32 %v6661, %v7045
        %v7174 = vmul.f32 %v6662, %v7046
        %v7175 = vmul.f32 %v6663, %v7047
        %v7176 = vmul.f32 %v6664, %v7048
        %v7177 = vmul.f32 %v6665, %v7049
        %v7178 = vmul.f32 %v6666, %v7050
        %v7179 = vmul.f32 %v6667, %v7051
        %v7180 = vmul.f32 %v6668, %v7052
        %v7181 = vmul.f32 %v6669, %v7053
        %v7182 = vmul.f32 %v6670, %v7054
        %v7183 = vmul.f32 %v6671, %v7055
        %v7184 = vmul.f32 %v6672, %v7056
        %v7185 = vmul.f32 %v6673, %v7057
        %v7186 = vmul.f32 %v6674, %v7058
        %v7187 = vmul.f32 %v6675, %v7059
        %v7188 = vmul.f32 %v6676, %v7060
        %v7189 = vmul.f32 %v6677, %v7061
        %v7190 = vmul.f32 %v6678, %v7062
        %v7191 = vmul.f32 %v6679, %v7063
        %v7192 = vmul.f32 %v6680, %v7064
        %v7193 = vmul.f32 %v6681, %v7065
        %v7194 = vmul.f32 %v6682, %v7066
        %v7195 = vmul.f32 %v6683, %v7067
        %v7196 = vmul.f32 %v6684, %v7068
        %v7197 = vmul.f32 %v6685, %v7069
        %v7198 = vmul.f32 %v6686, %v7070
        %v7199 = vmul.f32 %v6687, %v7071
        %v7200 = vmul.f32 %v6688, %v7072
        %v7201 = vmul.f32 %v6689, %v7073
        %v7202 = vmul.f32 %v6690, %v7074
        %v7203 = vmul.f32 %v6691, %v7075
        %v7204 = vmul.f32 %v6692, %v7076
        %v7205 = vmul.f32 %v6693, %v7077
        %v7206 = vmul.f32 %v6694, %v7078
        %v7207 = vmul.f32 %v6695, %v7079
        %v7208 = vmul.f32 %v6696, %v7080
        %v7209 = vmul.f32 %v6697, %v7081
        %v7210 = vmul.f32 %v6698, %v7082
        %v7211 = vmul.f32 %v6699, %v7083
        %v7212 = vmul.f32 %v6700, %v7084
        %v7213 = vmul.f32 %v6701, %v7085
        %v7214 = vmul.f32 %v6702, %v7086
        %v7215 = vmul.f32 %v6703, %v7087
        %v7216 = vmul.f32 %v6704, %v7088
        %v7217 = vmul.f32 %v6705, %v7089
        %v7218 = vmul.f32 %v6706, %v7090
        %v7219 = vmul.f32 %v6707, %v7091
        %v7220 = vmul.f32 %v6708, %v7092
        %v7221 = vmul.f32 %v6709, %v7093
        %v7222 = vmul.f32 %v6710, %v7094
        %v7223 = vmul.f32 %v6711, %v7095
        %v7224 = vmul.f32 %v6712, %v7096
        %v7225 = vmul.f32 %v6713, %v7097
        %v7226 = vmul.f32 %v6714, %v7098
        %v7227 = vmul.f32 %v6715, %v7099
        %v7228 = vmul.f32 %v6716, %v7100
        %v7229 = vmul.f32 %v6717, %v7101
        %v7230 = vmul.f32 %v6718, %v7102
        %v7231 = vmul.f32 %v6719, %v7103
        %v7232 = vmul.f32 %v6720, %v7104
        %v7233 = vmul.f32 %v6721, %v7105
        %v7234 = vpack.c.bf16 %v7110, %v7106
        %v7235 = vpack.c.bf16 %v7111, %v7107
        %v7236 = vpack.c.bf16 %v7112, %v7108
        %v7237 = vpack.c.bf16 %v7113, %v7109
        %v7238 = vpack.c.bf16 %v7118, %v7114
        %v7239 = vpack.c.bf16 %v7119, %v7115
        %v7240 = vpack.c.bf16 %v7120, %v7116
        %v7241 = vpack.c.bf16 %v7121, %v7117
        %v7242 = vpack.c.bf16 %v7126, %v7122
        %v7243 = vpack.c.bf16 %v7127, %v7123
        %v7244 = vpack.c.bf16 %v7128, %v7124
        %v7245 = vpack.c.bf16 %v7129, %v7125
        %v7246 = vpack.c.bf16 %v7134, %v7130
        %v7247 = vpack.c.bf16 %v7135, %v7131
        %v7248 = vpack.c.bf16 %v7136, %v7132
        %v7249 = vpack.c.bf16 %v7137, %v7133
        %v7250 = vpack.c.bf16 %v7142, %v7138
        %v7251 = vpack.c.bf16 %v7143, %v7139
        %v7252 = vpack.c.bf16 %v7144, %v7140
        %v7253 = vpack.c.bf16 %v7145, %v7141
        %v7254 = vpack.c.bf16 %v7150, %v7146
        %v7255 = vpack.c.bf16 %v7151, %v7147
        %v7256 = vpack.c.bf16 %v7152, %v7148
        %v7257 = vpack.c.bf16 %v7153, %v7149
        %v7258 = vpack.c.bf16 %v7158, %v7154
        %v7259 = vpack.c.bf16 %v7159, %v7155
        %v7260 = vpack.c.bf16 %v7160, %v7156
        %v7261 = vpack.c.bf16 %v7161, %v7157
        %v7262 = vpack.c.bf16 %v7166, %v7162
        %v7263 = vpack.c.bf16 %v7167, %v7163
        %v7264 = vpack.c.bf16 %v7168, %v7164
        %v7265 = vpack.c.bf16 %v7169, %v7165
        %v7266 = vpack.c.bf16 %v7174, %v7170
        %v7267 = vpack.c.bf16 %v7175, %v7171
        %v7268 = vpack.c.bf16 %v7176, %v7172
        %v7269 = vpack.c.bf16 %v7177, %v7173
        %v7270 = vpack.c.bf16 %v7182, %v7178
        %v7271 = vpack.c.bf16 %v7183, %v7179
        %v7272 = vpack.c.bf16 %v7184, %v7180
        %v7273 = vpack.c.bf16 %v7185, %v7181
        %v7274 = vpack.c.bf16 %v7190, %v7186
        %v7275 = vpack.c.bf16 %v7191, %v7187
        %v7276 = vpack.c.bf16 %v7192, %v7188
        %v7277 = vpack.c.bf16 %v7193, %v7189
        %v7278 = vpack.c.bf16 %v7198, %v7194
        %v7279 = vpack.c.bf16 %v7199, %v7195
        %v7280 = vpack.c.bf16 %v7200, %v7196
        %v7281 = vpack.c.bf16 %v7201, %v7197
        %v7282 = vpack.c.bf16 %v7206, %v7202
        %v7283 = vpack.c.bf16 %v7207, %v7203
        %v7284 = vpack.c.bf16 %v7208, %v7204
        %v7285 = vpack.c.bf16 %v7209, %v7205
        %v7286 = vpack.c.bf16 %v7214, %v7210
        %v7287 = vpack.c.bf16 %v7215, %v7211
        %v7288 = vpack.c.bf16 %v7216, %v7212
        %v7289 = vpack.c.bf16 %v7217, %v7213
        %v7290 = vpack.c.bf16 %v7222, %v7218
        %v7291 = vpack.c.bf16 %v7223, %v7219
        %v7292 = vpack.c.bf16 %v7224, %v7220
        %v7293 = vpack.c.bf16 %v7225, %v7221
        %v7294 = vpack.c.bf16 %v7230, %v7226
        %v7295 = vpack.c.bf16 %v7231, %v7227
        %v7296 = vpack.c.bf16 %v7232, %v7228
        %v7297 = vpack.c.bf16 %v7233, %v7229
        %s7298 = scalar_lea.vmem [#allocation16], 256
        %v7299 = vld [vmem:[%s7298] sm:$0xf]
        %v7300 = vld [vmem:[%s7298 + $0x4] sm:$0xf]
        %v7301 = vld [vmem:[%s7298 + $0x8] sm:$0xf]
        %v7302 = vld [vmem:[%s7298 + $0xc] sm:$0xf]
        %v7303 = vld [vmem:[%s7298 + $0x10] sm:$0xf]
        %v7304 = vld [vmem:[%s7298 + $0x14] sm:$0xf]
        %v7305 = vld [vmem:[%s7298 + $0x18] sm:$0xf]
        %v7306 = vld [vmem:[%s7298 + $0x1c] sm:$0xf]
        %v7307 = vld [vmem:[%s7298 + $0x20] sm:$0xf]
        %v7308 = vld [vmem:[%s7298 + $0x24] sm:$0xf]
        %v7309 = vld [vmem:[%s7298 + $0x28] sm:$0xf]
        %v7310 = vld [vmem:[%s7298 + $0x2c] sm:$0xf]
        %v7311 = vld [vmem:[%s7298 + $0x30] sm:$0xf]
        %v7312 = vld [vmem:[%s7298 + $0x34] sm:$0xf]
        %v7313 = vld [vmem:[%s7298 + $0x38] sm:$0xf]
        %v7314 = vld [vmem:[%s7298 + $0x3c] sm:$0xf]
        %v7315 = vld [vmem:[%s7298 + $0x40] sm:$0xf]
        %v7316 = vld [vmem:[%s7298 + $0x44] sm:$0xf]
        %v7317 = vld [vmem:[%s7298 + $0x48] sm:$0xf]
        %v7318 = vld [vmem:[%s7298 + $0x4c] sm:$0xf]
        %v7319 = vld [vmem:[%s7298 + $0x50] sm:$0xf]
        %v7320 = vld [vmem:[%s7298 + $0x54] sm:$0xf]
        %v7321 = vld [vmem:[%s7298 + $0x58] sm:$0xf]
        %v7322 = vld [vmem:[%s7298 + $0x5c] sm:$0xf]
        %v7323 = vld [vmem:[%s7298 + $0x60] sm:$0xf]
        %v7324 = vld [vmem:[%s7298 + $0x64] sm:$0xf]
        %v7325 = vld [vmem:[%s7298 + $0x68] sm:$0xf]
        %v7326 = vld [vmem:[%s7298 + $0x6c] sm:$0xf]
        %v7327 = vld [vmem:[%s7298 + $0x70] sm:$0xf]
        %v7328 = vld [vmem:[%s7298 + $0x74] sm:$0xf]
        %v7329 = vld [vmem:[%s7298 + $0x78] sm:$0xf]
        %v7330 = vld [vmem:[%s7298 + $0x7c] sm:$0xf]
        %v7331 = vld [vmem:[%s7298 + $0x80] sm:$0xf]
        %v7332 = vld [vmem:[%s7298 + $0x84] sm:$0xf]
        %v7333 = vld [vmem:[%s7298 + $0x88] sm:$0xf]
        %v7334 = vld [vmem:[%s7298 + $0x8c] sm:$0xf]
        %v7335 = vld [vmem:[%s7298 + $0x90] sm:$0xf]
        %v7336 = vld [vmem:[%s7298 + $0x94] sm:$0xf]
        %v7337 = vld [vmem:[%s7298 + $0x98] sm:$0xf]
        %v7338 = vld [vmem:[%s7298 + $0x9c] sm:$0xf]
        %v7339 = vld [vmem:[%s7298 + $0xa0] sm:$0xf]
        %v7340 = vld [vmem:[%s7298 + $0xa4] sm:$0xf]
        %v7341 = vld [vmem:[%s7298 + $0xa8] sm:$0xf]
        %v7342 = vld [vmem:[%s7298 + $0xac] sm:$0xf]
        %v7343 = vld [vmem:[%s7298 + $0xb0] sm:$0xf]
        %v7344 = vld [vmem:[%s7298 + $0xb4] sm:$0xf]
        %v7345 = vld [vmem:[%s7298 + $0xb8] sm:$0xf]
        %v7346 = vld [vmem:[%s7298 + $0xbc] sm:$0xf]
        %v7347 = vld [vmem:[%s7298 + $0xc0] sm:$0xf]
        %v7348 = vld [vmem:[%s7298 + $0xc4] sm:$0xf]
        %v7349 = vld [vmem:[%s7298 + $0xc8] sm:$0xf]
        %v7350 = vld [vmem:[%s7298 + $0xcc] sm:$0xf]
        %v7351 = vld [vmem:[%s7298 + $0xd0] sm:$0xf]
        %v7352 = vld [vmem:[%s7298 + $0xd4] sm:$0xf]
        %v7353 = vld [vmem:[%s7298 + $0xd8] sm:$0xf]
        %v7354 = vld [vmem:[%s7298 + $0xdc] sm:$0xf]
        %v7355 = vld [vmem:[%s7298 + $0xe0] sm:$0xf]
        %v7356 = vld [vmem:[%s7298 + $0xe4] sm:$0xf]
        %v7357 = vld [vmem:[%s7298 + $0xe8] sm:$0xf]
        %v7358 = vld [vmem:[%s7298 + $0xec] sm:$0xf]
        %v7359 = vld [vmem:[%s7298 + $0xf0] sm:$0xf]
        %v7360 = vld [vmem:[%s7298 + $0xf4] sm:$0xf]
        %v7361 = vld [vmem:[%s7298 + $0xf8] sm:$0xf]
        %v7362 = vld [vmem:[%s7298 + $0xfc] sm:$0xf]
        %v7364 = vlaneseq
        %v7365 = vshrl.u32 %v7364, 7
        %v7366 = vsub.s32 0, %v7365
        %v7367 = vrot.slane %v5017, %v7366
        %v7433 = vunpack.c.l.b16 %v7299
        %v7434 = vunpack.c.l.b16 %v7300
        %v7435 = vunpack.c.l.b16 %v7301
        %v7436 = vunpack.c.l.b16 %v7302
        %v7437 = vunpack.c.l.b16 %v7303
        %v7438 = vunpack.c.l.b16 %v7304
        %v7439 = vunpack.c.l.b16 %v7305
        %v7440 = vunpack.c.l.b16 %v7306
        %v7441 = vunpack.c.l.b16 %v7307
        %v7442 = vunpack.c.l.b16 %v7308
        %v7443 = vunpack.c.l.b16 %v7309
        %v7444 = vunpack.c.l.b16 %v7310
        %v7445 = vunpack.c.l.b16 %v7311
        %v7446 = vunpack.c.l.b16 %v7312
        %v7447 = vunpack.c.l.b16 %v7313
        %v7448 = vunpack.c.l.b16 %v7314
        %v7449 = vunpack.c.l.b16 %v7315
        %v7450 = vunpack.c.l.b16 %v7316
        %v7451 = vunpack.c.l.b16 %v7317
        %v7452 = vunpack.c.l.b16 %v7318
        %v7453 = vunpack.c.l.b16 %v7319
        %v7454 = vunpack.c.l.b16 %v7320
        %v7455 = vunpack.c.l.b16 %v7321
        %v7456 = vunpack.c.l.b16 %v7322
        %v7457 = vunpack.c.l.b16 %v7323
        %v7458 = vunpack.c.l.b16 %v7324
        %v7459 = vunpack.c.l.b16 %v7325
        %v7460 = vunpack.c.l.b16 %v7326
        %v7461 = vunpack.c.l.b16 %v7327
        %v7462 = vunpack.c.l.b16 %v7328
        %v7463 = vunpack.c.l.b16 %v7329
        %v7464 = vunpack.c.l.b16 %v7330
        %v7465 = vunpack.c.l.b16 %v7331
        %v7466 = vunpack.c.l.b16 %v7332
        %v7467 = vunpack.c.l.b16 %v7333
        %v7468 = vunpack.c.l.b16 %v7334
        %v7469 = vunpack.c.l.b16 %v7335
        %v7470 = vunpack.c.l.b16 %v7336
        %v7471 = vunpack.c.l.b16 %v7337
        %v7472 = vunpack.c.l.b16 %v7338
        %v7473 = vunpack.c.l.b16 %v7339
        %v7474 = vunpack.c.l.b16 %v7340
        %v7475 = vunpack.c.l.b16 %v7341
        %v7476 = vunpack.c.l.b16 %v7342
        %v7477 = vunpack.c.l.b16 %v7343
        %v7478 = vunpack.c.l.b16 %v7344
        %v7479 = vunpack.c.l.b16 %v7345
        %v7480 = vunpack.c.l.b16 %v7346
        %v7481 = vunpack.c.l.b16 %v7347
        %v7482 = vunpack.c.l.b16 %v7348
        %v7483 = vunpack.c.l.b16 %v7349
        %v7484 = vunpack.c.l.b16 %v7350
        %v7485 = vunpack.c.l.b16 %v7351
        %v7486 = vunpack.c.l.b16 %v7352
        %v7487 = vunpack.c.l.b16 %v7353
        %v7488 = vunpack.c.l.b16 %v7354
        %v7489 = vunpack.c.l.b16 %v7355
        %v7490 = vunpack.c.l.b16 %v7356
        %v7491 = vunpack.c.l.b16 %v7357
        %v7492 = vunpack.c.l.b16 %v7358
        %v7493 = vunpack.c.l.b16 %v7359
        %v7494 = vunpack.c.l.b16 %v7360
        %v7495 = vunpack.c.l.b16 %v7361
        %v7496 = vunpack.c.l.b16 %v7362
        %v7497 = vpack.c.b16 %v7434, %v7433
        %v7498 = vpack.c.b16 %v7436, %v7435
        %v7499 = vpack.c.b16 %v7438, %v7437
        %v7500 = vpack.c.b16 %v7440, %v7439
        %v7501 = vpack.c.b16 %v7442, %v7441
        %v7502 = vpack.c.b16 %v7444, %v7443
        %v7503 = vpack.c.b16 %v7446, %v7445
        %v7504 = vpack.c.b16 %v7448, %v7447
        %v7505 = vpack.c.b16 %v7450, %v7449
        %v7506 = vpack.c.b16 %v7452, %v7451
        %v7507 = vpack.c.b16 %v7454, %v7453
        %v7508 = vpack.c.b16 %v7456, %v7455
        %v7509 = vpack.c.b16 %v7458, %v7457
        %v7510 = vpack.c.b16 %v7460, %v7459
        %v7511 = vpack.c.b16 %v7462, %v7461
        %v7512 = vpack.c.b16 %v7464, %v7463
        %v7513 = vpack.c.b16 %v7466, %v7465
        %v7514 = vpack.c.b16 %v7468, %v7467
        %v7515 = vpack.c.b16 %v7470, %v7469
        %v7516 = vpack.c.b16 %v7472, %v7471
        %v7517 = vpack.c.b16 %v7474, %v7473
        %v7518 = vpack.c.b16 %v7476, %v7475
        %v7519 = vpack.c.b16 %v7478, %v7477
        %v7520 = vpack.c.b16 %v7480, %v7479
        %v7521 = vpack.c.b16 %v7482, %v7481
        %v7522 = vpack.c.b16 %v7484, %v7483
        %v7523 = vpack.c.b16 %v7486, %v7485
        %v7524 = vpack.c.b16 %v7488, %v7487
        %v7525 = vpack.c.b16 %v7490, %v7489
        %v7526 = vpack.c.b16 %v7492, %v7491
        %v7527 = vpack.c.b16 %v7494, %v7493
        %v7528 = vpack.c.b16 %v7496, %v7495
        %7561 = vmatprep.subr.bf16.mxu0 0
        %7562 = vmatpush1.bf16.msra.mxu0 %v7497
        %7563 = vmatprep.subr.bf16.mxu0 0
        %7564 = vmatpush1.bf16.msra.mxu0 %v7498
        %7565 = vmatprep.subr.bf16.mxu0 0
        %7566 = vmatpush1.bf16.msra.mxu0 %v7499
        %7567 = vmatprep.subr.bf16.mxu0 0
        %7568 = vmatpush1.bf16.msra.mxu0 %v7500
        %7569 = vmatprep.subr.bf16.mxu0 0
        %7570 = vmatpush1.bf16.msra.mxu0 %v7501
        %7571 = vmatprep.subr.bf16.mxu0 0
        %7572 = vmatpush1.bf16.msra.mxu0 %v7502
        %7573 = vmatprep.subr.bf16.mxu0 0
        %7574 = vmatpush1.bf16.msra.mxu0 %v7503
        %7575 = vmatprep.subr.bf16.mxu0 0
        %7576 = vmatpush1.bf16.msra.mxu0 %v7504
        %7577 = vmatprep.subr.bf16.mxu0 0
        %7578 = vmatpush1.bf16.msra.mxu0 %v7505
        %7579 = vmatprep.subr.bf16.mxu0 0
        %7580 = vmatpush1.bf16.msra.mxu0 %v7506
        %7581 = vmatprep.subr.bf16.mxu0 0
        %7582 = vmatpush1.bf16.msra.mxu0 %v7507
        %7583 = vmatprep.subr.bf16.mxu0 0
        %7584 = vmatpush1.bf16.msra.mxu0 %v7508
        %7585 = vmatprep.subr.bf16.mxu0 0
        %7586 = vmatpush1.bf16.msra.mxu0 %v7509
        %7587 = vmatprep.subr.bf16.mxu0 0
        %7588 = vmatpush1.bf16.msra.mxu0 %v7510
        %7589 = vmatprep.subr.bf16.mxu0 0
        %7590 = vmatpush1.bf16.msra.mxu0 %v7511
        %7591 = vmatprep.subr.bf16.mxu0 0
        %7592 = vmatpush1.bf16.msra.mxu0 %v7512
        %7593 = vmatprep.mubr.bf16.mxu0 %v7235
        %7594 = vmatmul.mubr.bf16.gmra.mrb[0].mxu0 %v7234
        %v7595 = vpop.f32.mrb[0].mxu0
        %v7596 = vadd.f32 %v7367, %v7595
        %v7597 = vpop.f32.mrb[0].mxu0
        %v7598 = vpop.f32.mrb[0].mxu0
        %v7599 = vadd.f32 %v7367, %v7598
        %v7600 = vpop.f32.mrb[0].mxu0
        %7601 = vmatprep.mubr.bf16.mxu0 %v7239
        %7602 = vmatmul.mubr.bf16.gmra.mrb[0].mxu0 %v7238
        %v7603 = vpop.f32.mrb[0].mxu0
        %v7604 = vadd.f32 %v7367, %v7603
        %v7605 = vpop.f32.mrb[0].mxu0
        %v7606 = vpop.f32.mrb[0].mxu0
        %v7607 = vadd.f32 %v7367, %v7606
        %v7608 = vpop.f32.mrb[0].mxu0
        %7609 = vmatprep.mubr.bf16.mxu0 %v7243
        %7610 = vmatmul.mubr.bf16.gmra.mrb[0].mxu0 %v7242
        %v7611 = vpop.f32.mrb[0].mxu0
        %v7612 = vadd.f32 %v7367, %v7611
        %v7613 = vpop.f32.mrb[0].mxu0
        %v7614 = vpop.f32.mrb[0].mxu0
        %v7615 = vadd.f32 %v7367, %v7614
        %v7616 = vpop.f32.mrb[0].mxu0
        %7617 = vmatprep.mubr.bf16.mxu0 %v7247
        %7618 = vmatmul.mubr.bf16.gmra.mrb[0].mxu0 %v7246
        %v7619 = vpop.f32.mrb[0].mxu0
        %v7620 = vadd.f32 %v7367, %v7619
        %v7621 = vpop.f32.mrb[0].mxu0
        %v7622 = vpop.f32.mrb[0].mxu0
        %v7623 = vadd.f32 %v7367, %v7622
        %v7624 = vpop.f32.mrb[0].mxu0
        %7625 = vmatprep.mubr.bf16.mxu0 %v7251
        %7626 = vmatmul.mubr.bf16.gmra.mrb[0].mxu0 %v7250
        %v7627 = vpop.f32.mrb[0].mxu0
        %v7628 = vadd.f32 %v7367, %v7627
        %v7629 = vpop.f32.mrb[0].mxu0
        %v7630 = vpop.f32.mrb[0].mxu0
        %v7631 = vadd.f32 %v7367, %v7630
        %v7632 = vpop.f32.mrb[0].mxu0
        %7633 = vmatprep.mubr.bf16.mxu0 %v7255
        %7634 = vmatmul.mubr.bf16.gmra.mrb[0].mxu0 %v7254
        %v7635 = vpop.f32.mrb[0].mxu0
        %v7636 = vadd.f32 %v7367, %v7635
        %v7637 = vpop.f32.mrb[0].mxu0
        %v7638 = vpop.f32.mrb[0].mxu0
        %v7639 = vadd.f32 %v7367, %v7638
        %v7640 = vpop.f32.mrb[0].mxu0
        %7641 = vmatprep.mubr.bf16.mxu0 %v7259
        %7642 = vmatmul.mubr.bf16.gmra.mrb[0].mxu0 %v7258
        %v7643 = vpop.f32.mrb[0].mxu0
        %v7644 = vadd.f32 %v7367, %v7643
        %v7645 = vpop.f32.mrb[0].mxu0
        %v7646 = vpop.f32.mrb[0].mxu0
        %v7647 = vadd.f32 %v7367, %v7646
        %v7648 = vpop.f32.mrb[0].mxu0
        %7649 = vmatprep.mubr.bf16.mxu0 %v7263
        %7650 = vmatmul.mubr.bf16.gmra.mrb[0].mxu0 %v7262
        %v7651 = vpop.f32.mrb[0].mxu0
        %v7652 = vadd.f32 %v7367, %v7651
        %v7653 = vpop.f32.mrb[0].mxu0
        %v7654 = vpop.f32.mrb[0].mxu0
        %v7655 = vadd.f32 %v7367, %v7654
        %v7656 = vpop.f32.mrb[0].mxu0
        %7657 = vmatprep.mubr.bf16.mxu0 %v7267
        %7658 = vmatmul.mubr.bf16.gmra.mrb[0].mxu0 %v7266
        %v7659 = vpop.f32.mrb[0].mxu0
        %v7660 = vadd.f32 %v7367, %v7659
        %v7661 = vpop.f32.mrb[0].mxu0
        %v7662 = vpop.f32.mrb[0].mxu0
        %v7663 = vadd.f32 %v7367, %v7662
        %v7664 = vpop.f32.mrb[0].mxu0
        %7665 = vmatprep.mubr.bf16.mxu0 %v7271
        %7666 = vmatmul.mubr.bf16.gmra.mrb[0].mxu0 %v7270
        %v7667 = vpop.f32.mrb[0].mxu0
        %v7668 = vadd.f32 %v7367, %v7667
        %v7669 = vpop.f32.mrb[0].mxu0
        %v7670 = vpop.f32.mrb[0].mxu0
        %v7671 = vadd.f32 %v7367, %v7670
        %v7672 = vpop.f32.mrb[0].mxu0
        %7673 = vmatprep.mubr.bf16.mxu0 %v7275
        %7674 = vmatmul.mubr.bf16.gmra.mrb[0].mxu0 %v7274
        %v7675 = vpop.f32.mrb[0].mxu0
        %v7676 = vadd.f32 %v7367, %v7675
        %v7677 = vpop.f32.mrb[0].mxu0
        %v7678 = vpop.f32.mrb[0].mxu0
        %v7679 = vadd.f32 %v7367, %v7678
        %v7680 = vpop.f32.mrb[0].mxu0
        %7681 = vmatprep.mubr.bf16.mxu0 %v7279
        %7682 = vmatmul.mubr.bf16.gmra.mrb[0].mxu0 %v7278
        %v7683 = vpop.f32.mrb[0].mxu0
        %v7684 = vadd.f32 %v7367, %v7683
        %v7685 = vpop.f32.mrb[0].mxu0
        %v7686 = vpop.f32.mrb[0].mxu0
        %v7687 = vadd.f32 %v7367, %v7686
        %v7688 = vpop.f32.mrb[0].mxu0
        %7689 = vmatprep.mubr.bf16.mxu0 %v7283
        %7690 = vmatmul.mubr.bf16.gmra.mrb[0].mxu0 %v7282
        %v7691 = vpop.f32.mrb[0].mxu0
        %v7692 = vadd.f32 %v7367, %v7691
        %v7693 = vpop.f32.mrb[0].mxu0
        %v7694 = vpop.f32.mrb[0].mxu0
        %v7695 = vadd.f32 %v7367, %v7694
        %v7696 = vpop.f32.mrb[0].mxu0
        %7697 = vmatprep.mubr.bf16.mxu0 %v7287
        %7698 = vmatmul.mubr.bf16.gmra.mrb[0].mxu0 %v7286
        %v7699 = vpop.f32.mrb[0].mxu0
        %v7700 = vadd.f32 %v7367, %v7699
        %v7701 = vpop.f32.mrb[0].mxu0
        %v7702 = vpop.f32.mrb[0].mxu0
        %v7703 = vadd.f32 %v7367, %v7702
        %v7704 = vpop.f32.mrb[0].mxu0
        %7705 = vmatprep.mubr.bf16.mxu0 %v7291
        %7706 = vmatmul.mubr.bf16.gmra.mrb[0].mxu0 %v7290
        %v7707 = vpop.f32.mrb[0].mxu0
        %v7708 = vadd.f32 %v7367, %v7707
        %v7709 = vpop.f32.mrb[0].mxu0
        %v7710 = vpop.f32.mrb[0].mxu0
        %v7711 = vadd.f32 %v7367, %v7710
        %v7712 = vpop.f32.mrb[0].mxu0
        %7713 = vmatprep.mubr.bf16.mxu0 %v7295
        %7714 = vmatmul.mubr.bf16.gmra.mrb[0].mxu0 %v7294
        %v7715 = vpop.f32.mrb[0].mxu0
        %v7716 = vadd.f32 %v7367, %v7715
        %v7717 = vpop.f32.mrb[0].mxu0
        %v7718 = vpop.f32.mrb[0].mxu0
        %v7719 = vadd.f32 %v7367, %v7718
        %v7720 = vpop.f32.mrb[0].mxu0
        %7721 = vdwg.mxu0
        %7722 = vmatprep.subr.bf16.mxu0 0
        %7723 = vmatpush1.bf16.msra.mxu0 %v7513
        %7724 = vmatprep.subr.bf16.mxu0 0
        %7725 = vmatpush1.bf16.msra.mxu0 %v7514
        %7726 = vmatprep.subr.bf16.mxu0 0
        %7727 = vmatpush1.bf16.msra.mxu0 %v7515
        %7728 = vmatprep.subr.bf16.mxu0 0
        %7729 = vmatpush1.bf16.msra.mxu0 %v7516
        %7730 = vmatprep.subr.bf16.mxu0 0
        %7731 = vmatpush1.bf16.msra.mxu0 %v7517
        %7732 = vmatprep.subr.bf16.mxu0 0
        %7733 = vmatpush1.bf16.msra.mxu0 %v7518
        %7734 = vmatprep.subr.bf16.mxu0 0
        %7735 = vmatpush1.bf16.msra.mxu0 %v7519
        %7736 = vmatprep.subr.bf16.mxu0 0
        %7737 = vmatpush1.bf16.msra.mxu0 %v7520
        %7738 = vmatprep.subr.bf16.mxu0 0
        %7739 = vmatpush1.bf16.msra.mxu0 %v7521
        %7740 = vmatprep.subr.bf16.mxu0 0
        %7741 = vmatpush1.bf16.msra.mxu0 %v7522
        %7742 = vmatprep.subr.bf16.mxu0 0
        %7743 = vmatpush1.bf16.msra.mxu0 %v7523
        %7744 = vmatprep.subr.bf16.mxu0 0
        %7745 = vmatpush1.bf16.msra.mxu0 %v7524
        %7746 = vmatprep.subr.bf16.mxu0 0
        %7747 = vmatpush1.bf16.msra.mxu0 %v7525
        %7748 = vmatprep.subr.bf16.mxu0 0
        %7749 = vmatpush1.bf16.msra.mxu0 %v7526
        %7750 = vmatprep.subr.bf16.mxu0 0
        %7751 = vmatpush1.bf16.msra.mxu0 %v7527
        %7752 = vmatprep.subr.bf16.mxu0 0
        %7753 = vmatpush1.bf16.msra.mxu0 %v7528
        %7754 = vmatprep.mubr.bf16.mxu0 %v7237
        %7755 = vmatmul.mubr.bf16.gmra.mrb[0].mxu0 %v7236
        %v7756 = vpop.f32.mrb[0].mxu0
        %v7757 = vadd.f32 %v7596, %v7756
        %v7758 = vpop.f32.mrb[0].mxu0
        %v7759 = vpop.f32.mrb[0].mxu0
        %v7760 = vadd.f32 %v7599, %v7759
        %v7761 = vpop.f32.mrb[0].mxu0
        %7762 = vmatprep.mubr.bf16.mxu0 %v7241
        %7763 = vmatmul.mubr.bf16.gmra.mrb[0].mxu0 %v7240
        %v7764 = vpop.f32.mrb[0].mxu0
        %v7765 = vadd.f32 %v7604, %v7764
        %v7766 = vpop.f32.mrb[0].mxu0
        %v7767 = vpop.f32.mrb[0].mxu0
        %v7768 = vadd.f32 %v7607, %v7767
        %v7769 = vpop.f32.mrb[0].mxu0
        %7770 = vmatprep.mubr.bf16.mxu0 %v7245
        %7771 = vmatmul.mubr.bf16.gmra.mrb[0].mxu0 %v7244
        %v7772 = vpop.f32.mrb[0].mxu0
        %v7773 = vadd.f32 %v7612, %v7772
        %v7774 = vpop.f32.mrb[0].mxu0
        %v7775 = vpop.f32.mrb[0].mxu0
        %v7776 = vadd.f32 %v7615, %v7775
        %v7777 = vpop.f32.mrb[0].mxu0
        %7778 = vmatprep.mubr.bf16.mxu0 %v7249
        %7779 = vmatmul.mubr.bf16.gmra.mrb[0].mxu0 %v7248
        %v7780 = vpop.f32.mrb[0].mxu0
        %v7781 = vadd.f32 %v7620, %v7780
        %v7782 = vpop.f32.mrb[0].mxu0
        %v7783 = vpop.f32.mrb[0].mxu0
        %v7784 = vadd.f32 %v7623, %v7783
        %v7785 = vpop.f32.mrb[0].mxu0
        %7786 = vmatprep.mubr.bf16.mxu0 %v7253
        %7787 = vmatmul.mubr.bf16.gmra.mrb[0].mxu0 %v7252
        %v7788 = vpop.f32.mrb[0].mxu0
        %v7789 = vadd.f32 %v7628, %v7788
        %v7790 = vpop.f32.mrb[0].mxu0
        %v7791 = vpop.f32.mrb[0].mxu0
        %v7792 = vadd.f32 %v7631, %v7791
        %v7793 = vpop.f32.mrb[0].mxu0
        %7794 = vmatprep.mubr.bf16.mxu0 %v7257
        %7795 = vmatmul.mubr.bf16.gmra.mrb[0].mxu0 %v7256
        %v7796 = vpop.f32.mrb[0].mxu0
        %v7797 = vadd.f32 %v7636, %v7796
        %v7798 = vpop.f32.mrb[0].mxu0
        %v7799 = vpop.f32.mrb[0].mxu0
        %v7800 = vadd.f32 %v7639, %v7799
        %v7801 = vpop.f32.mrb[0].mxu0
        %7802 = vmatprep.mubr.bf16.mxu0 %v7261
        %7803 = vmatmul.mubr.bf16.gmra.mrb[0].mxu0 %v7260
        %v7804 = vpop.f32.mrb[0].mxu0
        %v7805 = vadd.f32 %v7644, %v7804
        %v7806 = vpop.f32.mrb[0].mxu0
        %v7807 = vpop.f32.mrb[0].mxu0
        %v7808 = vadd.f32 %v7647, %v7807
        %v7809 = vpop.f32.mrb[0].mxu0
        %7810 = vmatprep.mubr.bf16.mxu0 %v7265
        %7811 = vmatmul.mubr.bf16.gmra.mrb[0].mxu0 %v7264
        %v7812 = vpop.f32.mrb[0].mxu0
        %v7813 = vadd.f32 %v7652, %v7812
        %v7814 = vpop.f32.mrb[0].mxu0
        %v7815 = vpop.f32.mrb[0].mxu0
        %v7816 = vadd.f32 %v7655, %v7815
        %v7817 = vpop.f32.mrb[0].mxu0
        %7818 = vmatprep.mubr.bf16.mxu0 %v7269
        %7819 = vmatmul.mubr.bf16.gmra.mrb[0].mxu0 %v7268
        %v7820 = vpop.f32.mrb[0].mxu0
        %v7821 = vadd.f32 %v7660, %v7820
        %v7822 = vpop.f32.mrb[0].mxu0
        %v7823 = vpop.f32.mrb[0].mxu0
        %v7824 = vadd.f32 %v7663, %v7823
        %v7825 = vpop.f32.mrb[0].mxu0
        %7826 = vmatprep.mubr.bf16.mxu0 %v7273
        %7827 = vmatmul.mubr.bf16.gmra.mrb[0].mxu0 %v7272
        %v7828 = vpop.f32.mrb[0].mxu0
        %v7829 = vadd.f32 %v7668, %v7828
        %v7830 = vpop.f32.mrb[0].mxu0
        %v7831 = vpop.f32.mrb[0].mxu0
        %v7832 = vadd.f32 %v7671, %v7831
        %v7833 = vpop.f32.mrb[0].mxu0
        %7834 = vmatprep.mubr.bf16.mxu0 %v7277
        %7835 = vmatmul.mubr.bf16.gmra.mrb[0].mxu0 %v7276
        %v7836 = vpop.f32.mrb[0].mxu0
        %v7837 = vadd.f32 %v7676, %v7836
        %v7838 = vpop.f32.mrb[0].mxu0
        %v7839 = vpop.f32.mrb[0].mxu0
        %v7840 = vadd.f32 %v7679, %v7839
        %v7841 = vpop.f32.mrb[0].mxu0
        %7842 = vmatprep.mubr.bf16.mxu0 %v7281
        %7843 = vmatmul.mubr.bf16.gmra.mrb[0].mxu0 %v7280
        %v7844 = vpop.f32.mrb[0].mxu0
        %v7845 = vadd.f32 %v7684, %v7844
        %v7846 = vpop.f32.mrb[0].mxu0
        %v7847 = vpop.f32.mrb[0].mxu0
        %v7848 = vadd.f32 %v7687, %v7847
        %v7849 = vpop.f32.mrb[0].mxu0
        %7850 = vmatprep.mubr.bf16.mxu0 %v7285
        %7851 = vmatmul.mubr.bf16.gmra.mrb[0].mxu0 %v7284
        %v7852 = vpop.f32.mrb[0].mxu0
        %v7853 = vadd.f32 %v7692, %v7852
        %v7854 = vpop.f32.mrb[0].mxu0
        %v7855 = vpop.f32.mrb[0].mxu0
        %v7856 = vadd.f32 %v7695, %v7855
        %v7857 = vpop.f32.mrb[0].mxu0
        %7858 = vmatprep.mubr.bf16.mxu0 %v7289
        %7859 = vmatmul.mubr.bf16.gmra.mrb[0].mxu0 %v7288
        %v7860 = vpop.f32.mrb[0].mxu0
        %v7861 = vadd.f32 %v7700, %v7860
        %v7862 = vpop.f32.mrb[0].mxu0
        %v7863 = vpop.f32.mrb[0].mxu0
        %v7864 = vadd.f32 %v7703, %v7863
        %v7865 = vpop.f32.mrb[0].mxu0
        %7866 = vmatprep.mubr.bf16.mxu0 %v7293
        %7867 = vmatmul.mubr.bf16.gmra.mrb[0].mxu0 %v7292
        %v7868 = vpop.f32.mrb[0].mxu0
        %v7869 = vadd.f32 %v7708, %v7868
        %v7870 = vpop.f32.mrb[0].mxu0
        %v7871 = vpop.f32.mrb[0].mxu0
        %v7872 = vadd.f32 %v7711, %v7871
        %v7873 = vpop.f32.mrb[0].mxu0
        %7874 = vmatprep.mubr.bf16.mxu0 %v7297
        %7875 = vmatmul.mubr.bf16.gmra.mrb[0].mxu0 %v7296
        %v7876 = vpop.f32.mrb[0].mxu0
        %v7877 = vadd.f32 %v7716, %v7876
        %v7878 = vpop.f32.mrb[0].mxu0
        %v7879 = vpop.f32.mrb[0].mxu0
        %v7880 = vadd.f32 %v7719, %v7879
        %v7881 = vpop.f32.mrb[0].mxu0
        %7882 = vdwg.mxu0
        %v7883 = vadd.f32 %v5946, %v7757
        %v7884 = vadd.f32 %v5947, %v7760
        %v7885 = vadd.f32 %v5948, %v7765
        %v7886 = vadd.f32 %v5949, %v7768
        %v7887 = vadd.f32 %v5950, %v7773
        %v7888 = vadd.f32 %v5951, %v7776
        %v7889 = vadd.f32 %v5952, %v7781
        %v7890 = vadd.f32 %v5953, %v7784
        %v7891 = vadd.f32 %v5954, %v7789
        %v7892 = vadd.f32 %v5955, %v7792
        %v7893 = vadd.f32 %v5956, %v7797
        %v7894 = vadd.f32 %v5957, %v7800
        %v7895 = vadd.f32 %v5958, %v7805
        %v7896 = vadd.f32 %v5959, %v7808
        %v7897 = vadd.f32 %v5960, %v7813
        %v7898 = vadd.f32 %v5961, %v7816
        %v7899 = vadd.f32 %v5962, %v7821
        %v7900 = vadd.f32 %v5963, %v7824
        %v7901 = vadd.f32 %v5964, %v7829
        %v7902 = vadd.f32 %v5965, %v7832
        %v7903 = vadd.f32 %v5966, %v7837
        %v7904 = vadd.f32 %v5967, %v7840
        %v7905 = vadd.f32 %v5968, %v7845
        %v7906 = vadd.f32 %v5969, %v7848
        %v7907 = vadd.f32 %v5970, %v7853
        %v7908 = vadd.f32 %v5971, %v7856
        %v7909 = vadd.f32 %v5972, %v7861
        %v7910 = vadd.f32 %v5973, %v7864
        %v7911 = vadd.f32 %v5974, %v7869
        %v7912 = vadd.f32 %v5975, %v7872
        %v7913 = vadd.f32 %v5976, %v7877
        %v7914 = vadd.f32 %v5977, %v7880
        %7915 = vadd.xlane.f32.xlu0 %v7883
        %v7916 = vpop.xlane.xlu0 %7915
        %7917 = vadd.xlane.f32.xlu0 %v7884
        %v7918 = vpop.xlane.xlu0 %7917
        %7919 = vadd.xlane.f32.xlu0 %v7885
        %v7920 = vpop.xlane.xlu0 %7919
        %7921 = vadd.xlane.f32.xlu0 %v7886
        %v7922 = vpop.xlane.xlu0 %7921
        %7923 = vadd.xlane.f32.xlu0 %v7887
        %v7924 = vpop.xlane.xlu0 %7923
        %7925 = vadd.xlane.f32.xlu0 %v7888
        %v7926 = vpop.xlane.xlu0 %7925
        %7927 = vadd.xlane.f32.xlu0 %v7889
        %v7928 = vpop.xlane.xlu0 %7927
        %7929 = vadd.xlane.f32.xlu0 %v7890
        %v7930 = vpop.xlane.xlu0 %7929
        %7931 = vadd.xlane.f32.xlu0 %v7891
        %v7932 = vpop.xlane.xlu0 %7931
        %7933 = vadd.xlane.f32.xlu0 %v7892
        %v7934 = vpop.xlane.xlu0 %7933
        %7935 = vadd.xlane.f32.xlu0 %v7893
        %v7936 = vpop.xlane.xlu0 %7935
        %7937 = vadd.xlane.f32.xlu0 %v7894
        %v7938 = vpop.xlane.xlu0 %7937
        %7939 = vadd.xlane.f32.xlu0 %v7895
        %v7940 = vpop.xlane.xlu0 %7939
        %7941 = vadd.xlane.f32.xlu0 %v7896
        %v7942 = vpop.xlane.xlu0 %7941
        %7943 = vadd.xlane.f32.xlu0 %v7897
        %v7944 = vpop.xlane.xlu0 %7943
        %7945 = vadd.xlane.f32.xlu0 %v7898
        %v7946 = vpop.xlane.xlu0 %7945
        %7947 = vadd.xlane.f32.xlu0 %v7899
        %v7948 = vpop.xlane.xlu0 %7947
        %7949 = vadd.xlane.f32.xlu0 %v7900
        %v7950 = vpop.xlane.xlu0 %7949
        %7951 = vadd.xlane.f32.xlu0 %v7901
        %v7952 = vpop.xlane.xlu0 %7951
        %7953 = vadd.xlane.f32.xlu0 %v7902
        %v7954 = vpop.xlane.xlu0 %7953
        %7955 = vadd.xlane.f32.xlu0 %v7903
        %v7956 = vpop.xlane.xlu0 %7955
        %7957 = vadd.xlane.f32.xlu0 %v7904
        %v7958 = vpop.xlane.xlu0 %7957
        %7959 = vadd.xlane.f32.xlu0 %v7905
        %v7960 = vpop.xlane.xlu0 %7959
        %7961 = vadd.xlane.f32.xlu0 %v7906
        %v7962 = vpop.xlane.xlu0 %7961
        %7963 = vadd.xlane.f32.xlu0 %v7907
        %v7964 = vpop.xlane.xlu0 %7963
        %7965 = vadd.xlane.f32.xlu0 %v7908
        %v7966 = vpop.xlane.xlu0 %7965
        %7967 = vadd.xlane.f32.xlu0 %v7909
        %v7968 = vpop.xlane.xlu0 %7967
        %7969 = vadd.xlane.f32.xlu0 %v7910
        %v7970 = vpop.xlane.xlu0 %7969
        %7971 = vadd.xlane.f32.xlu0 %v7911
        %v7972 = vpop.xlane.xlu0 %7971
        %7973 = vadd.xlane.f32.xlu0 %v7912
        %v7974 = vpop.xlane.xlu0 %7973
        %7975 = vadd.xlane.f32.xlu0 %v7913
        %v7976 = vpop.xlane.xlu0 %7975
        %7977 = vadd.xlane.f32.xlu0 %v7914
        %v7978 = vpop.xlane.xlu0 %7977
        %v7979 = vmul.f32 %v7916, %v2278
        %v7980 = vmul.f32 %v7918, %v2278
        %v7981 = vmul.f32 %v7920, %v2278
        %v7982 = vmul.f32 %v7922, %v2278
        %v7983 = vmul.f32 %v7924, %v2278
        %v7984 = vmul.f32 %v7926, %v2278
        %v7985 = vmul.f32 %v7928, %v2278
        %v7986 = vmul.f32 %v7930, %v2278
        %v7987 = vmul.f32 %v7932, %v2278
        %v7988 = vmul.f32 %v7934, %v2278
        %v7989 = vmul.f32 %v7936, %v2278
        %v7990 = vmul.f32 %v7938, %v2278
        %v7991 = vmul.f32 %v7940, %v2278
        %v7992 = vmul.f32 %v7942, %v2278
        %v7993 = vmul.f32 %v7944, %v2278
        %v7994 = vmul.f32 %v7946, %v2278
        %v7995 = vmul.f32 %v7948, %v2278
        %v7996 = vmul.f32 %v7950, %v2278
        %v7997 = vmul.f32 %v7952, %v2278
        %v7998 = vmul.f32 %v7954, %v2278
        %v7999 = vmul.f32 %v7956, %v2278
        %v8000 = vmul.f32 %v7958, %v2278
        %v8001 = vmul.f32 %v7960, %v2278
        %v8002 = vmul.f32 %v7962, %v2278
        %v8003 = vmul.f32 %v7964, %v2278
        %v8004 = vmul.f32 %v7966, %v2278
        %v8005 = vmul.f32 %v7968, %v2278
        %v8006 = vmul.f32 %v7970, %v2278
        %v8007 = vmul.f32 %v7972, %v2278
        %v8008 = vmul.f32 %v7974, %v2278
        %v8009 = vmul.f32 %v7976, %v2278
        %v8010 = vmul.f32 %v7978, %v2278
        %v8011 = vsub.f32 %v7883, %v7979
        %v8012 = vsub.f32 %v7884, %v7980
        %v8013 = vsub.f32 %v7885, %v7981
        %v8014 = vsub.f32 %v7886, %v7982
        %v8015 = vsub.f32 %v7887, %v7983
        %v8016 = vsub.f32 %v7888, %v7984
        %v8017 = vsub.f32 %v7889, %v7985
        %v8018 = vsub.f32 %v7890, %v7986
        %v8019 = vsub.f32 %v7891, %v7987
        %v8020 = vsub.f32 %v7892, %v7988
        %v8021 = vsub.f32 %v7893, %v7989
        %v8022 = vsub.f32 %v7894, %v7990
        %v8023 = vsub.f32 %v7895, %v7991
        %v8024 = vsub.f32 %v7896, %v7992
        %v8025 = vsub.f32 %v7897, %v7993
        %v8026 = vsub.f32 %v7898, %v7994
        %v8027 = vsub.f32 %v7899, %v7995
        %v8028 = vsub.f32 %v7900, %v7996
        %v8029 = vsub.f32 %v7901, %v7997
        %v8030 = vsub.f32 %v7902, %v7998
        %v8031 = vsub.f32 %v7903, %v7999
        %v8032 = vsub.f32 %v7904, %v8000
        %v8033 = vsub.f32 %v7905, %v8001
        %v8034 = vsub.f32 %v7906, %v8002
        %v8035 = vsub.f32 %v7907, %v8003
        %v8036 = vsub.f32 %v7908, %v8004
        %v8037 = vsub.f32 %v7909, %v8005
        %v8038 = vsub.f32 %v7910, %v8006
        %v8039 = vsub.f32 %v7911, %v8007
        %v8040 = vsub.f32 %v7912, %v8008
        %v8041 = vsub.f32 %v7913, %v8009
        %v8042 = vsub.f32 %v7914, %v8010
        %v8043 = vmul.f32 %v8011, %v8011
        %v8044 = vmul.f32 %v8012, %v8012
        %v8045 = vmul.f32 %v8013, %v8013
        %v8046 = vmul.f32 %v8014, %v8014
        %v8047 = vmul.f32 %v8015, %v8015
        %v8048 = vmul.f32 %v8016, %v8016
        %v8049 = vmul.f32 %v8017, %v8017
        %v8050 = vmul.f32 %v8018, %v8018
        %v8051 = vmul.f32 %v8019, %v8019
        %v8052 = vmul.f32 %v8020, %v8020
        %v8053 = vmul.f32 %v8021, %v8021
        %v8054 = vmul.f32 %v8022, %v8022
        %v8055 = vmul.f32 %v8023, %v8023
        %v8056 = vmul.f32 %v8024, %v8024
        %v8057 = vmul.f32 %v8025, %v8025
        %v8058 = vmul.f32 %v8026, %v8026
        %v8059 = vmul.f32 %v8027, %v8027
        %v8060 = vmul.f32 %v8028, %v8028
        %v8061 = vmul.f32 %v8029, %v8029
        %v8062 = vmul.f32 %v8030, %v8030
        %v8063 = vmul.f32 %v8031, %v8031
        %v8064 = vmul.f32 %v8032, %v8032
        %v8065 = vmul.f32 %v8033, %v8033
        %v8066 = vmul.f32 %v8034, %v8034
        %v8067 = vmul.f32 %v8035, %v8035
        %v8068 = vmul.f32 %v8036, %v8036
        %v8069 = vmul.f32 %v8037, %v8037
        %v8070 = vmul.f32 %v8038, %v8038
        %v8071 = vmul.f32 %v8039, %v8039
        %v8072 = vmul.f32 %v8040, %v8040
        %v8073 = vmul.f32 %v8041, %v8041
        %v8074 = vmul.f32 %v8042, %v8042
        %8075 = vadd.xlane.f32.xlu0 %v8043
        %v8076 = vpop.xlane.xlu0 %8075
        %8077 = vadd.xlane.f32.xlu0 %v8044
        %v8078 = vpop.xlane.xlu0 %8077
        %8079 = vadd.xlane.f32.xlu0 %v8045
        %v8080 = vpop.xlane.xlu0 %8079
        %8081 = vadd.xlane.f32.xlu0 %v8046
        %v8082 = vpop.xlane.xlu0 %8081
        %8083 = vadd.xlane.f32.xlu0 %v8047
        %v8084 = vpop.xlane.xlu0 %8083
        %8085 = vadd.xlane.f32.xlu0 %v8048
        %v8086 = vpop.xlane.xlu0 %8085
        %8087 = vadd.xlane.f32.xlu0 %v8049
        %v8088 = vpop.xlane.xlu0 %8087
        %8089 = vadd.xlane.f32.xlu0 %v8050
        %v8090 = vpop.xlane.xlu0 %8089
        %8091 = vadd.xlane.f32.xlu0 %v8051
        %v8092 = vpop.xlane.xlu0 %8091
        %8093 = vadd.xlane.f32.xlu0 %v8052
        %v8094 = vpop.xlane.xlu0 %8093
        %8095 = vadd.xlane.f32.xlu0 %v8053
        %v8096 = vpop.xlane.xlu0 %8095
        %8097 = vadd.xlane.f32.xlu0 %v8054
        %v8098 = vpop.xlane.xlu0 %8097
        %8099 = vadd.xlane.f32.xlu0 %v8055
        %v8100 = vpop.xlane.xlu0 %8099
        %8101 = vadd.xlane.f32.xlu0 %v8056
        %v8102 = vpop.xlane.xlu0 %8101
        %8103 = vadd.xlane.f32.xlu0 %v8057
        %v8104 = vpop.xlane.xlu0 %8103
        %8105 = vadd.xlane.f32.xlu0 %v8058
        %v8106 = vpop.xlane.xlu0 %8105
        %8107 = vadd.xlane.f32.xlu0 %v8059
        %v8108 = vpop.xlane.xlu0 %8107
        %8109 = vadd.xlane.f32.xlu0 %v8060
        %v8110 = vpop.xlane.xlu0 %8109
        %8111 = vadd.xlane.f32.xlu0 %v8061
        %v8112 = vpop.xlane.xlu0 %8111
        %8113 = vadd.xlane.f32.xlu0 %v8062
        %v8114 = vpop.xlane.xlu0 %8113
        %8115 = vadd.xlane.f32.xlu0 %v8063
        %v8116 = vpop.xlane.xlu0 %8115
        %8117 = vadd.xlane.f32.xlu0 %v8064
        %v8118 = vpop.xlane.xlu0 %8117
        %8119 = vadd.xlane.f32.xlu0 %v8065
        %v8120 = vpop.xlane.xlu0 %8119
        %8121 = vadd.xlane.f32.xlu0 %v8066
        %v8122 = vpop.xlane.xlu0 %8121
        %8123 = vadd.xlane.f32.xlu0 %v8067
        %v8124 = vpop.xlane.xlu0 %8123
        %8125 = vadd.xlane.f32.xlu0 %v8068
        %v8126 = vpop.xlane.xlu0 %8125
        %8127 = vadd.xlane.f32.xlu0 %v8069
        %v8128 = vpop.xlane.xlu0 %8127
        %8129 = vadd.xlane.f32.xlu0 %v8070
        %v8130 = vpop.xlane.xlu0 %8129
        %8131 = vadd.xlane.f32.xlu0 %v8071
        %v8132 = vpop.xlane.xlu0 %8131
        %8133 = vadd.xlane.f32.xlu0 %v8072
        %v8134 = vpop.xlane.xlu0 %8133
        %8135 = vadd.xlane.f32.xlu0 %v8073
        %v8136 = vpop.xlane.xlu0 %8135
        %8137 = vadd.xlane.f32.xlu0 %v8074
        %v8138 = vpop.xlane.xlu0 %8137
        %v8139 = vmul.f32 %v8076, %v2278
        %v8140 = vmul.f32 %v8078, %v2278
        %v8141 = vmul.f32 %v8080, %v2278
        %v8142 = vmul.f32 %v8082, %v2278
        %v8143 = vmul.f32 %v8084, %v2278
        %v8144 = vmul.f32 %v8086, %v2278
        %v8145 = vmul.f32 %v8088, %v2278
        %v8146 = vmul.f32 %v8090, %v2278
        %v8147 = vmul.f32 %v8092, %v2278
        %v8148 = vmul.f32 %v8094, %v2278
        %v8149 = vmul.f32 %v8096, %v2278
        %v8150 = vmul.f32 %v8098, %v2278
        %v8151 = vmul.f32 %v8100, %v2278
        %v8152 = vmul.f32 %v8102, %v2278
        %v8153 = vmul.f32 %v8104, %v2278
        %v8154 = vmul.f32 %v8106, %v2278
        %v8155 = vmul.f32 %v8108, %v2278
        %v8156 = vmul.f32 %v8110, %v2278
        %v8157 = vmul.f32 %v8112, %v2278
        %v8158 = vmul.f32 %v8114, %v2278
        %v8159 = vmul.f32 %v8116, %v2278
        %v8160 = vmul.f32 %v8118, %v2278
        %v8161 = vmul.f32 %v8120, %v2278
        %v8162 = vmul.f32 %v8122, %v2278
        %v8163 = vmul.f32 %v8124, %v2278
        %v8164 = vmul.f32 %v8126, %v2278
        %v8165 = vmul.f32 %v8128, %v2278
        %v8166 = vmul.f32 %v8130, %v2278
        %v8167 = vmul.f32 %v8132, %v2278
        %v8168 = vmul.f32 %v8134, %v2278
        %v8169 = vmul.f32 %v8136, %v2278
        %v8170 = vmul.f32 %v8138, %v2278
        %v8171 = vadd.f32 %v8139, 1e-05
        %v8172 = vadd.f32 %v8140, 1e-05
        %v8173 = vadd.f32 %v8141, 1e-05
        %v8174 = vadd.f32 %v8142, 1e-05
        %v8175 = vadd.f32 %v8143, 1e-05
        %v8176 = vadd.f32 %v8144, 1e-05
        %v8177 = vadd.f32 %v8145, 1e-05
        %v8178 = vadd.f32 %v8146, 1e-05
        %v8179 = vadd.f32 %v8147, 1e-05
        %v8180 = vadd.f32 %v8148, 1e-05
        %v8181 = vadd.f32 %v8149, 1e-05
        %v8182 = vadd.f32 %v8150, 1e-05
        %v8183 = vadd.f32 %v8151, 1e-05
        %v8184 = vadd.f32 %v8152, 1e-05
        %v8185 = vadd.f32 %v8153, 1e-05
        %v8186 = vadd.f32 %v8154, 1e-05
        %v8187 = vadd.f32 %v8155, 1e-05
        %v8188 = vadd.f32 %v8156, 1e-05
        %v8189 = vadd.f32 %v8157, 1e-05
        %v8190 = vadd.f32 %v8158, 1e-05
        %v8191 = vadd.f32 %v8159, 1e-05
        %v8192 = vadd.f32 %v8160, 1e-05
        %v8193 = vadd.f32 %v8161, 1e-05
        %v8194 = vadd.f32 %v8162, 1e-05
        %v8195 = vadd.f32 %v8163, 1e-05
        %v8196 = vadd.f32 %v8164, 1e-05
        %v8197 = vadd.f32 %v8165, 1e-05
        %v8198 = vadd.f32 %v8166, 1e-05
        %v8199 = vadd.f32 %v8167, 1e-05
        %v8200 = vadd.f32 %v8168, 1e-05
        %v8201 = vadd.f32 %v8169, 1e-05
        %v8202 = vadd.f32 %v8170, 1e-05
        %v8203 = vrsqrt.pop %v8171
        %v8204 = vrsqrt.pop %v8172
        %v8205 = vrsqrt.pop %v8173
        %v8206 = vrsqrt.pop %v8174
        %v8207 = vrsqrt.pop %v8175
        %v8208 = vrsqrt.pop %v8176
        %v8209 = vrsqrt.pop %v8177
        %v8210 = vrsqrt.pop %v8178
        %v8211 = vrsqrt.pop %v8179
        %v8212 = vrsqrt.pop %v8180
        %v8213 = vrsqrt.pop %v8181
        %v8214 = vrsqrt.pop %v8182
        %v8215 = vrsqrt.pop %v8183
        %v8216 = vrsqrt.pop %v8184
        %v8217 = vrsqrt.pop %v8185
        %v8218 = vrsqrt.pop %v8186
        %v8219 = vrsqrt.pop %v8187
        %v8220 = vrsqrt.pop %v8188
        %v8221 = vrsqrt.pop %v8189
        %v8222 = vrsqrt.pop %v8190
        %v8223 = vrsqrt.pop %v8191
        %v8224 = vrsqrt.pop %v8192
        %v8225 = vrsqrt.pop %v8193
        %v8226 = vrsqrt.pop %v8194
        %v8227 = vrsqrt.pop %v8195
        %v8228 = vrsqrt.pop %v8196
        %v8229 = vrsqrt.pop %v8197
        %v8230 = vrsqrt.pop %v8198
        %v8231 = vrsqrt.pop %v8199
        %v8232 = vrsqrt.pop %v8200
        %v8233 = vrsqrt.pop %v8201
        %v8234 = vrsqrt.pop %v8202
        %v8235 = vmul.f32 %v8011, %v8203
        %v8236 = vmul.f32 %v8012, %v8204
        %v8237 = vmul.f32 %v8013, %v8205
        %v8238 = vmul.f32 %v8014, %v8206
        %v8239 = vmul.f32 %v8015, %v8207
        %v8240 = vmul.f32 %v8016, %v8208
        %v8241 = vmul.f32 %v8017, %v8209
        %v8242 = vmul.f32 %v8018, %v8210
        %v8243 = vmul.f32 %v8019, %v8211
        %v8244 = vmul.f32 %v8020, %v8212
        %v8245 = vmul.f32 %v8021, %v8213
        %v8246 = vmul.f32 %v8022, %v8214
        %v8247 = vmul.f32 %v8023, %v8215
        %v8248 = vmul.f32 %v8024, %v8216
        %v8249 = vmul.f32 %v8025, %v8217
        %v8250 = vmul.f32 %v8026, %v8218
        %v8251 = vmul.f32 %v8027, %v8219
        %v8252 = vmul.f32 %v8028, %v8220
        %v8253 = vmul.f32 %v8029, %v8221
        %v8254 = vmul.f32 %v8030, %v8222
        %v8255 = vmul.f32 %v8031, %v8223
        %v8256 = vmul.f32 %v8032, %v8224
        %v8257 = vmul.f32 %v8033, %v8225
        %v8258 = vmul.f32 %v8034, %v8226
        %v8259 = vmul.f32 %v8035, %v8227
        %v8260 = vmul.f32 %v8036, %v8228
        %v8261 = vmul.f32 %v8037, %v8229
        %v8262 = vmul.f32 %v8038, %v8230
        %v8263 = vmul.f32 %v8039, %v8231
        %v8264 = vmul.f32 %v8040, %v8232
        %v8265 = vmul.f32 %v8041, %v8233
        %v8266 = vmul.f32 %v8042, %v8234
        %v8268 = vlaneseq
        %v8269 = vshrl.u32 %v8268, 7
        %v8270 = vsub.s32 0, %v8269
        %v8271 = vrot.slane %v5019, %v8270
        %v8273 = vmul.f32 %v8235, %v8271
        %v8274 = vmul.f32 %v8236, %v8271
        %v8275 = vmul.f32 %v8237, %v8271
        %v8276 = vmul.f32 %v8238, %v8271
        %v8277 = vmul.f32 %v8239, %v8271
        %v8278 = vmul.f32 %v8240, %v8271
        %v8279 = vmul.f32 %v8241, %v8271
        %v8280 = vmul.f32 %v8242, %v8271
        %v8281 = vmul.f32 %v8243, %v8271
        %v8282 = vmul.f32 %v8244, %v8271
        %v8283 = vmul.f32 %v8245, %v8271
        %v8284 = vmul.f32 %v8246, %v8271
        %v8285 = vmul.f32 %v8247, %v8271
        %v8286 = vmul.f32 %v8248, %v8271
        %v8287 = vmul.f32 %v8249, %v8271
        %v8288 = vmul.f32 %v8250, %v8271
        %v8289 = vmul.f32 %v8251, %v8271
        %v8290 = vmul.f32 %v8252, %v8271
        %v8291 = vmul.f32 %v8253, %v8271
        %v8292 = vmul.f32 %v8254, %v8271
        %v8293 = vmul.f32 %v8255, %v8271
        %v8294 = vmul.f32 %v8256, %v8271
        %v8295 = vmul.f32 %v8257, %v8271
        %v8296 = vmul.f32 %v8258, %v8271
        %v8297 = vmul.f32 %v8259, %v8271
        %v8298 = vmul.f32 %v8260, %v8271
        %v8299 = vmul.f32 %v8261, %v8271
        %v8300 = vmul.f32 %v8262, %v8271
        %v8301 = vmul.f32 %v8263, %v8271
        %v8302 = vmul.f32 %v8264, %v8271
        %v8303 = vmul.f32 %v8265, %v8271
        %v8304 = vmul.f32 %v8266, %v8271
        %v8306 = vlaneseq
        %v8307 = vshrl.u32 %v8306, 7
        %v8308 = vsub.s32 0, %v8307
        %v8309 = vrot.slane %v5021, %v8308
        %v8311 = vadd.f32 %v8273, %v8309
        %v8312 = vadd.f32 %v8274, %v8309
        %v8313 = vadd.f32 %v8275, %v8309
        %v8314 = vadd.f32 %v8276, %v8309
        %v8315 = vadd.f32 %v8277, %v8309
        %v8316 = vadd.f32 %v8278, %v8309
        %v8317 = vadd.f32 %v8279, %v8309
        %v8318 = vadd.f32 %v8280, %v8309
        %v8319 = vadd.f32 %v8281, %v8309
        %v8320 = vadd.f32 %v8282, %v8309
        %v8321 = vadd.f32 %v8283, %v8309
        %v8322 = vadd.f32 %v8284, %v8309
        %v8323 = vadd.f32 %v8285, %v8309
        %v8324 = vadd.f32 %v8286, %v8309
        %v8325 = vadd.f32 %v8287, %v8309
        %v8326 = vadd.f32 %v8288, %v8309
        %v8327 = vadd.f32 %v8289, %v8309
        %v8328 = vadd.f32 %v8290, %v8309
        %v8329 = vadd.f32 %v8291, %v8309
        %v8330 = vadd.f32 %v8292, %v8309
        %v8331 = vadd.f32 %v8293, %v8309
        %v8332 = vadd.f32 %v8294, %v8309
        %v8333 = vadd.f32 %v8295, %v8309
        %v8334 = vadd.f32 %v8296, %v8309
        %v8335 = vadd.f32 %v8297, %v8309
        %v8336 = vadd.f32 %v8298, %v8309
        %v8337 = vadd.f32 %v8299, %v8309
        %v8338 = vadd.f32 %v8300, %v8309
        %v8339 = vadd.f32 %v8301, %v8309
        %v8340 = vadd.f32 %v8302, %v8309
        %v8341 = vadd.f32 %v8303, %v8309
        %v8342 = vadd.f32 %v8304, %v8309
        %v8343 = vld [vmem:[%s17] sm:$0x1]
        %v8344 = vld [vmem:[%s18] sm:$0x1]
        %8345 = vadd.xlane.f32.xlu0 %v8311
        %v8346 = vpop.xlane.xlu0 %8345
        %8347 = vadd.xlane.f32.xlu0 %v8312
        %v8348 = vpop.xlane.xlu0 %8347
        %8349 = vadd.xlane.f32.xlu0 %v8313
        %v8350 = vpop.xlane.xlu0 %8349
        %8351 = vadd.xlane.f32.xlu0 %v8314
        %v8352 = vpop.xlane.xlu0 %8351
        %8353 = vadd.xlane.f32.xlu0 %v8315
        %v8354 = vpop.xlane.xlu0 %8353
        %8355 = vadd.xlane.f32.xlu0 %v8316
        %v8356 = vpop.xlane.xlu0 %8355
        %8357 = vadd.xlane.f32.xlu0 %v8317
        %v8358 = vpop.xlane.xlu0 %8357
        %8359 = vadd.xlane.f32.xlu0 %v8318
        %v8360 = vpop.xlane.xlu0 %8359
        %8361 = vadd.xlane.f32.xlu0 %v8319
        %v8362 = vpop.xlane.xlu0 %8361
        %8363 = vadd.xlane.f32.xlu0 %v8320
        %v8364 = vpop.xlane.xlu0 %8363
        %8365 = vadd.xlane.f32.xlu0 %v8321
        %v8366 = vpop.xlane.xlu0 %8365
        %8367 = vadd.xlane.f32.xlu0 %v8322
        %v8368 = vpop.xlane.xlu0 %8367
        %8369 = vadd.xlane.f32.xlu0 %v8323
        %v8370 = vpop.xlane.xlu0 %8369
        %8371 = vadd.xlane.f32.xlu0 %v8324
        %v8372 = vpop.xlane.xlu0 %8371
        %8373 = vadd.xlane.f32.xlu0 %v8325
        %v8374 = vpop.xlane.xlu0 %8373
        %8375 = vadd.xlane.f32.xlu0 %v8326
        %v8376 = vpop.xlane.xlu0 %8375
        %8377 = vadd.xlane.f32.xlu0 %v8327
        %v8378 = vpop.xlane.xlu0 %8377
        %8379 = vadd.xlane.f32.xlu0 %v8328
        %v8380 = vpop.xlane.xlu0 %8379
        %8381 = vadd.xlane.f32.xlu0 %v8329
        %v8382 = vpop.xlane.xlu0 %8381
        %8383 = vadd.xlane.f32.xlu0 %v8330
        %v8384 = vpop.xlane.xlu0 %8383
        %8385 = vadd.xlane.f32.xlu0 %v8331
        %v8386 = vpop.xlane.xlu0 %8385
        %8387 = vadd.xlane.f32.xlu0 %v8332
        %v8388 = vpop.xlane.xlu0 %8387
        %8389 = vadd.xlane.f32.xlu0 %v8333
        %v8390 = vpop.xlane.xlu0 %8389
        %8391 = vadd.xlane.f32.xlu0 %v8334
        %v8392 = vpop.xlane.xlu0 %8391
        %8393 = vadd.xlane.f32.xlu0 %v8335
        %v8394 = vpop.xlane.xlu0 %8393
        %8395 = vadd.xlane.f32.xlu0 %v8336
        %v8396 = vpop.xlane.xlu0 %8395
        %8397 = vadd.xlane.f32.xlu0 %v8337
        %v8398 = vpop.xlane.xlu0 %8397
        %8399 = vadd.xlane.f32.xlu0 %v8338
        %v8400 = vpop.xlane.xlu0 %8399
        %8401 = vadd.xlane.f32.xlu0 %v8339
        %v8402 = vpop.xlane.xlu0 %8401
        %8403 = vadd.xlane.f32.xlu0 %v8340
        %v8404 = vpop.xlane.xlu0 %8403
        %8405 = vadd.xlane.f32.xlu0 %v8341
        %v8406 = vpop.xlane.xlu0 %8405
        %8407 = vadd.xlane.f32.xlu0 %v8342
        %v8408 = vpop.xlane.xlu0 %8407
        %v8409 = vmul.f32 %v8346, %v2278
        %v8410 = vmul.f32 %v8348, %v2278
        %v8411 = vmul.f32 %v8350, %v2278
        %v8412 = vmul.f32 %v8352, %v2278
        %v8413 = vmul.f32 %v8354, %v2278
        %v8414 = vmul.f32 %v8356, %v2278
        %v8415 = vmul.f32 %v8358, %v2278
        %v8416 = vmul.f32 %v8360, %v2278
        %v8417 = vmul.f32 %v8362, %v2278
        %v8418 = vmul.f32 %v8364, %v2278
        %v8419 = vmul.f32 %v8366, %v2278
        %v8420 = vmul.f32 %v8368, %v2278
        %v8421 = vmul.f32 %v8370, %v2278
        %v8422 = vmul.f32 %v8372, %v2278
        %v8423 = vmul.f32 %v8374, %v2278
        %v8424 = vmul.f32 %v8376, %v2278
        %v8425 = vmul.f32 %v8378, %v2278
        %v8426 = vmul.f32 %v8380, %v2278
        %v8427 = vmul.f32 %v8382, %v2278
        %v8428 = vmul.f32 %v8384, %v2278
        %v8429 = vmul.f32 %v8386, %v2278
        %v8430 = vmul.f32 %v8388, %v2278
        %v8431 = vmul.f32 %v8390, %v2278
        %v8432 = vmul.f32 %v8392, %v2278
        %v8433 = vmul.f32 %v8394, %v2278
        %v8434 = vmul.f32 %v8396, %v2278
        %v8435 = vmul.f32 %v8398, %v2278
        %v8436 = vmul.f32 %v8400, %v2278
        %v8437 = vmul.f32 %v8402, %v2278
        %v8438 = vmul.f32 %v8404, %v2278
        %v8439 = vmul.f32 %v8406, %v2278
        %v8440 = vmul.f32 %v8408, %v2278
        %v8441 = vsub.f32 %v8311, %v8409
        %v8442 = vsub.f32 %v8312, %v8410
        %v8443 = vsub.f32 %v8313, %v8411
        %v8444 = vsub.f32 %v8314, %v8412
        %v8445 = vsub.f32 %v8315, %v8413
        %v8446 = vsub.f32 %v8316, %v8414
        %v8447 = vsub.f32 %v8317, %v8415
        %v8448 = vsub.f32 %v8318, %v8416
        %v8449 = vsub.f32 %v8319, %v8417
        %v8450 = vsub.f32 %v8320, %v8418
        %v8451 = vsub.f32 %v8321, %v8419
        %v8452 = vsub.f32 %v8322, %v8420
        %v8453 = vsub.f32 %v8323, %v8421
        %v8454 = vsub.f32 %v8324, %v8422
        %v8455 = vsub.f32 %v8325, %v8423
        %v8456 = vsub.f32 %v8326, %v8424
        %v8457 = vsub.f32 %v8327, %v8425
        %v8458 = vsub.f32 %v8328, %v8426
        %v8459 = vsub.f32 %v8329, %v8427
        %v8460 = vsub.f32 %v8330, %v8428
        %v8461 = vsub.f32 %v8331, %v8429
        %v8462 = vsub.f32 %v8332, %v8430
        %v8463 = vsub.f32 %v8333, %v8431
        %v8464 = vsub.f32 %v8334, %v8432
        %v8465 = vsub.f32 %v8335, %v8433
        %v8466 = vsub.f32 %v8336, %v8434
        %v8467 = vsub.f32 %v8337, %v8435
        %v8468 = vsub.f32 %v8338, %v8436
        %v8469 = vsub.f32 %v8339, %v8437
        %v8470 = vsub.f32 %v8340, %v8438
        %v8471 = vsub.f32 %v8341, %v8439
        %v8472 = vsub.f32 %v8342, %v8440
        %v8473 = vmul.f32 %v8441, %v8441
        %v8474 = vmul.f32 %v8442, %v8442
        %v8475 = vmul.f32 %v8443, %v8443
        %v8476 = vmul.f32 %v8444, %v8444
        %v8477 = vmul.f32 %v8445, %v8445
        %v8478 = vmul.f32 %v8446, %v8446
        %v8479 = vmul.f32 %v8447, %v8447
        %v8480 = vmul.f32 %v8448, %v8448
        %v8481 = vmul.f32 %v8449, %v8449
        %v8482 = vmul.f32 %v8450, %v8450
        %v8483 = vmul.f32 %v8451, %v8451
        %v8484 = vmul.f32 %v8452, %v8452
        %v8485 = vmul.f32 %v8453, %v8453
        %v8486 = vmul.f32 %v8454, %v8454
        %v8487 = vmul.f32 %v8455, %v8455
        %v8488 = vmul.f32 %v8456, %v8456
        %v8489 = vmul.f32 %v8457, %v8457
        %v8490 = vmul.f32 %v8458, %v8458
        %v8491 = vmul.f32 %v8459, %v8459
        %v8492 = vmul.f32 %v8460, %v8460
        %v8493 = vmul.f32 %v8461, %v8461
        %v8494 = vmul.f32 %v8462, %v8462
        %v8495 = vmul.f32 %v8463, %v8463
        %v8496 = vmul.f32 %v8464, %v8464
        %v8497 = vmul.f32 %v8465, %v8465
        %v8498 = vmul.f32 %v8466, %v8466
        %v8499 = vmul.f32 %v8467, %v8467
        %v8500 = vmul.f32 %v8468, %v8468
        %v8501 = vmul.f32 %v8469, %v8469
        %v8502 = vmul.f32 %v8470, %v8470
        %v8503 = vmul.f32 %v8471, %v8471
        %v8504 = vmul.f32 %v8472, %v8472
        %8505 = vadd.xlane.f32.xlu0 %v8473
        %v8506 = vpop.xlane.xlu0 %8505
        %8507 = vadd.xlane.f32.xlu0 %v8474
        %v8508 = vpop.xlane.xlu0 %8507
        %8509 = vadd.xlane.f32.xlu0 %v8475
        %v8510 = vpop.xlane.xlu0 %8509
        %8511 = vadd.xlane.f32.xlu0 %v8476
        %v8512 = vpop.xlane.xlu0 %8511
        %8513 = vadd.xlane.f32.xlu0 %v8477
        %v8514 = vpop.xlane.xlu0 %8513
        %8515 = vadd.xlane.f32.xlu0 %v8478
        %v8516 = vpop.xlane.xlu0 %8515
        %8517 = vadd.xlane.f32.xlu0 %v8479
        %v8518 = vpop.xlane.xlu0 %8517
        %8519 = vadd.xlane.f32.xlu0 %v8480
        %v8520 = vpop.xlane.xlu0 %8519
        %8521 = vadd.xlane.f32.xlu0 %v8481
        %v8522 = vpop.xlane.xlu0 %8521
        %8523 = vadd.xlane.f32.xlu0 %v8482
        %v8524 = vpop.xlane.xlu0 %8523
        %8525 = vadd.xlane.f32.xlu0 %v8483
        %v8526 = vpop.xlane.xlu0 %8525
        %8527 = vadd.xlane.f32.xlu0 %v8484
        %v8528 = vpop.xlane.xlu0 %8527
        %8529 = vadd.xlane.f32.xlu0 %v8485
        %v8530 = vpop.xlane.xlu0 %8529
        %8531 = vadd.xlane.f32.xlu0 %v8486
        %v8532 = vpop.xlane.xlu0 %8531
        %8533 = vadd.xlane.f32.xlu0 %v8487
        %v8534 = vpop.xlane.xlu0 %8533
        %8535 = vadd.xlane.f32.xlu0 %v8488
        %v8536 = vpop.xlane.xlu0 %8535
        %8537 = vadd.xlane.f32.xlu0 %v8489
        %v8538 = vpop.xlane.xlu0 %8537
        %8539 = vadd.xlane.f32.xlu0 %v8490
        %v8540 = vpop.xlane.xlu0 %8539
        %8541 = vadd.xlane.f32.xlu0 %v8491
        %v8542 = vpop.xlane.xlu0 %8541
        %8543 = vadd.xlane.f32.xlu0 %v8492
        %v8544 = vpop.xlane.xlu0 %8543
        %8545 = vadd.xlane.f32.xlu0 %v8493
        %v8546 = vpop.xlane.xlu0 %8545
        %8547 = vadd.xlane.f32.xlu0 %v8494
        %v8548 = vpop.xlane.xlu0 %8547
        %8549 = vadd.xlane.f32.xlu0 %v8495
        %v8550 = vpop.xlane.xlu0 %8549
        %8551 = vadd.xlane.f32.xlu0 %v8496
        %v8552 = vpop.xlane.xlu0 %8551
        %8553 = vadd.xlane.f32.xlu0 %v8497
        %v8554 = vpop.xlane.xlu0 %8553
        %8555 = vadd.xlane.f32.xlu0 %v8498
        %v8556 = vpop.xlane.xlu0 %8555
        %8557 = vadd.xlane.f32.xlu0 %v8499
        %v8558 = vpop.xlane.xlu0 %8557
        %8559 = vadd.xlane.f32.xlu0 %v8500
        %v8560 = vpop.xlane.xlu0 %8559
        %8561 = vadd.xlane.f32.xlu0 %v8501
        %v8562 = vpop.xlane.xlu0 %8561
        %8563 = vadd.xlane.f32.xlu0 %v8502
        %v8564 = vpop.xlane.xlu0 %8563
        %8565 = vadd.xlane.f32.xlu0 %v8503
        %v8566 = vpop.xlane.xlu0 %8565
        %8567 = vadd.xlane.f32.xlu0 %v8504
        %v8568 = vpop.xlane.xlu0 %8567
        %v8569 = vmul.f32 %v8506, %v2278
        %v8570 = vmul.f32 %v8508, %v2278
        %v8571 = vmul.f32 %v8510, %v2278
        %v8572 = vmul.f32 %v8512, %v2278
        %v8573 = vmul.f32 %v8514, %v2278
        %v8574 = vmul.f32 %v8516, %v2278
        %v8575 = vmul.f32 %v8518, %v2278
        %v8576 = vmul.f32 %v8520, %v2278
        %v8577 = vmul.f32 %v8522, %v2278
        %v8578 = vmul.f32 %v8524, %v2278
        %v8579 = vmul.f32 %v8526, %v2278
        %v8580 = vmul.f32 %v8528, %v2278
        %v8581 = vmul.f32 %v8530, %v2278
        %v8582 = vmul.f32 %v8532, %v2278
        %v8583 = vmul.f32 %v8534, %v2278
        %v8584 = vmul.f32 %v8536, %v2278
        %v8585 = vmul.f32 %v8538, %v2278
        %v8586 = vmul.f32 %v8540, %v2278
        %v8587 = vmul.f32 %v8542, %v2278
        %v8588 = vmul.f32 %v8544, %v2278
        %v8589 = vmul.f32 %v8546, %v2278
        %v8590 = vmul.f32 %v8548, %v2278
        %v8591 = vmul.f32 %v8550, %v2278
        %v8592 = vmul.f32 %v8552, %v2278
        %v8593 = vmul.f32 %v8554, %v2278
        %v8594 = vmul.f32 %v8556, %v2278
        %v8595 = vmul.f32 %v8558, %v2278
        %v8596 = vmul.f32 %v8560, %v2278
        %v8597 = vmul.f32 %v8562, %v2278
        %v8598 = vmul.f32 %v8564, %v2278
        %v8599 = vmul.f32 %v8566, %v2278
        %v8600 = vmul.f32 %v8568, %v2278
        %v8601 = vadd.f32 %v8569, 1e-05
        %v8602 = vadd.f32 %v8570, 1e-05
        %v8603 = vadd.f32 %v8571, 1e-05
        %v8604 = vadd.f32 %v8572, 1e-05
        %v8605 = vadd.f32 %v8573, 1e-05
        %v8606 = vadd.f32 %v8574, 1e-05
        %v8607 = vadd.f32 %v8575, 1e-05
        %v8608 = vadd.f32 %v8576, 1e-05
        %v8609 = vadd.f32 %v8577, 1e-05
        %v8610 = vadd.f32 %v8578, 1e-05
        %v8611 = vadd.f32 %v8579, 1e-05
        %v8612 = vadd.f32 %v8580, 1e-05
        %v8613 = vadd.f32 %v8581, 1e-05
        %v8614 = vadd.f32 %v8582, 1e-05
        %v8615 = vadd.f32 %v8583, 1e-05
        %v8616 = vadd.f32 %v8584, 1e-05
        %v8617 = vadd.f32 %v8585, 1e-05
        %v8618 = vadd.f32 %v8586, 1e-05
        %v8619 = vadd.f32 %v8587, 1e-05
        %v8620 = vadd.f32 %v8588, 1e-05
        %v8621 = vadd.f32 %v8589, 1e-05
        %v8622 = vadd.f32 %v8590, 1e-05
        %v8623 = vadd.f32 %v8591, 1e-05
        %v8624 = vadd.f32 %v8592, 1e-05
        %v8625 = vadd.f32 %v8593, 1e-05
        %v8626 = vadd.f32 %v8594, 1e-05
        %v8627 = vadd.f32 %v8595, 1e-05
        %v8628 = vadd.f32 %v8596, 1e-05
        %v8629 = vadd.f32 %v8597, 1e-05
        %v8630 = vadd.f32 %v8598, 1e-05
        %v8631 = vadd.f32 %v8599, 1e-05
        %v8632 = vadd.f32 %v8600, 1e-05
        %v8633 = vrsqrt.pop %v8601
        %v8634 = vrsqrt.pop %v8602
        %v8635 = vrsqrt.pop %v8603
        %v8636 = vrsqrt.pop %v8604
        %v8637 = vrsqrt.pop %v8605
        %v8638 = vrsqrt.pop %v8606
        %v8639 = vrsqrt.pop %v8607
        %v8640 = vrsqrt.pop %v8608
        %v8641 = vrsqrt.pop %v8609
        %v8642 = vrsqrt.pop %v8610
        %v8643 = vrsqrt.pop %v8611
        %v8644 = vrsqrt.pop %v8612
        %v8645 = vrsqrt.pop %v8613
        %v8646 = vrsqrt.pop %v8614
        %v8647 = vrsqrt.pop %v8615
        %v8648 = vrsqrt.pop %v8616
        %v8649 = vrsqrt.pop %v8617
        %v8650 = vrsqrt.pop %v8618
        %v8651 = vrsqrt.pop %v8619
        %v8652 = vrsqrt.pop %v8620
        %v8653 = vrsqrt.pop %v8621
        %v8654 = vrsqrt.pop %v8622
        %v8655 = vrsqrt.pop %v8623
        %v8656 = vrsqrt.pop %v8624
        %v8657 = vrsqrt.pop %v8625
        %v8658 = vrsqrt.pop %v8626
        %v8659 = vrsqrt.pop %v8627
        %v8660 = vrsqrt.pop %v8628
        %v8661 = vrsqrt.pop %v8629
        %v8662 = vrsqrt.pop %v8630
        %v8663 = vrsqrt.pop %v8631
        %v8664 = vrsqrt.pop %v8632
        %v8665 = vmul.f32 %v8441, %v8633
        %v8666 = vmul.f32 %v8442, %v8634
        %v8667 = vmul.f32 %v8443, %v8635
        %v8668 = vmul.f32 %v8444, %v8636
        %v8669 = vmul.f32 %v8445, %v8637
        %v8670 = vmul.f32 %v8446, %v8638
        %v8671 = vmul.f32 %v8447, %v8639
        %v8672 = vmul.f32 %v8448, %v8640
        %v8673 = vmul.f32 %v8449, %v8641
        %v8674 = vmul.f32 %v8450, %v8642
        %v8675 = vmul.f32 %v8451, %v8643
        %v8676 = vmul.f32 %v8452, %v8644
        %v8677 = vmul.f32 %v8453, %v8645
        %v8678 = vmul.f32 %v8454, %v8646
        %v8679 = vmul.f32 %v8455, %v8647
        %v8680 = vmul.f32 %v8456, %v8648
        %v8681 = vmul.f32 %v8457, %v8649
        %v8682 = vmul.f32 %v8458, %v8650
        %v8683 = vmul.f32 %v8459, %v8651
        %v8684 = vmul.f32 %v8460, %v8652
        %v8685 = vmul.f32 %v8461, %v8653
        %v8686 = vmul.f32 %v8462, %v8654
        %v8687 = vmul.f32 %v8463, %v8655
        %v8688 = vmul.f32 %v8464, %v8656
        %v8689 = vmul.f32 %v8465, %v8657
        %v8690 = vmul.f32 %v8466, %v8658
        %v8691 = vmul.f32 %v8467, %v8659
        %v8692 = vmul.f32 %v8468, %v8660
        %v8693 = vmul.f32 %v8469, %v8661
        %v8694 = vmul.f32 %v8470, %v8662
        %v8695 = vmul.f32 %v8471, %v8663
        %v8696 = vmul.f32 %v8472, %v8664
        %v8698 = vlaneseq
        %v8699 = vshrl.u32 %v8698, 7
        %v8700 = vsub.s32 0, %v8699
        %v8701 = vrot.slane %v8343, %v8700
        %v8703 = vmul.f32 %v8665, %v8701
        %v8704 = vmul.f32 %v8666, %v8701
        %v8705 = vmul.f32 %v8667, %v8701
        %v8706 = vmul.f32 %v8668, %v8701
        %v8707 = vmul.f32 %v8669, %v8701
        %v8708 = vmul.f32 %v8670, %v8701
        %v8709 = vmul.f32 %v8671, %v8701
        %v8710 = vmul.f32 %v8672, %v8701
        %v8711 = vmul.f32 %v8673, %v8701
        %v8712 = vmul.f32 %v8674, %v8701
        %v8713 = vmul.f32 %v8675, %v8701
        %v8714 = vmul.f32 %v8676, %v8701
        %v8715 = vmul.f32 %v8677, %v8701
        %v8716 = vmul.f32 %v8678, %v8701
        %v8717 = vmul.f32 %v8679, %v8701
        %v8718 = vmul.f32 %v8680, %v8701
        %v8719 = vmul.f32 %v8681, %v8701
        %v8720 = vmul.f32 %v8682, %v8701
        %v8721 = vmul.f32 %v8683, %v8701
        %v8722 = vmul.f32 %v8684, %v8701
        %v8723 = vmul.f32 %v8685, %v8701
        %v8724 = vmul.f32 %v8686, %v8701
        %v8725 = vmul.f32 %v8687, %v8701
        %v8726 = vmul.f32 %v8688, %v8701
        %v8727 = vmul.f32 %v8689, %v8701
        %v8728 = vmul.f32 %v8690, %v8701
        %v8729 = vmul.f32 %v8691, %v8701
        %v8730 = vmul.f32 %v8692, %v8701
        %v8731 = vmul.f32 %v8693, %v8701
        %v8732 = vmul.f32 %v8694, %v8701
        %v8733 = vmul.f32 %v8695, %v8701
        %v8734 = vmul.f32 %v8696, %v8701
        %v8736 = vlaneseq
        %v8737 = vshrl.u32 %v8736, 7
        %v8738 = vsub.s32 0, %v8737
        %v8739 = vrot.slane %v8344, %v8738
        %v8741 = vadd.f32 %v8703, %v8739
        %v8742 = vadd.f32 %v8704, %v8739
        %v8743 = vadd.f32 %v8705, %v8739
        %v8744 = vadd.f32 %v8706, %v8739
        %v8745 = vadd.f32 %v8707, %v8739
        %v8746 = vadd.f32 %v8708, %v8739
        %v8747 = vadd.f32 %v8709, %v8739
        %v8748 = vadd.f32 %v8710, %v8739
        %v8749 = vadd.f32 %v8711, %v8739
        %v8750 = vadd.f32 %v8712, %v8739
        %v8751 = vadd.f32 %v8713, %v8739
        %v8752 = vadd.f32 %v8714, %v8739
        %v8753 = vadd.f32 %v8715, %v8739
        %v8754 = vadd.f32 %v8716, %v8739
        %v8755 = vadd.f32 %v8717, %v8739
        %v8756 = vadd.f32 %v8718, %v8739
        %v8757 = vadd.f32 %v8719, %v8739
        %v8758 = vadd.f32 %v8720, %v8739
        %v8759 = vadd.f32 %v8721, %v8739
        %v8760 = vadd.f32 %v8722, %v8739
        %v8761 = vadd.f32 %v8723, %v8739
        %v8762 = vadd.f32 %v8724, %v8739
        %v8763 = vadd.f32 %v8725, %v8739
        %v8764 = vadd.f32 %v8726, %v8739
        %v8765 = vadd.f32 %v8727, %v8739
        %v8766 = vadd.f32 %v8728, %v8739
        %v8767 = vadd.f32 %v8729, %v8739
        %v8768 = vadd.f32 %v8730, %v8739
        %v8769 = vadd.f32 %v8731, %v8739
        %v8770 = vadd.f32 %v8732, %v8739
        %v8771 = vadd.f32 %v8733, %v8739
        %v8772 = vadd.f32 %v8734, %v8739
        %8773 = vst [vmem:[%s782] sm:$0xff] %v8741
        %8774 = vst [vmem:[%s782 + $0x8] sm:$0xff] %v8742
        %8775 = vst [vmem:[%s782 + $0x10] sm:$0xff] %v8743
        %8776 = vst [vmem:[%s782 + $0x18] sm:$0xff] %v8744
        %8777 = vst [vmem:[%s782 + $0x20] sm:$0xff] %v8745
        %8778 = vst [vmem:[%s782 + $0x28] sm:$0xff] %v8746
        %8779 = vst [vmem:[%s782 + $0x30] sm:$0xff] %v8747
        %8780 = vst [vmem:[%s782 + $0x38] sm:$0xff] %v8748
        %8781 = vst [vmem:[%s782 + $0x40] sm:$0xff] %v8749
        %8782 = vst [vmem:[%s782 + $0x48] sm:$0xff] %v8750
        %8783 = vst [vmem:[%s782 + $0x50] sm:$0xff] %v8751
        %8784 = vst [vmem:[%s782 + $0x58] sm:$0xff] %v8752
        %8785 = vst [vmem:[%s782 + $0x60] sm:$0xff] %v8753
        %8786 = vst [vmem:[%s782 + $0x68] sm:$0xff] %v8754
        %8787 = vst [vmem:[%s782 + $0x70] sm:$0xff] %v8755
        %8788 = vst [vmem:[%s782 + $0x78] sm:$0xff] %v8756
        %8789 = vst [vmem:[%s782 + $0x80] sm:$0xff] %v8757
        %8790 = vst [vmem:[%s782 + $0x88] sm:$0xff] %v8758
        %8791 = vst [vmem:[%s782 + $0x90] sm:$0xff] %v8759
        %8792 = vst [vmem:[%s782 + $0x98] sm:$0xff] %v8760
        %8793 = vst [vmem:[%s782 + $0xa0] sm:$0xff] %v8761
        %8794 = vst [vmem:[%s782 + $0xa8] sm:$0xff] %v8762
        %8795 = vst [vmem:[%s782 + $0xb0] sm:$0xff] %v8763
        %8796 = vst [vmem:[%s782 + $0xb8] sm:$0xff] %v8764
        %8797 = vst [vmem:[%s782 + $0xc0] sm:$0xff] %v8765
        %8798 = vst [vmem:[%s782 + $0xc8] sm:$0xff] %v8766
        %8799 = vst [vmem:[%s782 + $0xd0] sm:$0xff] %v8767
        %8800 = vst [vmem:[%s782 + $0xd8] sm:$0xff] %v8768
        %8801 = vst [vmem:[%s782 + $0xe0] sm:$0xff] %v8769
        %8802 = vst [vmem:[%s782 + $0xe8] sm:$0xff] %v8770
        %8803 = vst [vmem:[%s782 + $0xf0] sm:$0xff] %v8771
        %8804 = vst [vmem:[%s782 + $0xf8] sm:$0xff] %v8772
        %s8805 = sand.u32 %s464, 1
        %s8806 = scalar_lea.sflag [#allocation4], %s8805
        %s8807 = sand.u32 %s464, 1
        %s8808 = smul.addr %s8807, 256
        %s8809 = scalar_lea.vmem [#allocation17], %s8808
        // Predicated region
        $region133: #{tpu_custom_call.1} parent=95 // pred_check
          %p8810 = pneg %p474
        $region134: #{tpu_custom_call.1} parent=95 // pred_check_branch
          %8812 = sbr.rel (%p8810) target = $region136
        $region135: #{tpu_custom_call.1} parent=95 // pred_region
          %s8813 = smul.u32 32, %s42
          %s8815 = ssub.s32 4096, 4096
          %8816 = vsyncadd %s8806, %s8815
          %s8817 = smul.addr %s8813, 128
          %s8818 = scalar_lea.hbm %s19, %s8817
          %s8819 = sshll.u32 %s8809, 4
          %s8820 = int_to_ptr.vmem [resolvable:$true] %s8819
          %8825 = dma.vmem_to_hbm [thread:$0]  %s8820, 4096, %s8818, %s8806, 128, 128, 8
        $region136: #{tpu_custom_call.1} parent=95 // pred_fallthru
          _
      $region96: #{tpu_custom_call.1} parent=5 // pred_fallthru
        _
      %p8826 = scmp.le.s32.totalorder 2, %s37
      // Predicated region
      $region137: #{tpu_custom_call.1} parent=5 // pred_check
        %p8827 = pneg %p8826
      $region138: #{tpu_custom_call.1} parent=5 // pred_check_branch
        %8829 = sbr.rel (%p8827) target = $region140
      $region139: #{tpu_custom_call.1} parent=5 // pred_region
        %s8830 = ssub.s32 %s37, 2
        // Predicated region
        $region141: #{tpu_custom_call.1} parent=139 // pred_check
          %p8831 = pneg %p480
        $region142: #{tpu_custom_call.1} parent=139 // pred_check_branch
          %8833 = sbr.rel (%p8831) target = $region144
        $region143: #{tpu_custom_call.1} parent=139 // pred_region
          %s8834 = sand.u32 %s465, 1
          %s8835 = scalar_lea.sflag [#allocation4], %s8834
          %s8836 = sand.u32 %s465, 1
          %s8837 = smul.addr %s8836, 256
          %s8838 = scalar_lea.vmem [#allocation17], %s8837
          %8839 = dma.done %s8835, 4096
        $region144: #{tpu_custom_call.1} parent=139 // pred_fallthru
          _
      $region140: #{tpu_custom_call.1} parent=5 // pred_fallthru
        _
    $region6: #{tpu_custom_call.1} parent=1 // loop_footer
      %s41 = sadd.s32 1, %s37
    $region7: #{tpu_custom_call.1} parent=1 // loop_footer_branch
      %36 = sbr.rel target = $region3
    $region8: #{tpu_custom_call.1} parent=1 // loop_exit
      _
    %8840 = vsyncpa [#allocation3], 1
    %s8841 = scalar_lea.sflag [#allocation3], 1
    %8842 = vsyncpa %s8841, 1
    %8843 = vsyncpa [#allocation6], 1
    %s8844 = scalar_lea.sflag [#allocation6], 1
    %8845 = vsyncpa %s8844, 1
    %8846 = vsyncpa [#allocation9], 1
    %8847 = vsyncpa [#allocation12], 1
    %8848 = vsyncpa [#allocation15], 1
    %8849 = vsyncpa [#allocation4], 1
    %s8850 = scalar_lea.sflag [#allocation4], 1
    %8851 = vsyncpa %s8850, 1

</llo_original>
